<compile_context>
chip_gen: v6e
topology: v6e:2x2x1
jax: 0.10.0
libtpu: 0.0.40
codegen_flags: <defaults>
</compile_context>

<pallas_src>
import functools

import jax
import jax.numpy as jnp
from jax.experimental import pallas as pl
from jax.experimental.pallas import tpu as pltpu


# -----------------------------------------------------------------------------
# Fused kernel: [DSConv3D + BN + ReLU] x n_layers  ->  SE gate  ->  + skip
#
# Layout: activations are (n, D, H, W*C) with the packed (w, c) index on the
# 128-wide lane axis.  d-padding lives in 2 extra leading-dim planes of the
# scratch; h-padding lives in sublane-aligned halo strips (interior starts at a
# multiple of 8); w-padding is encoded structurally in the folded 128x128
# matrices (missing off-band blocks).
# -----------------------------------------------------------------------------
def _fused_se_block_kernel(x_ref, m_ref, b_ref, w1_ref, b1_ref, w2_ref, b2_ref,
                           o_ref, pa_ref, stage_ref, *,
                           D, H, WC, k, pad, n_layers, NB, IH0, HP):
    Dp = D + 2 * pad          # d-padded extent
    DH = D * H
    M = NB * DH               # matmul M dim: NB images stacked
    f32 = jnp.float32

    # ---- zero ONLY the halo strips (interior is overwritten every layer) ----
    pa_ref[:, :, 0:IH0, :] = jnp.zeros((NB, Dp, IH0, WC), f32)           # top h halo
    pa_ref[:, :, IH0 + H:HP, :] = jnp.zeros((NB, Dp, HP - IH0 - H, WC), f32)  # bottom h halo
    zplane = jnp.zeros((NB, pad, H, WC), f32)
    pa_ref[:, 0:pad, IH0:IH0 + H, :] = zplane                            # front d halo
    pa_ref[:, pad + D:Dp, IH0:IH0 + H, :] = zplane                       # back d halo

    # layer-0 input: interior write is sublane-aligned (IH0 % 8 == 0)
    pa_ref[:, pad:pad + D, IH0:IH0 + H, :] = x_ref[...]

    y = None
    for l in range(n_layers):
        # -- stage all k*k (kd, kh) halo windows as one (M, k*k*WC) bf16 slab --
        # One (possibly sublane-shifted) read per kh -> k shift-reads per layer
        # instead of k*k misaligned window relayouts; every stage store is a
        # full-tile, lane-dense, unmasked store.
        for kh in range(k):
            off = IH0 + kh - pad
            v = pa_ref[:, :, off:off + H, :]                 # (NB, Dp, H, WC)
            for kd in range(k):
                t = kd * k + kh
                win = v[:, kd:kd + D].reshape(M, WC)
                stage_ref[:, t * WC:(t + 1) * WC] = win.astype(jnp.bfloat16)

        # -- one bf16 MXU matmul with K = k*k*WC, f32 accumulator --
        acc = jnp.dot(stage_ref[...], m_ref[l],
                      preferred_element_type=jnp.float32)    # (M, WC)
        # folded (depthwise bias + pointwise bias + BN) term, then ReLU
        y = jnp.maximum(acc + b_ref[l:l + 1, :], 0.0)
        if l + 1 < n_layers:
            pa_ref[:, pad:pad + D, IH0:IH0 + H, :] = y.reshape(NB, D, H, WC)

    # ---- SE (squeeze / excite) + residual skip, fused epilogue (per image) ----
    for n in range(NB):
        yn = y[n * DH:(n + 1) * DH, :]                       # (DH, WC)
        # column sums over (d, h); the mean over w and 1/(D*H*W) are folded
        # into w1 at pack time.
        col = jnp.sum(yn, axis=0, keepdims=True)             # (1, WC)
        z1 = jnp.dot(col, w1_ref[...],
                     preferred_element_type=jnp.float32) + b1_ref[...]   # (1, Cr)
        h1 = jnp.maximum(z1, 0.0)
        z2 = jnp.dot(h1, w2_ref[...],
                     preferred_element_type=jnp.float32) + b2_ref[...]   # (1, WC)
        s = 1.0 / (1.0 + jnp.exp(-z2))                       # sigmoid gate
        xn = x_ref[n:n + 1].reshape(DH, WC)                  # residual (exact f32)
        o_ref[n:n + 1] = (yn * s + xn).reshape(1, D, H, WC)


# -----------------------------------------------------------------------------
# Weight packing (wrapper-side, plain JAX): fold BN + biases and build the
# combined depthwise + pointwise (k*k*WC, WC) bf16 matrix per layer.
# -----------------------------------------------------------------------------
def _pack_layer(prm, *, W, k, pad):
    dw = prm["dw_w"]                       # (k^3, Ci)   taps, index kd*k*k+kh*k+kw
    pw = prm["pw_w"]                       # (Ci, Co)
    scale = prm["bn_scale"][0]             # (Co,)
    shift = prm["bn_shift"][0]             # (Co,)
    dwb = prm["dw_b"][0]                   # (Ci,)
    pwb = prm["pw_b"][0]                   # (Co,)
    Ci, Co = pw.shape

    pw_s = pw * scale[None, :]                                # BN scale folded
    weff = dw[:, :, None] * pw_s[None]                        # (k^3, Ci, Co)
    weff = weff.reshape(k, k, k, Ci, Co)                      # [kd, kh, kw, ci, co]

    # band[kw, w_in, w_out] = 1 iff w_in == w_out + kw - pad (w zero-padding is
    # realized by the missing blocks at the boundary).
    bands = jnp.stack([jnp.eye(W, W, k=pad - kw, dtype=jnp.float32)
                       for kw in range(k)])                   # (k, W, W)
    # M6[kd, kh, w_in, ci, w_out, co]
    M6 = jnp.einsum("kxy,abkcd->abxcyd", bands, weff)
    M = M6.reshape(k * k * W * Ci, W * Co).astype(jnp.bfloat16)  # (k*k*WC, WC) bf16

    bias = (pwb + dwb @ pw) * scale + shift                   # (Co,) f32
    return M, jnp.tile(bias, W)                               # (k*k*WC, WC), (WC,)


def _pack_se(se, *, W, S):
    w1, b1, w2, b2 = se["w1"], se["b1"], se["w2"], se["b2"]
    w1p = jnp.tile(w1, (W, 1)) / float(S)      # (W*C, Cr)  mean 1/S folded in
    w2p = jnp.tile(w2, (1, W))                 # (Cr, W*C)
    b2p = jnp.tile(b2, (1, W))                 # (1, W*C)
    return w1p, b1, w2p, b2p


# -----------------------------------------------------------------------------
# Full SqueezeAndExcitationBlock forward (stride=1, in_channels == out_channels)
# -----------------------------------------------------------------------------
def se_block_forward(x_ndhwc, layer_params, se_params, *, k, pad,
                     images_per_step=None):
    N, D, H, W, C = x_ndhwc.shape
    assert pad == k // 2, "only the padding == kernel_size // 2 config is fused"
    WC = W * C
    assert WC % 128 == 0 and H % 8 == 0, "lane-dense packing needs W*C%128==0, H%8==0"
    L = len(layer_params)

    if images_per_step is None:
        # Fill an MXU pass on the M axis: M = NB * D * H >= 128 when batch allows.
        images_per_step = max(1, min(N, -(-128 // (D * H))))
        while N % images_per_step:
            images_per_step -= 1
    NB = images_per_step
    assert N % NB == 0

    Ms, biases = [], []
    for prm in layer_params:
        Mm, b = _pack_layer(prm, W=W, k=k, pad=pad)
        Ms.append(Mm)
        biases.append(b)
    Ms = jnp.stack(Ms)                      # (L, k*k*WC, WC) bf16
    biases = jnp.stack(biases)              # (L, WC) f32
    w1p, b1, w2p, b2p = _pack_se(se_params, W=W, S=D * H * W)
    Cr = w1p.shape[1]
    KK = k * k * WC

    x_packed = x_ndhwc.reshape(N, D, H, WC)  # lane-dense (w, c) packing (free)

    # Padded-activation scratch geometry: h interior starts at a sublane-aligned
    # offset IH0 (multiple of 8); one halo row above (row IH0-1) and one below
    # (row IH0+H) live inside the surrounding aligned 8-row strips.
    IH0 = -(-pad // 8) * 8
    HP = IH0 + (-(-(H + pad) // 8)) * 8

    kern = functools.partial(_fused_se_block_kernel, D=D, H=H, WC=WC, k=k,
                             pad=pad, n_layers=L, NB=NB, IH0=IH0, HP=HP)
    out = pl.pallas_call(
        kern,
        out_shape=jax.ShapeDtypeStruct((N, D, H, WC), jnp.float32),
        grid=(N // NB,),
        in_specs=[
            pl.BlockSpec((NB, D, H, WC), lambda n: (n, 0, 0, 0)),
            # Weight operands: constant block index -> fetched once, no
            # per-step re-DMA across grid steps.
            pl.BlockSpec((L, KK, WC), lambda n: (0, 0, 0)),
            pl.BlockSpec((L, WC), lambda n: (0, 0)),
            pl.BlockSpec((WC, Cr), lambda n: (0, 0)),
            pl.BlockSpec((1, Cr), lambda n: (0, 0)),
            pl.BlockSpec((Cr, WC), lambda n: (0, 0)),
            pl.BlockSpec((1, WC), lambda n: (0, 0)),
        ],
        out_specs=pl.BlockSpec((NB, D, H, WC), lambda n: (n, 0, 0, 0)),
        scratch_shapes=[
            pltpu.VMEM((NB, D + 2 * pad, HP, WC), jnp.float32),   # padded activation
            pltpu.VMEM((NB * D * H, KK), jnp.bfloat16),           # staged halo windows
        ],
        compiler_params=pltpu.CompilerParams(
            dimension_semantics=("parallel",)),
    )(x_packed, Ms, biases, w1p, b1, w2p, b2p)

    return out.reshape(N, D, H, W, C)


# -----------------------------------------------------------------------------
# Pure-JAX reference (original, unfolded math) for a correctness check
# -----------------------------------------------------------------------------
def _ref_dsconv_bn_act(x, *, dw_w, dw_b, pw_w, pw_b, bn_scale, bn_shift, k, pad):
    N, D, H, W, c_in = x.shape
    xp = jnp.pad(x, ((0, 0), (pad, pad), (pad, pad), (pad, pad), (0, 0)))
    acc = jnp.zeros((N, D, H, W, c_in), jnp.float32) + dw_b
    for kd in range(k):
        for kh in range(k):
            for kw in range(k):
                acc = acc + xp[:, kd:kd + D, kh:kh + H, kw:kw + W, :] * \
                    dw_w[kd * k * k + kh * k + kw]
    y = jnp.einsum("ndhwi,io->ndhwo", acc, pw_w,
                   precision=jax.lax.Precision.HIGHEST) + pw_b
    y = y * bn_scale + bn_shift
    return jnp.maximum(y, 0.0)


def ref_forward(x, layer_params, se_params, *, k, pad):
    skip = x
    h = x
    pads = [pad] * (len(layer_params) - 1) + [k // 2]
    for p, prm in zip(pads, layer_params):
        h = _ref_dsconv_bn_act(h, **prm, k=k, pad=p)
    pooled = jnp.mean(h, axis=(1, 2, 3))                           # (N, C)
    z1 = jnp.maximum(pooled @ se_params["w1"] + se_params["b1"], 0.0)
    s = jax.nn.sigmoid(z1 @ se_params["w2"] + se_params["b2"])     # (N, C)
    return h * s[:, None, None, None, :] + skip


# -----------------------------------------------------------------------------
# Deterministic parameter initialization (PyTorch weight layouts -> kernel layout)
# -----------------------------------------------------------------------------
def init_dsconv_bn(key, c_in, c_out, k):
    ks = jax.random.split(key, 8)
    dw_w_t = 0.1 * jax.random.normal(ks[0], (c_in, 1, k, k, k), jnp.float32)
    dw_b = 0.1 * jax.random.normal(ks[1], (c_in,), jnp.float32)
    pw_w_t = 0.1 * jax.random.normal(ks[2], (c_out, c_in, 1, 1, 1), jnp.float32)
    pw_b = 0.1 * jax.random.normal(ks[3], (c_out,), jnp.float32)
    gamma = 1.0 + 0.1 * jax.random.normal(ks[4], (c_out,), jnp.float32)
    beta = 0.1 * jax.random.normal(ks[5], (c_out,), jnp.float32)
    rmean = 0.1 * jax.random.normal(ks[6], (c_out,), jnp.float32)
    rvar = jax.random.uniform(ks[7], (c_out,), jnp.float32, minval=0.5, maxval=1.5)
    eps = 1e-5
    scale = gamma / jnp.sqrt(rvar + eps)
    shift = beta - rmean * scale
    return dict(
        dw_w=jnp.transpose(dw_w_t[:, 0], (1, 2, 3, 0)).reshape(k * k * k, c_in),
        dw_b=dw_b.reshape(1, c_in),
        pw_w=jnp.transpose(pw_w_t[:, :, 0, 0, 0], (1, 0)),
        pw_b=pw_b.reshape(1, c_out),
        bn_scale=scale.reshape(1, c_out),
        bn_shift=shift.reshape(1, c_out),
    )


def init_se(key, c):
    cr = c // 8
    ks = jax.random.split(key, 4)
    w1_t = 0.1 * jax.random.normal(ks[0], (cr, c, 1, 1, 1), jnp.float32)
    b1 = 0.1 * jax.random.normal(ks[1], (cr,), jnp.float32)
    w2_t = 0.1 * jax.random.normal(ks[2], (c, cr, 1, 1, 1), jnp.float32)
    b2 = 0.1 * jax.random.normal(ks[3], (c,), jnp.float32)
    return dict(
        w1=jnp.transpose(w1_t[:, :, 0, 0, 0], (1, 0)),   # (C, C//8)
        b1=b1.reshape(1, cr),
        w2=jnp.transpose(w2_t[:, :, 0, 0, 0], (1, 0)),   # (C//8, C)
        b2=b2.reshape(1, c),
    )


if __name__ == "__main__":
    # Module config: SqueezeAndExcitationBlock(16, 16, 3, stride=1, padding=1,
    #                                          dilation=1, layers=3)
    N, C_in, C_out = 2, 16, 16
    D = H = W = 8            # W * C = 128 -> lane-dense packing
    k, pad, layers = 3, 1, 3

    key = jax.random.PRNGKey(0)
    k_x, k_p = jax.random.split(key)

    # Input in PyTorch NCDHW layout, then transposed to the kernel NDHWC layout.
    x_ncdhw = jax.random.normal(k_x, (N, C_in, D, H, W), jnp.float32)
    x = jnp.transpose(x_ncdhw, (0, 2, 3, 4, 1))  # (N, D, H, W, C)

    # layers=3 -> input_layer + 1 intermediate DSConv/BN/Act + output_layer
    layer_keys = jax.random.split(k_p, layers + 1)
    layer_params = [init_dsconv_bn(layer_keys[0], C_in, C_out, k)]
    for i in range(layers - 2):
        layer_params.append(init_dsconv_bn(layer_keys[1 + i], C_out, C_out, k))
    layer_params.append(init_dsconv_bn(layer_keys[layers - 1], C_out, C_out, k))
    se_params = init_se(layer_keys[layers], C_out)

    out = se_block_forward(x, layer_params, se_params, k=k, pad=pad)
    out = jax.block_until_ready(out)

    ref = ref_forward(x, layer_params, se_params, k=k, pad=pad)
    assert out.shape == (N, D, H, W, C_out), out.shape
    max_err = float(jnp.max(jnp.abs(out - ref)))
    assert max_err < 1e-2, f"max abs error vs reference: {max_err}"

    print("KERNEL_OK")
</pallas_src>

<mosaic_0001>
module attributes {stable_mosaic.version = 11 : i64} {
  func.func @_fused_se_block_kernel(%arg0: i32, %arg1: memref<2x8x8x128xf32, #tpu.memory_space<vmem>>, %arg2: memref<3x1152x128xbf16, #tpu.memory_space<vmem>>, %arg3: memref<3x128xf32, #tpu.memory_space<vmem>>, %arg4: memref<128x2xf32, #tpu.memory_space<vmem>>, %arg5: memref<1x2xf32, #tpu.memory_space<vmem>>, %arg6: memref<2x128xf32, #tpu.memory_space<vmem>>, %arg7: memref<1x128xf32, #tpu.memory_space<vmem>>, %arg8: memref<2x8x8x128xf32, #tpu.memory_space<vmem>>, %arg9: memref<2x10x24x128xf32, #tpu.memory_space<vmem>>, %arg10: memref<128x1152xbf16, #tpu.memory_space<vmem>>) attributes {dimension_semantics = [#tpu.dimension_semantics<parallel>], iteration_bounds = array<i64: 1>, scalar_prefetch = 0 : i64, scratch_operands = 2 : i64, tpu.core_type = #tpu.core_type<tc>, window_params = [{transform_indices = @transform_0, window_bounds = array<i64: 2, 8, 8, 128>}, {pipeline_mode = #tpu.pipeline_mode<synchronous>, transform_indices = @transform_1, window_bounds = array<i64: 3, 1152, 128>}, {pipeline_mode = #tpu.pipeline_mode<synchronous>, transform_indices = @transform_2, window_bounds = array<i64: 3, 128>}, {pipeline_mode = #tpu.pipeline_mode<synchronous>, transform_indices = @transform_3, window_bounds = array<i64: 128, 2>}, {pipeline_mode = #tpu.pipeline_mode<synchronous>, transform_indices = @transform_4, window_bounds = array<i64: 1, 2>}, {pipeline_mode = #tpu.pipeline_mode<synchronous>, transform_indices = @transform_5, window_bounds = array<i64: 2, 128>}, {pipeline_mode = #tpu.pipeline_mode<synchronous>, transform_indices = @transform_6, window_bounds = array<i64: 1, 128>}, {transform_indices = @transform_7, window_bounds = array<i64: 2, 8, 8, 128>}]} {
    %cst = arith.constant 0.000000e+00 : f32
    %0 = vector.broadcast %cst : f32 to vector<2x10x8x128xf32>
    %c0 = arith.constant 0 : index
    %c0_0 = arith.constant 0 : index
    %c0_1 = arith.constant 0 : index
    %c0_2 = arith.constant 0 : index
    %1 = vector.load %arg9[%c0, %c0_0, %c0_1, %c0_2] : memref<2x10x24x128xf32, #tpu.memory_space<vmem>>, vector<2x10x8x128xf32>
    tpu.vector_store %arg9[%c0, %c0_0, %c0_1, %c0_2], %0 {strides = array<i32>} : memref<2x10x24x128xf32, #tpu.memory_space<vmem>>, vector<2x10x8x128xf32>,
    %cst_3 = arith.constant 0.000000e+00 : f32
    %2 = vector.broadcast %cst_3 : f32 to vector<2x10x8x128xf32>
    %c0_4 = arith.constant 0 : index
    %c0_5 = arith.constant 0 : index
    %c16 = arith.constant 16 : index
    %c0_6 = arith.constant 0 : index
    %3 = vector.load %arg9[%c0_4, %c0_5, %c16, %c0_6] : memref<2x10x24x128xf32, #tpu.memory_space<vmem>>, vector<2x10x8x128xf32>
    tpu.vector_store %arg9[%c0_4, %c0_5, %c16, %c0_6], %2 {strides = array<i32>} : memref<2x10x24x128xf32, #tpu.memory_space<vmem>>, vector<2x10x8x128xf32>,
    %cst_7 = arith.constant 0.000000e+00 : f32
    %4 = vector.broadcast %cst_7 : f32 to vector<2x1x8x128xf32>
    %c0_8 = arith.constant 0 : index
    %c0_9 = arith.constant 0 : index
    %c8 = arith.constant 8 : index
    %c0_10 = arith.constant 0 : index
    %5 = vector.load %arg9[%c0_8, %c0_9, %c8, %c0_10] : memref<2x10x24x128xf32, #tpu.memory_space<vmem>>, vector<2x1x8x128xf32>
    tpu.vector_store %arg9[%c0_8, %c0_9, %c8, %c0_10], %4 {strides = array<i32>} : memref<2x10x24x128xf32, #tpu.memory_space<vmem>>, vector<2x1x8x128xf32>,
    %c0_11 = arith.constant 0 : index
    %c9 = arith.constant 9 : index
    %c8_12 = arith.constant 8 : index
    %c0_13 = arith.constant 0 : index
    %6 = vector.load %arg9[%c0_11, %c9, %c8_12, %c0_13] : memref<2x10x24x128xf32, #tpu.memory_space<vmem>>, vector<2x1x8x128xf32>
    tpu.vector_store %arg9[%c0_11, %c9, %c8_12, %c0_13], %4 {strides = array<i32>} : memref<2x10x24x128xf32, #tpu.memory_space<vmem>>, vector<2x1x8x128xf32>,
    %c0_14 = arith.constant 0 : index
    %c0_15 = arith.constant 0 : index
    %c0_16 = arith.constant 0 : index
    %c0_17 = arith.constant 0 : index
    %7 = vector.load %arg1[%c0_14, %c0_15, %c0_16, %c0_17] : memref<2x8x8x128xf32, #tpu.memory_space<vmem>>, vector<2x8x8x128xf32>
    %c0_18 = arith.constant 0 : index
    %c1 = arith.constant 1 : index
    %c8_19 = arith.constant 8 : index
    %c0_20 = arith.constant 0 : index
    %8 = vector.load %arg9[%c0_18, %c1, %c8_19, %c0_20] : memref<2x10x24x128xf32, #tpu.memory_space<vmem>>, vector<2x8x8x128xf32>
    tpu.vector_store %arg9[%c0_18, %c1, %c8_19, %c0_20], %7 {strides = array<i32>} : memref<2x10x24x128xf32, #tpu.memory_space<vmem>>, vector<2x8x8x128xf32>,
    %c0_21 = arith.constant 0 : index
    %c0_22 = arith.constant 0 : index
    %c7 = arith.constant 7 : index
    %c0_23 = arith.constant 0 : index
    %9 = vector.load %arg9[%c0_21, %c0_22, %c7, %c0_23] : memref<2x10x24x128xf32, #tpu.memory_space<vmem>>, vector<2x10x8x128xf32>
    %10 = vector.extract_strided_slice %9 {offsets = [0, 0, 0, 0], sizes = [2, 8, 8, 128], strides = [1, 1, 1, 1]} : vector<2x10x8x128xf32> to vector<2x8x8x128xf32>
    %11 = vector.shape_cast %10 : vector<2x8x8x128xf32> to vector<128x128xf32>
    %12 = arith.truncf %11 : vector<128x128xf32> to vector<128x128xbf16>
    %c0_24 = arith.constant 0 : index
    %c0_25 = arith.constant 0 : index
    %13 = vector.load %arg10[%c0_24, %c0_25] : memref<128x1152xbf16, #tpu.memory_space<vmem>>, vector<128x128xbf16>
    tpu.vector_store %arg10[%c0_24, %c0_25], %12 {strides = array<i32>} : memref<128x1152xbf16, #tpu.memory_space<vmem>>, vector<128x128xbf16>,
    %14 = vector.extract_strided_slice %9 {offsets = [0, 1, 0, 0], sizes = [2, 8, 8, 128], strides = [1, 1, 1, 1]} : vector<2x10x8x128xf32> to vector<2x8x8x128xf32>
    %15 = vector.shape_cast %14 : vector<2x8x8x128xf32> to vector<128x128xf32>
    %16 = arith.truncf %15 : vector<128x128xf32> to vector<128x128xbf16>
    %c0_26 = arith.constant 0 : index
    %c384 = arith.constant 384 : index
    %17 = vector.load %arg10[%c0_26, %c384] : memref<128x1152xbf16, #tpu.memory_space<vmem>>, vector<128x128xbf16>
    tpu.vector_store %arg10[%c0_26, %c384], %16 {strides = array<i32>} : memref<128x1152xbf16, #tpu.memory_space<vmem>>, vector<128x128xbf16>,
    %18 = vector.extract_strided_slice %9 {offsets = [0, 2, 0, 0], sizes = [2, 8, 8, 128], strides = [1, 1, 1, 1]} : vector<2x10x8x128xf32> to vector<2x8x8x128xf32>
    %19 = vector.shape_cast %18 : vector<2x8x8x128xf32> to vector<128x128xf32>
    %20 = arith.truncf %19 : vector<128x128xf32> to vector<128x128xbf16>
    %c0_27 = arith.constant 0 : index
    %c768 = arith.constant 768 : index
    %21 = vector.load %arg10[%c0_27, %c768] : memref<128x1152xbf16, #tpu.memory_space<vmem>>, vector<128x128xbf16>
    tpu.vector_store %arg10[%c0_27, %c768], %20 {strides = array<i32>} : memref<128x1152xbf16, #tpu.memory_space<vmem>>, vector<128x128xbf16>,
    %c0_28 = arith.constant 0 : index
    %c0_29 = arith.constant 0 : index
    %c8_30 = arith.constant 8 : index
    %c0_31 = arith.constant 0 : index
    %22 = vector.load %arg9[%c0_28, %c0_29, %c8_30, %c0_31] : memref<2x10x24x128xf32, #tpu.memory_space<vmem>>, vector<2x10x8x128xf32>
    %23 = vector.extract_strided_slice %22 {offsets = [0, 0, 0, 0], sizes = [2, 8, 8, 128], strides = [1, 1, 1, 1]} : vector<2x10x8x128xf32> to vector<2x8x8x128xf32>
    %24 = vector.shape_cast %23 : vector<2x8x8x128xf32> to vector<128x128xf32>
    %25 = arith.truncf %24 : vector<128x128xf32> to vector<128x128xbf16>
    %c0_32 = arith.constant 0 : index
    %c128 = arith.constant 128 : index
    %26 = vector.load %arg10[%c0_32, %c128] : memref<128x1152xbf16, #tpu.memory_space<vmem>>, vector<128x128xbf16>
    tpu.vector_store %arg10[%c0_32, %c128], %25 {strides = array<i32>} : memref<128x1152xbf16, #tpu.memory_space<vmem>>, vector<128x128xbf16>,
    %27 = vector.extract_strided_slice %22 {offsets = [0, 1, 0, 0], sizes = [2, 8, 8, 128], strides = [1, 1, 1, 1]} : vector<2x10x8x128xf32> to vector<2x8x8x128xf32>
    %28 = vector.shape_cast %27 : vector<2x8x8x128xf32> to vector<128x128xf32>
    %29 = arith.truncf %28 : vector<128x128xf32> to vector<128x128xbf16>
    %c0_33 = arith.constant 0 : index
    %c512 = arith.constant 512 : index
    %30 = vector.load %arg10[%c0_33, %c512] : memref<128x1152xbf16, #tpu.memory_space<vmem>>, vector<128x128xbf16>
    tpu.vector_store %arg10[%c0_33, %c512], %29 {strides = array<i32>} : memref<128x1152xbf16, #tpu.memory_space<vmem>>, vector<128x128xbf16>,
    %31 = vector.extract_strided_slice %22 {offsets = [0, 2, 0, 0], sizes = [2, 8, 8, 128], strides = [1, 1, 1, 1]} : vector<2x10x8x128xf32> to vector<2x8x8x128xf32>
    %32 = vector.shape_cast %31 : vector<2x8x8x128xf32> to vector<128x128xf32>
    %33 = arith.truncf %32 : vector<128x128xf32> to vector<128x128xbf16>
    %c0_34 = arith.constant 0 : index
    %c896 = arith.constant 896 : index
    %34 = vector.load %arg10[%c0_34, %c896] : memref<128x1152xbf16, #tpu.memory_space<vmem>>, vector<128x128xbf16>
    tpu.vector_store %arg10[%c0_34, %c896], %33 {strides = array<i32>} : memref<128x1152xbf16, #tpu.memory_space<vmem>>, vector<128x128xbf16>,
    %c0_35 = arith.constant 0 : index
    %c0_36 = arith.constant 0 : index
    %c9_37 = arith.constant 9 : index
    %c0_38 = arith.constant 0 : index
    %35 = vector.load %arg9[%c0_35, %c0_36, %c9_37, %c0_38] : memref<2x10x24x128xf32, #tpu.memory_space<vmem>>, vector<2x10x8x128xf32>
    %36 = vector.extract_strided_slice %35 {offsets = [0, 0, 0, 0], sizes = [2, 8, 8, 128], strides = [1, 1, 1, 1]} : vector<2x10x8x128xf32> to vector<2x8x8x128xf32>
    %37 = vector.shape_cast %36 : vector<2x8x8x128xf32> to vector<128x128xf32>
    %38 = arith.truncf %37 : vector<128x128xf32> to vector<128x128xbf16>
    %c0_39 = arith.constant 0 : index
    %c256 = arith.constant 256 : index
    %39 = vector.load %arg10[%c0_39, %c256] : memref<128x1152xbf16, #tpu.memory_space<vmem>>, vector<128x128xbf16>
    tpu.vector_store %arg10[%c0_39, %c256], %38 {strides = array<i32>} : memref<128x1152xbf16, #tpu.memory_space<vmem>>, vector<128x128xbf16>,
    %40 = vector.extract_strided_slice %35 {offsets = [0, 1, 0, 0], sizes = [2, 8, 8, 128], strides = [1, 1, 1, 1]} : vector<2x10x8x128xf32> to vector<2x8x8x128xf32>
    %41 = vector.shape_cast %40 : vector<2x8x8x128xf32> to vector<128x128xf32>
    %42 = arith.truncf %41 : vector<128x128xf32> to vector<128x128xbf16>
    %c0_40 = arith.constant 0 : index
    %c640 = arith.constant 640 : index
    %43 = vector.load %arg10[%c0_40, %c640] : memref<128x1152xbf16, #tpu.memory_space<vmem>>, vector<128x128xbf16>
    tpu.vector_store %arg10[%c0_40, %c640], %42 {strides = array<i32>} : memref<128x1152xbf16, #tpu.memory_space<vmem>>, vector<128x128xbf16>,
    %44 = vector.extract_strided_slice %35 {offsets = [0, 2, 0, 0], sizes = [2, 8, 8, 128], strides = [1, 1, 1, 1]} : vector<2x10x8x128xf32> to vector<2x8x8x128xf32>
    %45 = vector.shape_cast %44 : vector<2x8x8x128xf32> to vector<128x128xf32>
    %46 = arith.truncf %45 : vector<128x128xf32> to vector<128x128xbf16>
    %c0_41 = arith.constant 0 : index
    %c1024 = arith.constant 1024 : index
    %47 = vector.load %arg10[%c0_41, %c1024] : memref<128x1152xbf16, #tpu.memory_space<vmem>>, vector<128x128xbf16>
    tpu.vector_store %arg10[%c0_41, %c1024], %46 {strides = array<i32>} : memref<128x1152xbf16, #tpu.memory_space<vmem>>, vector<128x128xbf16>,
    %c0_42 = arith.constant 0 : index
    %c0_43 = arith.constant 0 : index
    %48 = vector.load %arg10[%c0_42, %c0_43] : memref<128x1152xbf16, #tpu.memory_space<vmem>>, vector<128x1152xbf16>
    %c0_44 = arith.constant 0 : index
    %c0_45 = arith.constant 0 : index
    %c0_46 = arith.constant 0 : index
    %49 = vector.load %arg2[%c0_44, %c0_45, %c0_46] : memref<3x1152x128xbf16, #tpu.memory_space<vmem>>, vector<1x1152x128xbf16>
    %50 = vector.shape_cast %49 : vector<1x1152x128xbf16> to vector<1152x128xbf16>
    %cst_47 = arith.constant dense<0.000000e+00> : vector<128x128xf32>
    %51 = tpu.matmul %48, %50, %cst_47 {dimension_numbers = #tpu.dot_dimension_numbers<[1], [0], [0], [1], [0, 0, 1, 1], [], []>} : vector<128x1152xbf16>, vector<1152x128xbf16>, vector<128x128xf32> -> vector<128x128xf32>
    %c0_48 = arith.constant 0 : index
    %c0_49 = arith.constant 0 : index
    %52 = vector.load %arg3[%c0_48, %c0_49] : memref<3x128xf32, #tpu.memory_space<vmem>>, vector<1x128xf32>
    %53 = vector.broadcast %52 : vector<1x128xf32> to vector<128x128xf32>
    %54 = arith.addf %51, %53 : vector<128x128xf32>
    %cst_50 = arith.constant 0.000000e+00 : f32
    %55 = vector.broadcast %cst_50 : f32 to vector<128x128xf32>
    %56 = arith.maximumf %54, %55 : vector<128x128xf32>
    %57 = vector.shape_cast %56 : vector<128x128xf32> to vector<2x8x8x128xf32>
    %c0_51 = arith.constant 0 : index
    %c1_52 = arith.constant 1 : index
    %c8_53 = arith.constant 8 : index
    %c0_54 = arith.constant 0 : index
    %58 = vector.load %arg9[%c0_51, %c1_52, %c8_53, %c0_54] : memref<2x10x24x128xf32, #tpu.memory_space<vmem>>, vector<2x8x8x128xf32>
    tpu.vector_store %arg9[%c0_51, %c1_52, %c8_53, %c0_54], %57 {strides = array<i32>} : memref<2x10x24x128xf32, #tpu.memory_space<vmem>>, vector<2x8x8x128xf32>,
    %c0_55 = arith.constant 0 : index
    %c0_56 = arith.constant 0 : index
    %c7_57 = arith.constant 7 : index
    %c0_58 = arith.constant 0 : index
    %59 = vector.load %arg9[%c0_55, %c0_56, %c7_57, %c0_58] : memref<2x10x24x128xf32, #tpu.memory_space<vmem>>, vector<2x10x8x128xf32>
    %60 = vector.extract_strided_slice %59 {offsets = [0, 0, 0, 0], sizes = [2, 8, 8, 128], strides = [1, 1, 1, 1]} : vector<2x10x8x128xf32> to vector<2x8x8x128xf32>
    %61 = vector.shape_cast %60 : vector<2x8x8x128xf32> to vector<128x128xf32>
    %62 = arith.truncf %61 : vector<128x128xf32> to vector<128x128xbf16>
    %c0_59 = arith.constant 0 : index
    %c0_60 = arith.constant 0 : index
    %63 = vector.load %arg10[%c0_59, %c0_60] : memref<128x1152xbf16, #tpu.memory_space<vmem>>, vector<128x128xbf16>
    tpu.vector_store %arg10[%c0_59, %c0_60], %62 {strides = array<i32>} : memref<128x1152xbf16, #tpu.memory_space<vmem>>, vector<128x128xbf16>,
    %64 = vector.extract_strided_slice %59 {offsets = [0, 1, 0, 0], sizes = [2, 8, 8, 128], strides = [1, 1, 1, 1]} : vector<2x10x8x128xf32> to vector<2x8x8x128xf32>
    %65 = vector.shape_cast %64 : vector<2x8x8x128xf32> to vector<128x128xf32>
    %66 = arith.truncf %65 : vector<128x128xf32> to vector<128x128xbf16>
    %c0_61 = arith.constant 0 : index
    %c384_62 = arith.constant 384 : index
    %67 = vector.load %arg10[%c0_61, %c384_62] : memref<128x1152xbf16, #tpu.memory_space<vmem>>, vector<128x128xbf16>
    tpu.vector_store %arg10[%c0_61, %c384_62], %66 {strides = array<i32>} : memref<128x1152xbf16, #tpu.memory_space<vmem>>, vector<128x128xbf16>,
    %68 = vector.extract_strided_slice %59 {offsets = [0, 2, 0, 0], sizes = [2, 8, 8, 128], strides = [1, 1, 1, 1]} : vector<2x10x8x128xf32> to vector<2x8x8x128xf32>
    %69 = vector.shape_cast %68 : vector<2x8x8x128xf32> to vector<128x128xf32>
    %70 = arith.truncf %69 : vector<128x128xf32> to vector<128x128xbf16>
    %c0_63 = arith.constant 0 : index
    %c768_64 = arith.constant 768 : index
    %71 = vector.load %arg10[%c0_63, %c768_64] : memref<128x1152xbf16, #tpu.memory_space<vmem>>, vector<128x128xbf16>
    tpu.vector_store %arg10[%c0_63, %c768_64], %70 {strides = array<i32>} : memref<128x1152xbf16, #tpu.memory_space<vmem>>, vector<128x128xbf16>,
    %c0_65 = arith.constant 0 : index
    %c0_66 = arith.constant 0 : index
    %c8_67 = arith.constant 8 : index
    %c0_68 = arith.constant 0 : index
    %72 = vector.load %arg9[%c0_65, %c0_66, %c8_67, %c0_68] : memref<2x10x24x128xf32, #tpu.memory_space<vmem>>, vector<2x10x8x128xf32>
    %73 = vector.extract_strided_slice %72 {offsets = [0, 0, 0, 0], sizes = [2, 8, 8, 128], strides = [1, 1, 1, 1]} : vector<2x10x8x128xf32> to vector<2x8x8x128xf32>
    %74 = vector.shape_cast %73 : vector<2x8x8x128xf32> to vector<128x128xf32>
    %75 = arith.truncf %74 : vector<128x128xf32> to vector<128x128xbf16>
    %c0_69 = arith.constant 0 : index
    %c128_70 = arith.constant 128 : index
    %76 = vector.load %arg10[%c0_69, %c128_70] : memref<128x1152xbf16, #tpu.memory_space<vmem>>, vector<128x128xbf16>
    tpu.vector_store %arg10[%c0_69, %c128_70], %75 {strides = array<i32>} : memref<128x1152xbf16, #tpu.memory_space<vmem>>, vector<128x128xbf16>,
    %77 = vector.extract_strided_slice %72 {offsets = [0, 1, 0, 0], sizes = [2, 8, 8, 128], strides = [1, 1, 1, 1]} : vector<2x10x8x128xf32> to vector<2x8x8x128xf32>
    %78 = vector.shape_cast %77 : vector<2x8x8x128xf32> to vector<128x128xf32>
    %79 = arith.truncf %78 : vector<128x128xf32> to vector<128x128xbf16>
    %c0_71 = arith.constant 0 : index
    %c512_72 = arith.constant 512 : index
    %80 = vector.load %arg10[%c0_71, %c512_72] : memref<128x1152xbf16, #tpu.memory_space<vmem>>, vector<128x128xbf16>
    tpu.vector_store %arg10[%c0_71, %c512_72], %79 {strides = array<i32>} : memref<128x1152xbf16, #tpu.memory_space<vmem>>, vector<128x128xbf16>,
    %81 = vector.extract_strided_slice %72 {offsets = [0, 2, 0, 0], sizes = [2, 8, 8, 128], strides = [1, 1, 1, 1]} : vector<2x10x8x128xf32> to vector<2x8x8x128xf32>
    %82 = vector.shape_cast %81 : vector<2x8x8x128xf32> to vector<128x128xf32>
    %83 = arith.truncf %82 : vector<128x128xf32> to vector<128x128xbf16>
    %c0_73 = arith.constant 0 : index
    %c896_74 = arith.constant 896 : index
    %84 = vector.load %arg10[%c0_73, %c896_74] : memref<128x1152xbf16, #tpu.memory_space<vmem>>, vector<128x128xbf16>
    tpu.vector_store %arg10[%c0_73, %c896_74], %83 {strides = array<i32>} : memref<128x1152xbf16, #tpu.memory_space<vmem>>, vector<128x128xbf16>,
    %c0_75 = arith.constant 0 : index
    %c0_76 = arith.constant 0 : index
    %c9_77 = arith.constant 9 : index
    %c0_78 = arith.constant 0 : index
    %85 = vector.load %arg9[%c0_75, %c0_76, %c9_77, %c0_78] : memref<2x10x24x128xf32, #tpu.memory_space<vmem>>, vector<2x10x8x128xf32>
    %86 = vector.extract_strided_slice %85 {offsets = [0, 0, 0, 0], sizes = [2, 8, 8, 128], strides = [1, 1, 1, 1]} : vector<2x10x8x128xf32> to vector<2x8x8x128xf32>
    %87 = vector.shape_cast %86 : vector<2x8x8x128xf32> to vector<128x128xf32>
    %88 = arith.truncf %87 : vector<128x128xf32> to vector<128x128xbf16>
    %c0_79 = arith.constant 0 : index
    %c256_80 = arith.constant 256 : index
    %89 = vector.load %arg10[%c0_79, %c256_80] : memref<128x1152xbf16, #tpu.memory_space<vmem>>, vector<128x128xbf16>
    tpu.vector_store %arg10[%c0_79, %c256_80], %88 {strides = array<i32>} : memref<128x1152xbf16, #tpu.memory_space<vmem>>, vector<128x128xbf16>,
    %90 = vector.extract_strided_slice %85 {offsets = [0, 1, 0, 0], sizes = [2, 8, 8, 128], strides = [1, 1, 1, 1]} : vector<2x10x8x128xf32> to vector<2x8x8x128xf32>
    %91 = vector.shape_cast %90 : vector<2x8x8x128xf32> to vector<128x128xf32>
    %92 = arith.truncf %91 : vector<128x128xf32> to vector<128x128xbf16>
    %c0_81 = arith.constant 0 : index
    %c640_82 = arith.constant 640 : index
    %93 = vector.load %arg10[%c0_81, %c640_82] : memref<128x1152xbf16, #tpu.memory_space<vmem>>, vector<128x128xbf16>
    tpu.vector_store %arg10[%c0_81, %c640_82], %92 {strides = array<i32>} : memref<128x1152xbf16, #tpu.memory_space<vmem>>, vector<128x128xbf16>,
    %94 = vector.extract_strided_slice %85 {offsets = [0, 2, 0, 0], sizes = [2, 8, 8, 128], strides = [1, 1, 1, 1]} : vector<2x10x8x128xf32> to vector<2x8x8x128xf32>
    %95 = vector.shape_cast %94 : vector<2x8x8x128xf32> to vector<128x128xf32>
    %96 = arith.truncf %95 : vector<128x128xf32> to vector<128x128xbf16>
    %c0_83 = arith.constant 0 : index
    %c1024_84 = arith.constant 1024 : index
    %97 = vector.load %arg10[%c0_83, %c1024_84] : memref<128x1152xbf16, #tpu.memory_space<vmem>>, vector<128x128xbf16>
    tpu.vector_store %arg10[%c0_83, %c1024_84], %96 {strides = array<i32>} : memref<128x1152xbf16, #tpu.memory_space<vmem>>, vector<128x128xbf16>,
    %c0_85 = arith.constant 0 : index
    %c0_86 = arith.constant 0 : index
    %98 = vector.load %arg10[%c0_85, %c0_86] : memref<128x1152xbf16, #tpu.memory_space<vmem>>, vector<128x1152xbf16>
    %c1_87 = arith.constant 1 : index
    %c0_88 = arith.constant 0 : index
    %c0_89 = arith.constant 0 : index
    %99 = vector.load %arg2[%c1_87, %c0_88, %c0_89] : memref<3x1152x128xbf16, #tpu.memory_space<vmem>>, vector<1x1152x128xbf16>
    %100 = vector.shape_cast %99 : vector<1x1152x128xbf16> to vector<1152x128xbf16>
    %cst_90 = arith.constant dense<0.000000e+00> : vector<128x128xf32>
    %101 = tpu.matmul %98, %100, %cst_90 {dimension_numbers = #tpu.dot_dimension_numbers<[1], [0], [0], [1], [0, 0, 1, 1], [], []>} : vector<128x1152xbf16>, vector<1152x128xbf16>, vector<128x128xf32> -> vector<128x128xf32>
    %c1_91 = arith.constant 1 : index
    %c0_92 = arith.constant 0 : index
    %102 = vector.load %arg3[%c1_91, %c0_92] : memref<3x128xf32, #tpu.memory_space<vmem>>, vector<1x128xf32>
    %103 = vector.broadcast %102 : vector<1x128xf32> to vector<128x128xf32>
    %104 = arith.addf %101, %103 : vector<128x128xf32>
    %cst_93 = arith.constant 0.000000e+00 : f32
    %105 = vector.broadcast %cst_93 : f32 to vector<128x128xf32>
    %106 = arith.maximumf %104, %105 : vector<128x128xf32>
    %107 = vector.shape_cast %106 : vector<128x128xf32> to vector<2x8x8x128xf32>
    %c0_94 = arith.constant 0 : index
    %c1_95 = arith.constant 1 : index
    %c8_96 = arith.constant 8 : index
    %c0_97 = arith.constant 0 : index
    %108 = vector.load %arg9[%c0_94, %c1_95, %c8_96, %c0_97] : memref<2x10x24x128xf32, #tpu.memory_space<vmem>>, vector<2x8x8x128xf32>
    tpu.vector_store %arg9[%c0_94, %c1_95, %c8_96, %c0_97], %107 {strides = array<i32>} : memref<2x10x24x128xf32, #tpu.memory_space<vmem>>, vector<2x8x8x128xf32>,
    %c0_98 = arith.constant 0 : index
    %c0_99 = arith.constant 0 : index
    %c7_100 = arith.constant 7 : index
    %c0_101 = arith.constant 0 : index
    %109 = vector.load %arg9[%c0_98, %c0_99, %c7_100, %c0_101] : memref<2x10x24x128xf32, #tpu.memory_space<vmem>>, vector<2x10x8x128xf32>
    %110 = vector.extract_strided_slice %109 {offsets = [0, 0, 0, 0], sizes = [2, 8, 8, 128], strides = [1, 1, 1, 1]} : vector<2x10x8x128xf32> to vector<2x8x8x128xf32>
    %111 = vector.shape_cast %110 : vector<2x8x8x128xf32> to vector<128x128xf32>
    %112 = arith.truncf %111 : vector<128x128xf32> to vector<128x128xbf16>
    %c0_102 = arith.constant 0 : index
    %c0_103 = arith.constant 0 : index
    %113 = vector.load %arg10[%c0_102, %c0_103] : memref<128x1152xbf16, #tpu.memory_space<vmem>>, vector<128x128xbf16>
    tpu.vector_store %arg10[%c0_102, %c0_103], %112 {strides = array<i32>} : memref<128x1152xbf16, #tpu.memory_space<vmem>>, vector<128x128xbf16>,
    %114 = vector.extract_strided_slice %109 {offsets = [0, 1, 0, 0], sizes = [2, 8, 8, 128], strides = [1, 1, 1, 1]} : vector<2x10x8x128xf32> to vector<2x8x8x128xf32>
    %115 = vector.shape_cast %114 : vector<2x8x8x128xf32> to vector<128x128xf32>
    %116 = arith.truncf %115 : vector<128x128xf32> to vector<128x128xbf16>
    %c0_104 = arith.constant 0 : index
    %c384_105 = arith.constant 384 : index
    %117 = vector.load %arg10[%c0_104, %c384_105] : memref<128x1152xbf16, #tpu.memory_space<vmem>>, vector<128x128xbf16>
    tpu.vector_store %arg10[%c0_104, %c384_105], %116 {strides = array<i32>} : memref<128x1152xbf16, #tpu.memory_space<vmem>>, vector<128x128xbf16>,
    %118 = vector.extract_strided_slice %109 {offsets = [0, 2, 0, 0], sizes = [2, 8, 8, 128], strides = [1, 1, 1, 1]} : vector<2x10x8x128xf32> to vector<2x8x8x128xf32>
    %119 = vector.shape_cast %118 : vector<2x8x8x128xf32> to vector<128x128xf32>
    %120 = arith.truncf %119 : vector<128x128xf32> to vector<128x128xbf16>
    %c0_106 = arith.constant 0 : index
    %c768_107 = arith.constant 768 : index
    %121 = vector.load %arg10[%c0_106, %c768_107] : memref<128x1152xbf16, #tpu.memory_space<vmem>>, vector<128x128xbf16>
    tpu.vector_store %arg10[%c0_106, %c768_107], %120 {strides = array<i32>} : memref<128x1152xbf16, #tpu.memory_space<vmem>>, vector<128x128xbf16>,
    %c0_108 = arith.constant 0 : index
    %c0_109 = arith.constant 0 : index
    %c8_110 = arith.constant 8 : index
    %c0_111 = arith.constant 0 : index
    %122 = vector.load %arg9[%c0_108, %c0_109, %c8_110, %c0_111] : memref<2x10x24x128xf32, #tpu.memory_space<vmem>>, vector<2x10x8x128xf32>
    %123 = vector.extract_strided_slice %122 {offsets = [0, 0, 0, 0], sizes = [2, 8, 8, 128], strides = [1, 1, 1, 1]} : vector<2x10x8x128xf32> to vector<2x8x8x128xf32>
    %124 = vector.shape_cast %123 : vector<2x8x8x128xf32> to vector<128x128xf32>
    %125 = arith.truncf %124 : vector<128x128xf32> to vector<128x128xbf16>
    %c0_112 = arith.constant 0 : index
    %c128_113 = arith.constant 128 : index
    %126 = vector.load %arg10[%c0_112, %c128_113] : memref<128x1152xbf16, #tpu.memory_space<vmem>>, vector<128x128xbf16>
    tpu.vector_store %arg10[%c0_112, %c128_113], %125 {strides = array<i32>} : memref<128x1152xbf16, #tpu.memory_space<vmem>>, vector<128x128xbf16>,
    %127 = vector.extract_strided_slice %122 {offsets = [0, 1, 0, 0], sizes = [2, 8, 8, 128], strides = [1, 1, 1, 1]} : vector<2x10x8x128xf32> to vector<2x8x8x128xf32>
    %128 = vector.shape_cast %127 : vector<2x8x8x128xf32> to vector<128x128xf32>
    %129 = arith.truncf %128 : vector<128x128xf32> to vector<128x128xbf16>
    %c0_114 = arith.constant 0 : index
    %c512_115 = arith.constant 512 : index
    %130 = vector.load %arg10[%c0_114, %c512_115] : memref<128x1152xbf16, #tpu.memory_space<vmem>>, vector<128x128xbf16>
    tpu.vector_store %arg10[%c0_114, %c512_115], %129 {strides = array<i32>} : memref<128x1152xbf16, #tpu.memory_space<vmem>>, vector<128x128xbf16>,
    %131 = vector.extract_strided_slice %122 {offsets = [0, 2, 0, 0], sizes = [2, 8, 8, 128], strides = [1, 1, 1, 1]} : vector<2x10x8x128xf32> to vector<2x8x8x128xf32>
    %132 = vector.shape_cast %131 : vector<2x8x8x128xf32> to vector<128x128xf32>
    %133 = arith.truncf %132 : vector<128x128xf32> to vector<128x128xbf16>
    %c0_116 = arith.constant 0 : index
    %c896_117 = arith.constant 896 : index
    %134 = vector.load %arg10[%c0_116, %c896_117] : memref<128x1152xbf16, #tpu.memory_space<vmem>>, vector<128x128xbf16>
    tpu.vector_store %arg10[%c0_116, %c896_117], %133 {strides = array<i32>} : memref<128x1152xbf16, #tpu.memory_space<vmem>>, vector<128x128xbf16>,
    %c0_118 = arith.constant 0 : index
    %c0_119 = arith.constant 0 : index
    %c9_120 = arith.constant 9 : index
    %c0_121 = arith.constant 0 : index
    %135 = vector.load %arg9[%c0_118, %c0_119, %c9_120, %c0_121] : memref<2x10x24x128xf32, #tpu.memory_space<vmem>>, vector<2x10x8x128xf32>
    %136 = vector.extract_strided_slice %135 {offsets = [0, 0, 0, 0], sizes = [2, 8, 8, 128], strides = [1, 1, 1, 1]} : vector<2x10x8x128xf32> to vector<2x8x8x128xf32>
    %137 = vector.shape_cast %136 : vector<2x8x8x128xf32> to vector<128x128xf32>
    %138 = arith.truncf %137 : vector<128x128xf32> to vector<128x128xbf16>
    %c0_122 = arith.constant 0 : index
    %c256_123 = arith.constant 256 : index
    %139 = vector.load %arg10[%c0_122, %c256_123] : memref<128x1152xbf16, #tpu.memory_space<vmem>>, vector<128x128xbf16>
    tpu.vector_store %arg10[%c0_122, %c256_123], %138 {strides = array<i32>} : memref<128x1152xbf16, #tpu.memory_space<vmem>>, vector<128x128xbf16>,
    %140 = vector.extract_strided_slice %135 {offsets = [0, 1, 0, 0], sizes = [2, 8, 8, 128], strides = [1, 1, 1, 1]} : vector<2x10x8x128xf32> to vector<2x8x8x128xf32>
    %141 = vector.shape_cast %140 : vector<2x8x8x128xf32> to vector<128x128xf32>
    %142 = arith.truncf %141 : vector<128x128xf32> to vector<128x128xbf16>
    %c0_124 = arith.constant 0 : index
    %c640_125 = arith.constant 640 : index
    %143 = vector.load %arg10[%c0_124, %c640_125] : memref<128x1152xbf16, #tpu.memory_space<vmem>>, vector<128x128xbf16>
    tpu.vector_store %arg10[%c0_124, %c640_125], %142 {strides = array<i32>} : memref<128x1152xbf16, #tpu.memory_space<vmem>>, vector<128x128xbf16>,
    %144 = vector.extract_strided_slice %135 {offsets = [0, 2, 0, 0], sizes = [2, 8, 8, 128], strides = [1, 1, 1, 1]} : vector<2x10x8x128xf32> to vector<2x8x8x128xf32>
    %145 = vector.shape_cast %144 : vector<2x8x8x128xf32> to vector<128x128xf32>
    %146 = arith.truncf %145 : vector<128x128xf32> to vector<128x128xbf16>
    %c0_126 = arith.constant 0 : index
    %c1024_127 = arith.constant 1024 : index
    %147 = vector.load %arg10[%c0_126, %c1024_127] : memref<128x1152xbf16, #tpu.memory_space<vmem>>, vector<128x128xbf16>
    tpu.vector_store %arg10[%c0_126, %c1024_127], %146 {strides = array<i32>} : memref<128x1152xbf16, #tpu.memory_space<vmem>>, vector<128x128xbf16>,
    %c0_128 = arith.constant 0 : index
    %c0_129 = arith.constant 0 : index
    %148 = vector.load %arg10[%c0_128, %c0_129] : memref<128x1152xbf16, #tpu.memory_space<vmem>>, vector<128x1152xbf16>
    %c2 = arith.constant 2 : index
    %c0_130 = arith.constant 0 : index
    %c0_131 = arith.constant 0 : index
    %149 = vector.load %arg2[%c2, %c0_130, %c0_131] : memref<3x1152x128xbf16, #tpu.memory_space<vmem>>, vector<1x1152x128xbf16>
    %150 = vector.shape_cast %149 : vector<1x1152x128xbf16> to vector<1152x128xbf16>
    %cst_132 = arith.constant dense<0.000000e+00> : vector<128x128xf32>
    %151 = tpu.matmul %148, %150, %cst_132 {dimension_numbers = #tpu.dot_dimension_numbers<[1], [0], [0], [1], [0, 0, 1, 1], [], []>} : vector<128x1152xbf16>, vector<1152x128xbf16>, vector<128x128xf32> -> vector<128x128xf32>
    %c2_133 = arith.constant 2 : index
    %c0_134 = arith.constant 0 : index
    %152 = vector.load %arg3[%c2_133, %c0_134] : memref<3x128xf32, #tpu.memory_space<vmem>>, vector<1x128xf32>
    %153 = vector.broadcast %152 : vector<1x128xf32> to vector<128x128xf32>
    %154 = arith.addf %151, %153 : vector<128x128xf32>
    %cst_135 = arith.constant 0.000000e+00 : f32
    %155 = vector.broadcast %cst_135 : f32 to vector<128x128xf32>
    %156 = arith.maximumf %154, %155 : vector<128x128xf32>
    %157 = vector.extract_strided_slice %156 {offsets = [0, 0], sizes = [64, 128], strides = [1, 1]} : vector<128x128xf32> to vector<64x128xf32>
    %cst_136 = arith.constant dense<0.000000e+00> : vector<128xf32>
    %158 = vector.multi_reduction <add>, %157, %cst_136 [0] : vector<64x128xf32> to vector<128xf32>
    %159 = vector.shape_cast %158 : vector<128xf32> to vector<1x128xf32>
    %c0_137 = arith.constant 0 : index
    %c0_138 = arith.constant 0 : index
    %160 = vector.load %arg4[%c0_137, %c0_138] : memref<128x2xf32, #tpu.memory_space<vmem>>, vector<128x2xf32>
    %cst_139 = arith.constant dense<0.000000e+00> : vector<1x2xf32>
    %161 = tpu.matmul %159, %160, %cst_139 {dimension_numbers = #tpu.dot_dimension_numbers<[1], [0], [0], [1], [0, 0, 1, 1], [], []>} : vector<1x128xf32>, vector<128x2xf32>, vector<1x2xf32> -> vector<1x2xf32>
    %c0_140 = arith.constant 0 : index
    %c0_141 = arith.constant 0 : index
    %162 = vector.load %arg5[%c0_140, %c0_141] : memref<1x2xf32, #tpu.memory_space<vmem>>, vector<1x2xf32>
    %163 = arith.addf %161, %162 : vector<1x2xf32>
    %cst_142 = arith.constant 0.000000e+00 : f32
    %164 = vector.broadcast %cst_142 : f32 to vector<1x2xf32>
    %165 = arith.maximumf %163, %164 : vector<1x2xf32>
    %c0_143 = arith.constant 0 : index
    %c0_144 = arith.constant 0 : index
    %166 = vector.load %arg6[%c0_143, %c0_144] : memref<2x128xf32, #tpu.memory_space<vmem>>, vector<2x128xf32>
    %cst_145 = arith.constant dense<0.000000e+00> : vector<1x128xf32>
    %167 = tpu.matmul %165, %166, %cst_145 {dimension_numbers = #tpu.dot_dimension_numbers<[1], [0], [0], [1], [0, 0, 1, 1], [], []>} : vector<1x2xf32>, vector<2x128xf32>, vector<1x128xf32> -> vector<1x128xf32>
    %c0_146 = arith.constant 0 : index
    %c0_147 = arith.constant 0 : index
    %168 = vector.load %arg7[%c0_146, %c0_147] : memref<1x128xf32, #tpu.memory_space<vmem>>, vector<1x128xf32>
    %169 = arith.addf %167, %168 : vector<1x128xf32>
    %cst_148 = arith.constant 0.000000e+00 : f32
    %170 = vector.broadcast %cst_148 : f32 to vector<1x128xf32>
    %171 = arith.subf %170, %169 : vector<1x128xf32>
    %172 = math.exp %171 : vector<1x128xf32>
    %cst_149 = arith.constant 1.000000e+00 : f32
    %173 = vector.broadcast %cst_149 : f32 to vector<1x128xf32>
    %174 = arith.addf %173, %172 : vector<1x128xf32>
    %cst_150 = arith.constant 1.000000e+00 : f32
    %175 = vector.broadcast %cst_150 : f32 to vector<1x128xf32>
    %176 = arith.divf %175, %174 : vector<1x128xf32>
    %c0_151 = arith.constant 0 : index
    %c0_152 = arith.constant 0 : index
    %c0_153 = arith.constant 0 : index
    %c0_154 = arith.constant 0 : index
    %177 = vector.load %arg1[%c0_151, %c0_152, %c0_153, %c0_154] : memref<2x8x8x128xf32, #tpu.memory_space<vmem>>, vector<1x8x8x128xf32>
    %178 = vector.shape_cast %177 : vector<1x8x8x128xf32> to vector<64x128xf32>
    %179 = vector.broadcast %176 : vector<1x128xf32> to vector<64x128xf32>
    %180 = arith.mulf %157, %179 : vector<64x128xf32>
    %181 = arith.addf %180, %178 : vector<64x128xf32>
    %182 = vector.shape_cast %181 : vector<64x128xf32> to vector<1x8x8x128xf32>
    %c0_155 = arith.constant 0 : index
    %c0_156 = arith.constant 0 : index
    %c0_157 = arith.constant 0 : index
    %c0_158 = arith.constant 0 : index
    %183 = vector.load %arg8[%c0_155, %c0_156, %c0_157, %c0_158] : memref<2x8x8x128xf32, #tpu.memory_space<vmem>>, vector<1x8x8x128xf32>
    tpu.vector_store %arg8[%c0_155, %c0_156, %c0_157, %c0_158], %182 {strides = array<i32>} : memref<2x8x8x128xf32, #tpu.memory_space<vmem>>, vector<1x8x8x128xf32>,
    %184 = vector.extract_strided_slice %156 {offsets = [64, 0], sizes = [64, 128], strides = [1, 1]} : vector<128x128xf32> to vector<64x128xf32>
    %cst_159 = arith.constant dense<0.000000e+00> : vector<128xf32>
    %185 = vector.multi_reduction <add>, %184, %cst_159 [0] : vector<64x128xf32> to vector<128xf32>
    %186 = vector.shape_cast %185 : vector<128xf32> to vector<1x128xf32>
    %c0_160 = arith.constant 0 : index
    %c0_161 = arith.constant 0 : index
    %187 = vector.load %arg4[%c0_160, %c0_161] : memref<128x2xf32, #tpu.memory_space<vmem>>, vector<128x2xf32>
    %cst_162 = arith.constant dense<0.000000e+00> : vector<1x2xf32>
    %188 = tpu.matmul %186, %187, %cst_162 {dimension_numbers = #tpu.dot_dimension_numbers<[1], [0], [0], [1], [0, 0, 1, 1], [], []>} : vector<1x128xf32>, vector<128x2xf32>, vector<1x2xf32> -> vector<1x2xf32>
    %c0_163 = arith.constant 0 : index
    %c0_164 = arith.constant 0 : index
    %189 = vector.load %arg5[%c0_163, %c0_164] : memref<1x2xf32, #tpu.memory_space<vmem>>, vector<1x2xf32>
    %190 = arith.addf %188, %189 : vector<1x2xf32>
    %cst_165 = arith.constant 0.000000e+00 : f32
    %191 = vector.broadcast %cst_165 : f32 to vector<1x2xf32>
    %192 = arith.maximumf %190, %191 : vector<1x2xf32>
    %c0_166 = arith.constant 0 : index
    %c0_167 = arith.constant 0 : index
    %193 = vector.load %arg6[%c0_166, %c0_167] : memref<2x128xf32, #tpu.memory_space<vmem>>, vector<2x128xf32>
    %cst_168 = arith.constant dense<0.000000e+00> : vector<1x128xf32>
    %194 = tpu.matmul %192, %193, %cst_168 {dimension_numbers = #tpu.dot_dimension_numbers<[1], [0], [0], [1], [0, 0, 1, 1], [], []>} : vector<1x2xf32>, vector<2x128xf32>, vector<1x128xf32> -> vector<1x128xf32>
    %c0_169 = arith.constant 0 : index
    %c0_170 = arith.constant 0 : index
    %195 = vector.load %arg7[%c0_169, %c0_170] : memref<1x128xf32, #tpu.memory_space<vmem>>, vector<1x128xf32>
    %196 = arith.addf %194, %195 : vector<1x128xf32>
    %cst_171 = arith.constant 0.000000e+00 : f32
    %197 = vector.broadcast %cst_171 : f32 to vector<1x128xf32>
    %198 = arith.subf %197, %196 : vector<1x128xf32>
    %199 = math.exp %198 : vector<1x128xf32>
    %cst_172 = arith.constant 1.000000e+00 : f32
    %200 = vector.broadcast %cst_172 : f32 to vector<1x128xf32>
    %201 = arith.addf %200, %199 : vector<1x128xf32>
    %cst_173 = arith.constant 1.000000e+00 : f32
    %202 = vector.broadcast %cst_173 : f32 to vector<1x128xf32>
    %203 = arith.divf %202, %201 : vector<1x128xf32>
    %c1_174 = arith.constant 1 : index
    %c0_175 = arith.constant 0 : index
    %c0_176 = arith.constant 0 : index
    %c0_177 = arith.constant 0 : index
    %204 = vector.load %arg1[%c1_174, %c0_175, %c0_176, %c0_177] : memref<2x8x8x128xf32, #tpu.memory_space<vmem>>, vector<1x8x8x128xf32>
    %205 = vector.shape_cast %204 : vector<1x8x8x128xf32> to vector<64x128xf32>
    %206 = vector.broadcast %203 : vector<1x128xf32> to vector<64x128xf32>
    %207 = arith.mulf %184, %206 : vector<64x128xf32>
    %208 = arith.addf %207, %205 : vector<64x128xf32>
    %209 = vector.shape_cast %208 : vector<64x128xf32> to vector<1x8x8x128xf32>
    %c1_178 = arith.constant 1 : index
    %c0_179 = arith.constant 0 : index
    %c0_180 = arith.constant 0 : index
    %c0_181 = arith.constant 0 : index
    %210 = vector.load %arg8[%c1_178, %c0_179, %c0_180, %c0_181] : memref<2x8x8x128xf32, #tpu.memory_space<vmem>>, vector<1x8x8x128xf32>
    tpu.vector_store %arg8[%c1_178, %c0_179, %c0_180, %c0_181], %209 {strides = array<i32>} : memref<2x8x8x128xf32, #tpu.memory_space<vmem>>, vector<1x8x8x128xf32>,
    return
  }
  func.func @transform_0(%arg0: i32) -> (i32, i32, i32, i32) {
    %c0_i32 = arith.constant 0 : i32
    %c0_i32_0 = arith.constant 0 : i32
    %c0_i32_1 = arith.constant 0 : i32
    %c0_i32_2 = arith.constant 0 : i32
    return %arg0, %c0_i32, %c0_i32_0, %c0_i32_1 : i32, i32, i32, i32
  }
  func.func @transform_1(%arg0: i32) -> (i32, i32, i32) {
    %c0_i32 = arith.constant 0 : i32
    %c0_i32_0 = arith.constant 0 : i32
    %c0_i32_1 = arith.constant 0 : i32
    %c0_i32_2 = arith.constant 0 : i32
    return %c0_i32, %c0_i32_0, %c0_i32_1 : i32, i32, i32
  }
  func.func @transform_2(%arg0: i32) -> (i32, i32) {
    %c0_i32 = arith.constant 0 : i32
    %c0_i32_0 = arith.constant 0 : i32
    %c0_i32_1 = arith.constant 0 : i32
    return %c0_i32, %c0_i32_0 : i32, i32
  }
  func.func @transform_3(%arg0: i32) -> (i32, i32) {
    %c0_i32 = arith.constant 0 : i32
    %c0_i32_0 = arith.constant 0 : i32
    %c0_i32_1 = arith.constant 0 : i32
    return %c0_i32, %c0_i32_0 : i32, i32
  }
  func.func @transform_4(%arg0: i32) -> (i32, i32) {
    %c0_i32 = arith.constant 0 : i32
    %c0_i32_0 = arith.constant 0 : i32
    %c0_i32_1 = arith.constant 0 : i32
    return %c0_i32, %c0_i32_0 : i32, i32
  }
  func.func @transform_5(%arg0: i32) -> (i32, i32) {
    %c0_i32 = arith.constant 0 : i32
    %c0_i32_0 = arith.constant 0 : i32
    %c0_i32_1 = arith.constant 0 : i32
    return %c0_i32, %c0_i32_0 : i32, i32
  }
  func.func @transform_6(%arg0: i32) -> (i32, i32) {
    %c0_i32 = arith.constant 0 : i32
    %c0_i32_0 = arith.constant 0 : i32
    %c0_i32_1 = arith.constant 0 : i32
    return %c0_i32, %c0_i32_0 : i32, i32
  }
  func.func @transform_7(%arg0: i32) -> (i32, i32, i32, i32) {
    %c0_i32 = arith.constant 0 : i32
    %c0_i32_0 = arith.constant 0 : i32
    %c0_i32_1 = arith.constant 0 : i32
    %c0_i32_2 = arith.constant 0 : i32
    return %arg0, %c0_i32, %c0_i32_0, %c0_i32_1 : i32, i32, i32, i32
  }
}

</mosaic_0001>

<llo_original>
// kernel: tpu_custom_call.1
$region0: #{tpu_custom_call.1}
  #allocation0 [shape = 'u32[]', space=smem, size = 0x4, offset = 0x4, fixed_abs, tag = 'smem constant byte address 0x4 - core index']
  #allocation1 [shape = 'u32[144,128]{1,0:T(1,128)}', space=vmem, size = 0x12000, scoped, tag = 'internal scratch']
  #allocation2 [shape = 'f32[2,10,24,128]{3,2,1,0:T(8,128)}', space=vmem, size = 0x3c000, scoped, tag = 'scratch operand']
  #allocation3 [shape = 'bf16[128,1152]{1,0:T(8,128)(2,1)}', space=vmem, size = 0x48000, scoped, tag = 'scratch operand']
  %s0 = inlined_call_operand.vmem [shape: f32[2,8,8,128], index: 0, kind: input, shape index: {}]
  %s1 = inlined_call_operand.hbm [shape: bf16[3,1152,128], index: 1, kind: input, shape index: {}]
  %s2 = inlined_call_operand.vmem [shape: f32[3,128], index: 2, kind: input, shape index: {}]
  %s3 = inlined_call_operand.vmem [shape: f32[128,2], index: 3, kind: input, shape index: {}]
  %s4 = inlined_call_operand.vmem [shape: f32[1,2], index: 4, kind: input, shape index: {}]
  %s5 = inlined_call_operand.vmem [shape: f32[2,128], index: 5, kind: input, shape index: {}]
  %s6 = inlined_call_operand.vmem [shape: f32[1,128], index: 6, kind: input, shape index: {}]
  %s7 = inlined_call_operand.hbm [shape: f32[2,8,8,128], index: 7, kind: output, shape index: {}]
  %s8 = sld [smem:[#allocation0]]
  $region42: #{tpu_custom_call.1} parent=0
    _
  %s10 = ssub.s32 1, %s8
  %s11 = scalar_select 0, %s10, %s8
  $region1: #{tpu_custom_call.1} parent=0
    #allocation4 [shape = 'u8[884736]{0}', space=vmem, size = 0xd8000, scoped, tag = 'input window, operand 1, single buffered']
    #allocation5 [shape = 's32[1]{0}', space=sflag, size = 0x4, scoped, tag = 'scoped memory for tpu_custom_call.1']
    #allocation6 [shape = 's32[1]{0}', space=sflag, size = 0x4, scoped, tag = 'scoped memory for tpu_custom_call.1']
    #allocation7 [shape = 'u8[65536]{0}', space=vmem, size = 0x10000, scoped, tag = 'output window, operand 0, single buffered']
    %12 = vsyncpa [#allocation5], 0
    %13 = vsyncpa [#allocation6], 0
    // Predicated region
    $region2: #{tpu_custom_call.1} parent=1 // pred_check
      _
    $region3: #{tpu_custom_call.1} parent=1 // pred_check_branch
      %15 = sbr.rel (0) target = $region5
    $region4: #{tpu_custom_call.1} parent=1 // pred_region
      _
    $region5: #{tpu_custom_call.1} parent=1 // pred_fallthru
      _
    // Predicated region
    $region6: #{tpu_custom_call.1} parent=1 // pred_check
      _
    $region7: #{tpu_custom_call.1} parent=1 // pred_check_branch
      %17 = sbr.rel (0) target = $region9
    $region8: #{tpu_custom_call.1} parent=1 // pred_region
      %s19 = ssub.s32 27648, 27648
      %20 = vsyncadd [#allocation5], %s19
      %s21 = sshll.u32 [#allocation4], 4
      %s22 = int_to_ptr.vmem [resolvable:$true] %s21
      %27 = dma.hbm_to_vmem [thread:$0]  %s1, 27648, %s22, [#allocation5], 64, 64, 4
    $region9: #{tpu_custom_call.1} parent=1 // pred_fallthru
      _
    // Predicated region
    $region10: #{tpu_custom_call.1} parent=1 // pred_check
      _
    $region11: #{tpu_custom_call.1} parent=1 // pred_check_branch
      %29 = sbr.rel (0) target = $region13
    $region12: #{tpu_custom_call.1} parent=1 // pred_region
      _
    $region13: #{tpu_custom_call.1} parent=1 // pred_fallthru
      _
    // Predicated region
    $region14: #{tpu_custom_call.1} parent=1 // pred_check
      _
    $region15: #{tpu_custom_call.1} parent=1 // pred_check_branch
      %31 = sbr.rel (0) target = $region17
    $region16: #{tpu_custom_call.1} parent=1 // pred_region
      _
    $region17: #{tpu_custom_call.1} parent=1 // pred_fallthru
      _
    // Predicated region
    $region18: #{tpu_custom_call.1} parent=1 // pred_check
      _
    $region19: #{tpu_custom_call.1} parent=1 // pred_check_branch
      %33 = sbr.rel (0) target = $region21
    $region20: #{tpu_custom_call.1} parent=1 // pred_region
      _
    $region21: #{tpu_custom_call.1} parent=1 // pred_fallthru
      _
    // Predicated region
    $region22: #{tpu_custom_call.1} parent=1 // pred_check
      _
    $region23: #{tpu_custom_call.1} parent=1 // pred_check_branch
      %35 = sbr.rel (0) target = $region25
    $region24: #{tpu_custom_call.1} parent=1 // pred_region
      _
    $region25: #{tpu_custom_call.1} parent=1 // pred_fallthru
      _
    // Predicated region
    $region26: #{tpu_custom_call.1} parent=1 // pred_check
      _
    $region27: #{tpu_custom_call.1} parent=1 // pred_check_branch
      %37 = sbr.rel (0) target = $region29
    $region28: #{tpu_custom_call.1} parent=1 // pred_region
      _
    $region29: #{tpu_custom_call.1} parent=1 // pred_fallthru
      _
    // Predicated region
    $region30: #{tpu_custom_call.1} parent=1 // pred_check
      _
    $region31: #{tpu_custom_call.1} parent=1 // pred_check_branch
      %39 = sbr.rel (0) target = $region33
    $region32: #{tpu_custom_call.1} parent=1 // pred_region
      %40 = dma.done [#allocation5], 27648
    $region33: #{tpu_custom_call.1} parent=1 // pred_fallthru
      _
    %42 = vst [vmem:[#allocation2] sm:$0xff] 0.0
    %43 = vst [vmem:[#allocation2 + $0x18] sm:$0xff] 0.0
    %44 = vst [vmem:[#allocation2 + $0x30] sm:$0xff] 0.0
    %45 = vst [vmem:[#allocation2 + $0x48] sm:$0xff] 0.0
    %46 = vst [vmem:[#allocation2 + $0x60] sm:$0xff] 0.0
    %47 = vst [vmem:[#allocation2 + $0x78] sm:$0xff] 0.0
    %48 = vst [vmem:[#allocation2 + $0x90] sm:$0xff] 0.0
    %49 = vst [vmem:[#allocation2 + $0xa8] sm:$0xff] 0.0
    %50 = vst [vmem:[#allocation2 + $0xc0] sm:$0xff] 0.0
    %51 = vst [vmem:[#allocation2 + $0xd8] sm:$0xff] 0.0
    %52 = vst [vmem:[#allocation2 + $0xf0] sm:$0xff] 0.0
    %53 = vst [vmem:[#allocation2 + $0x108] sm:$0xff] 0.0
    %54 = vst [vmem:[#allocation2 + $0x120] sm:$0xff] 0.0
    %55 = vst [vmem:[#allocation2 + $0x138] sm:$0xff] 0.0
    %56 = vst [vmem:[#allocation2 + $0x150] sm:$0xff] 0.0
    %57 = vst [vmem:[#allocation2 + $0x168] sm:$0xff] 0.0
    %58 = vst [vmem:[#allocation2 + $0x180] sm:$0xff] 0.0
    %59 = vst [vmem:[#allocation2 + $0x198] sm:$0xff] 0.0
    %60 = vst [vmem:[#allocation2 + $0x1b0] sm:$0xff] 0.0
    %61 = vst [vmem:[#allocation2 + $0x1c8] sm:$0xff] 0.0
    %62 = vst [vmem:[#allocation2 + $0x10] sm:$0xff] 0.0
    %63 = vst [vmem:[#allocation2 + $0x28] sm:$0xff] 0.0
    %64 = vst [vmem:[#allocation2 + $0x40] sm:$0xff] 0.0
    %65 = vst [vmem:[#allocation2 + $0x58] sm:$0xff] 0.0
    %66 = vst [vmem:[#allocation2 + $0x70] sm:$0xff] 0.0
    %67 = vst [vmem:[#allocation2 + $0x88] sm:$0xff] 0.0
    %68 = vst [vmem:[#allocation2 + $0xa0] sm:$0xff] 0.0
    %69 = vst [vmem:[#allocation2 + $0xb8] sm:$0xff] 0.0
    %70 = vst [vmem:[#allocation2 + $0xd0] sm:$0xff] 0.0
    %71 = vst [vmem:[#allocation2 + $0xe8] sm:$0xff] 0.0
    %72 = vst [vmem:[#allocation2 + $0x100] sm:$0xff] 0.0
    %73 = vst [vmem:[#allocation2 + $0x118] sm:$0xff] 0.0
    %74 = vst [vmem:[#allocation2 + $0x130] sm:$0xff] 0.0
    %75 = vst [vmem:[#allocation2 + $0x148] sm:$0xff] 0.0
    %76 = vst [vmem:[#allocation2 + $0x160] sm:$0xff] 0.0
    %77 = vst [vmem:[#allocation2 + $0x178] sm:$0xff] 0.0
    %78 = vst [vmem:[#allocation2 + $0x190] sm:$0xff] 0.0
    %79 = vst [vmem:[#allocation2 + $0x1a8] sm:$0xff] 0.0
    %80 = vst [vmem:[#allocation2 + $0x1c0] sm:$0xff] 0.0
    %81 = vst [vmem:[#allocation2 + $0x1d8] sm:$0xff] 0.0
    %82 = vst [vmem:[#allocation2 + $0x8] sm:$0xff] 0.0
    %83 = vst [vmem:[#allocation2 + $0xf8] sm:$0xff] 0.0
    %s84 = scalar_lea.vmem [#allocation2], 216
    %85 = vst [vmem:[%s84 + $0x8] sm:$0xff] 0.0
    %86 = vst [vmem:[%s84 + $0xf8] sm:$0xff] 0.0
    %v87 = vld [vmem:[%s0] sm:$0xff]
    %v88 = vld [vmem:[%s0 + $0x8] sm:$0xff]
    %v89 = vld [vmem:[%s0 + $0x10] sm:$0xff]
    %v90 = vld [vmem:[%s0 + $0x18] sm:$0xff]
    %v91 = vld [vmem:[%s0 + $0x20] sm:$0xff]
    %v92 = vld [vmem:[%s0 + $0x28] sm:$0xff]
    %v93 = vld [vmem:[%s0 + $0x30] sm:$0xff]
    %v94 = vld [vmem:[%s0 + $0x38] sm:$0xff]
    %v95 = vld [vmem:[%s0 + $0x40] sm:$0xff]
    %v96 = vld [vmem:[%s0 + $0x48] sm:$0xff]
    %v97 = vld [vmem:[%s0 + $0x50] sm:$0xff]
    %v98 = vld [vmem:[%s0 + $0x58] sm:$0xff]
    %v99 = vld [vmem:[%s0 + $0x60] sm:$0xff]
    %v100 = vld [vmem:[%s0 + $0x68] sm:$0xff]
    %v101 = vld [vmem:[%s0 + $0x70] sm:$0xff]
    %v102 = vld [vmem:[%s0 + $0x78] sm:$0xff]
    %s103 = scalar_lea.vmem [#allocation2], 24
    %104 = vst [vmem:[%s103 + $0x8] sm:$0xff] %v87
    %105 = vst [vmem:[%s103 + $0x20] sm:$0xff] %v88
    %106 = vst [vmem:[%s103 + $0x38] sm:$0xff] %v89
    %107 = vst [vmem:[%s103 + $0x50] sm:$0xff] %v90
    %108 = vst [vmem:[%s103 + $0x68] sm:$0xff] %v91
    %109 = vst [vmem:[%s103 + $0x80] sm:$0xff] %v92
    %110 = vst [vmem:[%s103 + $0x98] sm:$0xff] %v93
    %111 = vst [vmem:[%s103 + $0xb0] sm:$0xff] %v94
    %112 = vst [vmem:[%s103 + $0xf8] sm:$0xff] %v95
    %113 = vst [vmem:[%s103 + $0x110] sm:$0xff] %v96
    %114 = vst [vmem:[%s103 + $0x128] sm:$0xff] %v97
    %115 = vst [vmem:[%s103 + $0x140] sm:$0xff] %v98
    %116 = vst [vmem:[%s103 + $0x158] sm:$0xff] %v99
    %117 = vst [vmem:[%s103 + $0x170] sm:$0xff] %v100
    %118 = vst [vmem:[%s103 + $0x188] sm:$0xff] %v101
    %119 = vst [vmem:[%s103 + $0x1a0] sm:$0xff] %v102
    %v120 = vld [vmem:[#allocation2 + $0x7] sm:$0xff]
    %v121 = vld [vmem:[#allocation2 + $0x1f] sm:$0xff]
    %v122 = vld [vmem:[#allocation2 + $0x37] sm:$0xff]
    %v123 = vld [vmem:[#allocation2 + $0x4f] sm:$0xff]
    %v124 = vld [vmem:[#allocation2 + $0x67] sm:$0xff]
    %v125 = vld [vmem:[#allocation2 + $0x7f] sm:$0xff]
    %v126 = vld [vmem:[#allocation2 + $0x97] sm:$0xff]
    %v127 = vld [vmem:[#allocation2 + $0xaf] sm:$0xff]
    %v128 = vld [vmem:[#allocation2 + $0xc7] sm:$0xff]
    %v129 = vld [vmem:[#allocation2 + $0xdf] sm:$0xff]
    %v130 = vld [vmem:[#allocation2 + $0xf7] sm:$0xff]
    %v131 = vld [vmem:[#allocation2 + $0x10f] sm:$0xff]
    %v132 = vld [vmem:[#allocation2 + $0x127] sm:$0xff]
    %v133 = vld [vmem:[#allocation2 + $0x13f] sm:$0xff]
    %v134 = vld [vmem:[#allocation2 + $0x157] sm:$0xff]
    %v135 = vld [vmem:[#allocation2 + $0x16f] sm:$0xff]
    %v136 = vld [vmem:[#allocation2 + $0x187] sm:$0xff]
    %v137 = vld [vmem:[#allocation2 + $0x19f] sm:$0xff]
    %v138 = vld [vmem:[#allocation2 + $0x1b7] sm:$0xff]
    %v139 = vld [vmem:[#allocation2 + $0x1cf] sm:$0xff]
    %v140 = vpack.c.bf16 %v121, %v120
    %v141 = vpack.c.bf16 %v123, %v122
    %v142 = vpack.c.bf16 %v125, %v124
    %v143 = vpack.c.bf16 %v127, %v126
    %v144 = vpack.c.bf16 %v131, %v130
    %v145 = vpack.c.bf16 %v133, %v132
    %v146 = vpack.c.bf16 %v135, %v134
    %v147 = vpack.c.bf16 %v137, %v136
    %v156 = vunpack.c.l.b16 %v140
    %v157 = vunpack.c.h.b16 %v140
    %v158 = vunpack.c.l.b16 %v141
    %v159 = vunpack.c.h.b16 %v141
    %v160 = vunpack.c.l.b16 %v142
    %v161 = vunpack.c.h.b16 %v142
    %v162 = vunpack.c.l.b16 %v143
    %v163 = vunpack.c.h.b16 %v143
    %v164 = vunpack.c.l.b16 %v144
    %v165 = vunpack.c.h.b16 %v144
    %v166 = vunpack.c.l.b16 %v145
    %v167 = vunpack.c.h.b16 %v145
    %v168 = vunpack.c.l.b16 %v146
    %v169 = vunpack.c.h.b16 %v146
    %v170 = vunpack.c.l.b16 %v147
    %v171 = vunpack.c.h.b16 %v147
    %v172 = vpack.c.b16 %v156, %v156
    %v173 = vpack.c.b16 %v157, %v157
    %v174 = vpack.c.b16 %v158, %v158
    %v175 = vpack.c.b16 %v159, %v159
    %v176 = vpack.c.b16 %v160, %v160
    %v177 = vpack.c.b16 %v161, %v161
    %v178 = vpack.c.b16 %v162, %v162
    %v179 = vpack.c.b16 %v163, %v163
    %v180 = vpack.c.b16 %v164, %v164
    %v181 = vpack.c.b16 %v165, %v165
    %v182 = vpack.c.b16 %v166, %v166
    %v183 = vpack.c.b16 %v167, %v167
    %v184 = vpack.c.b16 %v168, %v168
    %v185 = vpack.c.b16 %v169, %v169
    %v186 = vpack.c.b16 %v170, %v170
    %v187 = vpack.c.b16 %v171, %v171
    %204 = vst [vmem:[#allocation3] sm:$0xf] %v172
    %205 = vst [vmem:[#allocation3 + $0x24] sm:$0xf] %v173
    %206 = vst [vmem:[#allocation3 + $0x48] sm:$0xf] %v174
    %207 = vst [vmem:[#allocation3 + $0x6c] sm:$0xf] %v175
    %208 = vst [vmem:[#allocation3 + $0x90] sm:$0xf] %v176
    %209 = vst [vmem:[#allocation3 + $0xb4] sm:$0xf] %v177
    %210 = vst [vmem:[#allocation3 + $0xd8] sm:$0xf] %v178
    %211 = vst [vmem:[#allocation3 + $0xfc] sm:$0xf] %v179
    %212 = vst [vmem:[#allocation3 + $0x120] sm:$0xf] %v180
    %213 = vst [vmem:[#allocation3 + $0x144] sm:$0xf] %v181
    %214 = vst [vmem:[#allocation3 + $0x168] sm:$0xf] %v182
    %215 = vst [vmem:[#allocation3 + $0x18c] sm:$0xf] %v183
    %216 = vst [vmem:[#allocation3 + $0x1b0] sm:$0xf] %v184
    %217 = vst [vmem:[#allocation3 + $0x1d4] sm:$0xf] %v185
    %218 = vst [vmem:[#allocation3 + $0x1f8] sm:$0xf] %v186
    %219 = vst [vmem:[#allocation3 + $0x21c] sm:$0xf] %v187
    %v220 = vpack.c.bf16 %v122, %v121
    %v221 = vpack.c.bf16 %v124, %v123
    %v222 = vpack.c.bf16 %v126, %v125
    %v223 = vpack.c.bf16 %v128, %v127
    %v224 = vpack.c.bf16 %v132, %v131
    %v225 = vpack.c.bf16 %v134, %v133
    %v226 = vpack.c.bf16 %v136, %v135
    %v227 = vpack.c.bf16 %v138, %v137
    %v236 = vunpack.c.l.b16 %v220
    %v237 = vunpack.c.h.b16 %v220
    %v238 = vunpack.c.l.b16 %v221
    %v239 = vunpack.c.h.b16 %v221
    %v240 = vunpack.c.l.b16 %v222
    %v241 = vunpack.c.h.b16 %v222
    %v242 = vunpack.c.l.b16 %v223
    %v243 = vunpack.c.h.b16 %v223
    %v244 = vunpack.c.l.b16 %v224
    %v245 = vunpack.c.h.b16 %v224
    %v246 = vunpack.c.l.b16 %v225
    %v247 = vunpack.c.h.b16 %v225
    %v248 = vunpack.c.l.b16 %v226
    %v249 = vunpack.c.h.b16 %v226
    %v250 = vunpack.c.l.b16 %v227
    %v251 = vunpack.c.h.b16 %v227
    %v252 = vpack.c.b16 %v236, %v236
    %v253 = vpack.c.b16 %v237, %v237
    %v254 = vpack.c.b16 %v238, %v238
    %v255 = vpack.c.b16 %v239, %v239
    %v256 = vpack.c.b16 %v240, %v240
    %v257 = vpack.c.b16 %v241, %v241
    %v258 = vpack.c.b16 %v242, %v242
    %v259 = vpack.c.b16 %v243, %v243
    %v260 = vpack.c.b16 %v244, %v244
    %v261 = vpack.c.b16 %v245, %v245
    %v262 = vpack.c.b16 %v246, %v246
    %v263 = vpack.c.b16 %v247, %v247
    %v264 = vpack.c.b16 %v248, %v248
    %v265 = vpack.c.b16 %v249, %v249
    %v266 = vpack.c.b16 %v250, %v250
    %v267 = vpack.c.b16 %v251, %v251
    %284 = vst [vmem:[#allocation3 + $0xc] sm:$0xf] %v252
    %285 = vst [vmem:[#allocation3 + $0x30] sm:$0xf] %v253
    %286 = vst [vmem:[#allocation3 + $0x54] sm:$0xf] %v254
    %287 = vst [vmem:[#allocation3 + $0x78] sm:$0xf] %v255
    %288 = vst [vmem:[#allocation3 + $0x9c] sm:$0xf] %v256
    %289 = vst [vmem:[#allocation3 + $0xc0] sm:$0xf] %v257
    %290 = vst [vmem:[#allocation3 + $0xe4] sm:$0xf] %v258
    %291 = vst [vmem:[#allocation3 + $0x108] sm:$0xf] %v259
    %292 = vst [vmem:[#allocation3 + $0x12c] sm:$0xf] %v260
    %293 = vst [vmem:[#allocation3 + $0x150] sm:$0xf] %v261
    %294 = vst [vmem:[#allocation3 + $0x174] sm:$0xf] %v262
    %295 = vst [vmem:[#allocation3 + $0x198] sm:$0xf] %v263
    %296 = vst [vmem:[#allocation3 + $0x1bc] sm:$0xf] %v264
    %297 = vst [vmem:[#allocation3 + $0x1e0] sm:$0xf] %v265
    %298 = vst [vmem:[#allocation3 + $0x204] sm:$0xf] %v266
    %299 = vst [vmem:[#allocation3 + $0x228] sm:$0xf] %v267
    %v300 = vpack.c.bf16 %v129, %v128
    %v301 = vpack.c.bf16 %v139, %v138
    %v304 = vunpack.c.l.b16 %v300
    %v305 = vunpack.c.h.b16 %v300
    %v306 = vunpack.c.l.b16 %v301
    %v307 = vunpack.c.h.b16 %v301
    %v308 = vpack.c.b16 %v304, %v304
    %v309 = vpack.c.b16 %v305, %v305
    %v310 = vpack.c.b16 %v306, %v306
    %v311 = vpack.c.b16 %v307, %v307
    %316 = vst [vmem:[#allocation3 + $0x18] sm:$0xf] %v174
    %317 = vst [vmem:[#allocation3 + $0x3c] sm:$0xf] %v175
    %318 = vst [vmem:[#allocation3 + $0x60] sm:$0xf] %v176
    %319 = vst [vmem:[#allocation3 + $0x84] sm:$0xf] %v177
    %320 = vst [vmem:[#allocation3 + $0xa8] sm:$0xf] %v178
    %321 = vst [vmem:[#allocation3 + $0xcc] sm:$0xf] %v179
    %322 = vst [vmem:[#allocation3 + $0xf0] sm:$0xf] %v308
    %323 = vst [vmem:[#allocation3 + $0x114] sm:$0xf] %v309
    %324 = vst [vmem:[#allocation3 + $0x138] sm:$0xf] %v182
    %325 = vst [vmem:[#allocation3 + $0x15c] sm:$0xf] %v183
    %326 = vst [vmem:[#allocation3 + $0x180] sm:$0xf] %v184
    %327 = vst [vmem:[#allocation3 + $0x1a4] sm:$0xf] %v185
    %328 = vst [vmem:[#allocation3 + $0x1c8] sm:$0xf] %v186
    %329 = vst [vmem:[#allocation3 + $0x1ec] sm:$0xf] %v187
    %330 = vst [vmem:[#allocation3 + $0x210] sm:$0xf] %v310
    %331 = vst [vmem:[#allocation3 + $0x234] sm:$0xf] %v311
    %v332 = vld [vmem:[#allocation2 + $0x8] sm:$0xff]
    %v333 = vld [vmem:[#allocation2 + $0x20] sm:$0xff]
    %v334 = vld [vmem:[#allocation2 + $0x38] sm:$0xff]
    %v335 = vld [vmem:[#allocation2 + $0x50] sm:$0xff]
    %v336 = vld [vmem:[#allocation2 + $0x68] sm:$0xff]
    %v337 = vld [vmem:[#allocation2 + $0x80] sm:$0xff]
    %v338 = vld [vmem:[#allocation2 + $0x98] sm:$0xff]
    %v339 = vld [vmem:[#allocation2 + $0xb0] sm:$0xff]
    %v340 = vld [vmem:[#allocation2 + $0xc8] sm:$0xff]
    %v341 = vld [vmem:[#allocation2 + $0xe0] sm:$0xff]
    %v342 = vld [vmem:[#allocation2 + $0xf8] sm:$0xff]
    %v343 = vld [vmem:[#allocation2 + $0x110] sm:$0xff]
    %v344 = vld [vmem:[#allocation2 + $0x128] sm:$0xff]
    %v345 = vld [vmem:[#allocation2 + $0x140] sm:$0xff]
    %v346 = vld [vmem:[#allocation2 + $0x158] sm:$0xff]
    %v347 = vld [vmem:[#allocation2 + $0x170] sm:$0xff]
    %v348 = vld [vmem:[#allocation2 + $0x188] sm:$0xff]
    %v349 = vld [vmem:[#allocation2 + $0x1a0] sm:$0xff]
    %v350 = vld [vmem:[#allocation2 + $0x1b8] sm:$0xff]
    %v351 = vld [vmem:[#allocation2 + $0x1d0] sm:$0xff]
    %v352 = vpack.c.bf16 %v333, %v332
    %v353 = vpack.c.bf16 %v335, %v334
    %v354 = vpack.c.bf16 %v337, %v336
    %v355 = vpack.c.bf16 %v339, %v338
    %v356 = vpack.c.bf16 %v343, %v342
    %v357 = vpack.c.bf16 %v345, %v344
    %v358 = vpack.c.bf16 %v347, %v346
    %v359 = vpack.c.bf16 %v349, %v348
    %v368 = vunpack.c.l.b16 %v352
    %v369 = vunpack.c.h.b16 %v352
    %v370 = vunpack.c.l.b16 %v353
    %v371 = vunpack.c.h.b16 %v353
    %v372 = vunpack.c.l.b16 %v354
    %v373 = vunpack.c.h.b16 %v354
    %v374 = vunpack.c.l.b16 %v355
    %v375 = vunpack.c.h.b16 %v355
    %v376 = vunpack.c.l.b16 %v356
    %v377 = vunpack.c.h.b16 %v356
    %v378 = vunpack.c.l.b16 %v357
    %v379 = vunpack.c.h.b16 %v357
    %v380 = vunpack.c.l.b16 %v358
    %v381 = vunpack.c.h.b16 %v358
    %v382 = vunpack.c.l.b16 %v359
    %v383 = vunpack.c.h.b16 %v359
    %v384 = vpack.c.b16 %v368, %v368
    %v385 = vpack.c.b16 %v369, %v369
    %v386 = vpack.c.b16 %v370, %v370
    %v387 = vpack.c.b16 %v371, %v371
    %v388 = vpack.c.b16 %v372, %v372
    %v389 = vpack.c.b16 %v373, %v373
    %v390 = vpack.c.b16 %v374, %v374
    %v391 = vpack.c.b16 %v375, %v375
    %v392 = vpack.c.b16 %v376, %v376
    %v393 = vpack.c.b16 %v377, %v377
    %v394 = vpack.c.b16 %v378, %v378
    %v395 = vpack.c.b16 %v379, %v379
    %v396 = vpack.c.b16 %v380, %v380
    %v397 = vpack.c.b16 %v381, %v381
    %v398 = vpack.c.b16 %v382, %v382
    %v399 = vpack.c.b16 %v383, %v383
    %416 = vst [vmem:[#allocation3 + $0x4] sm:$0xf] %v384
    %417 = vst [vmem:[#allocation3 + $0x28] sm:$0xf] %v385
    %418 = vst [vmem:[#allocation3 + $0x4c] sm:$0xf] %v386
    %419 = vst [vmem:[#allocation3 + $0x70] sm:$0xf] %v387
    %420 = vst [vmem:[#allocation3 + $0x94] sm:$0xf] %v388
    %421 = vst [vmem:[#allocation3 + $0xb8] sm:$0xf] %v389
    %422 = vst [vmem:[#allocation3 + $0xdc] sm:$0xf] %v390
    %423 = vst [vmem:[#allocation3 + $0x100] sm:$0xf] %v391
    %424 = vst [vmem:[#allocation3 + $0x124] sm:$0xf] %v392
    %425 = vst [vmem:[#allocation3 + $0x148] sm:$0xf] %v393
    %426 = vst [vmem:[#allocation3 + $0x16c] sm:$0xf] %v394
    %427 = vst [vmem:[#allocation3 + $0x190] sm:$0xf] %v395
    %428 = vst [vmem:[#allocation3 + $0x1b4] sm:$0xf] %v396
    %429 = vst [vmem:[#allocation3 + $0x1d8] sm:$0xf] %v397
    %430 = vst [vmem:[#allocation3 + $0x1fc] sm:$0xf] %v398
    %431 = vst [vmem:[#allocation3 + $0x220] sm:$0xf] %v399
    %v432 = vpack.c.bf16 %v334, %v333
    %v433 = vpack.c.bf16 %v336, %v335
    %v434 = vpack.c.bf16 %v338, %v337
    %v435 = vpack.c.bf16 %v340, %v339
    %v436 = vpack.c.bf16 %v344, %v343
    %v437 = vpack.c.bf16 %v346, %v345
    %v438 = vpack.c.bf16 %v348, %v347
    %v439 = vpack.c.bf16 %v350, %v349
    %v448 = vunpack.c.l.b16 %v432
    %v449 = vunpack.c.h.b16 %v432
    %v450 = vunpack.c.l.b16 %v433
    %v451 = vunpack.c.h.b16 %v433
    %v452 = vunpack.c.l.b16 %v434
    %v453 = vunpack.c.h.b16 %v434
    %v454 = vunpack.c.l.b16 %v435
    %v455 = vunpack.c.h.b16 %v435
    %v456 = vunpack.c.l.b16 %v436
    %v457 = vunpack.c.h.b16 %v436
    %v458 = vunpack.c.l.b16 %v437
    %v459 = vunpack.c.h.b16 %v437
    %v460 = vunpack.c.l.b16 %v438
    %v461 = vunpack.c.h.b16 %v438
    %v462 = vunpack.c.l.b16 %v439
    %v463 = vunpack.c.h.b16 %v439
    %v464 = vpack.c.b16 %v448, %v448
    %v465 = vpack.c.b16 %v449, %v449
    %v466 = vpack.c.b16 %v450, %v450
    %v467 = vpack.c.b16 %v451, %v451
    %v468 = vpack.c.b16 %v452, %v452
    %v469 = vpack.c.b16 %v453, %v453
    %v470 = vpack.c.b16 %v454, %v454
    %v471 = vpack.c.b16 %v455, %v455
    %v472 = vpack.c.b16 %v456, %v456
    %v473 = vpack.c.b16 %v457, %v457
    %v474 = vpack.c.b16 %v458, %v458
    %v475 = vpack.c.b16 %v459, %v459
    %v476 = vpack.c.b16 %v460, %v460
    %v477 = vpack.c.b16 %v461, %v461
    %v478 = vpack.c.b16 %v462, %v462
    %v479 = vpack.c.b16 %v463, %v463
    %496 = vst [vmem:[#allocation3 + $0x10] sm:$0xf] %v464
    %497 = vst [vmem:[#allocation3 + $0x34] sm:$0xf] %v465
    %498 = vst [vmem:[#allocation3 + $0x58] sm:$0xf] %v466
    %499 = vst [vmem:[#allocation3 + $0x7c] sm:$0xf] %v467
    %500 = vst [vmem:[#allocation3 + $0xa0] sm:$0xf] %v468
    %501 = vst [vmem:[#allocation3 + $0xc4] sm:$0xf] %v469
    %502 = vst [vmem:[#allocation3 + $0xe8] sm:$0xf] %v470
    %503 = vst [vmem:[#allocation3 + $0x10c] sm:$0xf] %v471
    %504 = vst [vmem:[#allocation3 + $0x130] sm:$0xf] %v472
    %505 = vst [vmem:[#allocation3 + $0x154] sm:$0xf] %v473
    %506 = vst [vmem:[#allocation3 + $0x178] sm:$0xf] %v474
    %507 = vst [vmem:[#allocation3 + $0x19c] sm:$0xf] %v475
    %508 = vst [vmem:[#allocation3 + $0x1c0] sm:$0xf] %v476
    %509 = vst [vmem:[#allocation3 + $0x1e4] sm:$0xf] %v477
    %510 = vst [vmem:[#allocation3 + $0x208] sm:$0xf] %v478
    %511 = vst [vmem:[#allocation3 + $0x22c] sm:$0xf] %v479
    %v512 = vpack.c.bf16 %v341, %v340
    %v513 = vpack.c.bf16 %v351, %v350
    %v516 = vunpack.c.l.b16 %v512
    %v517 = vunpack.c.h.b16 %v512
    %v518 = vunpack.c.l.b16 %v513
    %v519 = vunpack.c.h.b16 %v513
    %v520 = vpack.c.b16 %v516, %v516
    %v521 = vpack.c.b16 %v517, %v517
    %v522 = vpack.c.b16 %v518, %v518
    %v523 = vpack.c.b16 %v519, %v519
    %528 = vst [vmem:[#allocation3 + $0x1c] sm:$0xf] %v386
    %529 = vst [vmem:[#allocation3 + $0x40] sm:$0xf] %v387
    %530 = vst [vmem:[#allocation3 + $0x64] sm:$0xf] %v388
    %531 = vst [vmem:[#allocation3 + $0x88] sm:$0xf] %v389
    %532 = vst [vmem:[#allocation3 + $0xac] sm:$0xf] %v390
    %533 = vst [vmem:[#allocation3 + $0xd0] sm:$0xf] %v391
    %534 = vst [vmem:[#allocation3 + $0xf4] sm:$0xf] %v520
    %535 = vst [vmem:[#allocation3 + $0x118] sm:$0xf] %v521
    %536 = vst [vmem:[#allocation3 + $0x13c] sm:$0xf] %v394
    %537 = vst [vmem:[#allocation3 + $0x160] sm:$0xf] %v395
    %538 = vst [vmem:[#allocation3 + $0x184] sm:$0xf] %v396
    %539 = vst [vmem:[#allocation3 + $0x1a8] sm:$0xf] %v397
    %540 = vst [vmem:[#allocation3 + $0x1cc] sm:$0xf] %v398
    %541 = vst [vmem:[#allocation3 + $0x1f0] sm:$0xf] %v399
    %542 = vst [vmem:[#allocation3 + $0x214] sm:$0xf] %v522
    %543 = vst [vmem:[#allocation3 + $0x238] sm:$0xf] %v523
    %v544 = vld [vmem:[#allocation2 + $0x9] sm:$0xff]
    %v545 = vld [vmem:[#allocation2 + $0x21] sm:$0xff]
    %v546 = vld [vmem:[#allocation2 + $0x39] sm:$0xff]
    %v547 = vld [vmem:[#allocation2 + $0x51] sm:$0xff]
    %v548 = vld [vmem:[#allocation2 + $0x69] sm:$0xff]
    %v549 = vld [vmem:[#allocation2 + $0x81] sm:$0xff]
    %v550 = vld [vmem:[#allocation2 + $0x99] sm:$0xff]
    %v551 = vld [vmem:[#allocation2 + $0xb1] sm:$0xff]
    %v552 = vld [vmem:[#allocation2 + $0xc9] sm:$0xff]
    %v553 = vld [vmem:[#allocation2 + $0xe1] sm:$0xff]
    %v554 = vld [vmem:[#allocation2 + $0xf9] sm:$0xff]
    %v555 = vld [vmem:[#allocation2 + $0x111] sm:$0xff]
    %v556 = vld [vmem:[#allocation2 + $0x129] sm:$0xff]
    %v557 = vld [vmem:[#allocation2 + $0x141] sm:$0xff]
    %v558 = vld [vmem:[#allocation2 + $0x159] sm:$0xff]
    %v559 = vld [vmem:[#allocation2 + $0x171] sm:$0xff]
    %v560 = vld [vmem:[#allocation2 + $0x189] sm:$0xff]
    %v561 = vld [vmem:[#allocation2 + $0x1a1] sm:$0xff]
    %v562 = vld [vmem:[#allocation2 + $0x1b9] sm:$0xff]
    %v563 = vld [vmem:[#allocation2 + $0x1d1] sm:$0xff]
    %v564 = vpack.c.bf16 %v545, %v544
    %v565 = vpack.c.bf16 %v547, %v546
    %v566 = vpack.c.bf16 %v549, %v548
    %v567 = vpack.c.bf16 %v551, %v550
    %v568 = vpack.c.bf16 %v555, %v554
    %v569 = vpack.c.bf16 %v557, %v556
    %v570 = vpack.c.bf16 %v559, %v558
    %v571 = vpack.c.bf16 %v561, %v560
    %v580 = vunpack.c.l.b16 %v564
    %v581 = vunpack.c.h.b16 %v564
    %v582 = vunpack.c.l.b16 %v565
    %v583 = vunpack.c.h.b16 %v565
    %v584 = vunpack.c.l.b16 %v566
    %v585 = vunpack.c.h.b16 %v566
    %v586 = vunpack.c.l.b16 %v567
    %v587 = vunpack.c.h.b16 %v567
    %v588 = vunpack.c.l.b16 %v568
    %v589 = vunpack.c.h.b16 %v568
    %v590 = vunpack.c.l.b16 %v569
    %v591 = vunpack.c.h.b16 %v569
    %v592 = vunpack.c.l.b16 %v570
    %v593 = vunpack.c.h.b16 %v570
    %v594 = vunpack.c.l.b16 %v571
    %v595 = vunpack.c.h.b16 %v571
    %v596 = vpack.c.b16 %v580, %v580
    %v597 = vpack.c.b16 %v581, %v581
    %v598 = vpack.c.b16 %v582, %v582
    %v599 = vpack.c.b16 %v583, %v583
    %v600 = vpack.c.b16 %v584, %v584
    %v601 = vpack.c.b16 %v585, %v585
    %v602 = vpack.c.b16 %v586, %v586
    %v603 = vpack.c.b16 %v587, %v587
    %v604 = vpack.c.b16 %v588, %v588
    %v605 = vpack.c.b16 %v589, %v589
    %v606 = vpack.c.b16 %v590, %v590
    %v607 = vpack.c.b16 %v591, %v591
    %v608 = vpack.c.b16 %v592, %v592
    %v609 = vpack.c.b16 %v593, %v593
    %v610 = vpack.c.b16 %v594, %v594
    %v611 = vpack.c.b16 %v595, %v595
    %628 = vst [vmem:[#allocation3 + $0x8] sm:$0xf] %v596
    %629 = vst [vmem:[#allocation3 + $0x2c] sm:$0xf] %v597
    %630 = vst [vmem:[#allocation3 + $0x50] sm:$0xf] %v598
    %631 = vst [vmem:[#allocation3 + $0x74] sm:$0xf] %v599
    %632 = vst [vmem:[#allocation3 + $0x98] sm:$0xf] %v600
    %633 = vst [vmem:[#allocation3 + $0xbc] sm:$0xf] %v601
    %634 = vst [vmem:[#allocation3 + $0xe0] sm:$0xf] %v602
    %635 = vst [vmem:[#allocation3 + $0x104] sm:$0xf] %v603
    %636 = vst [vmem:[#allocation3 + $0x128] sm:$0xf] %v604
    %637 = vst [vmem:[#allocation3 + $0x14c] sm:$0xf] %v605
    %638 = vst [vmem:[#allocation3 + $0x170] sm:$0xf] %v606
    %639 = vst [vmem:[#allocation3 + $0x194] sm:$0xf] %v607
    %640 = vst [vmem:[#allocation3 + $0x1b8] sm:$0xf] %v608
    %641 = vst [vmem:[#allocation3 + $0x1dc] sm:$0xf] %v609
    %642 = vst [vmem:[#allocation3 + $0x200] sm:$0xf] %v610
    %643 = vst [vmem:[#allocation3 + $0x224] sm:$0xf] %v611
    %v644 = vpack.c.bf16 %v546, %v545
    %v645 = vpack.c.bf16 %v548, %v547
    %v646 = vpack.c.bf16 %v550, %v549
    %v647 = vpack.c.bf16 %v552, %v551
    %v648 = vpack.c.bf16 %v556, %v555
    %v649 = vpack.c.bf16 %v558, %v557
    %v650 = vpack.c.bf16 %v560, %v559
    %v651 = vpack.c.bf16 %v562, %v561
    %v660 = vunpack.c.l.b16 %v644
    %v661 = vunpack.c.h.b16 %v644
    %v662 = vunpack.c.l.b16 %v645
    %v663 = vunpack.c.h.b16 %v645
    %v664 = vunpack.c.l.b16 %v646
    %v665 = vunpack.c.h.b16 %v646
    %v666 = vunpack.c.l.b16 %v647
    %v667 = vunpack.c.h.b16 %v647
    %v668 = vunpack.c.l.b16 %v648
    %v669 = vunpack.c.h.b16 %v648
    %v670 = vunpack.c.l.b16 %v649
    %v671 = vunpack.c.h.b16 %v649
    %v672 = vunpack.c.l.b16 %v650
    %v673 = vunpack.c.h.b16 %v650
    %v674 = vunpack.c.l.b16 %v651
    %v675 = vunpack.c.h.b16 %v651
    %v676 = vpack.c.b16 %v660, %v660
    %v677 = vpack.c.b16 %v661, %v661
    %v678 = vpack.c.b16 %v662, %v662
    %v679 = vpack.c.b16 %v663, %v663
    %v680 = vpack.c.b16 %v664, %v664
    %v681 = vpack.c.b16 %v665, %v665
    %v682 = vpack.c.b16 %v666, %v666
    %v683 = vpack.c.b16 %v667, %v667
    %v684 = vpack.c.b16 %v668, %v668
    %v685 = vpack.c.b16 %v669, %v669
    %v686 = vpack.c.b16 %v670, %v670
    %v687 = vpack.c.b16 %v671, %v671
    %v688 = vpack.c.b16 %v672, %v672
    %v689 = vpack.c.b16 %v673, %v673
    %v690 = vpack.c.b16 %v674, %v674
    %v691 = vpack.c.b16 %v675, %v675
    %708 = vst [vmem:[#allocation3 + $0x14] sm:$0xf] %v676
    %709 = vst [vmem:[#allocation3 + $0x38] sm:$0xf] %v677
    %710 = vst [vmem:[#allocation3 + $0x5c] sm:$0xf] %v678
    %711 = vst [vmem:[#allocation3 + $0x80] sm:$0xf] %v679
    %712 = vst [vmem:[#allocation3 + $0xa4] sm:$0xf] %v680
    %713 = vst [vmem:[#allocation3 + $0xc8] sm:$0xf] %v681
    %714 = vst [vmem:[#allocation3 + $0xec] sm:$0xf] %v682
    %715 = vst [vmem:[#allocation3 + $0x110] sm:$0xf] %v683
    %716 = vst [vmem:[#allocation3 + $0x134] sm:$0xf] %v684
    %717 = vst [vmem:[#allocation3 + $0x158] sm:$0xf] %v685
    %718 = vst [vmem:[#allocation3 + $0x17c] sm:$0xf] %v686
    %719 = vst [vmem:[#allocation3 + $0x1a0] sm:$0xf] %v687
    %720 = vst [vmem:[#allocation3 + $0x1c4] sm:$0xf] %v688
    %721 = vst [vmem:[#allocation3 + $0x1e8] sm:$0xf] %v689
    %722 = vst [vmem:[#allocation3 + $0x20c] sm:$0xf] %v690
    %723 = vst [vmem:[#allocation3 + $0x230] sm:$0xf] %v691
    %v724 = vpack.c.bf16 %v553, %v552
    %v725 = vpack.c.bf16 %v563, %v562
    %v728 = vunpack.c.l.b16 %v724
    %v729 = vunpack.c.h.b16 %v724
    %v730 = vunpack.c.l.b16 %v725
    %v731 = vunpack.c.h.b16 %v725
    %v732 = vpack.c.b16 %v728, %v728
    %v733 = vpack.c.b16 %v729, %v729
    %v734 = vpack.c.b16 %v730, %v730
    %v735 = vpack.c.b16 %v731, %v731
    %740 = vst [vmem:[#allocation3 + $0x20] sm:$0xf] %v598
    %741 = vst [vmem:[#allocation3 + $0x44] sm:$0xf] %v599
    %742 = vst [vmem:[#allocation3 + $0x68] sm:$0xf] %v600
    %743 = vst [vmem:[#allocation3 + $0x8c] sm:$0xf] %v601
    %744 = vst [vmem:[#allocation3 + $0xb0] sm:$0xf] %v602
    %745 = vst [vmem:[#allocation3 + $0xd4] sm:$0xf] %v603
    %746 = vst [vmem:[#allocation3 + $0xf8] sm:$0xf] %v732
    %747 = vst [vmem:[#allocation3 + $0x11c] sm:$0xf] %v733
    %748 = vst [vmem:[#allocation3 + $0x140] sm:$0xf] %v606
    %749 = vst [vmem:[#allocation3 + $0x164] sm:$0xf] %v607
    %750 = vst [vmem:[#allocation3 + $0x188] sm:$0xf] %v608
    %751 = vst [vmem:[#allocation3 + $0x1ac] sm:$0xf] %v609
    %752 = vst [vmem:[#allocation3 + $0x1d0] sm:$0xf] %v610
    %753 = vst [vmem:[#allocation3 + $0x1f4] sm:$0xf] %v611
    %754 = vst [vmem:[#allocation3 + $0x218] sm:$0xf] %v734
    %755 = vst [vmem:[#allocation3 + $0x23c] sm:$0xf] %v735
    %v756 = vld [vmem:[#allocation3] sm:$0xff]
    %v757 = vld [vmem:[#allocation3 + $0x8] sm:$0xff]
    %v758 = vld [vmem:[#allocation3 + $0x10] sm:$0xff]
    %v759 = vld [vmem:[#allocation3 + $0x18] sm:$0xff]
    %v760 = vld [vmem:[#allocation3 + $0x20] sm:$0xf]
    %v761 = vld [vmem:[#allocation3 + $0x24] sm:$0xff]
    %v762 = vld [vmem:[#allocation3 + $0x2c] sm:$0xff]
    %v763 = vld [vmem:[#allocation3 + $0x34] sm:$0xff]
    %v764 = vld [vmem:[#allocation3 + $0x3c] sm:$0xff]
    %v765 = vld [vmem:[#allocation3 + $0x44] sm:$0xf]
    %v766 = vld [vmem:[#allocation3 + $0x48] sm:$0xff]
    %v767 = vld [vmem:[#allocation3 + $0x50] sm:$0xff]
    %v768 = vld [vmem:[#allocation3 + $0x58] sm:$0xff]
    %v769 = vld [vmem:[#allocation3 + $0x60] sm:$0xff]
    %v770 = vld [vmem:[#allocation3 + $0x68] sm:$0xf]
    %v771 = vld [vmem:[#allocation3 + $0x6c] sm:$0xff]
    %v772 = vld [vmem:[#allocation3 + $0x74] sm:$0xff]
    %v773 = vld [vmem:[#allocation3 + $0x7c] sm:$0xff]
    %v774 = vld [vmem:[#allocation3 + $0x84] sm:$0xff]
    %v775 = vld [vmem:[#allocation3 + $0x8c] sm:$0xf]
    %v776 = vld [vmem:[#allocation3 + $0x90] sm:$0xff]
    %v777 = vld [vmem:[#allocation3 + $0x98] sm:$0xff]
    %v778 = vld [vmem:[#allocation3 + $0xa0] sm:$0xff]
    %v779 = vld [vmem:[#allocation3 + $0xa8] sm:$0xff]
    %v780 = vld [vmem:[#allocation3 + $0xb0] sm:$0xf]
    %v781 = vld [vmem:[#allocation3 + $0xb4] sm:$0xff]
    %v782 = vld [vmem:[#allocation3 + $0xbc] sm:$0xff]
    %v783 = vld [vmem:[#allocation3 + $0xc4] sm:$0xff]
    %v784 = vld [vmem:[#allocation3 + $0xcc] sm:$0xff]
    %v785 = vld [vmem:[#allocation3 + $0xd4] sm:$0xf]
    %v786 = vld [vmem:[#allocation3 + $0xd8] sm:$0xff]
    %v787 = vld [vmem:[#allocation3 + $0xe0] sm:$0xff]
    %v788 = vld [vmem:[#allocation3 + $0xe8] sm:$0xff]
    %v789 = vld [vmem:[#allocation3 + $0xf0] sm:$0xff]
    %v790 = vld [vmem:[#allocation3 + $0xf8] sm:$0xf]
    %v791 = vld [vmem:[#allocation3 + $0xfc] sm:$0xff]
    %v792 = vld [vmem:[#allocation3 + $0x104] sm:$0xff]
    %v793 = vld [vmem:[#allocation3 + $0x10c] sm:$0xff]
    %v794 = vld [vmem:[#allocation3 + $0x114] sm:$0xff]
    %v795 = vld [vmem:[#allocation3 + $0x11c] sm:$0xf]
    %v796 = vld [vmem:[#allocation3 + $0x120] sm:$0xff]
    %v797 = vld [vmem:[#allocation3 + $0x128] sm:$0xff]
    %v798 = vld [vmem:[#allocation3 + $0x130] sm:$0xff]
    %v799 = vld [vmem:[#allocation3 + $0x138] sm:$0xff]
    %v800 = vld [vmem:[#allocation3 + $0x140] sm:$0xf]
    %v801 = vld [vmem:[#allocation3 + $0x144] sm:$0xff]
    %v802 = vld [vmem:[#allocation3 + $0x14c] sm:$0xff]
    %v803 = vld [vmem:[#allocation3 + $0x154] sm:$0xff]
    %v804 = vld [vmem:[#allocation3 + $0x15c] sm:$0xff]
    %v805 = vld [vmem:[#allocation3 + $0x164] sm:$0xf]
    %v806 = vld [vmem:[#allocation3 + $0x168] sm:$0xff]
    %v807 = vld [vmem:[#allocation3 + $0x170] sm:$0xff]
    %v808 = vld [vmem:[#allocation3 + $0x178] sm:$0xff]
    %v809 = vld [vmem:[#allocation3 + $0x180] sm:$0xff]
    %v810 = vld [vmem:[#allocation3 + $0x188] sm:$0xf]
    %v811 = vld [vmem:[#allocation3 + $0x18c] sm:$0xff]
    %v812 = vld [vmem:[#allocation3 + $0x194] sm:$0xff]
    %v813 = vld [vmem:[#allocation3 + $0x19c] sm:$0xff]
    %v814 = vld [vmem:[#allocation3 + $0x1a4] sm:$0xff]
    %v815 = vld [vmem:[#allocation3 + $0x1ac] sm:$0xf]
    %v816 = vld [vmem:[#allocation3 + $0x1b0] sm:$0xff]
    %v817 = vld [vmem:[#allocation3 + $0x1b8] sm:$0xff]
    %v818 = vld [vmem:[#allocation3 + $0x1c0] sm:$0xff]
    %v819 = vld [vmem:[#allocation3 + $0x1c8] sm:$0xff]
    %v820 = vld [vmem:[#allocation3 + $0x1d0] sm:$0xf]
    %v821 = vld [vmem:[#allocation3 + $0x1d4] sm:$0xff]
    %v822 = vld [vmem:[#allocation3 + $0x1dc] sm:$0xff]
    %v823 = vld [vmem:[#allocation3 + $0x1e4] sm:$0xff]
    %v824 = vld [vmem:[#allocation3 + $0x1ec] sm:$0xff]
    %v825 = vld [vmem:[#allocation3 + $0x1f4] sm:$0xf]
    %v826 = vld [vmem:[#allocation3 + $0x1f8] sm:$0xff]
    %v827 = vld [vmem:[#allocation3 + $0x200] sm:$0xff]
    %v828 = vld [vmem:[#allocation3 + $0x208] sm:$0xff]
    %v829 = vld [vmem:[#allocation3 + $0x210] sm:$0xff]
    %v830 = vld [vmem:[#allocation3 + $0x218] sm:$0xf]
    %v831 = vld [vmem:[#allocation3 + $0x21c] sm:$0xff]
    %v832 = vld [vmem:[#allocation3 + $0x224] sm:$0xff]
    %v833 = vld [vmem:[#allocation3 + $0x22c] sm:$0xff]
    %v834 = vld [vmem:[#allocation3 + $0x234] sm:$0xff]
    %v835 = vld [vmem:[#allocation3 + $0x23c] sm:$0xf]
    %v836 = vld [vmem:[#allocation4] sm:$0xf]
    %v837 = vld [vmem:[#allocation4 + $0x4] sm:$0xf]
    %v838 = vld [vmem:[#allocation4 + $0x8] sm:$0xf]
    %v839 = vld [vmem:[#allocation4 + $0xc] sm:$0xf]
    %v840 = vld [vmem:[#allocation4 + $0x10] sm:$0xf]
    %v841 = vld [vmem:[#allocation4 + $0x14] sm:$0xf]
    %v842 = vld [vmem:[#allocation4 + $0x18] sm:$0xf]
    %v843 = vld [vmem:[#allocation4 + $0x1c] sm:$0xf]
    %v844 = vld [vmem:[#allocation4 + $0x20] sm:$0xf]
    %v845 = vld [vmem:[#allocation4 + $0x24] sm:$0xf]
    %v846 = vld [vmem:[#allocation4 + $0x28] sm:$0xf]
    %v847 = vld [vmem:[#allocation4 + $0x2c] sm:$0xf]
    %v848 = vld [vmem:[#allocation4 + $0x30] sm:$0xf]
    %v849 = vld [vmem:[#allocation4 + $0x34] sm:$0xf]
    %v850 = vld [vmem:[#allocation4 + $0x38] sm:$0xf]
    %v851 = vld [vmem:[#allocation4 + $0x3c] sm:$0xf]
    %v852 = vld [vmem:[#allocation4 + $0x40] sm:$0xf]
    %v853 = vld [vmem:[#allocation4 + $0x44] sm:$0xf]
    %v854 = vld [vmem:[#allocation4 + $0x48] sm:$0xf]
    %v855 = vld [vmem:[#allocation4 + $0x4c] sm:$0xf]
    %v856 = vld [vmem:[#allocation4 + $0x50] sm:$0xf]
    %v857 = vld [vmem:[#allocation4 + $0x54] sm:$0xf]
    %v858 = vld [vmem:[#allocation4 + $0x58] sm:$0xf]
    %v859 = vld [vmem:[#allocation4 + $0x5c] sm:$0xf]
    %v860 = vld [vmem:[#allocation4 + $0x60] sm:$0xf]
    %v861 = vld [vmem:[#allocation4 + $0x64] sm:$0xf]
    %v862 = vld [vmem:[#allocation4 + $0x68] sm:$0xf]
    %v863 = vld [vmem:[#allocation4 + $0x6c] sm:$0xf]
    %v864 = vld [vmem:[#allocation4 + $0x70] sm:$0xf]
    %v865 = vld [vmem:[#allocation4 + $0x74] sm:$0xf]
    %v866 = vld [vmem:[#allocation4 + $0x78] sm:$0xf]
    %v867 = vld [vmem:[#allocation4 + $0x7c] sm:$0xf]
    %v868 = vld [vmem:[#allocation4 + $0x80] sm:$0xf]
    %v869 = vld [vmem:[#allocation4 + $0x84] sm:$0xf]
    %v870 = vld [vmem:[#allocation4 + $0x88] sm:$0xf]
    %v871 = vld [vmem:[#allocation4 + $0x8c] sm:$0xf]
    %v872 = vld [vmem:[#allocation4 + $0x90] sm:$0xf]
    %v873 = vld [vmem:[#allocation4 + $0x94] sm:$0xf]
    %v874 = vld [vmem:[#allocation4 + $0x98] sm:$0xf]
    %v875 = vld [vmem:[#allocation4 + $0x9c] sm:$0xf]
    %v876 = vld [vmem:[#allocation4 + $0xa0] sm:$0xf]
    %v877 = vld [vmem:[#allocation4 + $0xa4] sm:$0xf]
    %v878 = vld [vmem:[#allocation4 + $0xa8] sm:$0xf]
    %v879 = vld [vmem:[#allocation4 + $0xac] sm:$0xf]
    %v880 = vld [vmem:[#allocation4 + $0xb0] sm:$0xf]
    %v881 = vld [vmem:[#allocation4 + $0xb4] sm:$0xf]
    %v882 = vld [vmem:[#allocation4 + $0xb8] sm:$0xf]
    %v883 = vld [vmem:[#allocation4 + $0xbc] sm:$0xf]
    %v884 = vld [vmem:[#allocation4 + $0xc0] sm:$0xf]
    %v885 = vld [vmem:[#allocation4 + $0xc4] sm:$0xf]
    %v886 = vld [vmem:[#allocation4 + $0xc8] sm:$0xf]
    %v887 = vld [vmem:[#allocation4 + $0xcc] sm:$0xf]
    %v888 = vld [vmem:[#allocation4 + $0xd0] sm:$0xf]
    %v889 = vld [vmem:[#allocation4 + $0xd4] sm:$0xf]
    %v890 = vld [vmem:[#allocation4 + $0xd8] sm:$0xf]
    %v891 = vld [vmem:[#allocation4 + $0xdc] sm:$0xf]
    %v892 = vld [vmem:[#allocation4 + $0xe0] sm:$0xf]
    %v893 = vld [vmem:[#allocation4 + $0xe4] sm:$0xf]
    %v894 = vld [vmem:[#allocation4 + $0xe8] sm:$0xf]
    %v895 = vld [vmem:[#allocation4 + $0xec] sm:$0xf]
    %v896 = vld [vmem:[#allocation4 + $0xf0] sm:$0xf]
    %v897 = vld [vmem:[#allocation4 + $0xf4] sm:$0xf]
    %v898 = vld [vmem:[#allocation4 + $0xf8] sm:$0xf]
    %v899 = vld [vmem:[#allocation4 + $0xfc] sm:$0xf]
    %v900 = vld [vmem:[#allocation4 + $0x100] sm:$0xf]
    %v901 = vld [vmem:[#allocation4 + $0x104] sm:$0xf]
    %v902 = vld [vmem:[#allocation4 + $0x108] sm:$0xf]
    %v903 = vld [vmem:[#allocation4 + $0x10c] sm:$0xf]
    %v904 = vld [vmem:[#allocation4 + $0x110] sm:$0xf]
    %v905 = vld [vmem:[#allocation4 + $0x114] sm:$0xf]
    %v906 = vld [vmem:[#allocation4 + $0x118] sm:$0xf]
    %v907 = vld [vmem:[#allocation4 + $0x11c] sm:$0xf]
    %v908 = vld [vmem:[#allocation4 + $0x120] sm:$0xf]
    %v909 = vld [vmem:[#allocation4 + $0x124] sm:$0xf]
    %v910 = vld [vmem:[#allocation4 + $0x128] sm:$0xf]
    %v911 = vld [vmem:[#allocation4 + $0x12c] sm:$0xf]
    %v912 = vld [vmem:[#allocation4 + $0x130] sm:$0xf]
    %v913 = vld [vmem:[#allocation4 + $0x134] sm:$0xf]
    %v914 = vld [vmem:[#allocation4 + $0x138] sm:$0xf]
    %v915 = vld [vmem:[#allocation4 + $0x13c] sm:$0xf]
    %v916 = vld [vmem:[#allocation4 + $0x140] sm:$0xf]
    %v917 = vld [vmem:[#allocation4 + $0x144] sm:$0xf]
    %v918 = vld [vmem:[#allocation4 + $0x148] sm:$0xf]
    %v919 = vld [vmem:[#allocation4 + $0x14c] sm:$0xf]
    %v920 = vld [vmem:[#allocation4 + $0x150] sm:$0xf]
    %v921 = vld [vmem:[#allocation4 + $0x154] sm:$0xf]
    %v922 = vld [vmem:[#allocation4 + $0x158] sm:$0xf]
    %v923 = vld [vmem:[#allocation4 + $0x15c] sm:$0xf]
    %v924 = vld [vmem:[#allocation4 + $0x160] sm:$0xf]
    %v925 = vld [vmem:[#allocation4 + $0x164] sm:$0xf]
    %v926 = vld [vmem:[#allocation4 + $0x168] sm:$0xf]
    %v927 = vld [vmem:[#allocation4 + $0x16c] sm:$0xf]
    %v928 = vld [vmem:[#allocation4 + $0x170] sm:$0xf]
    %v929 = vld [vmem:[#allocation4 + $0x174] sm:$0xf]
    %v930 = vld [vmem:[#allocation4 + $0x178] sm:$0xf]
    %v931 = vld [vmem:[#allocation4 + $0x17c] sm:$0xf]
    %v932 = vld [vmem:[#allocation4 + $0x180] sm:$0xf]
    %v933 = vld [vmem:[#allocation4 + $0x184] sm:$0xf]
    %v934 = vld [vmem:[#allocation4 + $0x188] sm:$0xf]
    %v935 = vld [vmem:[#allocation4 + $0x18c] sm:$0xf]
    %v936 = vld [vmem:[#allocation4 + $0x190] sm:$0xf]
    %v937 = vld [vmem:[#allocation4 + $0x194] sm:$0xf]
    %v938 = vld [vmem:[#allocation4 + $0x198] sm:$0xf]
    %v939 = vld [vmem:[#allocation4 + $0x19c] sm:$0xf]
    %v940 = vld [vmem:[#allocation4 + $0x1a0] sm:$0xf]
    %v941 = vld [vmem:[#allocation4 + $0x1a4] sm:$0xf]
    %v942 = vld [vmem:[#allocation4 + $0x1a8] sm:$0xf]
    %v943 = vld [vmem:[#allocation4 + $0x1ac] sm:$0xf]
    %v944 = vld [vmem:[#allocation4 + $0x1b0] sm:$0xf]
    %v945 = vld [vmem:[#allocation4 + $0x1b4] sm:$0xf]
    %v946 = vld [vmem:[#allocation4 + $0x1b8] sm:$0xf]
    %v947 = vld [vmem:[#allocation4 + $0x1bc] sm:$0xf]
    %v948 = vld [vmem:[#allocation4 + $0x1c0] sm:$0xf]
    %v949 = vld [vmem:[#allocation4 + $0x1c4] sm:$0xf]
    %v950 = vld [vmem:[#allocation4 + $0x1c8] sm:$0xf]
    %v951 = vld [vmem:[#allocation4 + $0x1cc] sm:$0xf]
    %v952 = vld [vmem:[#allocation4 + $0x1d0] sm:$0xf]
    %v953 = vld [vmem:[#allocation4 + $0x1d4] sm:$0xf]
    %v954 = vld [vmem:[#allocation4 + $0x1d8] sm:$0xf]
    %v955 = vld [vmem:[#allocation4 + $0x1dc] sm:$0xf]
    %v956 = vld [vmem:[#allocation4 + $0x1e0] sm:$0xf]
    %v957 = vld [vmem:[#allocation4 + $0x1e4] sm:$0xf]
    %v958 = vld [vmem:[#allocation4 + $0x1e8] sm:$0xf]
    %v959 = vld [vmem:[#allocation4 + $0x1ec] sm:$0xf]
    %v960 = vld [vmem:[#allocation4 + $0x1f0] sm:$0xf]
    %v961 = vld [vmem:[#allocation4 + $0x1f4] sm:$0xf]
    %v962 = vld [vmem:[#allocation4 + $0x1f8] sm:$0xf]
    %v963 = vld [vmem:[#allocation4 + $0x1fc] sm:$0xf]
    %v964 = vld [vmem:[#allocation4 + $0x200] sm:$0xf]
    %v965 = vld [vmem:[#allocation4 + $0x204] sm:$0xf]
    %v966 = vld [vmem:[#allocation4 + $0x208] sm:$0xf]
    %v967 = vld [vmem:[#allocation4 + $0x20c] sm:$0xf]
    %v968 = vld [vmem:[#allocation4 + $0x210] sm:$0xf]
    %v969 = vld [vmem:[#allocation4 + $0x214] sm:$0xf]
    %v970 = vld [vmem:[#allocation4 + $0x218] sm:$0xf]
    %v971 = vld [vmem:[#allocation4 + $0x21c] sm:$0xf]
    %v972 = vld [vmem:[#allocation4 + $0x220] sm:$0xf]
    %v973 = vld [vmem:[#allocation4 + $0x224] sm:$0xf]
    %v974 = vld [vmem:[#allocation4 + $0x228] sm:$0xf]
    %v975 = vld [vmem:[#allocation4 + $0x22c] sm:$0xf]
    %v976 = vld [vmem:[#allocation4 + $0x230] sm:$0xf]
    %v977 = vld [vmem:[#allocation4 + $0x234] sm:$0xf]
    %v978 = vld [vmem:[#allocation4 + $0x238] sm:$0xf]
    %v979 = vld [vmem:[#allocation4 + $0x23c] sm:$0xf]
    %v980 = vld [vmem:[%s2] sm:$0x1]
    %v981 = vlaneseq
    %v982 = vshrl.u32 %v981, 7
    %v983 = vsub.s32 0, %v982
    %v984 = vrot.slane %v980, %v983
    %v1065 = vunpack.c.l.b16 %v756
    %v1066 = vunpack.c.h.b16 %v756
    %v1067 = vunpack.c.l.b16 %v757
    %v1068 = vunpack.c.h.b16 %v757
    %v1069 = vunpack.c.l.b16 %v758
    %v1070 = vunpack.c.h.b16 %v758
    %v1071 = vunpack.c.l.b16 %v759
    %v1072 = vunpack.c.h.b16 %v759
    %v1073 = vunpack.c.l.b16 %v760
    %v1074 = vunpack.c.l.b16 %v761
    %v1075 = vunpack.c.h.b16 %v761
    %v1076 = vunpack.c.l.b16 %v762
    %v1077 = vunpack.c.h.b16 %v762
    %v1078 = vunpack.c.l.b16 %v763
    %v1079 = vunpack.c.h.b16 %v763
    %v1080 = vunpack.c.l.b16 %v764
    %v1081 = vunpack.c.h.b16 %v764
    %v1082 = vunpack.c.l.b16 %v765
    %v1083 = vunpack.c.l.b16 %v766
    %v1084 = vunpack.c.h.b16 %v766
    %v1085 = vunpack.c.l.b16 %v767
    %v1086 = vunpack.c.h.b16 %v767
    %v1087 = vunpack.c.l.b16 %v768
    %v1088 = vunpack.c.h.b16 %v768
    %v1089 = vunpack.c.l.b16 %v769
    %v1090 = vunpack.c.h.b16 %v769
    %v1091 = vunpack.c.l.b16 %v770
    %v1092 = vunpack.c.l.b16 %v771
    %v1093 = vunpack.c.h.b16 %v771
    %v1094 = vunpack.c.l.b16 %v772
    %v1095 = vunpack.c.h.b16 %v772
    %v1096 = vunpack.c.l.b16 %v773
    %v1097 = vunpack.c.h.b16 %v773
    %v1098 = vunpack.c.l.b16 %v774
    %v1099 = vunpack.c.h.b16 %v774
    %v1100 = vunpack.c.l.b16 %v775
    %v1101 = vunpack.c.l.b16 %v776
    %v1102 = vunpack.c.h.b16 %v776
    %v1103 = vunpack.c.l.b16 %v777
    %v1104 = vunpack.c.h.b16 %v777
    %v1105 = vunpack.c.l.b16 %v778
    %v1106 = vunpack.c.h.b16 %v778
    %v1107 = vunpack.c.l.b16 %v779
    %v1108 = vunpack.c.h.b16 %v779
    %v1109 = vunpack.c.l.b16 %v780
    %v1110 = vunpack.c.l.b16 %v781
    %v1111 = vunpack.c.h.b16 %v781
    %v1112 = vunpack.c.l.b16 %v782
    %v1113 = vunpack.c.h.b16 %v782
    %v1114 = vunpack.c.l.b16 %v783
    %v1115 = vunpack.c.h.b16 %v783
    %v1116 = vunpack.c.l.b16 %v784
    %v1117 = vunpack.c.h.b16 %v784
    %v1118 = vunpack.c.l.b16 %v785
    %v1119 = vunpack.c.l.b16 %v786
    %v1120 = vunpack.c.h.b16 %v786
    %v1121 = vunpack.c.l.b16 %v787
    %v1122 = vunpack.c.h.b16 %v787
    %v1123 = vunpack.c.l.b16 %v788
    %v1124 = vunpack.c.h.b16 %v788
    %v1125 = vunpack.c.l.b16 %v789
    %v1126 = vunpack.c.h.b16 %v789
    %v1127 = vunpack.c.l.b16 %v790
    %v1128 = vunpack.c.l.b16 %v791
    %v1129 = vunpack.c.h.b16 %v791
    %v1130 = vunpack.c.l.b16 %v792
    %v1131 = vunpack.c.h.b16 %v792
    %v1132 = vunpack.c.l.b16 %v793
    %v1133 = vunpack.c.h.b16 %v793
    %v1134 = vunpack.c.l.b16 %v794
    %v1135 = vunpack.c.h.b16 %v794
    %v1136 = vunpack.c.l.b16 %v795
    %v1137 = vunpack.c.l.b16 %v796
    %v1138 = vunpack.c.h.b16 %v796
    %v1139 = vunpack.c.l.b16 %v797
    %v1140 = vunpack.c.h.b16 %v797
    %v1141 = vunpack.c.l.b16 %v798
    %v1142 = vunpack.c.h.b16 %v798
    %v1143 = vunpack.c.l.b16 %v799
    %v1144 = vunpack.c.h.b16 %v799
    %v1145 = vunpack.c.l.b16 %v800
    %v1146 = vunpack.c.l.b16 %v801
    %v1147 = vunpack.c.h.b16 %v801
    %v1148 = vunpack.c.l.b16 %v802
    %v1149 = vunpack.c.h.b16 %v802
    %v1150 = vunpack.c.l.b16 %v803
    %v1151 = vunpack.c.h.b16 %v803
    %v1152 = vunpack.c.l.b16 %v804
    %v1153 = vunpack.c.h.b16 %v804
    %v1154 = vunpack.c.l.b16 %v805
    %v1155 = vunpack.c.l.b16 %v806
    %v1156 = vunpack.c.h.b16 %v806
    %v1157 = vunpack.c.l.b16 %v807
    %v1158 = vunpack.c.h.b16 %v807
    %v1159 = vunpack.c.l.b16 %v808
    %v1160 = vunpack.c.h.b16 %v808
    %v1161 = vunpack.c.l.b16 %v809
    %v1162 = vunpack.c.h.b16 %v809
    %v1163 = vunpack.c.l.b16 %v810
    %v1164 = vunpack.c.l.b16 %v811
    %v1165 = vunpack.c.h.b16 %v811
    %v1166 = vunpack.c.l.b16 %v812
    %v1167 = vunpack.c.h.b16 %v812
    %v1168 = vunpack.c.l.b16 %v813
    %v1169 = vunpack.c.h.b16 %v813
    %v1170 = vunpack.c.l.b16 %v814
    %v1171 = vunpack.c.h.b16 %v814
    %v1172 = vunpack.c.l.b16 %v815
    %v1173 = vunpack.c.l.b16 %v816
    %v1174 = vunpack.c.h.b16 %v816
    %v1175 = vunpack.c.l.b16 %v817
    %v1176 = vunpack.c.h.b16 %v817
    %v1177 = vunpack.c.l.b16 %v818
    %v1178 = vunpack.c.h.b16 %v818
    %v1179 = vunpack.c.l.b16 %v819
    %v1180 = vunpack.c.h.b16 %v819
    %v1181 = vunpack.c.l.b16 %v820
    %v1182 = vunpack.c.l.b16 %v821
    %v1183 = vunpack.c.h.b16 %v821
    %v1184 = vunpack.c.l.b16 %v822
    %v1185 = vunpack.c.h.b16 %v822
    %v1186 = vunpack.c.l.b16 %v823
    %v1187 = vunpack.c.h.b16 %v823
    %v1188 = vunpack.c.l.b16 %v824
    %v1189 = vunpack.c.h.b16 %v824
    %v1190 = vunpack.c.l.b16 %v825
    %v1191 = vunpack.c.l.b16 %v826
    %v1192 = vunpack.c.h.b16 %v826
    %v1193 = vunpack.c.l.b16 %v827
    %v1194 = vunpack.c.h.b16 %v827
    %v1195 = vunpack.c.l.b16 %v828
    %v1196 = vunpack.c.h.b16 %v828
    %v1197 = vunpack.c.l.b16 %v829
    %v1198 = vunpack.c.h.b16 %v829
    %v1199 = vunpack.c.l.b16 %v830
    %v1200 = vunpack.c.l.b16 %v831
    %v1201 = vunpack.c.h.b16 %v831
    %v1202 = vunpack.c.l.b16 %v832
    %v1203 = vunpack.c.h.b16 %v832
    %v1204 = vunpack.c.l.b16 %v833
    %v1205 = vunpack.c.h.b16 %v833
    %v1206 = vunpack.c.l.b16 %v834
    %v1207 = vunpack.c.h.b16 %v834
    %v1208 = vunpack.c.l.b16 %v835
    %v1209 = vpack.c.b16 %v1074, %v1065
    %v1210 = vpack.c.b16 %v1075, %v1066
    %v1211 = vpack.c.b16 %v1076, %v1067
    %v1212 = vpack.c.b16 %v1077, %v1068
    %v1213 = vpack.c.b16 %v1078, %v1069
    %v1214 = vpack.c.b16 %v1079, %v1070
    %v1215 = vpack.c.b16 %v1080, %v1071
    %v1216 = vpack.c.b16 %v1081, %v1072
    %v1217 = vpack.c.b16 %v1082, %v1073
    %v1218 = vpack.c.b16 %v1092, %v1083
    %v1219 = vpack.c.b16 %v1093, %v1084
    %v1220 = vpack.c.b16 %v1094, %v1085
    %v1221 = vpack.c.b16 %v1095, %v1086
    %v1222 = vpack.c.b16 %v1096, %v1087
    %v1223 = vpack.c.b16 %v1097, %v1088
    %v1224 = vpack.c.b16 %v1098, %v1089
    %v1225 = vpack.c.b16 %v1099, %v1090
    %v1226 = vpack.c.b16 %v1100, %v1091
    %v1227 = vpack.c.b16 %v1110, %v1101
    %v1228 = vpack.c.b16 %v1111, %v1102
    %v1229 = vpack.c.b16 %v1112, %v1103
    %v1230 = vpack.c.b16 %v1113, %v1104
    %v1231 = vpack.c.b16 %v1114, %v1105
    %v1232 = vpack.c.b16 %v1115, %v1106
    %v1233 = vpack.c.b16 %v1116, %v1107
    %v1234 = vpack.c.b16 %v1117, %v1108
    %v1235 = vpack.c.b16 %v1118, %v1109
    %v1236 = vpack.c.b16 %v1128, %v1119
    %v1237 = vpack.c.b16 %v1129, %v1120
    %v1238 = vpack.c.b16 %v1130, %v1121
    %v1239 = vpack.c.b16 %v1131, %v1122
    %v1240 = vpack.c.b16 %v1132, %v1123
    %v1241 = vpack.c.b16 %v1133, %v1124
    %v1242 = vpack.c.b16 %v1134, %v1125
    %v1243 = vpack.c.b16 %v1135, %v1126
    %v1244 = vpack.c.b16 %v1136, %v1127
    %v1245 = vpack.c.b16 %v1146, %v1137
    %v1246 = vpack.c.b16 %v1147, %v1138
    %v1247 = vpack.c.b16 %v1148, %v1139
    %v1248 = vpack.c.b16 %v1149, %v1140
    %v1249 = vpack.c.b16 %v1150, %v1141
    %v1250 = vpack.c.b16 %v1151, %v1142
    %v1251 = vpack.c.b16 %v1152, %v1143
    %v1252 = vpack.c.b16 %v1153, %v1144
    %v1253 = vpack.c.b16 %v1154, %v1145
    %v1254 = vpack.c.b16 %v1164, %v1155
    %v1255 = vpack.c.b16 %v1165, %v1156
    %v1256 = vpack.c.b16 %v1166, %v1157
    %v1257 = vpack.c.b16 %v1167, %v1158
    %v1258 = vpack.c.b16 %v1168, %v1159
    %v1259 = vpack.c.b16 %v1169, %v1160
    %v1260 = vpack.c.b16 %v1170, %v1161
    %v1261 = vpack.c.b16 %v1171, %v1162
    %v1262 = vpack.c.b16 %v1172, %v1163
    %v1263 = vpack.c.b16 %v1182, %v1173
    %v1264 = vpack.c.b16 %v1183, %v1174
    %v1265 = vpack.c.b16 %v1184, %v1175
    %v1266 = vpack.c.b16 %v1185, %v1176
    %v1267 = vpack.c.b16 %v1186, %v1177
    %v1268 = vpack.c.b16 %v1187, %v1178
    %v1269 = vpack.c.b16 %v1188, %v1179
    %v1270 = vpack.c.b16 %v1189, %v1180
    %v1271 = vpack.c.b16 %v1190, %v1181
    %v1272 = vpack.c.b16 %v1200, %v1191
    %v1273 = vpack.c.b16 %v1201, %v1192
    %v1274 = vpack.c.b16 %v1202, %v1193
    %v1275 = vpack.c.b16 %v1203, %v1194
    %v1276 = vpack.c.b16 %v1204, %v1195
    %v1277 = vpack.c.b16 %v1205, %v1196
    %v1278 = vpack.c.b16 %v1206, %v1197
    %v1279 = vpack.c.b16 %v1207, %v1198
    %v1280 = vpack.c.b16 %v1208, %v1199
    %v1497 = vunpack.c.l.b16 %v836
    %v1498 = vunpack.c.l.b16 %v837
    %v1499 = vunpack.c.l.b16 %v838
    %v1500 = vunpack.c.l.b16 %v839
    %v1501 = vunpack.c.l.b16 %v840
    %v1502 = vunpack.c.l.b16 %v841
    %v1503 = vunpack.c.l.b16 %v842
    %v1504 = vunpack.c.l.b16 %v843
    %v1505 = vunpack.c.l.b16 %v844
    %v1506 = vunpack.c.l.b16 %v845
    %v1507 = vunpack.c.l.b16 %v846
    %v1508 = vunpack.c.l.b16 %v847
    %v1509 = vunpack.c.l.b16 %v848
    %v1510 = vunpack.c.l.b16 %v849
    %v1511 = vunpack.c.l.b16 %v850
    %v1512 = vunpack.c.l.b16 %v851
    %v1513 = vunpack.c.l.b16 %v852
    %v1514 = vunpack.c.l.b16 %v853
    %v1515 = vunpack.c.l.b16 %v854
    %v1516 = vunpack.c.l.b16 %v855
    %v1517 = vunpack.c.l.b16 %v856
    %v1518 = vunpack.c.l.b16 %v857
    %v1519 = vunpack.c.l.b16 %v858
    %v1520 = vunpack.c.l.b16 %v859
    %v1521 = vunpack.c.l.b16 %v860
    %v1522 = vunpack.c.l.b16 %v861
    %v1523 = vunpack.c.l.b16 %v862
    %v1524 = vunpack.c.l.b16 %v863
    %v1525 = vunpack.c.l.b16 %v864
    %v1526 = vunpack.c.l.b16 %v865
    %v1527 = vunpack.c.l.b16 %v866
    %v1528 = vunpack.c.l.b16 %v867
    %v1529 = vunpack.c.l.b16 %v868
    %v1530 = vunpack.c.l.b16 %v869
    %v1531 = vunpack.c.l.b16 %v870
    %v1532 = vunpack.c.l.b16 %v871
    %v1533 = vunpack.c.l.b16 %v872
    %v1534 = vunpack.c.l.b16 %v873
    %v1535 = vunpack.c.l.b16 %v874
    %v1536 = vunpack.c.l.b16 %v875
    %v1537 = vunpack.c.l.b16 %v876
    %v1538 = vunpack.c.l.b16 %v877
    %v1539 = vunpack.c.l.b16 %v878
    %v1540 = vunpack.c.l.b16 %v879
    %v1541 = vunpack.c.l.b16 %v880
    %v1542 = vunpack.c.l.b16 %v881
    %v1543 = vunpack.c.l.b16 %v882
    %v1544 = vunpack.c.l.b16 %v883
    %v1545 = vunpack.c.l.b16 %v884
    %v1546 = vunpack.c.l.b16 %v885
    %v1547 = vunpack.c.l.b16 %v886
    %v1548 = vunpack.c.l.b16 %v887
    %v1549 = vunpack.c.l.b16 %v888
    %v1550 = vunpack.c.l.b16 %v889
    %v1551 = vunpack.c.l.b16 %v890
    %v1552 = vunpack.c.l.b16 %v891
    %v1553 = vunpack.c.l.b16 %v892
    %v1554 = vunpack.c.l.b16 %v893
    %v1555 = vunpack.c.l.b16 %v894
    %v1556 = vunpack.c.l.b16 %v895
    %v1557 = vunpack.c.l.b16 %v896
    %v1558 = vunpack.c.l.b16 %v897
    %v1559 = vunpack.c.l.b16 %v898
    %v1560 = vunpack.c.l.b16 %v899
    %v1561 = vunpack.c.l.b16 %v900
    %v1562 = vunpack.c.l.b16 %v901
    %v1563 = vunpack.c.l.b16 %v902
    %v1564 = vunpack.c.l.b16 %v903
    %v1565 = vunpack.c.l.b16 %v904
    %v1566 = vunpack.c.l.b16 %v905
    %v1567 = vunpack.c.l.b16 %v906
    %v1568 = vunpack.c.l.b16 %v907
    %v1569 = vunpack.c.l.b16 %v908
    %v1570 = vunpack.c.l.b16 %v909
    %v1571 = vunpack.c.l.b16 %v910
    %v1572 = vunpack.c.l.b16 %v911
    %v1573 = vunpack.c.l.b16 %v912
    %v1574 = vunpack.c.l.b16 %v913
    %v1575 = vunpack.c.l.b16 %v914
    %v1576 = vunpack.c.l.b16 %v915
    %v1577 = vunpack.c.l.b16 %v916
    %v1578 = vunpack.c.l.b16 %v917
    %v1579 = vunpack.c.l.b16 %v918
    %v1580 = vunpack.c.l.b16 %v919
    %v1581 = vunpack.c.l.b16 %v920
    %v1582 = vunpack.c.l.b16 %v921
    %v1583 = vunpack.c.l.b16 %v922
    %v1584 = vunpack.c.l.b16 %v923
    %v1585 = vunpack.c.l.b16 %v924
    %v1586 = vunpack.c.l.b16 %v925
    %v1587 = vunpack.c.l.b16 %v926
    %v1588 = vunpack.c.l.b16 %v927
    %v1589 = vunpack.c.l.b16 %v928
    %v1590 = vunpack.c.l.b16 %v929
    %v1591 = vunpack.c.l.b16 %v930
    %v1592 = vunpack.c.l.b16 %v931
    %v1593 = vunpack.c.l.b16 %v932
    %v1594 = vunpack.c.l.b16 %v933
    %v1595 = vunpack.c.l.b16 %v934
    %v1596 = vunpack.c.l.b16 %v935
    %v1597 = vunpack.c.l.b16 %v936
    %v1598 = vunpack.c.l.b16 %v937
    %v1599 = vunpack.c.l.b16 %v938
    %v1600 = vunpack.c.l.b16 %v939
    %v1601 = vunpack.c.l.b16 %v940
    %v1602 = vunpack.c.l.b16 %v941
    %v1603 = vunpack.c.l.b16 %v942
    %v1604 = vunpack.c.l.b16 %v943
    %v1605 = vunpack.c.l.b16 %v944
    %v1606 = vunpack.c.l.b16 %v945
    %v1607 = vunpack.c.l.b16 %v946
    %v1608 = vunpack.c.l.b16 %v947
    %v1609 = vunpack.c.l.b16 %v948
    %v1610 = vunpack.c.l.b16 %v949
    %v1611 = vunpack.c.l.b16 %v950
    %v1612 = vunpack.c.l.b16 %v951
    %v1613 = vunpack.c.l.b16 %v952
    %v1614 = vunpack.c.l.b16 %v953
    %v1615 = vunpack.c.l.b16 %v954
    %v1616 = vunpack.c.l.b16 %v955
    %v1617 = vunpack.c.l.b16 %v956
    %v1618 = vunpack.c.l.b16 %v957
    %v1619 = vunpack.c.l.b16 %v958
    %v1620 = vunpack.c.l.b16 %v959
    %v1621 = vunpack.c.l.b16 %v960
    %v1622 = vunpack.c.l.b16 %v961
    %v1623 = vunpack.c.l.b16 %v962
    %v1624 = vunpack.c.l.b16 %v963
    %v1625 = vunpack.c.l.b16 %v964
    %v1626 = vunpack.c.l.b16 %v965
    %v1627 = vunpack.c.l.b16 %v966
    %v1628 = vunpack.c.l.b16 %v967
    %v1629 = vunpack.c.l.b16 %v968
    %v1630 = vunpack.c.l.b16 %v969
    %v1631 = vunpack.c.l.b16 %v970
    %v1632 = vunpack.c.l.b16 %v971
    %v1633 = vunpack.c.l.b16 %v972
    %v1634 = vunpack.c.l.b16 %v973
    %v1635 = vunpack.c.l.b16 %v974
    %v1636 = vunpack.c.l.b16 %v975
    %v1637 = vunpack.c.l.b16 %v976
    %v1638 = vunpack.c.l.b16 %v977
    %v1639 = vunpack.c.l.b16 %v978
    %v1640 = vunpack.c.l.b16 %v979
    %v1641 = vpack.c.b16 %v1498, %v1497
    %v1642 = vpack.c.b16 %v1500, %v1499
    %v1643 = vpack.c.b16 %v1502, %v1501
    %v1644 = vpack.c.b16 %v1504, %v1503
    %v1645 = vpack.c.b16 %v1506, %v1505
    %v1646 = vpack.c.b16 %v1508, %v1507
    %v1647 = vpack.c.b16 %v1510, %v1509
    %v1648 = vpack.c.b16 %v1512, %v1511
    %v1649 = vpack.c.b16 %v1514, %v1513
    %v1650 = vpack.c.b16 %v1516, %v1515
    %v1651 = vpack.c.b16 %v1518, %v1517
    %v1652 = vpack.c.b16 %v1520, %v1519
    %v1653 = vpack.c.b16 %v1522, %v1521
    %v1654 = vpack.c.b16 %v1524, %v1523
    %v1655 = vpack.c.b16 %v1526, %v1525
    %v1656 = vpack.c.b16 %v1528, %v1527
    %v1657 = vpack.c.b16 %v1530, %v1529
    %v1658 = vpack.c.b16 %v1532, %v1531
    %v1659 = vpack.c.b16 %v1534, %v1533
    %v1660 = vpack.c.b16 %v1536, %v1535
    %v1661 = vpack.c.b16 %v1538, %v1537
    %v1662 = vpack.c.b16 %v1540, %v1539
    %v1663 = vpack.c.b16 %v1542, %v1541
    %v1664 = vpack.c.b16 %v1544, %v1543
    %v1665 = vpack.c.b16 %v1546, %v1545
    %v1666 = vpack.c.b16 %v1548, %v1547
    %v1667 = vpack.c.b16 %v1550, %v1549
    %v1668 = vpack.c.b16 %v1552, %v1551
    %v1669 = vpack.c.b16 %v1554, %v1553
    %v1670 = vpack.c.b16 %v1556, %v1555
    %v1671 = vpack.c.b16 %v1558, %v1557
    %v1672 = vpack.c.b16 %v1560, %v1559
    %v1673 = vpack.c.b16 %v1562, %v1561
    %v1674 = vpack.c.b16 %v1564, %v1563
    %v1675 = vpack.c.b16 %v1566, %v1565
    %v1676 = vpack.c.b16 %v1568, %v1567
    %v1677 = vpack.c.b16 %v1570, %v1569
    %v1678 = vpack.c.b16 %v1572, %v1571
    %v1679 = vpack.c.b16 %v1574, %v1573
    %v1680 = vpack.c.b16 %v1576, %v1575
    %v1681 = vpack.c.b16 %v1578, %v1577
    %v1682 = vpack.c.b16 %v1580, %v1579
    %v1683 = vpack.c.b16 %v1582, %v1581
    %v1684 = vpack.c.b16 %v1584, %v1583
    %v1685 = vpack.c.b16 %v1586, %v1585
    %v1686 = vpack.c.b16 %v1588, %v1587
    %v1687 = vpack.c.b16 %v1590, %v1589
    %v1688 = vpack.c.b16 %v1592, %v1591
    %v1689 = vpack.c.b16 %v1594, %v1593
    %v1690 = vpack.c.b16 %v1596, %v1595
    %v1691 = vpack.c.b16 %v1598, %v1597
    %v1692 = vpack.c.b16 %v1600, %v1599
    %v1693 = vpack.c.b16 %v1602, %v1601
    %v1694 = vpack.c.b16 %v1604, %v1603
    %v1695 = vpack.c.b16 %v1606, %v1605
    %v1696 = vpack.c.b16 %v1608, %v1607
    %v1697 = vpack.c.b16 %v1610, %v1609
    %v1698 = vpack.c.b16 %v1612, %v1611
    %v1699 = vpack.c.b16 %v1614, %v1613
    %v1700 = vpack.c.b16 %v1616, %v1615
    %v1701 = vpack.c.b16 %v1618, %v1617
    %v1702 = vpack.c.b16 %v1620, %v1619
    %v1703 = vpack.c.b16 %v1622, %v1621
    %v1704 = vpack.c.b16 %v1624, %v1623
    %v1705 = vpack.c.b16 %v1626, %v1625
    %v1706 = vpack.c.b16 %v1628, %v1627
    %v1707 = vpack.c.b16 %v1630, %v1629
    %v1708 = vpack.c.b16 %v1632, %v1631
    %v1709 = vpack.c.b16 %v1634, %v1633
    %v1710 = vpack.c.b16 %v1636, %v1635
    %v1711 = vpack.c.b16 %v1638, %v1637
    %v1712 = vpack.c.b16 %v1640, %v1639
    %1785 = vmatprep.subr.bf16.mxu0 0
    %1786 = vmatpush1.bf16.msra.mxu0 %v1648
    %1787 = vmatprep.subr.bf16.mxu0 0
    %1788 = vmatpush1.bf16.msra.mxu0 %v1647
    %1789 = vmatprep.subr.bf16.mxu0 0
    %1790 = vmatpush1.bf16.msra.mxu0 %v1646
    %1791 = vmatprep.subr.bf16.mxu0 0
    %1792 = vmatpush1.bf16.msra.mxu0 %v1645
    %1793 = vmatprep.subr.bf16.mxu0 0
    %1794 = vmatpush1.bf16.msra.mxu0 %v1644
    %1795 = vmatprep.subr.bf16.mxu0 0
    %1796 = vmatpush1.bf16.msra.mxu0 %v1643
    %1797 = vmatprep.subr.bf16.mxu0 0
    %1798 = vmatpush1.bf16.msra.mxu0 %v1642
    %1799 = vmatprep.subr.bf16.mxu0 0
    %1800 = vmatpush1.bf16.msra.mxu0 %v1641
    %1801 = vmatprep.subr.bf16.mxu0 0
    %1802 = vmatpush2.bf16.msra.mxu0 %v1656
    %1803 = vmatprep.subr.bf16.mxu0 0
    %1804 = vmatpush2.bf16.msra.mxu0 %v1655
    %1805 = vmatprep.subr.bf16.mxu0 0
    %1806 = vmatpush2.bf16.msra.mxu0 %v1654
    %1807 = vmatprep.subr.bf16.mxu0 0
    %1808 = vmatpush2.bf16.msra.mxu0 %v1653
    %1809 = vmatprep.subr.bf16.mxu0 0
    %1810 = vmatpush2.bf16.msra.mxu0 %v1652
    %1811 = vmatprep.subr.bf16.mxu0 0
    %1812 = vmatpush2.bf16.msra.mxu0 %v1651
    %1813 = vmatprep.subr.bf16.mxu0 0
    %1814 = vmatpush2.bf16.msra.mxu0 %v1650
    %1815 = vmatprep.subr.bf16.mxu0 0
    %1816 = vmatpush2.bf16.msra.mxu0 %v1649
    %1817 = vmatprep.mubr.bf16.mxu0 %v1210
    %1818 = vmatmul.mubr.bf16.gmra.mxu0 %v1209
    %v1819 = vpop.f32.mrf.mxu0
    %v1820 = vadd.f32 %v984, %v1819
    %v1821 = vpop.f32.mrf.mxu0
    %v1822 = vpop.f32.mrf.mxu0
    %v1823 = vadd.f32 %v984, %v1822
    %v1824 = vpop.f32.mrf.mxu0
    %1825 = vmatprep.mubr.bf16.mxu0 %v1219
    %1826 = vmatmul.mubr.bf16.gmra.mxu0 %v1218
    %v1827 = vpop.f32.mrf.mxu0
    %v1828 = vadd.f32 %v984, %v1827
    %v1829 = vpop.f32.mrf.mxu0
    %v1830 = vpop.f32.mrf.mxu0
    %v1831 = vadd.f32 %v984, %v1830
    %v1832 = vpop.f32.mrf.mxu0
    %1833 = vmatprep.mubr.bf16.mxu0 %v1228
    %1834 = vmatmul.mubr.bf16.gmra.mxu0 %v1227
    %v1835 = vpop.f32.mrf.mxu0
    %v1836 = vadd.f32 %v984, %v1835
    %v1837 = vpop.f32.mrf.mxu0
    %v1838 = vpop.f32.mrf.mxu0
    %v1839 = vadd.f32 %v984, %v1838
    %v1840 = vpop.f32.mrf.mxu0
    %1841 = vmatprep.mubr.bf16.mxu0 %v1237
    %1842 = vmatmul.mubr.bf16.gmra.mxu0 %v1236
    %v1843 = vpop.f32.mrf.mxu0
    %v1844 = vadd.f32 %v984, %v1843
    %v1845 = vpop.f32.mrf.mxu0
    %v1846 = vpop.f32.mrf.mxu0
    %v1847 = vadd.f32 %v984, %v1846
    %v1848 = vpop.f32.mrf.mxu0
    %1849 = vmatprep.mubr.bf16.mxu0 %v1246
    %1850 = vmatmul.mubr.bf16.gmra.mxu0 %v1245
    %v1851 = vpop.f32.mrf.mxu0
    %v1852 = vadd.f32 %v984, %v1851
    %v1853 = vpop.f32.mrf.mxu0
    %v1854 = vpop.f32.mrf.mxu0
    %v1855 = vadd.f32 %v984, %v1854
    %v1856 = vpop.f32.mrf.mxu0
    %1857 = vmatprep.mubr.bf16.mxu0 %v1255
    %1858 = vmatmul.mubr.bf16.gmra.mxu0 %v1254
    %v1859 = vpop.f32.mrf.mxu0
    %v1860 = vadd.f32 %v984, %v1859
    %v1861 = vpop.f32.mrf.mxu0
    %v1862 = vpop.f32.mrf.mxu0
    %v1863 = vadd.f32 %v984, %v1862
    %v1864 = vpop.f32.mrf.mxu0
    %1865 = vmatprep.mubr.bf16.mxu0 %v1264
    %1866 = vmatmul.mubr.bf16.gmra.mxu0 %v1263
    %v1867 = vpop.f32.mrf.mxu0
    %v1868 = vadd.f32 %v984, %v1867
    %v1869 = vpop.f32.mrf.mxu0
    %v1870 = vpop.f32.mrf.mxu0
    %v1871 = vadd.f32 %v984, %v1870
    %v1872 = vpop.f32.mrf.mxu0
    %1873 = vmatprep.mubr.bf16.mxu0 %v1273
    %1874 = vmatmul.mubr.bf16.gmra.mxu0 %v1272
    %v1875 = vpop.f32.mrf.mxu0
    %v1876 = vadd.f32 %v984, %v1875
    %v1877 = vpop.f32.mrf.mxu0
    %v1878 = vpop.f32.mrf.mxu0
    %v1879 = vadd.f32 %v984, %v1878
    %v1880 = vpop.f32.mrf.mxu0
    %1881 = vdwg.mxu0
    %1882 = vmatprep.subr.bf16.mxu0 0
    %1883 = vmatpush1.bf16.msra.mxu0 %v1664
    %1884 = vmatprep.subr.bf16.mxu0 0
    %1885 = vmatpush1.bf16.msra.mxu0 %v1663
    %1886 = vmatprep.subr.bf16.mxu0 0
    %1887 = vmatpush1.bf16.msra.mxu0 %v1662
    %1888 = vmatprep.subr.bf16.mxu0 0
    %1889 = vmatpush1.bf16.msra.mxu0 %v1661
    %1890 = vmatprep.subr.bf16.mxu0 0
    %1891 = vmatpush1.bf16.msra.mxu0 %v1660
    %1892 = vmatprep.subr.bf16.mxu0 0
    %1893 = vmatpush1.bf16.msra.mxu0 %v1659
    %1894 = vmatprep.subr.bf16.mxu0 0
    %1895 = vmatpush1.bf16.msra.mxu0 %v1658
    %1896 = vmatprep.subr.bf16.mxu0 0
    %1897 = vmatpush1.bf16.msra.mxu0 %v1657
    %1898 = vmatprep.subr.bf16.mxu0 0
    %1899 = vmatpush2.bf16.msra.mxu0 %v1672
    %1900 = vmatprep.subr.bf16.mxu0 0
    %1901 = vmatpush2.bf16.msra.mxu0 %v1671
    %1902 = vmatprep.subr.bf16.mxu0 0
    %1903 = vmatpush2.bf16.msra.mxu0 %v1670
    %1904 = vmatprep.subr.bf16.mxu0 0
    %1905 = vmatpush2.bf16.msra.mxu0 %v1669
    %1906 = vmatprep.subr.bf16.mxu0 0
    %1907 = vmatpush2.bf16.msra.mxu0 %v1668
    %1908 = vmatprep.subr.bf16.mxu0 0
    %1909 = vmatpush2.bf16.msra.mxu0 %v1667
    %1910 = vmatprep.subr.bf16.mxu0 0
    %1911 = vmatpush2.bf16.msra.mxu0 %v1666
    %1912 = vmatprep.subr.bf16.mxu0 0
    %1913 = vmatpush2.bf16.msra.mxu0 %v1665
    %1914 = vmatprep.mubr.bf16.mxu0 %v1212
    %1915 = vmatmul.mubr.bf16.gmra.mxu0 %v1211
    %v1916 = vpop.f32.mrf.mxu0
    %v1917 = vadd.f32 %v1820, %v1916
    %v1918 = vpop.f32.mrf.mxu0
    %v1919 = vpop.f32.mrf.mxu0
    %v1920 = vadd.f32 %v1823, %v1919
    %v1921 = vpop.f32.mrf.mxu0
    %1922 = vmatprep.mubr.bf16.mxu0 %v1221
    %1923 = vmatmul.mubr.bf16.gmra.mxu0 %v1220
    %v1924 = vpop.f32.mrf.mxu0
    %v1925 = vadd.f32 %v1828, %v1924
    %v1926 = vpop.f32.mrf.mxu0
    %v1927 = vpop.f32.mrf.mxu0
    %v1928 = vadd.f32 %v1831, %v1927
    %v1929 = vpop.f32.mrf.mxu0
    %1930 = vmatprep.mubr.bf16.mxu0 %v1230
    %1931 = vmatmul.mubr.bf16.gmra.mxu0 %v1229
    %v1932 = vpop.f32.mrf.mxu0
    %v1933 = vadd.f32 %v1836, %v1932
    %v1934 = vpop.f32.mrf.mxu0
    %v1935 = vpop.f32.mrf.mxu0
    %v1936 = vadd.f32 %v1839, %v1935
    %v1937 = vpop.f32.mrf.mxu0
    %1938 = vmatprep.mubr.bf16.mxu0 %v1239
    %1939 = vmatmul.mubr.bf16.gmra.mxu0 %v1238
    %v1940 = vpop.f32.mrf.mxu0
    %v1941 = vadd.f32 %v1844, %v1940
    %v1942 = vpop.f32.mrf.mxu0
    %v1943 = vpop.f32.mrf.mxu0
    %v1944 = vadd.f32 %v1847, %v1943
    %v1945 = vpop.f32.mrf.mxu0
    %1946 = vmatprep.mubr.bf16.mxu0 %v1248
    %1947 = vmatmul.mubr.bf16.gmra.mxu0 %v1247
    %v1948 = vpop.f32.mrf.mxu0
    %v1949 = vadd.f32 %v1852, %v1948
    %v1950 = vpop.f32.mrf.mxu0
    %v1951 = vpop.f32.mrf.mxu0
    %v1952 = vadd.f32 %v1855, %v1951
    %v1953 = vpop.f32.mrf.mxu0
    %1954 = vmatprep.mubr.bf16.mxu0 %v1257
    %1955 = vmatmul.mubr.bf16.gmra.mxu0 %v1256
    %v1956 = vpop.f32.mrf.mxu0
    %v1957 = vadd.f32 %v1860, %v1956
    %v1958 = vpop.f32.mrf.mxu0
    %v1959 = vpop.f32.mrf.mxu0
    %v1960 = vadd.f32 %v1863, %v1959
    %v1961 = vpop.f32.mrf.mxu0
    %1962 = vmatprep.mubr.bf16.mxu0 %v1266
    %1963 = vmatmul.mubr.bf16.gmra.mxu0 %v1265
    %v1964 = vpop.f32.mrf.mxu0
    %v1965 = vadd.f32 %v1868, %v1964
    %v1966 = vpop.f32.mrf.mxu0
    %v1967 = vpop.f32.mrf.mxu0
    %v1968 = vadd.f32 %v1871, %v1967
    %v1969 = vpop.f32.mrf.mxu0
    %1970 = vmatprep.mubr.bf16.mxu0 %v1275
    %1971 = vmatmul.mubr.bf16.gmra.mxu0 %v1274
    %v1972 = vpop.f32.mrf.mxu0
    %v1973 = vadd.f32 %v1876, %v1972
    %v1974 = vpop.f32.mrf.mxu0
    %v1975 = vpop.f32.mrf.mxu0
    %v1976 = vadd.f32 %v1879, %v1975
    %v1977 = vpop.f32.mrf.mxu0
    %1978 = vdwg.mxu0
    %1979 = vmatprep.subr.bf16.mxu0 0
    %1980 = vmatpush1.bf16.msra.mxu0 %v1680
    %1981 = vmatprep.subr.bf16.mxu0 0
    %1982 = vmatpush1.bf16.msra.mxu0 %v1679
    %1983 = vmatprep.subr.bf16.mxu0 0
    %1984 = vmatpush1.bf16.msra.mxu0 %v1678
    %1985 = vmatprep.subr.bf16.mxu0 0
    %1986 = vmatpush1.bf16.msra.mxu0 %v1677
    %1987 = vmatprep.subr.bf16.mxu0 0
    %1988 = vmatpush1.bf16.msra.mxu0 %v1676
    %1989 = vmatprep.subr.bf16.mxu0 0
    %1990 = vmatpush1.bf16.msra.mxu0 %v1675
    %1991 = vmatprep.subr.bf16.mxu0 0
    %1992 = vmatpush1.bf16.msra.mxu0 %v1674
    %1993 = vmatprep.subr.bf16.mxu0 0
    %1994 = vmatpush1.bf16.msra.mxu0 %v1673
    %1995 = vmatprep.subr.bf16.mxu0 0
    %1996 = vmatpush2.bf16.msra.mxu0 %v1688
    %1997 = vmatprep.subr.bf16.mxu0 0
    %1998 = vmatpush2.bf16.msra.mxu0 %v1687
    %1999 = vmatprep.subr.bf16.mxu0 0
    %2000 = vmatpush2.bf16.msra.mxu0 %v1686
    %2001 = vmatprep.subr.bf16.mxu0 0
    %2002 = vmatpush2.bf16.msra.mxu0 %v1685
    %2003 = vmatprep.subr.bf16.mxu0 0
    %2004 = vmatpush2.bf16.msra.mxu0 %v1684
    %2005 = vmatprep.subr.bf16.mxu0 0
    %2006 = vmatpush2.bf16.msra.mxu0 %v1683
    %2007 = vmatprep.subr.bf16.mxu0 0
    %2008 = vmatpush2.bf16.msra.mxu0 %v1682
    %2009 = vmatprep.subr.bf16.mxu0 0
    %2010 = vmatpush2.bf16.msra.mxu0 %v1681
    %2011 = vmatprep.mubr.bf16.mxu0 %v1214
    %2012 = vmatmul.mubr.bf16.gmra.mxu0 %v1213
    %v2013 = vpop.f32.mrf.mxu0
    %v2014 = vadd.f32 %v1917, %v2013
    %v2015 = vpop.f32.mrf.mxu0
    %v2016 = vpop.f32.mrf.mxu0
    %v2017 = vadd.f32 %v1920, %v2016
    %v2018 = vpop.f32.mrf.mxu0
    %2019 = vmatprep.mubr.bf16.mxu0 %v1223
    %2020 = vmatmul.mubr.bf16.gmra.mxu0 %v1222
    %v2021 = vpop.f32.mrf.mxu0
    %v2022 = vadd.f32 %v1925, %v2021
    %v2023 = vpop.f32.mrf.mxu0
    %v2024 = vpop.f32.mrf.mxu0
    %v2025 = vadd.f32 %v1928, %v2024
    %v2026 = vpop.f32.mrf.mxu0
    %2027 = vmatprep.mubr.bf16.mxu0 %v1232
    %2028 = vmatmul.mubr.bf16.gmra.mxu0 %v1231
    %v2029 = vpop.f32.mrf.mxu0
    %v2030 = vadd.f32 %v1933, %v2029
    %v2031 = vpop.f32.mrf.mxu0
    %v2032 = vpop.f32.mrf.mxu0
    %v2033 = vadd.f32 %v1936, %v2032
    %v2034 = vpop.f32.mrf.mxu0
    %2035 = vmatprep.mubr.bf16.mxu0 %v1241
    %2036 = vmatmul.mubr.bf16.gmra.mxu0 %v1240
    %v2037 = vpop.f32.mrf.mxu0
    %v2038 = vadd.f32 %v1941, %v2037
    %v2039 = vpop.f32.mrf.mxu0
    %v2040 = vpop.f32.mrf.mxu0
    %v2041 = vadd.f32 %v1944, %v2040
    %v2042 = vpop.f32.mrf.mxu0
    %2043 = vmatprep.mubr.bf16.mxu0 %v1250
    %2044 = vmatmul.mubr.bf16.gmra.mxu0 %v1249
    %v2045 = vpop.f32.mrf.mxu0
    %v2046 = vadd.f32 %v1949, %v2045
    %v2047 = vpop.f32.mrf.mxu0
    %v2048 = vpop.f32.mrf.mxu0
    %v2049 = vadd.f32 %v1952, %v2048
    %v2050 = vpop.f32.mrf.mxu0
    %2051 = vmatprep.mubr.bf16.mxu0 %v1259
    %2052 = vmatmul.mubr.bf16.gmra.mxu0 %v1258
    %v2053 = vpop.f32.mrf.mxu0
    %v2054 = vadd.f32 %v1957, %v2053
    %v2055 = vpop.f32.mrf.mxu0
    %v2056 = vpop.f32.mrf.mxu0
    %v2057 = vadd.f32 %v1960, %v2056
    %v2058 = vpop.f32.mrf.mxu0
    %2059 = vmatprep.mubr.bf16.mxu0 %v1268
    %2060 = vmatmul.mubr.bf16.gmra.mxu0 %v1267
    %v2061 = vpop.f32.mrf.mxu0
    %v2062 = vadd.f32 %v1965, %v2061
    %v2063 = vpop.f32.mrf.mxu0
    %v2064 = vpop.f32.mrf.mxu0
    %v2065 = vadd.f32 %v1968, %v2064
    %v2066 = vpop.f32.mrf.mxu0
    %2067 = vmatprep.mubr.bf16.mxu0 %v1277
    %2068 = vmatmul.mubr.bf16.gmra.mxu0 %v1276
    %v2069 = vpop.f32.mrf.mxu0
    %v2070 = vadd.f32 %v1973, %v2069
    %v2071 = vpop.f32.mrf.mxu0
    %v2072 = vpop.f32.mrf.mxu0
    %v2073 = vadd.f32 %v1976, %v2072
    %v2074 = vpop.f32.mrf.mxu0
    %2075 = vdwg.mxu0
    %2076 = vmatprep.subr.bf16.mxu0 0
    %2077 = vmatpush1.bf16.msra.mxu0 %v1696
    %2078 = vmatprep.subr.bf16.mxu0 0
    %2079 = vmatpush1.bf16.msra.mxu0 %v1695
    %2080 = vmatprep.subr.bf16.mxu0 0
    %2081 = vmatpush1.bf16.msra.mxu0 %v1694
    %2082 = vmatprep.subr.bf16.mxu0 0
    %2083 = vmatpush1.bf16.msra.mxu0 %v1693
    %2084 = vmatprep.subr.bf16.mxu0 0
    %2085 = vmatpush1.bf16.msra.mxu0 %v1692
    %2086 = vmatprep.subr.bf16.mxu0 0
    %2087 = vmatpush1.bf16.msra.mxu0 %v1691
    %2088 = vmatprep.subr.bf16.mxu0 0
    %2089 = vmatpush1.bf16.msra.mxu0 %v1690
    %2090 = vmatprep.subr.bf16.mxu0 0
    %2091 = vmatpush1.bf16.msra.mxu0 %v1689
    %2092 = vmatprep.subr.bf16.mxu0 0
    %2093 = vmatpush2.bf16.msra.mxu0 %v1704
    %2094 = vmatprep.subr.bf16.mxu0 0
    %2095 = vmatpush2.bf16.msra.mxu0 %v1703
    %2096 = vmatprep.subr.bf16.mxu0 0
    %2097 = vmatpush2.bf16.msra.mxu0 %v1702
    %2098 = vmatprep.subr.bf16.mxu0 0
    %2099 = vmatpush2.bf16.msra.mxu0 %v1701
    %2100 = vmatprep.subr.bf16.mxu0 0
    %2101 = vmatpush2.bf16.msra.mxu0 %v1700
    %2102 = vmatprep.subr.bf16.mxu0 0
    %2103 = vmatpush2.bf16.msra.mxu0 %v1699
    %2104 = vmatprep.subr.bf16.mxu0 0
    %2105 = vmatpush2.bf16.msra.mxu0 %v1698
    %2106 = vmatprep.subr.bf16.mxu0 0
    %2107 = vmatpush2.bf16.msra.mxu0 %v1697
    %2108 = vmatprep.mubr.bf16.mxu0 %v1216
    %2109 = vmatmul.mubr.bf16.gmra.mxu0 %v1215
    %v2110 = vpop.f32.mrf.mxu0
    %v2111 = vadd.f32 %v2014, %v2110
    %v2112 = vpop.f32.mrf.mxu0
    %v2113 = vpop.f32.mrf.mxu0
    %v2114 = vadd.f32 %v2017, %v2113
    %v2115 = vpop.f32.mrf.mxu0
    %2116 = vmatprep.mubr.bf16.mxu0 %v1225
    %2117 = vmatmul.mubr.bf16.gmra.mxu0 %v1224
    %v2118 = vpop.f32.mrf.mxu0
    %v2119 = vadd.f32 %v2022, %v2118
    %v2120 = vpop.f32.mrf.mxu0
    %v2121 = vpop.f32.mrf.mxu0
    %v2122 = vadd.f32 %v2025, %v2121
    %v2123 = vpop.f32.mrf.mxu0
    %2124 = vmatprep.mubr.bf16.mxu0 %v1234
    %2125 = vmatmul.mubr.bf16.gmra.mxu0 %v1233
    %v2126 = vpop.f32.mrf.mxu0
    %v2127 = vadd.f32 %v2030, %v2126
    %v2128 = vpop.f32.mrf.mxu0
    %v2129 = vpop.f32.mrf.mxu0
    %v2130 = vadd.f32 %v2033, %v2129
    %v2131 = vpop.f32.mrf.mxu0
    %2132 = vmatprep.mubr.bf16.mxu0 %v1243
    %2133 = vmatmul.mubr.bf16.gmra.mxu0 %v1242
    %v2134 = vpop.f32.mrf.mxu0
    %v2135 = vadd.f32 %v2038, %v2134
    %v2136 = vpop.f32.mrf.mxu0
    %v2137 = vpop.f32.mrf.mxu0
    %v2138 = vadd.f32 %v2041, %v2137
    %v2139 = vpop.f32.mrf.mxu0
    %2140 = vmatprep.mubr.bf16.mxu0 %v1252
    %2141 = vmatmul.mubr.bf16.gmra.mxu0 %v1251
    %v2142 = vpop.f32.mrf.mxu0
    %v2143 = vadd.f32 %v2046, %v2142
    %v2144 = vpop.f32.mrf.mxu0
    %v2145 = vpop.f32.mrf.mxu0
    %v2146 = vadd.f32 %v2049, %v2145
    %v2147 = vpop.f32.mrf.mxu0
    %2148 = vmatprep.mubr.bf16.mxu0 %v1261
    %2149 = vmatmul.mubr.bf16.gmra.mxu0 %v1260
    %v2150 = vpop.f32.mrf.mxu0
    %v2151 = vadd.f32 %v2054, %v2150
    %v2152 = vpop.f32.mrf.mxu0
    %v2153 = vpop.f32.mrf.mxu0
    %v2154 = vadd.f32 %v2057, %v2153
    %v2155 = vpop.f32.mrf.mxu0
    %2156 = vmatprep.mubr.bf16.mxu0 %v1270
    %2157 = vmatmul.mubr.bf16.gmra.mxu0 %v1269
    %v2158 = vpop.f32.mrf.mxu0
    %v2159 = vadd.f32 %v2062, %v2158
    %v2160 = vpop.f32.mrf.mxu0
    %v2161 = vpop.f32.mrf.mxu0
    %v2162 = vadd.f32 %v2065, %v2161
    %v2163 = vpop.f32.mrf.mxu0
    %2164 = vmatprep.mubr.bf16.mxu0 %v1279
    %2165 = vmatmul.mubr.bf16.gmra.mxu0 %v1278
    %v2166 = vpop.f32.mrf.mxu0
    %v2167 = vadd.f32 %v2070, %v2166
    %v2168 = vpop.f32.mrf.mxu0
    %v2169 = vpop.f32.mrf.mxu0
    %v2170 = vadd.f32 %v2073, %v2169
    %v2171 = vpop.f32.mrf.mxu0
    %2172 = vdwg.mxu0
    %2173 = vmatprep.subr.bf16.mxu0 0
    %2174 = vmatpush1.bf16.msra.mxu0 %v1712
    %2175 = vmatprep.subr.bf16.mxu0 0
    %2176 = vmatpush1.bf16.msra.mxu0 %v1711
    %2177 = vmatprep.subr.bf16.mxu0 0
    %2178 = vmatpush1.bf16.msra.mxu0 %v1710
    %2179 = vmatprep.subr.bf16.mxu0 0
    %2180 = vmatpush1.bf16.msra.mxu0 %v1709
    %2181 = vmatprep.subr.bf16.mxu0 0
    %2182 = vmatpush1.bf16.msra.mxu0 %v1708
    %2183 = vmatprep.subr.bf16.mxu0 0
    %2184 = vmatpush1.bf16.msra.mxu0 %v1707
    %2185 = vmatprep.subr.bf16.mxu0 0
    %2186 = vmatpush1.bf16.msra.mxu0 %v1706
    %2187 = vmatprep.subr.bf16.mxu0 0
    %2188 = vmatpush1.bf16.msra.mxu0 %v1705
    %2189 = vmatprep.subr.bf16.mxu0 0
    %2190 = vmatpush2.bf16.msra.mxu0 0
    %2191 = vmatprep.subr.bf16.mxu0 0
    %2192 = vmatpush2.bf16.msra.mxu0 0
    %2193 = vmatprep.subr.bf16.mxu0 0
    %2194 = vmatpush2.bf16.msra.mxu0 0
    %2195 = vmatprep.subr.bf16.mxu0 0
    %2196 = vmatpush2.bf16.msra.mxu0 0
    %2197 = vmatprep.subr.bf16.mxu0 0
    %2198 = vmatpush2.bf16.msra.mxu0 0
    %2199 = vmatprep.subr.bf16.mxu0 0
    %2200 = vmatpush2.bf16.msra.mxu0 0
    %2201 = vmatprep.subr.bf16.mxu0 0
    %2202 = vmatpush2.bf16.msra.mxu0 0
    %2203 = vmatprep.subr.bf16.mxu0 0
    %2204 = vmatpush2.bf16.msra.mxu0 0
    %2205 = vmatprep.mubr.bf16.mxu0 0
    %2206 = vmatmul.mubr.bf16.gmra.mxu0 %v1217
    %v2207 = vpop.f32.mrf.mxu0
    %v2208 = vadd.f32 %v2111, %v2207
    %v2209 = vpop.f32.mrf.mxu0
    %v2210 = vpop.f32.mrf.mxu0
    %v2211 = vadd.f32 %v2114, %v2210
    %v2212 = vpop.f32.mrf.mxu0
    %2213 = vmatprep.mubr.bf16.mxu0 0
    %2214 = vmatmul.mubr.bf16.gmra.mxu0 %v1226
    %v2215 = vpop.f32.mrf.mxu0
    %v2216 = vadd.f32 %v2119, %v2215
    %v2217 = vpop.f32.mrf.mxu0
    %v2218 = vpop.f32.mrf.mxu0
    %v2219 = vadd.f32 %v2122, %v2218
    %v2220 = vpop.f32.mrf.mxu0
    %2221 = vmatprep.mubr.bf16.mxu0 0
    %2222 = vmatmul.mubr.bf16.gmra.mxu0 %v1235
    %v2223 = vpop.f32.mrf.mxu0
    %v2224 = vadd.f32 %v2127, %v2223
    %v2225 = vpop.f32.mrf.mxu0
    %v2226 = vpop.f32.mrf.mxu0
    %v2227 = vadd.f32 %v2130, %v2226
    %v2228 = vpop.f32.mrf.mxu0
    %2229 = vmatprep.mubr.bf16.mxu0 0
    %2230 = vmatmul.mubr.bf16.gmra.mxu0 %v1244
    %v2231 = vpop.f32.mrf.mxu0
    %v2232 = vadd.f32 %v2135, %v2231
    %v2233 = vpop.f32.mrf.mxu0
    %v2234 = vpop.f32.mrf.mxu0
    %v2235 = vadd.f32 %v2138, %v2234
    %v2236 = vpop.f32.mrf.mxu0
    %2237 = vmatprep.mubr.bf16.mxu0 0
    %2238 = vmatmul.mubr.bf16.gmra.mxu0 %v1253
    %v2239 = vpop.f32.mrf.mxu0
    %v2240 = vadd.f32 %v2143, %v2239
    %v2241 = vpop.f32.mrf.mxu0
    %v2242 = vpop.f32.mrf.mxu0
    %v2243 = vadd.f32 %v2146, %v2242
    %v2244 = vpop.f32.mrf.mxu0
    %2245 = vmatprep.mubr.bf16.mxu0 0
    %2246 = vmatmul.mubr.bf16.gmra.mxu0 %v1262
    %v2247 = vpop.f32.mrf.mxu0
    %v2248 = vadd.f32 %v2151, %v2247
    %v2249 = vpop.f32.mrf.mxu0
    %v2250 = vpop.f32.mrf.mxu0
    %v2251 = vadd.f32 %v2154, %v2250
    %v2252 = vpop.f32.mrf.mxu0
    %2253 = vmatprep.mubr.bf16.mxu0 0
    %2254 = vmatmul.mubr.bf16.gmra.mxu0 %v1271
    %v2255 = vpop.f32.mrf.mxu0
    %v2256 = vadd.f32 %v2159, %v2255
    %v2257 = vpop.f32.mrf.mxu0
    %v2258 = vpop.f32.mrf.mxu0
    %v2259 = vadd.f32 %v2162, %v2258
    %v2260 = vpop.f32.mrf.mxu0
    %2261 = vmatprep.mubr.bf16.mxu0 0
    %2262 = vmatmul.mubr.bf16.gmra.mxu0 %v1280
    %v2263 = vpop.f32.mrf.mxu0
    %v2264 = vadd.f32 %v2167, %v2263
    %v2265 = vpop.f32.mrf.mxu0
    %v2266 = vpop.f32.mrf.mxu0
    %v2267 = vadd.f32 %v2170, %v2266
    %v2268 = vpop.f32.mrf.mxu0
    %2269 = vdwg.mxu0
    %v2270 = vmax.f32 %v2208, 0.0
    %v2271 = vmax.f32 %v2211, 0.0
    %v2272 = vmax.f32 %v2216, 0.0
    %v2273 = vmax.f32 %v2219, 0.0
    %v2274 = vmax.f32 %v2224, 0.0
    %v2275 = vmax.f32 %v2227, 0.0
    %v2276 = vmax.f32 %v2232, 0.0
    %v2277 = vmax.f32 %v2235, 0.0
    %v2278 = vmax.f32 %v2240, 0.0
    %v2279 = vmax.f32 %v2243, 0.0
    %v2280 = vmax.f32 %v2248, 0.0
    %v2281 = vmax.f32 %v2251, 0.0
    %v2282 = vmax.f32 %v2256, 0.0
    %v2283 = vmax.f32 %v2259, 0.0
    %v2284 = vmax.f32 %v2264, 0.0
    %v2285 = vmax.f32 %v2267, 0.0
    %2286 = vst [vmem:[%s103 + $0x8] sm:$0xff] %v2270
    %2287 = vst [vmem:[%s103 + $0x20] sm:$0xff] %v2271
    %2288 = vst [vmem:[%s103 + $0x38] sm:$0xff] %v2272
    %2289 = vst [vmem:[%s103 + $0x50] sm:$0xff] %v2273
    %2290 = vst [vmem:[%s103 + $0x68] sm:$0xff] %v2274
    %2291 = vst [vmem:[%s103 + $0x80] sm:$0xff] %v2275
    %2292 = vst [vmem:[%s103 + $0x98] sm:$0xff] %v2276
    %2293 = vst [vmem:[%s103 + $0xb0] sm:$0xff] %v2277
    %2294 = vst [vmem:[%s103 + $0xf8] sm:$0xff] %v2278
    %2295 = vst [vmem:[%s103 + $0x110] sm:$0xff] %v2279
    %2296 = vst [vmem:[%s103 + $0x128] sm:$0xff] %v2280
    %2297 = vst [vmem:[%s103 + $0x140] sm:$0xff] %v2281
    %2298 = vst [vmem:[%s103 + $0x158] sm:$0xff] %v2282
    %2299 = vst [vmem:[%s103 + $0x170] sm:$0xff] %v2283
    %2300 = vst [vmem:[%s103 + $0x188] sm:$0xff] %v2284
    %2301 = vst [vmem:[%s103 + $0x1a0] sm:$0xff] %v2285
    %v2302 = vld [vmem:[#allocation2 + $0x7] sm:$0xff]
    %v2303 = vld [vmem:[#allocation2 + $0x1f] sm:$0xff]
    %v2304 = vld [vmem:[#allocation2 + $0x37] sm:$0xff]
    %v2305 = vld [vmem:[#allocation2 + $0x4f] sm:$0xff]
    %v2306 = vld [vmem:[#allocation2 + $0x67] sm:$0xff]
    %v2307 = vld [vmem:[#allocation2 + $0x7f] sm:$0xff]
    %v2308 = vld [vmem:[#allocation2 + $0x97] sm:$0xff]
    %v2309 = vld [vmem:[#allocation2 + $0xaf] sm:$0xff]
    %v2310 = vld [vmem:[#allocation2 + $0xc7] sm:$0xff]
    %v2311 = vld [vmem:[#allocation2 + $0xdf] sm:$0xff]
    %v2312 = vld [vmem:[#allocation2 + $0xf7] sm:$0xff]
    %v2313 = vld [vmem:[#allocation2 + $0x10f] sm:$0xff]
    %v2314 = vld [vmem:[#allocation2 + $0x127] sm:$0xff]
    %v2315 = vld [vmem:[#allocation2 + $0x13f] sm:$0xff]
    %v2316 = vld [vmem:[#allocation2 + $0x157] sm:$0xff]
    %v2317 = vld [vmem:[#allocation2 + $0x16f] sm:$0xff]
    %v2318 = vld [vmem:[#allocation2 + $0x187] sm:$0xff]
    %v2319 = vld [vmem:[#allocation2 + $0x19f] sm:$0xff]
    %v2320 = vld [vmem:[#allocation2 + $0x1b7] sm:$0xff]
    %v2321 = vld [vmem:[#allocation2 + $0x1cf] sm:$0xff]
    %v2322 = vpack.c.bf16 %v2303, %v2302
    %v2323 = vpack.c.bf16 %v2305, %v2304
    %v2324 = vpack.c.bf16 %v2307, %v2306
    %v2325 = vpack.c.bf16 %v2309, %v2308
    %v2326 = vpack.c.bf16 %v2313, %v2312
    %v2327 = vpack.c.bf16 %v2315, %v2314
    %v2328 = vpack.c.bf16 %v2317, %v2316
    %v2329 = vpack.c.bf16 %v2319, %v2318
    %v2338 = vunpack.c.l.b16 %v2322
    %v2339 = vunpack.c.h.b16 %v2322
    %v2340 = vunpack.c.l.b16 %v2323
    %v2341 = vunpack.c.h.b16 %v2323
    %v2342 = vunpack.c.l.b16 %v2324
    %v2343 = vunpack.c.h.b16 %v2324
    %v2344 = vunpack.c.l.b16 %v2325
    %v2345 = vunpack.c.h.b16 %v2325
    %v2346 = vunpack.c.l.b16 %v2326
    %v2347 = vunpack.c.h.b16 %v2326
    %v2348 = vunpack.c.l.b16 %v2327
    %v2349 = vunpack.c.h.b16 %v2327
    %v2350 = vunpack.c.l.b16 %v2328
    %v2351 = vunpack.c.h.b16 %v2328
    %v2352 = vunpack.c.l.b16 %v2329
    %v2353 = vunpack.c.h.b16 %v2329
    %v2354 = vpack.c.b16 %v2338, %v2338
    %v2355 = vpack.c.b16 %v2339, %v2339
    %v2356 = vpack.c.b16 %v2340, %v2340
    %v2357 = vpack.c.b16 %v2341, %v2341
    %v2358 = vpack.c.b16 %v2342, %v2342
    %v2359 = vpack.c.b16 %v2343, %v2343
    %v2360 = vpack.c.b16 %v2344, %v2344
    %v2361 = vpack.c.b16 %v2345, %v2345
    %v2362 = vpack.c.b16 %v2346, %v2346
    %v2363 = vpack.c.b16 %v2347, %v2347
    %v2364 = vpack.c.b16 %v2348, %v2348
    %v2365 = vpack.c.b16 %v2349, %v2349
    %v2366 = vpack.c.b16 %v2350, %v2350
    %v2367 = vpack.c.b16 %v2351, %v2351
    %v2368 = vpack.c.b16 %v2352, %v2352
    %v2369 = vpack.c.b16 %v2353, %v2353
    %2386 = vst [vmem:[#allocation3] sm:$0xf] %v2354
    %2387 = vst [vmem:[#allocation3 + $0x24] sm:$0xf] %v2355
    %2388 = vst [vmem:[#allocation3 + $0x48] sm:$0xf] %v2356
    %2389 = vst [vmem:[#allocation3 + $0x6c] sm:$0xf] %v2357
    %2390 = vst [vmem:[#allocation3 + $0x90] sm:$0xf] %v2358
    %2391 = vst [vmem:[#allocation3 + $0xb4] sm:$0xf] %v2359
    %2392 = vst [vmem:[#allocation3 + $0xd8] sm:$0xf] %v2360
    %2393 = vst [vmem:[#allocation3 + $0xfc] sm:$0xf] %v2361
    %2394 = vst [vmem:[#allocation3 + $0x120] sm:$0xf] %v2362
    %2395 = vst [vmem:[#allocation3 + $0x144] sm:$0xf] %v2363
    %2396 = vst [vmem:[#allocation3 + $0x168] sm:$0xf] %v2364
    %2397 = vst [vmem:[#allocation3 + $0x18c] sm:$0xf] %v2365
    %2398 = vst [vmem:[#allocation3 + $0x1b0] sm:$0xf] %v2366
    %2399 = vst [vmem:[#allocation3 + $0x1d4] sm:$0xf] %v2367
    %2400 = vst [vmem:[#allocation3 + $0x1f8] sm:$0xf] %v2368
    %2401 = vst [vmem:[#allocation3 + $0x21c] sm:$0xf] %v2369
    %v2402 = vpack.c.bf16 %v2304, %v2303
    %v2403 = vpack.c.bf16 %v2306, %v2305
    %v2404 = vpack.c.bf16 %v2308, %v2307
    %v2405 = vpack.c.bf16 %v2310, %v2309
    %v2406 = vpack.c.bf16 %v2314, %v2313
    %v2407 = vpack.c.bf16 %v2316, %v2315
    %v2408 = vpack.c.bf16 %v2318, %v2317
    %v2409 = vpack.c.bf16 %v2320, %v2319
    %v2418 = vunpack.c.l.b16 %v2402
    %v2419 = vunpack.c.h.b16 %v2402
    %v2420 = vunpack.c.l.b16 %v2403
    %v2421 = vunpack.c.h.b16 %v2403
    %v2422 = vunpack.c.l.b16 %v2404
    %v2423 = vunpack.c.h.b16 %v2404
    %v2424 = vunpack.c.l.b16 %v2405
    %v2425 = vunpack.c.h.b16 %v2405
    %v2426 = vunpack.c.l.b16 %v2406
    %v2427 = vunpack.c.h.b16 %v2406
    %v2428 = vunpack.c.l.b16 %v2407
    %v2429 = vunpack.c.h.b16 %v2407
    %v2430 = vunpack.c.l.b16 %v2408
    %v2431 = vunpack.c.h.b16 %v2408
    %v2432 = vunpack.c.l.b16 %v2409
    %v2433 = vunpack.c.h.b16 %v2409
    %v2434 = vpack.c.b16 %v2418, %v2418
    %v2435 = vpack.c.b16 %v2419, %v2419
    %v2436 = vpack.c.b16 %v2420, %v2420
    %v2437 = vpack.c.b16 %v2421, %v2421
    %v2438 = vpack.c.b16 %v2422, %v2422
    %v2439 = vpack.c.b16 %v2423, %v2423
    %v2440 = vpack.c.b16 %v2424, %v2424
    %v2441 = vpack.c.b16 %v2425, %v2425
    %v2442 = vpack.c.b16 %v2426, %v2426
    %v2443 = vpack.c.b16 %v2427, %v2427
    %v2444 = vpack.c.b16 %v2428, %v2428
    %v2445 = vpack.c.b16 %v2429, %v2429
    %v2446 = vpack.c.b16 %v2430, %v2430
    %v2447 = vpack.c.b16 %v2431, %v2431
    %v2448 = vpack.c.b16 %v2432, %v2432
    %v2449 = vpack.c.b16 %v2433, %v2433
    %2466 = vst [vmem:[#allocation3 + $0xc] sm:$0xf] %v2434
    %2467 = vst [vmem:[#allocation3 + $0x30] sm:$0xf] %v2435
    %2468 = vst [vmem:[#allocation3 + $0x54] sm:$0xf] %v2436
    %2469 = vst [vmem:[#allocation3 + $0x78] sm:$0xf] %v2437
    %2470 = vst [vmem:[#allocation3 + $0x9c] sm:$0xf] %v2438
    %2471 = vst [vmem:[#allocation3 + $0xc0] sm:$0xf] %v2439
    %2472 = vst [vmem:[#allocation3 + $0xe4] sm:$0xf] %v2440
    %2473 = vst [vmem:[#allocation3 + $0x108] sm:$0xf] %v2441
    %2474 = vst [vmem:[#allocation3 + $0x12c] sm:$0xf] %v2442
    %2475 = vst [vmem:[#allocation3 + $0x150] sm:$0xf] %v2443
    %2476 = vst [vmem:[#allocation3 + $0x174] sm:$0xf] %v2444
    %2477 = vst [vmem:[#allocation3 + $0x198] sm:$0xf] %v2445
    %2478 = vst [vmem:[#allocation3 + $0x1bc] sm:$0xf] %v2446
    %2479 = vst [vmem:[#allocation3 + $0x1e0] sm:$0xf] %v2447
    %2480 = vst [vmem:[#allocation3 + $0x204] sm:$0xf] %v2448
    %2481 = vst [vmem:[#allocation3 + $0x228] sm:$0xf] %v2449
    %v2482 = vpack.c.bf16 %v2311, %v2310
    %v2483 = vpack.c.bf16 %v2321, %v2320
    %v2486 = vunpack.c.l.b16 %v2482
    %v2487 = vunpack.c.h.b16 %v2482
    %v2488 = vunpack.c.l.b16 %v2483
    %v2489 = vunpack.c.h.b16 %v2483
    %v2490 = vpack.c.b16 %v2486, %v2486
    %v2491 = vpack.c.b16 %v2487, %v2487
    %v2492 = vpack.c.b16 %v2488, %v2488
    %v2493 = vpack.c.b16 %v2489, %v2489
    %2498 = vst [vmem:[#allocation3 + $0x18] sm:$0xf] %v2356
    %2499 = vst [vmem:[#allocation3 + $0x3c] sm:$0xf] %v2357
    %2500 = vst [vmem:[#allocation3 + $0x60] sm:$0xf] %v2358
    %2501 = vst [vmem:[#allocation3 + $0x84] sm:$0xf] %v2359
    %2502 = vst [vmem:[#allocation3 + $0xa8] sm:$0xf] %v2360
    %2503 = vst [vmem:[#allocation3 + $0xcc] sm:$0xf] %v2361
    %2504 = vst [vmem:[#allocation3 + $0xf0] sm:$0xf] %v2490
    %2505 = vst [vmem:[#allocation3 + $0x114] sm:$0xf] %v2491
    %2506 = vst [vmem:[#allocation3 + $0x138] sm:$0xf] %v2364
    %2507 = vst [vmem:[#allocation3 + $0x15c] sm:$0xf] %v2365
    %2508 = vst [vmem:[#allocation3 + $0x180] sm:$0xf] %v2366
    %2509 = vst [vmem:[#allocation3 + $0x1a4] sm:$0xf] %v2367
    %2510 = vst [vmem:[#allocation3 + $0x1c8] sm:$0xf] %v2368
    %2511 = vst [vmem:[#allocation3 + $0x1ec] sm:$0xf] %v2369
    %2512 = vst [vmem:[#allocation3 + $0x210] sm:$0xf] %v2492
    %2513 = vst [vmem:[#allocation3 + $0x234] sm:$0xf] %v2493
    %v2514 = vld [vmem:[#allocation2 + $0x8] sm:$0xff]
    %v2515 = vld [vmem:[#allocation2 + $0x20] sm:$0xff]
    %v2516 = vld [vmem:[#allocation2 + $0x38] sm:$0xff]
    %v2517 = vld [vmem:[#allocation2 + $0x50] sm:$0xff]
    %v2518 = vld [vmem:[#allocation2 + $0x68] sm:$0xff]
    %v2519 = vld [vmem:[#allocation2 + $0x80] sm:$0xff]
    %v2520 = vld [vmem:[#allocation2 + $0x98] sm:$0xff]
    %v2521 = vld [vmem:[#allocation2 + $0xb0] sm:$0xff]
    %v2522 = vld [vmem:[#allocation2 + $0xc8] sm:$0xff]
    %v2523 = vld [vmem:[#allocation2 + $0xe0] sm:$0xff]
    %v2524 = vld [vmem:[#allocation2 + $0xf8] sm:$0xff]
    %v2525 = vld [vmem:[#allocation2 + $0x110] sm:$0xff]
    %v2526 = vld [vmem:[#allocation2 + $0x128] sm:$0xff]
    %v2527 = vld [vmem:[#allocation2 + $0x140] sm:$0xff]
    %v2528 = vld [vmem:[#allocation2 + $0x158] sm:$0xff]
    %v2529 = vld [vmem:[#allocation2 + $0x170] sm:$0xff]
    %v2530 = vld [vmem:[#allocation2 + $0x188] sm:$0xff]
    %v2531 = vld [vmem:[#allocation2 + $0x1a0] sm:$0xff]
    %v2532 = vld [vmem:[#allocation2 + $0x1b8] sm:$0xff]
    %v2533 = vld [vmem:[#allocation2 + $0x1d0] sm:$0xff]
    %v2534 = vpack.c.bf16 %v2515, %v2514
    %v2535 = vpack.c.bf16 %v2517, %v2516
    %v2536 = vpack.c.bf16 %v2519, %v2518
    %v2537 = vpack.c.bf16 %v2521, %v2520
    %v2538 = vpack.c.bf16 %v2525, %v2524
    %v2539 = vpack.c.bf16 %v2527, %v2526
    %v2540 = vpack.c.bf16 %v2529, %v2528
    %v2541 = vpack.c.bf16 %v2531, %v2530
    %v2550 = vunpack.c.l.b16 %v2534
    %v2551 = vunpack.c.h.b16 %v2534
    %v2552 = vunpack.c.l.b16 %v2535
    %v2553 = vunpack.c.h.b16 %v2535
    %v2554 = vunpack.c.l.b16 %v2536
    %v2555 = vunpack.c.h.b16 %v2536
    %v2556 = vunpack.c.l.b16 %v2537
    %v2557 = vunpack.c.h.b16 %v2537
    %v2558 = vunpack.c.l.b16 %v2538
    %v2559 = vunpack.c.h.b16 %v2538
    %v2560 = vunpack.c.l.b16 %v2539
    %v2561 = vunpack.c.h.b16 %v2539
    %v2562 = vunpack.c.l.b16 %v2540
    %v2563 = vunpack.c.h.b16 %v2540
    %v2564 = vunpack.c.l.b16 %v2541
    %v2565 = vunpack.c.h.b16 %v2541
    %v2566 = vpack.c.b16 %v2550, %v2550
    %v2567 = vpack.c.b16 %v2551, %v2551
    %v2568 = vpack.c.b16 %v2552, %v2552
    %v2569 = vpack.c.b16 %v2553, %v2553
    %v2570 = vpack.c.b16 %v2554, %v2554
    %v2571 = vpack.c.b16 %v2555, %v2555
    %v2572 = vpack.c.b16 %v2556, %v2556
    %v2573 = vpack.c.b16 %v2557, %v2557
    %v2574 = vpack.c.b16 %v2558, %v2558
    %v2575 = vpack.c.b16 %v2559, %v2559
    %v2576 = vpack.c.b16 %v2560, %v2560
    %v2577 = vpack.c.b16 %v2561, %v2561
    %v2578 = vpack.c.b16 %v2562, %v2562
    %v2579 = vpack.c.b16 %v2563, %v2563
    %v2580 = vpack.c.b16 %v2564, %v2564
    %v2581 = vpack.c.b16 %v2565, %v2565
    %2598 = vst [vmem:[#allocation3 + $0x4] sm:$0xf] %v2566
    %2599 = vst [vmem:[#allocation3 + $0x28] sm:$0xf] %v2567
    %2600 = vst [vmem:[#allocation3 + $0x4c] sm:$0xf] %v2568
    %2601 = vst [vmem:[#allocation3 + $0x70] sm:$0xf] %v2569
    %2602 = vst [vmem:[#allocation3 + $0x94] sm:$0xf] %v2570
    %2603 = vst [vmem:[#allocation3 + $0xb8] sm:$0xf] %v2571
    %2604 = vst [vmem:[#allocation3 + $0xdc] sm:$0xf] %v2572
    %2605 = vst [vmem:[#allocation3 + $0x100] sm:$0xf] %v2573
    %2606 = vst [vmem:[#allocation3 + $0x124] sm:$0xf] %v2574
    %2607 = vst [vmem:[#allocation3 + $0x148] sm:$0xf] %v2575
    %2608 = vst [vmem:[#allocation3 + $0x16c] sm:$0xf] %v2576
    %2609 = vst [vmem:[#allocation3 + $0x190] sm:$0xf] %v2577
    %2610 = vst [vmem:[#allocation3 + $0x1b4] sm:$0xf] %v2578
    %2611 = vst [vmem:[#allocation3 + $0x1d8] sm:$0xf] %v2579
    %2612 = vst [vmem:[#allocation3 + $0x1fc] sm:$0xf] %v2580
    %2613 = vst [vmem:[#allocation3 + $0x220] sm:$0xf] %v2581
    %v2614 = vpack.c.bf16 %v2516, %v2515
    %v2615 = vpack.c.bf16 %v2518, %v2517
    %v2616 = vpack.c.bf16 %v2520, %v2519
    %v2617 = vpack.c.bf16 %v2522, %v2521
    %v2618 = vpack.c.bf16 %v2526, %v2525
    %v2619 = vpack.c.bf16 %v2528, %v2527
    %v2620 = vpack.c.bf16 %v2530, %v2529
    %v2621 = vpack.c.bf16 %v2532, %v2531
    %v2630 = vunpack.c.l.b16 %v2614
    %v2631 = vunpack.c.h.b16 %v2614
    %v2632 = vunpack.c.l.b16 %v2615
    %v2633 = vunpack.c.h.b16 %v2615
    %v2634 = vunpack.c.l.b16 %v2616
    %v2635 = vunpack.c.h.b16 %v2616
    %v2636 = vunpack.c.l.b16 %v2617
    %v2637 = vunpack.c.h.b16 %v2617
    %v2638 = vunpack.c.l.b16 %v2618
    %v2639 = vunpack.c.h.b16 %v2618
    %v2640 = vunpack.c.l.b16 %v2619
    %v2641 = vunpack.c.h.b16 %v2619
    %v2642 = vunpack.c.l.b16 %v2620
    %v2643 = vunpack.c.h.b16 %v2620
    %v2644 = vunpack.c.l.b16 %v2621
    %v2645 = vunpack.c.h.b16 %v2621
    %v2646 = vpack.c.b16 %v2630, %v2630
    %v2647 = vpack.c.b16 %v2631, %v2631
    %v2648 = vpack.c.b16 %v2632, %v2632
    %v2649 = vpack.c.b16 %v2633, %v2633
    %v2650 = vpack.c.b16 %v2634, %v2634
    %v2651 = vpack.c.b16 %v2635, %v2635
    %v2652 = vpack.c.b16 %v2636, %v2636
    %v2653 = vpack.c.b16 %v2637, %v2637
    %v2654 = vpack.c.b16 %v2638, %v2638
    %v2655 = vpack.c.b16 %v2639, %v2639
    %v2656 = vpack.c.b16 %v2640, %v2640
    %v2657 = vpack.c.b16 %v2641, %v2641
    %v2658 = vpack.c.b16 %v2642, %v2642
    %v2659 = vpack.c.b16 %v2643, %v2643
    %v2660 = vpack.c.b16 %v2644, %v2644
    %v2661 = vpack.c.b16 %v2645, %v2645
    %2678 = vst [vmem:[#allocation3 + $0x10] sm:$0xf] %v2646
    %2679 = vst [vmem:[#allocation3 + $0x34] sm:$0xf] %v2647
    %2680 = vst [vmem:[#allocation3 + $0x58] sm:$0xf] %v2648
    %2681 = vst [vmem:[#allocation3 + $0x7c] sm:$0xf] %v2649
    %2682 = vst [vmem:[#allocation3 + $0xa0] sm:$0xf] %v2650
    %2683 = vst [vmem:[#allocation3 + $0xc4] sm:$0xf] %v2651
    %2684 = vst [vmem:[#allocation3 + $0xe8] sm:$0xf] %v2652
    %2685 = vst [vmem:[#allocation3 + $0x10c] sm:$0xf] %v2653
    %2686 = vst [vmem:[#allocation3 + $0x130] sm:$0xf] %v2654
    %2687 = vst [vmem:[#allocation3 + $0x154] sm:$0xf] %v2655
    %2688 = vst [vmem:[#allocation3 + $0x178] sm:$0xf] %v2656
    %2689 = vst [vmem:[#allocation3 + $0x19c] sm:$0xf] %v2657
    %2690 = vst [vmem:[#allocation3 + $0x1c0] sm:$0xf] %v2658
    %2691 = vst [vmem:[#allocation3 + $0x1e4] sm:$0xf] %v2659
    %2692 = vst [vmem:[#allocation3 + $0x208] sm:$0xf] %v2660
    %2693 = vst [vmem:[#allocation3 + $0x22c] sm:$0xf] %v2661
    %v2694 = vpack.c.bf16 %v2523, %v2522
    %v2695 = vpack.c.bf16 %v2533, %v2532
    %v2698 = vunpack.c.l.b16 %v2694
    %v2699 = vunpack.c.h.b16 %v2694
    %v2700 = vunpack.c.l.b16 %v2695
    %v2701 = vunpack.c.h.b16 %v2695
    %v2702 = vpack.c.b16 %v2698, %v2698
    %v2703 = vpack.c.b16 %v2699, %v2699
    %v2704 = vpack.c.b16 %v2700, %v2700
    %v2705 = vpack.c.b16 %v2701, %v2701
    %2710 = vst [vmem:[#allocation3 + $0x1c] sm:$0xf] %v2568
    %2711 = vst [vmem:[#allocation3 + $0x40] sm:$0xf] %v2569
    %2712 = vst [vmem:[#allocation3 + $0x64] sm:$0xf] %v2570
    %2713 = vst [vmem:[#allocation3 + $0x88] sm:$0xf] %v2571
    %2714 = vst [vmem:[#allocation3 + $0xac] sm:$0xf] %v2572
    %2715 = vst [vmem:[#allocation3 + $0xd0] sm:$0xf] %v2573
    %2716 = vst [vmem:[#allocation3 + $0xf4] sm:$0xf] %v2702
    %2717 = vst [vmem:[#allocation3 + $0x118] sm:$0xf] %v2703
    %2718 = vst [vmem:[#allocation3 + $0x13c] sm:$0xf] %v2576
    %2719 = vst [vmem:[#allocation3 + $0x160] sm:$0xf] %v2577
    %2720 = vst [vmem:[#allocation3 + $0x184] sm:$0xf] %v2578
    %2721 = vst [vmem:[#allocation3 + $0x1a8] sm:$0xf] %v2579
    %2722 = vst [vmem:[#allocation3 + $0x1cc] sm:$0xf] %v2580
    %2723 = vst [vmem:[#allocation3 + $0x1f0] sm:$0xf] %v2581
    %2724 = vst [vmem:[#allocation3 + $0x214] sm:$0xf] %v2704
    %2725 = vst [vmem:[#allocation3 + $0x238] sm:$0xf] %v2705
    %v2726 = vld [vmem:[#allocation2 + $0x9] sm:$0xff]
    %v2727 = vld [vmem:[#allocation2 + $0x21] sm:$0xff]
    %v2728 = vld [vmem:[#allocation2 + $0x39] sm:$0xff]
    %v2729 = vld [vmem:[#allocation2 + $0x51] sm:$0xff]
    %v2730 = vld [vmem:[#allocation2 + $0x69] sm:$0xff]
    %v2731 = vld [vmem:[#allocation2 + $0x81] sm:$0xff]
    %v2732 = vld [vmem:[#allocation2 + $0x99] sm:$0xff]
    %v2733 = vld [vmem:[#allocation2 + $0xb1] sm:$0xff]
    %v2734 = vld [vmem:[#allocation2 + $0xc9] sm:$0xff]
    %v2735 = vld [vmem:[#allocation2 + $0xe1] sm:$0xff]
    %v2736 = vld [vmem:[#allocation2 + $0xf9] sm:$0xff]
    %v2737 = vld [vmem:[#allocation2 + $0x111] sm:$0xff]
    %v2738 = vld [vmem:[#allocation2 + $0x129] sm:$0xff]
    %v2739 = vld [vmem:[#allocation2 + $0x141] sm:$0xff]
    %v2740 = vld [vmem:[#allocation2 + $0x159] sm:$0xff]
    %v2741 = vld [vmem:[#allocation2 + $0x171] sm:$0xff]
    %v2742 = vld [vmem:[#allocation2 + $0x189] sm:$0xff]
    %v2743 = vld [vmem:[#allocation2 + $0x1a1] sm:$0xff]
    %v2744 = vld [vmem:[#allocation2 + $0x1b9] sm:$0xff]
    %v2745 = vld [vmem:[#allocation2 + $0x1d1] sm:$0xff]
    %v2746 = vpack.c.bf16 %v2727, %v2726
    %v2747 = vpack.c.bf16 %v2729, %v2728
    %v2748 = vpack.c.bf16 %v2731, %v2730
    %v2749 = vpack.c.bf16 %v2733, %v2732
    %v2750 = vpack.c.bf16 %v2737, %v2736
    %v2751 = vpack.c.bf16 %v2739, %v2738
    %v2752 = vpack.c.bf16 %v2741, %v2740
    %v2753 = vpack.c.bf16 %v2743, %v2742
    %v2762 = vunpack.c.l.b16 %v2746
    %v2763 = vunpack.c.h.b16 %v2746
    %v2764 = vunpack.c.l.b16 %v2747
    %v2765 = vunpack.c.h.b16 %v2747
    %v2766 = vunpack.c.l.b16 %v2748
    %v2767 = vunpack.c.h.b16 %v2748
    %v2768 = vunpack.c.l.b16 %v2749
    %v2769 = vunpack.c.h.b16 %v2749
    %v2770 = vunpack.c.l.b16 %v2750
    %v2771 = vunpack.c.h.b16 %v2750
    %v2772 = vunpack.c.l.b16 %v2751
    %v2773 = vunpack.c.h.b16 %v2751
    %v2774 = vunpack.c.l.b16 %v2752
    %v2775 = vunpack.c.h.b16 %v2752
    %v2776 = vunpack.c.l.b16 %v2753
    %v2777 = vunpack.c.h.b16 %v2753
    %v2778 = vpack.c.b16 %v2762, %v2762
    %v2779 = vpack.c.b16 %v2763, %v2763
    %v2780 = vpack.c.b16 %v2764, %v2764
    %v2781 = vpack.c.b16 %v2765, %v2765
    %v2782 = vpack.c.b16 %v2766, %v2766
    %v2783 = vpack.c.b16 %v2767, %v2767
    %v2784 = vpack.c.b16 %v2768, %v2768
    %v2785 = vpack.c.b16 %v2769, %v2769
    %v2786 = vpack.c.b16 %v2770, %v2770
    %v2787 = vpack.c.b16 %v2771, %v2771
    %v2788 = vpack.c.b16 %v2772, %v2772
    %v2789 = vpack.c.b16 %v2773, %v2773
    %v2790 = vpack.c.b16 %v2774, %v2774
    %v2791 = vpack.c.b16 %v2775, %v2775
    %v2792 = vpack.c.b16 %v2776, %v2776
    %v2793 = vpack.c.b16 %v2777, %v2777
    %2810 = vst [vmem:[#allocation3 + $0x8] sm:$0xf] %v2778
    %2811 = vst [vmem:[#allocation3 + $0x2c] sm:$0xf] %v2779
    %2812 = vst [vmem:[#allocation3 + $0x50] sm:$0xf] %v2780
    %2813 = vst [vmem:[#allocation3 + $0x74] sm:$0xf] %v2781
    %2814 = vst [vmem:[#allocation3 + $0x98] sm:$0xf] %v2782
    %2815 = vst [vmem:[#allocation3 + $0xbc] sm:$0xf] %v2783
    %2816 = vst [vmem:[#allocation3 + $0xe0] sm:$0xf] %v2784
    %2817 = vst [vmem:[#allocation3 + $0x104] sm:$0xf] %v2785
    %2818 = vst [vmem:[#allocation3 + $0x128] sm:$0xf] %v2786
    %2819 = vst [vmem:[#allocation3 + $0x14c] sm:$0xf] %v2787
    %2820 = vst [vmem:[#allocation3 + $0x170] sm:$0xf] %v2788
    %2821 = vst [vmem:[#allocation3 + $0x194] sm:$0xf] %v2789
    %2822 = vst [vmem:[#allocation3 + $0x1b8] sm:$0xf] %v2790
    %2823 = vst [vmem:[#allocation3 + $0x1dc] sm:$0xf] %v2791
    %2824 = vst [vmem:[#allocation3 + $0x200] sm:$0xf] %v2792
    %2825 = vst [vmem:[#allocation3 + $0x224] sm:$0xf] %v2793
    %v2826 = vpack.c.bf16 %v2728, %v2727
    %v2827 = vpack.c.bf16 %v2730, %v2729
    %v2828 = vpack.c.bf16 %v2732, %v2731
    %v2829 = vpack.c.bf16 %v2734, %v2733
    %v2830 = vpack.c.bf16 %v2738, %v2737
    %v2831 = vpack.c.bf16 %v2740, %v2739
    %v2832 = vpack.c.bf16 %v2742, %v2741
    %v2833 = vpack.c.bf16 %v2744, %v2743
    %v2842 = vunpack.c.l.b16 %v2826
    %v2843 = vunpack.c.h.b16 %v2826
    %v2844 = vunpack.c.l.b16 %v2827
    %v2845 = vunpack.c.h.b16 %v2827
    %v2846 = vunpack.c.l.b16 %v2828
    %v2847 = vunpack.c.h.b16 %v2828
    %v2848 = vunpack.c.l.b16 %v2829
    %v2849 = vunpack.c.h.b16 %v2829
    %v2850 = vunpack.c.l.b16 %v2830
    %v2851 = vunpack.c.h.b16 %v2830
    %v2852 = vunpack.c.l.b16 %v2831
    %v2853 = vunpack.c.h.b16 %v2831
    %v2854 = vunpack.c.l.b16 %v2832
    %v2855 = vunpack.c.h.b16 %v2832
    %v2856 = vunpack.c.l.b16 %v2833
    %v2857 = vunpack.c.h.b16 %v2833
    %v2858 = vpack.c.b16 %v2842, %v2842
    %v2859 = vpack.c.b16 %v2843, %v2843
    %v2860 = vpack.c.b16 %v2844, %v2844
    %v2861 = vpack.c.b16 %v2845, %v2845
    %v2862 = vpack.c.b16 %v2846, %v2846
    %v2863 = vpack.c.b16 %v2847, %v2847
    %v2864 = vpack.c.b16 %v2848, %v2848
    %v2865 = vpack.c.b16 %v2849, %v2849
    %v2866 = vpack.c.b16 %v2850, %v2850
    %v2867 = vpack.c.b16 %v2851, %v2851
    %v2868 = vpack.c.b16 %v2852, %v2852
    %v2869 = vpack.c.b16 %v2853, %v2853
    %v2870 = vpack.c.b16 %v2854, %v2854
    %v2871 = vpack.c.b16 %v2855, %v2855
    %v2872 = vpack.c.b16 %v2856, %v2856
    %v2873 = vpack.c.b16 %v2857, %v2857
    %2890 = vst [vmem:[#allocation3 + $0x14] sm:$0xf] %v2858
    %2891 = vst [vmem:[#allocation3 + $0x38] sm:$0xf] %v2859
    %2892 = vst [vmem:[#allocation3 + $0x5c] sm:$0xf] %v2860
    %2893 = vst [vmem:[#allocation3 + $0x80] sm:$0xf] %v2861
    %2894 = vst [vmem:[#allocation3 + $0xa4] sm:$0xf] %v2862
    %2895 = vst [vmem:[#allocation3 + $0xc8] sm:$0xf] %v2863
    %2896 = vst [vmem:[#allocation3 + $0xec] sm:$0xf] %v2864
    %2897 = vst [vmem:[#allocation3 + $0x110] sm:$0xf] %v2865
    %2898 = vst [vmem:[#allocation3 + $0x134] sm:$0xf] %v2866
    %2899 = vst [vmem:[#allocation3 + $0x158] sm:$0xf] %v2867
    %2900 = vst [vmem:[#allocation3 + $0x17c] sm:$0xf] %v2868
    %2901 = vst [vmem:[#allocation3 + $0x1a0] sm:$0xf] %v2869
    %2902 = vst [vmem:[#allocation3 + $0x1c4] sm:$0xf] %v2870
    %2903 = vst [vmem:[#allocation3 + $0x1e8] sm:$0xf] %v2871
    %2904 = vst [vmem:[#allocation3 + $0x20c] sm:$0xf] %v2872
    %2905 = vst [vmem:[#allocation3 + $0x230] sm:$0xf] %v2873
    %v2906 = vpack.c.bf16 %v2735, %v2734
    %v2907 = vpack.c.bf16 %v2745, %v2744
    %v2910 = vunpack.c.l.b16 %v2906
    %v2911 = vunpack.c.h.b16 %v2906
    %v2912 = vunpack.c.l.b16 %v2907
    %v2913 = vunpack.c.h.b16 %v2907
    %v2914 = vpack.c.b16 %v2910, %v2910
    %v2915 = vpack.c.b16 %v2911, %v2911
    %v2916 = vpack.c.b16 %v2912, %v2912
    %v2917 = vpack.c.b16 %v2913, %v2913
    %2922 = vst [vmem:[#allocation3 + $0x20] sm:$0xf] %v2780
    %2923 = vst [vmem:[#allocation3 + $0x44] sm:$0xf] %v2781
    %2924 = vst [vmem:[#allocation3 + $0x68] sm:$0xf] %v2782
    %2925 = vst [vmem:[#allocation3 + $0x8c] sm:$0xf] %v2783
    %2926 = vst [vmem:[#allocation3 + $0xb0] sm:$0xf] %v2784
    %2927 = vst [vmem:[#allocation3 + $0xd4] sm:$0xf] %v2785
    %2928 = vst [vmem:[#allocation3 + $0xf8] sm:$0xf] %v2914
    %2929 = vst [vmem:[#allocation3 + $0x11c] sm:$0xf] %v2915
    %2930 = vst [vmem:[#allocation3 + $0x140] sm:$0xf] %v2788
    %2931 = vst [vmem:[#allocation3 + $0x164] sm:$0xf] %v2789
    %2932 = vst [vmem:[#allocation3 + $0x188] sm:$0xf] %v2790
    %2933 = vst [vmem:[#allocation3 + $0x1ac] sm:$0xf] %v2791
    %2934 = vst [vmem:[#allocation3 + $0x1d0] sm:$0xf] %v2792
    %2935 = vst [vmem:[#allocation3 + $0x1f4] sm:$0xf] %v2793
    %2936 = vst [vmem:[#allocation3 + $0x218] sm:$0xf] %v2916
    %2937 = vst [vmem:[#allocation3 + $0x23c] sm:$0xf] %v2917
    %v2938 = vld [vmem:[#allocation3] sm:$0xff]
    %v2939 = vld [vmem:[#allocation3 + $0x8] sm:$0xff]
    %v2940 = vld [vmem:[#allocation3 + $0x10] sm:$0xff]
    %v2941 = vld [vmem:[#allocation3 + $0x18] sm:$0xff]
    %v2942 = vld [vmem:[#allocation3 + $0x20] sm:$0xf]
    %v2943 = vld [vmem:[#allocation3 + $0x24] sm:$0xff]
    %v2944 = vld [vmem:[#allocation3 + $0x2c] sm:$0xff]
    %v2945 = vld [vmem:[#allocation3 + $0x34] sm:$0xff]
    %v2946 = vld [vmem:[#allocation3 + $0x3c] sm:$0xff]
    %v2947 = vld [vmem:[#allocation3 + $0x44] sm:$0xf]
    %v2948 = vld [vmem:[#allocation3 + $0x48] sm:$0xff]
    %v2949 = vld [vmem:[#allocation3 + $0x50] sm:$0xff]
    %v2950 = vld [vmem:[#allocation3 + $0x58] sm:$0xff]
    %v2951 = vld [vmem:[#allocation3 + $0x60] sm:$0xff]
    %v2952 = vld [vmem:[#allocation3 + $0x68] sm:$0xf]
    %v2953 = vld [vmem:[#allocation3 + $0x6c] sm:$0xff]
    %v2954 = vld [vmem:[#allocation3 + $0x74] sm:$0xff]
    %v2955 = vld [vmem:[#allocation3 + $0x7c] sm:$0xff]
    %v2956 = vld [vmem:[#allocation3 + $0x84] sm:$0xff]
    %v2957 = vld [vmem:[#allocation3 + $0x8c] sm:$0xf]
    %v2958 = vld [vmem:[#allocation3 + $0x90] sm:$0xff]
    %v2959 = vld [vmem:[#allocation3 + $0x98] sm:$0xff]
    %v2960 = vld [vmem:[#allocation3 + $0xa0] sm:$0xff]
    %v2961 = vld [vmem:[#allocation3 + $0xa8] sm:$0xff]
    %v2962 = vld [vmem:[#allocation3 + $0xb0] sm:$0xf]
    %v2963 = vld [vmem:[#allocation3 + $0xb4] sm:$0xff]
    %v2964 = vld [vmem:[#allocation3 + $0xbc] sm:$0xff]
    %v2965 = vld [vmem:[#allocation3 + $0xc4] sm:$0xff]
    %v2966 = vld [vmem:[#allocation3 + $0xcc] sm:$0xff]
    %v2967 = vld [vmem:[#allocation3 + $0xd4] sm:$0xf]
    %v2968 = vld [vmem:[#allocation3 + $0xd8] sm:$0xff]
    %v2969 = vld [vmem:[#allocation3 + $0xe0] sm:$0xff]
    %v2970 = vld [vmem:[#allocation3 + $0xe8] sm:$0xff]
    %v2971 = vld [vmem:[#allocation3 + $0xf0] sm:$0xff]
    %v2972 = vld [vmem:[#allocation3 + $0xf8] sm:$0xf]
    %v2973 = vld [vmem:[#allocation3 + $0xfc] sm:$0xff]
    %v2974 = vld [vmem:[#allocation3 + $0x104] sm:$0xff]
    %v2975 = vld [vmem:[#allocation3 + $0x10c] sm:$0xff]
    %v2976 = vld [vmem:[#allocation3 + $0x114] sm:$0xff]
    %v2977 = vld [vmem:[#allocation3 + $0x11c] sm:$0xf]
    %v2978 = vld [vmem:[#allocation3 + $0x120] sm:$0xff]
    %v2979 = vld [vmem:[#allocation3 + $0x128] sm:$0xff]
    %v2980 = vld [vmem:[#allocation3 + $0x130] sm:$0xff]
    %v2981 = vld [vmem:[#allocation3 + $0x138] sm:$0xff]
    %v2982 = vld [vmem:[#allocation3 + $0x140] sm:$0xf]
    %v2983 = vld [vmem:[#allocation3 + $0x144] sm:$0xff]
    %v2984 = vld [vmem:[#allocation3 + $0x14c] sm:$0xff]
    %v2985 = vld [vmem:[#allocation3 + $0x154] sm:$0xff]
    %v2986 = vld [vmem:[#allocation3 + $0x15c] sm:$0xff]
    %v2987 = vld [vmem:[#allocation3 + $0x164] sm:$0xf]
    %v2988 = vld [vmem:[#allocation3 + $0x168] sm:$0xff]
    %v2989 = vld [vmem:[#allocation3 + $0x170] sm:$0xff]
    %v2990 = vld [vmem:[#allocation3 + $0x178] sm:$0xff]
    %v2991 = vld [vmem:[#allocation3 + $0x180] sm:$0xff]
    %v2992 = vld [vmem:[#allocation3 + $0x188] sm:$0xf]
    %v2993 = vld [vmem:[#allocation3 + $0x18c] sm:$0xff]
    %v2994 = vld [vmem:[#allocation3 + $0x194] sm:$0xff]
    %v2995 = vld [vmem:[#allocation3 + $0x19c] sm:$0xff]
    %v2996 = vld [vmem:[#allocation3 + $0x1a4] sm:$0xff]
    %v2997 = vld [vmem:[#allocation3 + $0x1ac] sm:$0xf]
    %v2998 = vld [vmem:[#allocation3 + $0x1b0] sm:$0xff]
    %v2999 = vld [vmem:[#allocation3 + $0x1b8] sm:$0xff]
    %v3000 = vld [vmem:[#allocation3 + $0x1c0] sm:$0xff]
    %v3001 = vld [vmem:[#allocation3 + $0x1c8] sm:$0xff]
    %v3002 = vld [vmem:[#allocation3 + $0x1d0] sm:$0xf]
    %v3003 = vld [vmem:[#allocation3 + $0x1d4] sm:$0xff]
    %v3004 = vld [vmem:[#allocation3 + $0x1dc] sm:$0xff]
    %v3005 = vld [vmem:[#allocation3 + $0x1e4] sm:$0xff]
    %v3006 = vld [vmem:[#allocation3 + $0x1ec] sm:$0xff]
    %v3007 = vld [vmem:[#allocation3 + $0x1f4] sm:$0xf]
    %v3008 = vld [vmem:[#allocation3 + $0x1f8] sm:$0xff]
    %v3009 = vld [vmem:[#allocation3 + $0x200] sm:$0xff]
    %v3010 = vld [vmem:[#allocation3 + $0x208] sm:$0xff]
    %v3011 = vld [vmem:[#allocation3 + $0x210] sm:$0xff]
    %v3012 = vld [vmem:[#allocation3 + $0x218] sm:$0xf]
    %v3013 = vld [vmem:[#allocation3 + $0x21c] sm:$0xff]
    %v3014 = vld [vmem:[#allocation3 + $0x224] sm:$0xff]
    %v3015 = vld [vmem:[#allocation3 + $0x22c] sm:$0xff]
    %v3016 = vld [vmem:[#allocation3 + $0x234] sm:$0xff]
    %v3017 = vld [vmem:[#allocation3 + $0x23c] sm:$0xf]
    %s3018 = scalar_lea.vmem [#allocation4], 576
    %v3019 = vld [vmem:[%s3018] sm:$0xf]
    %v3020 = vld [vmem:[%s3018 + $0x4] sm:$0xf]
    %v3021 = vld [vmem:[%s3018 + $0x8] sm:$0xf]
    %v3022 = vld [vmem:[%s3018 + $0xc] sm:$0xf]
    %v3023 = vld [vmem:[%s3018 + $0x10] sm:$0xf]
    %v3024 = vld [vmem:[%s3018 + $0x14] sm:$0xf]
    %v3025 = vld [vmem:[%s3018 + $0x18] sm:$0xf]
    %v3026 = vld [vmem:[%s3018 + $0x1c] sm:$0xf]
    %v3027 = vld [vmem:[%s3018 + $0x20] sm:$0xf]
    %v3028 = vld [vmem:[%s3018 + $0x24] sm:$0xf]
    %v3029 = vld [vmem:[%s3018 + $0x28] sm:$0xf]
    %v3030 = vld [vmem:[%s3018 + $0x2c] sm:$0xf]
    %v3031 = vld [vmem:[%s3018 + $0x30] sm:$0xf]
    %v3032 = vld [vmem:[%s3018 + $0x34] sm:$0xf]
    %v3033 = vld [vmem:[%s3018 + $0x38] sm:$0xf]
    %v3034 = vld [vmem:[%s3018 + $0x3c] sm:$0xf]
    %v3035 = vld [vmem:[%s3018 + $0x40] sm:$0xf]
    %v3036 = vld [vmem:[%s3018 + $0x44] sm:$0xf]
    %v3037 = vld [vmem:[%s3018 + $0x48] sm:$0xf]
    %v3038 = vld [vmem:[%s3018 + $0x4c] sm:$0xf]
    %v3039 = vld [vmem:[%s3018 + $0x50] sm:$0xf]
    %v3040 = vld [vmem:[%s3018 + $0x54] sm:$0xf]
    %v3041 = vld [vmem:[%s3018 + $0x58] sm:$0xf]
    %v3042 = vld [vmem:[%s3018 + $0x5c] sm:$0xf]
    %v3043 = vld [vmem:[%s3018 + $0x60] sm:$0xf]
    %v3044 = vld [vmem:[%s3018 + $0x64] sm:$0xf]
    %v3045 = vld [vmem:[%s3018 + $0x68] sm:$0xf]
    %v3046 = vld [vmem:[%s3018 + $0x6c] sm:$0xf]
    %v3047 = vld [vmem:[%s3018 + $0x70] sm:$0xf]
    %v3048 = vld [vmem:[%s3018 + $0x74] sm:$0xf]
    %v3049 = vld [vmem:[%s3018 + $0x78] sm:$0xf]
    %v3050 = vld [vmem:[%s3018 + $0x7c] sm:$0xf]
    %v3051 = vld [vmem:[%s3018 + $0x80] sm:$0xf]
    %v3052 = vld [vmem:[%s3018 + $0x84] sm:$0xf]
    %v3053 = vld [vmem:[%s3018 + $0x88] sm:$0xf]
    %v3054 = vld [vmem:[%s3018 + $0x8c] sm:$0xf]
    %v3055 = vld [vmem:[%s3018 + $0x90] sm:$0xf]
    %v3056 = vld [vmem:[%s3018 + $0x94] sm:$0xf]
    %v3057 = vld [vmem:[%s3018 + $0x98] sm:$0xf]
    %v3058 = vld [vmem:[%s3018 + $0x9c] sm:$0xf]
    %v3059 = vld [vmem:[%s3018 + $0xa0] sm:$0xf]
    %v3060 = vld [vmem:[%s3018 + $0xa4] sm:$0xf]
    %v3061 = vld [vmem:[%s3018 + $0xa8] sm:$0xf]
    %v3062 = vld [vmem:[%s3018 + $0xac] sm:$0xf]
    %v3063 = vld [vmem:[%s3018 + $0xb0] sm:$0xf]
    %v3064 = vld [vmem:[%s3018 + $0xb4] sm:$0xf]
    %v3065 = vld [vmem:[%s3018 + $0xb8] sm:$0xf]
    %v3066 = vld [vmem:[%s3018 + $0xbc] sm:$0xf]
    %v3067 = vld [vmem:[%s3018 + $0xc0] sm:$0xf]
    %v3068 = vld [vmem:[%s3018 + $0xc4] sm:$0xf]
    %v3069 = vld [vmem:[%s3018 + $0xc8] sm:$0xf]
    %v3070 = vld [vmem:[%s3018 + $0xcc] sm:$0xf]
    %v3071 = vld [vmem:[%s3018 + $0xd0] sm:$0xf]
    %v3072 = vld [vmem:[%s3018 + $0xd4] sm:$0xf]
    %v3073 = vld [vmem:[%s3018 + $0xd8] sm:$0xf]
    %v3074 = vld [vmem:[%s3018 + $0xdc] sm:$0xf]
    %v3075 = vld [vmem:[%s3018 + $0xe0] sm:$0xf]
    %v3076 = vld [vmem:[%s3018 + $0xe4] sm:$0xf]
    %v3077 = vld [vmem:[%s3018 + $0xe8] sm:$0xf]
    %v3078 = vld [vmem:[%s3018 + $0xec] sm:$0xf]
    %v3079 = vld [vmem:[%s3018 + $0xf0] sm:$0xf]
    %v3080 = vld [vmem:[%s3018 + $0xf4] sm:$0xf]
    %v3081 = vld [vmem:[%s3018 + $0xf8] sm:$0xf]
    %v3082 = vld [vmem:[%s3018 + $0xfc] sm:$0xf]
    %v3083 = vld [vmem:[%s3018 + $0x100] sm:$0xf]
    %v3084 = vld [vmem:[%s3018 + $0x104] sm:$0xf]
    %v3085 = vld [vmem:[%s3018 + $0x108] sm:$0xf]
    %v3086 = vld [vmem:[%s3018 + $0x10c] sm:$0xf]
    %v3087 = vld [vmem:[%s3018 + $0x110] sm:$0xf]
    %v3088 = vld [vmem:[%s3018 + $0x114] sm:$0xf]
    %v3089 = vld [vmem:[%s3018 + $0x118] sm:$0xf]
    %v3090 = vld [vmem:[%s3018 + $0x11c] sm:$0xf]
    %v3091 = vld [vmem:[%s3018 + $0x120] sm:$0xf]
    %v3092 = vld [vmem:[%s3018 + $0x124] sm:$0xf]
    %v3093 = vld [vmem:[%s3018 + $0x128] sm:$0xf]
    %v3094 = vld [vmem:[%s3018 + $0x12c] sm:$0xf]
    %v3095 = vld [vmem:[%s3018 + $0x130] sm:$0xf]
    %v3096 = vld [vmem:[%s3018 + $0x134] sm:$0xf]
    %v3097 = vld [vmem:[%s3018 + $0x138] sm:$0xf]
    %v3098 = vld [vmem:[%s3018 + $0x13c] sm:$0xf]
    %v3099 = vld [vmem:[%s3018 + $0x140] sm:$0xf]
    %v3100 = vld [vmem:[%s3018 + $0x144] sm:$0xf]
    %v3101 = vld [vmem:[%s3018 + $0x148] sm:$0xf]
    %v3102 = vld [vmem:[%s3018 + $0x14c] sm:$0xf]
    %v3103 = vld [vmem:[%s3018 + $0x150] sm:$0xf]
    %v3104 = vld [vmem:[%s3018 + $0x154] sm:$0xf]
    %v3105 = vld [vmem:[%s3018 + $0x158] sm:$0xf]
    %v3106 = vld [vmem:[%s3018 + $0x15c] sm:$0xf]
    %v3107 = vld [vmem:[%s3018 + $0x160] sm:$0xf]
    %v3108 = vld [vmem:[%s3018 + $0x164] sm:$0xf]
    %v3109 = vld [vmem:[%s3018 + $0x168] sm:$0xf]
    %v3110 = vld [vmem:[%s3018 + $0x16c] sm:$0xf]
    %v3111 = vld [vmem:[%s3018 + $0x170] sm:$0xf]
    %v3112 = vld [vmem:[%s3018 + $0x174] sm:$0xf]
    %v3113 = vld [vmem:[%s3018 + $0x178] sm:$0xf]
    %v3114 = vld [vmem:[%s3018 + $0x17c] sm:$0xf]
    %v3115 = vld [vmem:[%s3018 + $0x180] sm:$0xf]
    %v3116 = vld [vmem:[%s3018 + $0x184] sm:$0xf]
    %v3117 = vld [vmem:[%s3018 + $0x188] sm:$0xf]
    %v3118 = vld [vmem:[%s3018 + $0x18c] sm:$0xf]
    %v3119 = vld [vmem:[%s3018 + $0x190] sm:$0xf]
    %v3120 = vld [vmem:[%s3018 + $0x194] sm:$0xf]
    %v3121 = vld [vmem:[%s3018 + $0x198] sm:$0xf]
    %v3122 = vld [vmem:[%s3018 + $0x19c] sm:$0xf]
    %v3123 = vld [vmem:[%s3018 + $0x1a0] sm:$0xf]
    %v3124 = vld [vmem:[%s3018 + $0x1a4] sm:$0xf]
    %v3125 = vld [vmem:[%s3018 + $0x1a8] sm:$0xf]
    %v3126 = vld [vmem:[%s3018 + $0x1ac] sm:$0xf]
    %v3127 = vld [vmem:[%s3018 + $0x1b0] sm:$0xf]
    %v3128 = vld [vmem:[%s3018 + $0x1b4] sm:$0xf]
    %v3129 = vld [vmem:[%s3018 + $0x1b8] sm:$0xf]
    %v3130 = vld [vmem:[%s3018 + $0x1bc] sm:$0xf]
    %v3131 = vld [vmem:[%s3018 + $0x1c0] sm:$0xf]
    %v3132 = vld [vmem:[%s3018 + $0x1c4] sm:$0xf]
    %v3133 = vld [vmem:[%s3018 + $0x1c8] sm:$0xf]
    %v3134 = vld [vmem:[%s3018 + $0x1cc] sm:$0xf]
    %v3135 = vld [vmem:[%s3018 + $0x1d0] sm:$0xf]
    %v3136 = vld [vmem:[%s3018 + $0x1d4] sm:$0xf]
    %v3137 = vld [vmem:[%s3018 + $0x1d8] sm:$0xf]
    %v3138 = vld [vmem:[%s3018 + $0x1dc] sm:$0xf]
    %v3139 = vld [vmem:[%s3018 + $0x1e0] sm:$0xf]
    %v3140 = vld [vmem:[%s3018 + $0x1e4] sm:$0xf]
    %v3141 = vld [vmem:[%s3018 + $0x1e8] sm:$0xf]
    %v3142 = vld [vmem:[%s3018 + $0x1ec] sm:$0xf]
    %v3143 = vld [vmem:[%s3018 + $0x1f0] sm:$0xf]
    %v3144 = vld [vmem:[%s3018 + $0x1f4] sm:$0xf]
    %v3145 = vld [vmem:[%s3018 + $0x1f8] sm:$0xf]
    %v3146 = vld [vmem:[%s3018 + $0x1fc] sm:$0xf]
    %v3147 = vld [vmem:[%s3018 + $0x200] sm:$0xf]
    %v3148 = vld [vmem:[%s3018 + $0x204] sm:$0xf]
    %v3149 = vld [vmem:[%s3018 + $0x208] sm:$0xf]
    %v3150 = vld [vmem:[%s3018 + $0x20c] sm:$0xf]
    %v3151 = vld [vmem:[%s3018 + $0x210] sm:$0xf]
    %v3152 = vld [vmem:[%s3018 + $0x214] sm:$0xf]
    %v3153 = vld [vmem:[%s3018 + $0x218] sm:$0xf]
    %v3154 = vld [vmem:[%s3018 + $0x21c] sm:$0xf]
    %v3155 = vld [vmem:[%s3018 + $0x220] sm:$0xf]
    %v3156 = vld [vmem:[%s3018 + $0x224] sm:$0xf]
    %v3157 = vld [vmem:[%s3018 + $0x228] sm:$0xf]
    %v3158 = vld [vmem:[%s3018 + $0x22c] sm:$0xf]
    %v3159 = vld [vmem:[%s3018 + $0x230] sm:$0xf]
    %v3160 = vld [vmem:[%s3018 + $0x234] sm:$0xf]
    %v3161 = vld [vmem:[%s3018 + $0x238] sm:$0xf]
    %v3162 = vld [vmem:[%s3018 + $0x23c] sm:$0xf]
    %v3163 = vld [vmem:[%s2 + $0x1] sm:$0x1]
    %v3164 = vlaneseq
    %v3165 = vshrl.u32 %v3164, 7
    %v3166 = vsub.s32 0, %v3165
    %v3167 = vrot.slane %v3163, %v3166
    %v3248 = vunpack.c.l.b16 %v2938
    %v3249 = vunpack.c.h.b16 %v2938
    %v3250 = vunpack.c.l.b16 %v2939
    %v3251 = vunpack.c.h.b16 %v2939
    %v3252 = vunpack.c.l.b16 %v2940
    %v3253 = vunpack.c.h.b16 %v2940
    %v3254 = vunpack.c.l.b16 %v2941
    %v3255 = vunpack.c.h.b16 %v2941
    %v3256 = vunpack.c.l.b16 %v2942
    %v3257 = vunpack.c.l.b16 %v2943
    %v3258 = vunpack.c.h.b16 %v2943
    %v3259 = vunpack.c.l.b16 %v2944
    %v3260 = vunpack.c.h.b16 %v2944
    %v3261 = vunpack.c.l.b16 %v2945
    %v3262 = vunpack.c.h.b16 %v2945
    %v3263 = vunpack.c.l.b16 %v2946
    %v3264 = vunpack.c.h.b16 %v2946
    %v3265 = vunpack.c.l.b16 %v2947
    %v3266 = vunpack.c.l.b16 %v2948
    %v3267 = vunpack.c.h.b16 %v2948
    %v3268 = vunpack.c.l.b16 %v2949
    %v3269 = vunpack.c.h.b16 %v2949
    %v3270 = vunpack.c.l.b16 %v2950
    %v3271 = vunpack.c.h.b16 %v2950
    %v3272 = vunpack.c.l.b16 %v2951
    %v3273 = vunpack.c.h.b16 %v2951
    %v3274 = vunpack.c.l.b16 %v2952
    %v3275 = vunpack.c.l.b16 %v2953
    %v3276 = vunpack.c.h.b16 %v2953
    %v3277 = vunpack.c.l.b16 %v2954
    %v3278 = vunpack.c.h.b16 %v2954
    %v3279 = vunpack.c.l.b16 %v2955
    %v3280 = vunpack.c.h.b16 %v2955
    %v3281 = vunpack.c.l.b16 %v2956
    %v3282 = vunpack.c.h.b16 %v2956
    %v3283 = vunpack.c.l.b16 %v2957
    %v3284 = vunpack.c.l.b16 %v2958
    %v3285 = vunpack.c.h.b16 %v2958
    %v3286 = vunpack.c.l.b16 %v2959
    %v3287 = vunpack.c.h.b16 %v2959
    %v3288 = vunpack.c.l.b16 %v2960
    %v3289 = vunpack.c.h.b16 %v2960
    %v3290 = vunpack.c.l.b16 %v2961
    %v3291 = vunpack.c.h.b16 %v2961
    %v3292 = vunpack.c.l.b16 %v2962
    %v3293 = vunpack.c.l.b16 %v2963
    %v3294 = vunpack.c.h.b16 %v2963
    %v3295 = vunpack.c.l.b16 %v2964
    %v3296 = vunpack.c.h.b16 %v2964
    %v3297 = vunpack.c.l.b16 %v2965
    %v3298 = vunpack.c.h.b16 %v2965
    %v3299 = vunpack.c.l.b16 %v2966
    %v3300 = vunpack.c.h.b16 %v2966
    %v3301 = vunpack.c.l.b16 %v2967
    %v3302 = vunpack.c.l.b16 %v2968
    %v3303 = vunpack.c.h.b16 %v2968
    %v3304 = vunpack.c.l.b16 %v2969
    %v3305 = vunpack.c.h.b16 %v2969
    %v3306 = vunpack.c.l.b16 %v2970
    %v3307 = vunpack.c.h.b16 %v2970
    %v3308 = vunpack.c.l.b16 %v2971
    %v3309 = vunpack.c.h.b16 %v2971
    %v3310 = vunpack.c.l.b16 %v2972
    %v3311 = vunpack.c.l.b16 %v2973
    %v3312 = vunpack.c.h.b16 %v2973
    %v3313 = vunpack.c.l.b16 %v2974
    %v3314 = vunpack.c.h.b16 %v2974
    %v3315 = vunpack.c.l.b16 %v2975
    %v3316 = vunpack.c.h.b16 %v2975
    %v3317 = vunpack.c.l.b16 %v2976
    %v3318 = vunpack.c.h.b16 %v2976
    %v3319 = vunpack.c.l.b16 %v2977
    %v3320 = vunpack.c.l.b16 %v2978
    %v3321 = vunpack.c.h.b16 %v2978
    %v3322 = vunpack.c.l.b16 %v2979
    %v3323 = vunpack.c.h.b16 %v2979
    %v3324 = vunpack.c.l.b16 %v2980
    %v3325 = vunpack.c.h.b16 %v2980
    %v3326 = vunpack.c.l.b16 %v2981
    %v3327 = vunpack.c.h.b16 %v2981
    %v3328 = vunpack.c.l.b16 %v2982
    %v3329 = vunpack.c.l.b16 %v2983
    %v3330 = vunpack.c.h.b16 %v2983
    %v3331 = vunpack.c.l.b16 %v2984
    %v3332 = vunpack.c.h.b16 %v2984
    %v3333 = vunpack.c.l.b16 %v2985
    %v3334 = vunpack.c.h.b16 %v2985
    %v3335 = vunpack.c.l.b16 %v2986
    %v3336 = vunpack.c.h.b16 %v2986
    %v3337 = vunpack.c.l.b16 %v2987
    %v3338 = vunpack.c.l.b16 %v2988
    %v3339 = vunpack.c.h.b16 %v2988
    %v3340 = vunpack.c.l.b16 %v2989
    %v3341 = vunpack.c.h.b16 %v2989
    %v3342 = vunpack.c.l.b16 %v2990
    %v3343 = vunpack.c.h.b16 %v2990
    %v3344 = vunpack.c.l.b16 %v2991
    %v3345 = vunpack.c.h.b16 %v2991
    %v3346 = vunpack.c.l.b16 %v2992
    %v3347 = vunpack.c.l.b16 %v2993
    %v3348 = vunpack.c.h.b16 %v2993
    %v3349 = vunpack.c.l.b16 %v2994
    %v3350 = vunpack.c.h.b16 %v2994
    %v3351 = vunpack.c.l.b16 %v2995
    %v3352 = vunpack.c.h.b16 %v2995
    %v3353 = vunpack.c.l.b16 %v2996
    %v3354 = vunpack.c.h.b16 %v2996
    %v3355 = vunpack.c.l.b16 %v2997
    %v3356 = vunpack.c.l.b16 %v2998
    %v3357 = vunpack.c.h.b16 %v2998
    %v3358 = vunpack.c.l.b16 %v2999
    %v3359 = vunpack.c.h.b16 %v2999
    %v3360 = vunpack.c.l.b16 %v3000
    %v3361 = vunpack.c.h.b16 %v3000
    %v3362 = vunpack.c.l.b16 %v3001
    %v3363 = vunpack.c.h.b16 %v3001
    %v3364 = vunpack.c.l.b16 %v3002
    %v3365 = vunpack.c.l.b16 %v3003
    %v3366 = vunpack.c.h.b16 %v3003
    %v3367 = vunpack.c.l.b16 %v3004
    %v3368 = vunpack.c.h.b16 %v3004
    %v3369 = vunpack.c.l.b16 %v3005
    %v3370 = vunpack.c.h.b16 %v3005
    %v3371 = vunpack.c.l.b16 %v3006
    %v3372 = vunpack.c.h.b16 %v3006
    %v3373 = vunpack.c.l.b16 %v3007
    %v3374 = vunpack.c.l.b16 %v3008
    %v3375 = vunpack.c.h.b16 %v3008
    %v3376 = vunpack.c.l.b16 %v3009
    %v3377 = vunpack.c.h.b16 %v3009
    %v3378 = vunpack.c.l.b16 %v3010
    %v3379 = vunpack.c.h.b16 %v3010
    %v3380 = vunpack.c.l.b16 %v3011
    %v3381 = vunpack.c.h.b16 %v3011
    %v3382 = vunpack.c.l.b16 %v3012
    %v3383 = vunpack.c.l.b16 %v3013
    %v3384 = vunpack.c.h.b16 %v3013
    %v3385 = vunpack.c.l.b16 %v3014
    %v3386 = vunpack.c.h.b16 %v3014
    %v3387 = vunpack.c.l.b16 %v3015
    %v3388 = vunpack.c.h.b16 %v3015
    %v3389 = vunpack.c.l.b16 %v3016
    %v3390 = vunpack.c.h.b16 %v3016
    %v3391 = vunpack.c.l.b16 %v3017
    %v3392 = vpack.c.b16 %v3257, %v3248
    %v3393 = vpack.c.b16 %v3258, %v3249
    %v3394 = vpack.c.b16 %v3259, %v3250
    %v3395 = vpack.c.b16 %v3260, %v3251
    %v3396 = vpack.c.b16 %v3261, %v3252
    %v3397 = vpack.c.b16 %v3262, %v3253
    %v3398 = vpack.c.b16 %v3263, %v3254
    %v3399 = vpack.c.b16 %v3264, %v3255
    %v3400 = vpack.c.b16 %v3265, %v3256
    %v3401 = vpack.c.b16 %v3275, %v3266
    %v3402 = vpack.c.b16 %v3276, %v3267
    %v3403 = vpack.c.b16 %v3277, %v3268
    %v3404 = vpack.c.b16 %v3278, %v3269
    %v3405 = vpack.c.b16 %v3279, %v3270
    %v3406 = vpack.c.b16 %v3280, %v3271
    %v3407 = vpack.c.b16 %v3281, %v3272
    %v3408 = vpack.c.b16 %v3282, %v3273
    %v3409 = vpack.c.b16 %v3283, %v3274
    %v3410 = vpack.c.b16 %v3293, %v3284
    %v3411 = vpack.c.b16 %v3294, %v3285
    %v3412 = vpack.c.b16 %v3295, %v3286
    %v3413 = vpack.c.b16 %v3296, %v3287
    %v3414 = vpack.c.b16 %v3297, %v3288
    %v3415 = vpack.c.b16 %v3298, %v3289
    %v3416 = vpack.c.b16 %v3299, %v3290
    %v3417 = vpack.c.b16 %v3300, %v3291
    %v3418 = vpack.c.b16 %v3301, %v3292
    %v3419 = vpack.c.b16 %v3311, %v3302
    %v3420 = vpack.c.b16 %v3312, %v3303
    %v3421 = vpack.c.b16 %v3313, %v3304
    %v3422 = vpack.c.b16 %v3314, %v3305
    %v3423 = vpack.c.b16 %v3315, %v3306
    %v3424 = vpack.c.b16 %v3316, %v3307
    %v3425 = vpack.c.b16 %v3317, %v3308
    %v3426 = vpack.c.b16 %v3318, %v3309
    %v3427 = vpack.c.b16 %v3319, %v3310
    %v3428 = vpack.c.b16 %v3329, %v3320
    %v3429 = vpack.c.b16 %v3330, %v3321
    %v3430 = vpack.c.b16 %v3331, %v3322
    %v3431 = vpack.c.b16 %v3332, %v3323
    %v3432 = vpack.c.b16 %v3333, %v3324
    %v3433 = vpack.c.b16 %v3334, %v3325
    %v3434 = vpack.c.b16 %v3335, %v3326
    %v3435 = vpack.c.b16 %v3336, %v3327
    %v3436 = vpack.c.b16 %v3337, %v3328
    %v3437 = vpack.c.b16 %v3347, %v3338
    %v3438 = vpack.c.b16 %v3348, %v3339
    %v3439 = vpack.c.b16 %v3349, %v3340
    %v3440 = vpack.c.b16 %v3350, %v3341
    %v3441 = vpack.c.b16 %v3351, %v3342
    %v3442 = vpack.c.b16 %v3352, %v3343
    %v3443 = vpack.c.b16 %v3353, %v3344
    %v3444 = vpack.c.b16 %v3354, %v3345
    %v3445 = vpack.c.b16 %v3355, %v3346
    %v3446 = vpack.c.b16 %v3365, %v3356
    %v3447 = vpack.c.b16 %v3366, %v3357
    %v3448 = vpack.c.b16 %v3367, %v3358
    %v3449 = vpack.c.b16 %v3368, %v3359
    %v3450 = vpack.c.b16 %v3369, %v3360
    %v3451 = vpack.c.b16 %v3370, %v3361
    %v3452 = vpack.c.b16 %v3371, %v3362
    %v3453 = vpack.c.b16 %v3372, %v3363
    %v3454 = vpack.c.b16 %v3373, %v3364
    %v3455 = vpack.c.b16 %v3383, %v3374
    %v3456 = vpack.c.b16 %v3384, %v3375
    %v3457 = vpack.c.b16 %v3385, %v3376
    %v3458 = vpack.c.b16 %v3386, %v3377
    %v3459 = vpack.c.b16 %v3387, %v3378
    %v3460 = vpack.c.b16 %v3388, %v3379
    %v3461 = vpack.c.b16 %v3389, %v3380
    %v3462 = vpack.c.b16 %v3390, %v3381
    %v3463 = vpack.c.b16 %v3391, %v3382
    %v3680 = vunpack.c.l.b16 %v3019
    %v3681 = vunpack.c.l.b16 %v3020
    %v3682 = vunpack.c.l.b16 %v3021
    %v3683 = vunpack.c.l.b16 %v3022
    %v3684 = vunpack.c.l.b16 %v3023
    %v3685 = vunpack.c.l.b16 %v3024
    %v3686 = vunpack.c.l.b16 %v3025
    %v3687 = vunpack.c.l.b16 %v3026
    %v3688 = vunpack.c.l.b16 %v3027
    %v3689 = vunpack.c.l.b16 %v3028
    %v3690 = vunpack.c.l.b16 %v3029
    %v3691 = vunpack.c.l.b16 %v3030
    %v3692 = vunpack.c.l.b16 %v3031
    %v3693 = vunpack.c.l.b16 %v3032
    %v3694 = vunpack.c.l.b16 %v3033
    %v3695 = vunpack.c.l.b16 %v3034
    %v3696 = vunpack.c.l.b16 %v3035
    %v3697 = vunpack.c.l.b16 %v3036
    %v3698 = vunpack.c.l.b16 %v3037
    %v3699 = vunpack.c.l.b16 %v3038
    %v3700 = vunpack.c.l.b16 %v3039
    %v3701 = vunpack.c.l.b16 %v3040
    %v3702 = vunpack.c.l.b16 %v3041
    %v3703 = vunpack.c.l.b16 %v3042
    %v3704 = vunpack.c.l.b16 %v3043
    %v3705 = vunpack.c.l.b16 %v3044
    %v3706 = vunpack.c.l.b16 %v3045
    %v3707 = vunpack.c.l.b16 %v3046
    %v3708 = vunpack.c.l.b16 %v3047
    %v3709 = vunpack.c.l.b16 %v3048
    %v3710 = vunpack.c.l.b16 %v3049
    %v3711 = vunpack.c.l.b16 %v3050
    %v3712 = vunpack.c.l.b16 %v3051
    %v3713 = vunpack.c.l.b16 %v3052
    %v3714 = vunpack.c.l.b16 %v3053
    %v3715 = vunpack.c.l.b16 %v3054
    %v3716 = vunpack.c.l.b16 %v3055
    %v3717 = vunpack.c.l.b16 %v3056
    %v3718 = vunpack.c.l.b16 %v3057
    %v3719 = vunpack.c.l.b16 %v3058
    %v3720 = vunpack.c.l.b16 %v3059
    %v3721 = vunpack.c.l.b16 %v3060
    %v3722 = vunpack.c.l.b16 %v3061
    %v3723 = vunpack.c.l.b16 %v3062
    %v3724 = vunpack.c.l.b16 %v3063
    %v3725 = vunpack.c.l.b16 %v3064
    %v3726 = vunpack.c.l.b16 %v3065
    %v3727 = vunpack.c.l.b16 %v3066
    %v3728 = vunpack.c.l.b16 %v3067
    %v3729 = vunpack.c.l.b16 %v3068
    %v3730 = vunpack.c.l.b16 %v3069
    %v3731 = vunpack.c.l.b16 %v3070
    %v3732 = vunpack.c.l.b16 %v3071
    %v3733 = vunpack.c.l.b16 %v3072
    %v3734 = vunpack.c.l.b16 %v3073
    %v3735 = vunpack.c.l.b16 %v3074
    %v3736 = vunpack.c.l.b16 %v3075
    %v3737 = vunpack.c.l.b16 %v3076
    %v3738 = vunpack.c.l.b16 %v3077
    %v3739 = vunpack.c.l.b16 %v3078
    %v3740 = vunpack.c.l.b16 %v3079
    %v3741 = vunpack.c.l.b16 %v3080
    %v3742 = vunpack.c.l.b16 %v3081
    %v3743 = vunpack.c.l.b16 %v3082
    %v3744 = vunpack.c.l.b16 %v3083
    %v3745 = vunpack.c.l.b16 %v3084
    %v3746 = vunpack.c.l.b16 %v3085
    %v3747 = vunpack.c.l.b16 %v3086
    %v3748 = vunpack.c.l.b16 %v3087
    %v3749 = vunpack.c.l.b16 %v3088
    %v3750 = vunpack.c.l.b16 %v3089
    %v3751 = vunpack.c.l.b16 %v3090
    %v3752 = vunpack.c.l.b16 %v3091
    %v3753 = vunpack.c.l.b16 %v3092
    %v3754 = vunpack.c.l.b16 %v3093
    %v3755 = vunpack.c.l.b16 %v3094
    %v3756 = vunpack.c.l.b16 %v3095
    %v3757 = vunpack.c.l.b16 %v3096
    %v3758 = vunpack.c.l.b16 %v3097
    %v3759 = vunpack.c.l.b16 %v3098
    %v3760 = vunpack.c.l.b16 %v3099
    %v3761 = vunpack.c.l.b16 %v3100
    %v3762 = vunpack.c.l.b16 %v3101
    %v3763 = vunpack.c.l.b16 %v3102
    %v3764 = vunpack.c.l.b16 %v3103
    %v3765 = vunpack.c.l.b16 %v3104
    %v3766 = vunpack.c.l.b16 %v3105
    %v3767 = vunpack.c.l.b16 %v3106
    %v3768 = vunpack.c.l.b16 %v3107
    %v3769 = vunpack.c.l.b16 %v3108
    %v3770 = vunpack.c.l.b16 %v3109
    %v3771 = vunpack.c.l.b16 %v3110
    %v3772 = vunpack.c.l.b16 %v3111
    %v3773 = vunpack.c.l.b16 %v3112
    %v3774 = vunpack.c.l.b16 %v3113
    %v3775 = vunpack.c.l.b16 %v3114
    %v3776 = vunpack.c.l.b16 %v3115
    %v3777 = vunpack.c.l.b16 %v3116
    %v3778 = vunpack.c.l.b16 %v3117
    %v3779 = vunpack.c.l.b16 %v3118
    %v3780 = vunpack.c.l.b16 %v3119
    %v3781 = vunpack.c.l.b16 %v3120
    %v3782 = vunpack.c.l.b16 %v3121
    %v3783 = vunpack.c.l.b16 %v3122
    %v3784 = vunpack.c.l.b16 %v3123
    %v3785 = vunpack.c.l.b16 %v3124
    %v3786 = vunpack.c.l.b16 %v3125
    %v3787 = vunpack.c.l.b16 %v3126
    %v3788 = vunpack.c.l.b16 %v3127
    %v3789 = vunpack.c.l.b16 %v3128
    %v3790 = vunpack.c.l.b16 %v3129
    %v3791 = vunpack.c.l.b16 %v3130
    %v3792 = vunpack.c.l.b16 %v3131
    %v3793 = vunpack.c.l.b16 %v3132
    %v3794 = vunpack.c.l.b16 %v3133
    %v3795 = vunpack.c.l.b16 %v3134
    %v3796 = vunpack.c.l.b16 %v3135
    %v3797 = vunpack.c.l.b16 %v3136
    %v3798 = vunpack.c.l.b16 %v3137
    %v3799 = vunpack.c.l.b16 %v3138
    %v3800 = vunpack.c.l.b16 %v3139
    %v3801 = vunpack.c.l.b16 %v3140
    %v3802 = vunpack.c.l.b16 %v3141
    %v3803 = vunpack.c.l.b16 %v3142
    %v3804 = vunpack.c.l.b16 %v3143
    %v3805 = vunpack.c.l.b16 %v3144
    %v3806 = vunpack.c.l.b16 %v3145
    %v3807 = vunpack.c.l.b16 %v3146
    %v3808 = vunpack.c.l.b16 %v3147
    %v3809 = vunpack.c.l.b16 %v3148
    %v3810 = vunpack.c.l.b16 %v3149
    %v3811 = vunpack.c.l.b16 %v3150
    %v3812 = vunpack.c.l.b16 %v3151
    %v3813 = vunpack.c.l.b16 %v3152
    %v3814 = vunpack.c.l.b16 %v3153
    %v3815 = vunpack.c.l.b16 %v3154
    %v3816 = vunpack.c.l.b16 %v3155
    %v3817 = vunpack.c.l.b16 %v3156
    %v3818 = vunpack.c.l.b16 %v3157
    %v3819 = vunpack.c.l.b16 %v3158
    %v3820 = vunpack.c.l.b16 %v3159
    %v3821 = vunpack.c.l.b16 %v3160
    %v3822 = vunpack.c.l.b16 %v3161
    %v3823 = vunpack.c.l.b16 %v3162
    %v3824 = vpack.c.b16 %v3681, %v3680
    %v3825 = vpack.c.b16 %v3683, %v3682
    %v3826 = vpack.c.b16 %v3685, %v3684
    %v3827 = vpack.c.b16 %v3687, %v3686
    %v3828 = vpack.c.b16 %v3689, %v3688
    %v3829 = vpack.c.b16 %v3691, %v3690
    %v3830 = vpack.c.b16 %v3693, %v3692
    %v3831 = vpack.c.b16 %v3695, %v3694
    %v3832 = vpack.c.b16 %v3697, %v3696
    %v3833 = vpack.c.b16 %v3699, %v3698
    %v3834 = vpack.c.b16 %v3701, %v3700
    %v3835 = vpack.c.b16 %v3703, %v3702
    %v3836 = vpack.c.b16 %v3705, %v3704
    %v3837 = vpack.c.b16 %v3707, %v3706
    %v3838 = vpack.c.b16 %v3709, %v3708
    %v3839 = vpack.c.b16 %v3711, %v3710
    %v3840 = vpack.c.b16 %v3713, %v3712
    %v3841 = vpack.c.b16 %v3715, %v3714
    %v3842 = vpack.c.b16 %v3717, %v3716
    %v3843 = vpack.c.b16 %v3719, %v3718
    %v3844 = vpack.c.b16 %v3721, %v3720
    %v3845 = vpack.c.b16 %v3723, %v3722
    %v3846 = vpack.c.b16 %v3725, %v3724
    %v3847 = vpack.c.b16 %v3727, %v3726
    %v3848 = vpack.c.b16 %v3729, %v3728
    %v3849 = vpack.c.b16 %v3731, %v3730
    %v3850 = vpack.c.b16 %v3733, %v3732
    %v3851 = vpack.c.b16 %v3735, %v3734
    %v3852 = vpack.c.b16 %v3737, %v3736
    %v3853 = vpack.c.b16 %v3739, %v3738
    %v3854 = vpack.c.b16 %v3741, %v3740
    %v3855 = vpack.c.b16 %v3743, %v3742
    %v3856 = vpack.c.b16 %v3745, %v3744
    %v3857 = vpack.c.b16 %v3747, %v3746
    %v3858 = vpack.c.b16 %v3749, %v3748
    %v3859 = vpack.c.b16 %v3751, %v3750
    %v3860 = vpack.c.b16 %v3753, %v3752
    %v3861 = vpack.c.b16 %v3755, %v3754
    %v3862 = vpack.c.b16 %v3757, %v3756
    %v3863 = vpack.c.b16 %v3759, %v3758
    %v3864 = vpack.c.b16 %v3761, %v3760
    %v3865 = vpack.c.b16 %v3763, %v3762
    %v3866 = vpack.c.b16 %v3765, %v3764
    %v3867 = vpack.c.b16 %v3767, %v3766
    %v3868 = vpack.c.b16 %v3769, %v3768
    %v3869 = vpack.c.b16 %v3771, %v3770
    %v3870 = vpack.c.b16 %v3773, %v3772
    %v3871 = vpack.c.b16 %v3775, %v3774
    %v3872 = vpack.c.b16 %v3777, %v3776
    %v3873 = vpack.c.b16 %v3779, %v3778
    %v3874 = vpack.c.b16 %v3781, %v3780
    %v3875 = vpack.c.b16 %v3783, %v3782
    %v3876 = vpack.c.b16 %v3785, %v3784
    %v3877 = vpack.c.b16 %v3787, %v3786
    %v3878 = vpack.c.b16 %v3789, %v3788
    %v3879 = vpack.c.b16 %v3791, %v3790
    %v3880 = vpack.c.b16 %v3793, %v3792
    %v3881 = vpack.c.b16 %v3795, %v3794
    %v3882 = vpack.c.b16 %v3797, %v3796
    %v3883 = vpack.c.b16 %v3799, %v3798
    %v3884 = vpack.c.b16 %v3801, %v3800
    %v3885 = vpack.c.b16 %v3803, %v3802
    %v3886 = vpack.c.b16 %v3805, %v3804
    %v3887 = vpack.c.b16 %v3807, %v3806
    %v3888 = vpack.c.b16 %v3809, %v3808
    %v3889 = vpack.c.b16 %v3811, %v3810
    %v3890 = vpack.c.b16 %v3813, %v3812
    %v3891 = vpack.c.b16 %v3815, %v3814
    %v3892 = vpack.c.b16 %v3817, %v3816
    %v3893 = vpack.c.b16 %v3819, %v3818
    %v3894 = vpack.c.b16 %v3821, %v3820
    %v3895 = vpack.c.b16 %v3823, %v3822
    %3968 = vmatprep.subr.bf16.mxu0 0
    %3969 = vmatpush1.bf16.msra.mxu0 %v3831
    %3970 = vmatprep.subr.bf16.mxu0 0
    %3971 = vmatpush1.bf16.msra.mxu0 %v3830
    %3972 = vmatprep.subr.bf16.mxu0 0
    %3973 = vmatpush1.bf16.msra.mxu0 %v3829
    %3974 = vmatprep.subr.bf16.mxu0 0
    %3975 = vmatpush1.bf16.msra.mxu0 %v3828
    %3976 = vmatprep.subr.bf16.mxu0 0
    %3977 = vmatpush1.bf16.msra.mxu0 %v3827
    %3978 = vmatprep.subr.bf16.mxu0 0
    %3979 = vmatpush1.bf16.msra.mxu0 %v3826
    %3980 = vmatprep.subr.bf16.mxu0 0
    %3981 = vmatpush1.bf16.msra.mxu0 %v3825
    %3982 = vmatprep.subr.bf16.mxu0 0
    %3983 = vmatpush1.bf16.msra.mxu0 %v3824
    %3984 = vmatprep.subr.bf16.mxu0 0
    %3985 = vmatpush2.bf16.msra.mxu0 %v3839
    %3986 = vmatprep.subr.bf16.mxu0 0
    %3987 = vmatpush2.bf16.msra.mxu0 %v3838
    %3988 = vmatprep.subr.bf16.mxu0 0
    %3989 = vmatpush2.bf16.msra.mxu0 %v3837
    %3990 = vmatprep.subr.bf16.mxu0 0
    %3991 = vmatpush2.bf16.msra.mxu0 %v3836
    %3992 = vmatprep.subr.bf16.mxu0 0
    %3993 = vmatpush2.bf16.msra.mxu0 %v3835
    %3994 = vmatprep.subr.bf16.mxu0 0
    %3995 = vmatpush2.bf16.msra.mxu0 %v3834
    %3996 = vmatprep.subr.bf16.mxu0 0
    %3997 = vmatpush2.bf16.msra.mxu0 %v3833
    %3998 = vmatprep.subr.bf16.mxu0 0
    %3999 = vmatpush2.bf16.msra.mxu0 %v3832
    %4000 = vmatprep.mubr.bf16.mxu0 %v3393
    %4001 = vmatmul.mubr.bf16.gmra.mxu0 %v3392
    %v4002 = vpop.f32.mrf.mxu0
    %v4003 = vadd.f32 %v3167, %v4002
    %v4004 = vpop.f32.mrf.mxu0
    %v4005 = vpop.f32.mrf.mxu0
    %v4006 = vadd.f32 %v3167, %v4005
    %v4007 = vpop.f32.mrf.mxu0
    %4008 = vmatprep.mubr.bf16.mxu0 %v3402
    %4009 = vmatmul.mubr.bf16.gmra.mxu0 %v3401
    %v4010 = vpop.f32.mrf.mxu0
    %v4011 = vadd.f32 %v3167, %v4010
    %v4012 = vpop.f32.mrf.mxu0
    %v4013 = vpop.f32.mrf.mxu0
    %v4014 = vadd.f32 %v3167, %v4013
    %v4015 = vpop.f32.mrf.mxu0
    %4016 = vmatprep.mubr.bf16.mxu0 %v3411
    %4017 = vmatmul.mubr.bf16.gmra.mxu0 %v3410
    %v4018 = vpop.f32.mrf.mxu0
    %v4019 = vadd.f32 %v3167, %v4018
    %v4020 = vpop.f32.mrf.mxu0
    %v4021 = vpop.f32.mrf.mxu0
    %v4022 = vadd.f32 %v3167, %v4021
    %v4023 = vpop.f32.mrf.mxu0
    %4024 = vmatprep.mubr.bf16.mxu0 %v3420
    %4025 = vmatmul.mubr.bf16.gmra.mxu0 %v3419
    %v4026 = vpop.f32.mrf.mxu0
    %v4027 = vadd.f32 %v3167, %v4026
    %v4028 = vpop.f32.mrf.mxu0
    %v4029 = vpop.f32.mrf.mxu0
    %v4030 = vadd.f32 %v3167, %v4029
    %v4031 = vpop.f32.mrf.mxu0
    %4032 = vmatprep.mubr.bf16.mxu0 %v3429
    %4033 = vmatmul.mubr.bf16.gmra.mxu0 %v3428
    %v4034 = vpop.f32.mrf.mxu0
    %v4035 = vadd.f32 %v3167, %v4034
    %v4036 = vpop.f32.mrf.mxu0
    %v4037 = vpop.f32.mrf.mxu0
    %v4038 = vadd.f32 %v3167, %v4037
    %v4039 = vpop.f32.mrf.mxu0
    %4040 = vmatprep.mubr.bf16.mxu0 %v3438
    %4041 = vmatmul.mubr.bf16.gmra.mxu0 %v3437
    %v4042 = vpop.f32.mrf.mxu0
    %v4043 = vadd.f32 %v3167, %v4042
    %v4044 = vpop.f32.mrf.mxu0
    %v4045 = vpop.f32.mrf.mxu0
    %v4046 = vadd.f32 %v3167, %v4045
    %v4047 = vpop.f32.mrf.mxu0
    %4048 = vmatprep.mubr.bf16.mxu0 %v3447
    %4049 = vmatmul.mubr.bf16.gmra.mxu0 %v3446
    %v4050 = vpop.f32.mrf.mxu0
    %v4051 = vadd.f32 %v3167, %v4050
    %v4052 = vpop.f32.mrf.mxu0
    %v4053 = vpop.f32.mrf.mxu0
    %v4054 = vadd.f32 %v3167, %v4053
    %v4055 = vpop.f32.mrf.mxu0
    %4056 = vmatprep.mubr.bf16.mxu0 %v3456
    %4057 = vmatmul.mubr.bf16.gmra.mxu0 %v3455
    %v4058 = vpop.f32.mrf.mxu0
    %v4059 = vadd.f32 %v3167, %v4058
    %v4060 = vpop.f32.mrf.mxu0
    %v4061 = vpop.f32.mrf.mxu0
    %v4062 = vadd.f32 %v3167, %v4061
    %v4063 = vpop.f32.mrf.mxu0
    %4064 = vdwg.mxu0
    %4065 = vmatprep.subr.bf16.mxu0 0
    %4066 = vmatpush1.bf16.msra.mxu0 %v3847
    %4067 = vmatprep.subr.bf16.mxu0 0
    %4068 = vmatpush1.bf16.msra.mxu0 %v3846
    %4069 = vmatprep.subr.bf16.mxu0 0
    %4070 = vmatpush1.bf16.msra.mxu0 %v3845
    %4071 = vmatprep.subr.bf16.mxu0 0
    %4072 = vmatpush1.bf16.msra.mxu0 %v3844
    %4073 = vmatprep.subr.bf16.mxu0 0
    %4074 = vmatpush1.bf16.msra.mxu0 %v3843
    %4075 = vmatprep.subr.bf16.mxu0 0
    %4076 = vmatpush1.bf16.msra.mxu0 %v3842
    %4077 = vmatprep.subr.bf16.mxu0 0
    %4078 = vmatpush1.bf16.msra.mxu0 %v3841
    %4079 = vmatprep.subr.bf16.mxu0 0
    %4080 = vmatpush1.bf16.msra.mxu0 %v3840
    %4081 = vmatprep.subr.bf16.mxu0 0
    %4082 = vmatpush2.bf16.msra.mxu0 %v3855
    %4083 = vmatprep.subr.bf16.mxu0 0
    %4084 = vmatpush2.bf16.msra.mxu0 %v3854
    %4085 = vmatprep.subr.bf16.mxu0 0
    %4086 = vmatpush2.bf16.msra.mxu0 %v3853
    %4087 = vmatprep.subr.bf16.mxu0 0
    %4088 = vmatpush2.bf16.msra.mxu0 %v3852
    %4089 = vmatprep.subr.bf16.mxu0 0
    %4090 = vmatpush2.bf16.msra.mxu0 %v3851
    %4091 = vmatprep.subr.bf16.mxu0 0
    %4092 = vmatpush2.bf16.msra.mxu0 %v3850
    %4093 = vmatprep.subr.bf16.mxu0 0
    %4094 = vmatpush2.bf16.msra.mxu0 %v3849
    %4095 = vmatprep.subr.bf16.mxu0 0
    %4096 = vmatpush2.bf16.msra.mxu0 %v3848
    %4097 = vmatprep.mubr.bf16.mxu0 %v3395
    %4098 = vmatmul.mubr.bf16.gmra.mxu0 %v3394
    %v4099 = vpop.f32.mrf.mxu0
    %v4100 = vadd.f32 %v4003, %v4099
    %v4101 = vpop.f32.mrf.mxu0
    %v4102 = vpop.f32.mrf.mxu0
    %v4103 = vadd.f32 %v4006, %v4102
    %v4104 = vpop.f32.mrf.mxu0
    %4105 = vmatprep.mubr.bf16.mxu0 %v3404
    %4106 = vmatmul.mubr.bf16.gmra.mxu0 %v3403
    %v4107 = vpop.f32.mrf.mxu0
    %v4108 = vadd.f32 %v4011, %v4107
    %v4109 = vpop.f32.mrf.mxu0
    %v4110 = vpop.f32.mrf.mxu0
    %v4111 = vadd.f32 %v4014, %v4110
    %v4112 = vpop.f32.mrf.mxu0
    %4113 = vmatprep.mubr.bf16.mxu0 %v3413
    %4114 = vmatmul.mubr.bf16.gmra.mxu0 %v3412
    %v4115 = vpop.f32.mrf.mxu0
    %v4116 = vadd.f32 %v4019, %v4115
    %v4117 = vpop.f32.mrf.mxu0
    %v4118 = vpop.f32.mrf.mxu0
    %v4119 = vadd.f32 %v4022, %v4118
    %v4120 = vpop.f32.mrf.mxu0
    %4121 = vmatprep.mubr.bf16.mxu0 %v3422
    %4122 = vmatmul.mubr.bf16.gmra.mxu0 %v3421
    %v4123 = vpop.f32.mrf.mxu0
    %v4124 = vadd.f32 %v4027, %v4123
    %v4125 = vpop.f32.mrf.mxu0
    %v4126 = vpop.f32.mrf.mxu0
    %v4127 = vadd.f32 %v4030, %v4126
    %v4128 = vpop.f32.mrf.mxu0
    %4129 = vmatprep.mubr.bf16.mxu0 %v3431
    %4130 = vmatmul.mubr.bf16.gmra.mxu0 %v3430
    %v4131 = vpop.f32.mrf.mxu0
    %v4132 = vadd.f32 %v4035, %v4131
    %v4133 = vpop.f32.mrf.mxu0
    %v4134 = vpop.f32.mrf.mxu0
    %v4135 = vadd.f32 %v4038, %v4134
    %v4136 = vpop.f32.mrf.mxu0
    %4137 = vmatprep.mubr.bf16.mxu0 %v3440
    %4138 = vmatmul.mubr.bf16.gmra.mxu0 %v3439
    %v4139 = vpop.f32.mrf.mxu0
    %v4140 = vadd.f32 %v4043, %v4139
    %v4141 = vpop.f32.mrf.mxu0
    %v4142 = vpop.f32.mrf.mxu0
    %v4143 = vadd.f32 %v4046, %v4142
    %v4144 = vpop.f32.mrf.mxu0
    %4145 = vmatprep.mubr.bf16.mxu0 %v3449
    %4146 = vmatmul.mubr.bf16.gmra.mxu0 %v3448
    %v4147 = vpop.f32.mrf.mxu0
    %v4148 = vadd.f32 %v4051, %v4147
    %v4149 = vpop.f32.mrf.mxu0
    %v4150 = vpop.f32.mrf.mxu0
    %v4151 = vadd.f32 %v4054, %v4150
    %v4152 = vpop.f32.mrf.mxu0
    %4153 = vmatprep.mubr.bf16.mxu0 %v3458
    %4154 = vmatmul.mubr.bf16.gmra.mxu0 %v3457
    %v4155 = vpop.f32.mrf.mxu0
    %v4156 = vadd.f32 %v4059, %v4155
    %v4157 = vpop.f32.mrf.mxu0
    %v4158 = vpop.f32.mrf.mxu0
    %v4159 = vadd.f32 %v4062, %v4158
    %v4160 = vpop.f32.mrf.mxu0
    %4161 = vdwg.mxu0
    %4162 = vmatprep.subr.bf16.mxu0 0
    %4163 = vmatpush1.bf16.msra.mxu0 %v3863
    %4164 = vmatprep.subr.bf16.mxu0 0
    %4165 = vmatpush1.bf16.msra.mxu0 %v3862
    %4166 = vmatprep.subr.bf16.mxu0 0
    %4167 = vmatpush1.bf16.msra.mxu0 %v3861
    %4168 = vmatprep.subr.bf16.mxu0 0
    %4169 = vmatpush1.bf16.msra.mxu0 %v3860
    %4170 = vmatprep.subr.bf16.mxu0 0
    %4171 = vmatpush1.bf16.msra.mxu0 %v3859
    %4172 = vmatprep.subr.bf16.mxu0 0
    %4173 = vmatpush1.bf16.msra.mxu0 %v3858
    %4174 = vmatprep.subr.bf16.mxu0 0
    %4175 = vmatpush1.bf16.msra.mxu0 %v3857
    %4176 = vmatprep.subr.bf16.mxu0 0
    %4177 = vmatpush1.bf16.msra.mxu0 %v3856
    %4178 = vmatprep.subr.bf16.mxu0 0
    %4179 = vmatpush2.bf16.msra.mxu0 %v3871
    %4180 = vmatprep.subr.bf16.mxu0 0
    %4181 = vmatpush2.bf16.msra.mxu0 %v3870
    %4182 = vmatprep.subr.bf16.mxu0 0
    %4183 = vmatpush2.bf16.msra.mxu0 %v3869
    %4184 = vmatprep.subr.bf16.mxu0 0
    %4185 = vmatpush2.bf16.msra.mxu0 %v3868
    %4186 = vmatprep.subr.bf16.mxu0 0
    %4187 = vmatpush2.bf16.msra.mxu0 %v3867
    %4188 = vmatprep.subr.bf16.mxu0 0
    %4189 = vmatpush2.bf16.msra.mxu0 %v3866
    %4190 = vmatprep.subr.bf16.mxu0 0
    %4191 = vmatpush2.bf16.msra.mxu0 %v3865
    %4192 = vmatprep.subr.bf16.mxu0 0
    %4193 = vmatpush2.bf16.msra.mxu0 %v3864
    %4194 = vmatprep.mubr.bf16.mxu0 %v3397
    %4195 = vmatmul.mubr.bf16.gmra.mxu0 %v3396
    %v4196 = vpop.f32.mrf.mxu0
    %v4197 = vadd.f32 %v4100, %v4196
    %v4198 = vpop.f32.mrf.mxu0
    %v4199 = vpop.f32.mrf.mxu0
    %v4200 = vadd.f32 %v4103, %v4199
    %v4201 = vpop.f32.mrf.mxu0
    %4202 = vmatprep.mubr.bf16.mxu0 %v3406
    %4203 = vmatmul.mubr.bf16.gmra.mxu0 %v3405
    %v4204 = vpop.f32.mrf.mxu0
    %v4205 = vadd.f32 %v4108, %v4204
    %v4206 = vpop.f32.mrf.mxu0
    %v4207 = vpop.f32.mrf.mxu0
    %v4208 = vadd.f32 %v4111, %v4207
    %v4209 = vpop.f32.mrf.mxu0
    %4210 = vmatprep.mubr.bf16.mxu0 %v3415
    %4211 = vmatmul.mubr.bf16.gmra.mxu0 %v3414
    %v4212 = vpop.f32.mrf.mxu0
    %v4213 = vadd.f32 %v4116, %v4212
    %v4214 = vpop.f32.mrf.mxu0
    %v4215 = vpop.f32.mrf.mxu0
    %v4216 = vadd.f32 %v4119, %v4215
    %v4217 = vpop.f32.mrf.mxu0
    %4218 = vmatprep.mubr.bf16.mxu0 %v3424
    %4219 = vmatmul.mubr.bf16.gmra.mxu0 %v3423
    %v4220 = vpop.f32.mrf.mxu0
    %v4221 = vadd.f32 %v4124, %v4220
    %v4222 = vpop.f32.mrf.mxu0
    %v4223 = vpop.f32.mrf.mxu0
    %v4224 = vadd.f32 %v4127, %v4223
    %v4225 = vpop.f32.mrf.mxu0
    %4226 = vmatprep.mubr.bf16.mxu0 %v3433
    %4227 = vmatmul.mubr.bf16.gmra.mxu0 %v3432
    %v4228 = vpop.f32.mrf.mxu0
    %v4229 = vadd.f32 %v4132, %v4228
    %v4230 = vpop.f32.mrf.mxu0
    %v4231 = vpop.f32.mrf.mxu0
    %v4232 = vadd.f32 %v4135, %v4231
    %v4233 = vpop.f32.mrf.mxu0
    %4234 = vmatprep.mubr.bf16.mxu0 %v3442
    %4235 = vmatmul.mubr.bf16.gmra.mxu0 %v3441
    %v4236 = vpop.f32.mrf.mxu0
    %v4237 = vadd.f32 %v4140, %v4236
    %v4238 = vpop.f32.mrf.mxu0
    %v4239 = vpop.f32.mrf.mxu0
    %v4240 = vadd.f32 %v4143, %v4239
    %v4241 = vpop.f32.mrf.mxu0
    %4242 = vmatprep.mubr.bf16.mxu0 %v3451
    %4243 = vmatmul.mubr.bf16.gmra.mxu0 %v3450
    %v4244 = vpop.f32.mrf.mxu0
    %v4245 = vadd.f32 %v4148, %v4244
    %v4246 = vpop.f32.mrf.mxu0
    %v4247 = vpop.f32.mrf.mxu0
    %v4248 = vadd.f32 %v4151, %v4247
    %v4249 = vpop.f32.mrf.mxu0
    %4250 = vmatprep.mubr.bf16.mxu0 %v3460
    %4251 = vmatmul.mubr.bf16.gmra.mxu0 %v3459
    %v4252 = vpop.f32.mrf.mxu0
    %v4253 = vadd.f32 %v4156, %v4252
    %v4254 = vpop.f32.mrf.mxu0
    %v4255 = vpop.f32.mrf.mxu0
    %v4256 = vadd.f32 %v4159, %v4255
    %v4257 = vpop.f32.mrf.mxu0
    %4258 = vdwg.mxu0
    %4259 = vmatprep.subr.bf16.mxu0 0
    %4260 = vmatpush1.bf16.msra.mxu0 %v3879
    %4261 = vmatprep.subr.bf16.mxu0 0
    %4262 = vmatpush1.bf16.msra.mxu0 %v3878
    %4263 = vmatprep.subr.bf16.mxu0 0
    %4264 = vmatpush1.bf16.msra.mxu0 %v3877
    %4265 = vmatprep.subr.bf16.mxu0 0
    %4266 = vmatpush1.bf16.msra.mxu0 %v3876
    %4267 = vmatprep.subr.bf16.mxu0 0
    %4268 = vmatpush1.bf16.msra.mxu0 %v3875
    %4269 = vmatprep.subr.bf16.mxu0 0
    %4270 = vmatpush1.bf16.msra.mxu0 %v3874
    %4271 = vmatprep.subr.bf16.mxu0 0
    %4272 = vmatpush1.bf16.msra.mxu0 %v3873
    %4273 = vmatprep.subr.bf16.mxu0 0
    %4274 = vmatpush1.bf16.msra.mxu0 %v3872
    %4275 = vmatprep.subr.bf16.mxu0 0
    %4276 = vmatpush2.bf16.msra.mxu0 %v3887
    %4277 = vmatprep.subr.bf16.mxu0 0
    %4278 = vmatpush2.bf16.msra.mxu0 %v3886
    %4279 = vmatprep.subr.bf16.mxu0 0
    %4280 = vmatpush2.bf16.msra.mxu0 %v3885
    %4281 = vmatprep.subr.bf16.mxu0 0
    %4282 = vmatpush2.bf16.msra.mxu0 %v3884
    %4283 = vmatprep.subr.bf16.mxu0 0
    %4284 = vmatpush2.bf16.msra.mxu0 %v3883
    %4285 = vmatprep.subr.bf16.mxu0 0
    %4286 = vmatpush2.bf16.msra.mxu0 %v3882
    %4287 = vmatprep.subr.bf16.mxu0 0
    %4288 = vmatpush2.bf16.msra.mxu0 %v3881
    %4289 = vmatprep.subr.bf16.mxu0 0
    %4290 = vmatpush2.bf16.msra.mxu0 %v3880
    %4291 = vmatprep.mubr.bf16.mxu0 %v3399
    %4292 = vmatmul.mubr.bf16.gmra.mxu0 %v3398
    %v4293 = vpop.f32.mrf.mxu0
    %v4294 = vadd.f32 %v4197, %v4293
    %v4295 = vpop.f32.mrf.mxu0
    %v4296 = vpop.f32.mrf.mxu0
    %v4297 = vadd.f32 %v4200, %v4296
    %v4298 = vpop.f32.mrf.mxu0
    %4299 = vmatprep.mubr.bf16.mxu0 %v3408
    %4300 = vmatmul.mubr.bf16.gmra.mxu0 %v3407
    %v4301 = vpop.f32.mrf.mxu0
    %v4302 = vadd.f32 %v4205, %v4301
    %v4303 = vpop.f32.mrf.mxu0
    %v4304 = vpop.f32.mrf.mxu0
    %v4305 = vadd.f32 %v4208, %v4304
    %v4306 = vpop.f32.mrf.mxu0
    %4307 = vmatprep.mubr.bf16.mxu0 %v3417
    %4308 = vmatmul.mubr.bf16.gmra.mxu0 %v3416
    %v4309 = vpop.f32.mrf.mxu0
    %v4310 = vadd.f32 %v4213, %v4309
    %v4311 = vpop.f32.mrf.mxu0
    %v4312 = vpop.f32.mrf.mxu0
    %v4313 = vadd.f32 %v4216, %v4312
    %v4314 = vpop.f32.mrf.mxu0
    %4315 = vmatprep.mubr.bf16.mxu0 %v3426
    %4316 = vmatmul.mubr.bf16.gmra.mxu0 %v3425
    %v4317 = vpop.f32.mrf.mxu0
    %v4318 = vadd.f32 %v4221, %v4317
    %v4319 = vpop.f32.mrf.mxu0
    %v4320 = vpop.f32.mrf.mxu0
    %v4321 = vadd.f32 %v4224, %v4320
    %v4322 = vpop.f32.mrf.mxu0
    %4323 = vmatprep.mubr.bf16.mxu0 %v3435
    %4324 = vmatmul.mubr.bf16.gmra.mxu0 %v3434
    %v4325 = vpop.f32.mrf.mxu0
    %v4326 = vadd.f32 %v4229, %v4325
    %v4327 = vpop.f32.mrf.mxu0
    %v4328 = vpop.f32.mrf.mxu0
    %v4329 = vadd.f32 %v4232, %v4328
    %v4330 = vpop.f32.mrf.mxu0
    %4331 = vmatprep.mubr.bf16.mxu0 %v3444
    %4332 = vmatmul.mubr.bf16.gmra.mxu0 %v3443
    %v4333 = vpop.f32.mrf.mxu0
    %v4334 = vadd.f32 %v4237, %v4333
    %v4335 = vpop.f32.mrf.mxu0
    %v4336 = vpop.f32.mrf.mxu0
    %v4337 = vadd.f32 %v4240, %v4336
    %v4338 = vpop.f32.mrf.mxu0
    %4339 = vmatprep.mubr.bf16.mxu0 %v3453
    %4340 = vmatmul.mubr.bf16.gmra.mxu0 %v3452
    %v4341 = vpop.f32.mrf.mxu0
    %v4342 = vadd.f32 %v4245, %v4341
    %v4343 = vpop.f32.mrf.mxu0
    %v4344 = vpop.f32.mrf.mxu0
    %v4345 = vadd.f32 %v4248, %v4344
    %v4346 = vpop.f32.mrf.mxu0
    %4347 = vmatprep.mubr.bf16.mxu0 %v3462
    %4348 = vmatmul.mubr.bf16.gmra.mxu0 %v3461
    %v4349 = vpop.f32.mrf.mxu0
    %v4350 = vadd.f32 %v4253, %v4349
    %v4351 = vpop.f32.mrf.mxu0
    %v4352 = vpop.f32.mrf.mxu0
    %v4353 = vadd.f32 %v4256, %v4352
    %v4354 = vpop.f32.mrf.mxu0
    %4355 = vdwg.mxu0
    %4356 = vmatprep.subr.bf16.mxu0 0
    %4357 = vmatpush1.bf16.msra.mxu0 %v3895
    %4358 = vmatprep.subr.bf16.mxu0 0
    %4359 = vmatpush1.bf16.msra.mxu0 %v3894
    %4360 = vmatprep.subr.bf16.mxu0 0
    %4361 = vmatpush1.bf16.msra.mxu0 %v3893
    %4362 = vmatprep.subr.bf16.mxu0 0
    %4363 = vmatpush1.bf16.msra.mxu0 %v3892
    %4364 = vmatprep.subr.bf16.mxu0 0
    %4365 = vmatpush1.bf16.msra.mxu0 %v3891
    %4366 = vmatprep.subr.bf16.mxu0 0
    %4367 = vmatpush1.bf16.msra.mxu0 %v3890
    %4368 = vmatprep.subr.bf16.mxu0 0
    %4369 = vmatpush1.bf16.msra.mxu0 %v3889
    %4370 = vmatprep.subr.bf16.mxu0 0
    %4371 = vmatpush1.bf16.msra.mxu0 %v3888
    %4372 = vmatprep.subr.bf16.mxu0 0
    %4373 = vmatpush2.bf16.msra.mxu0 0
    %4374 = vmatprep.subr.bf16.mxu0 0
    %4375 = vmatpush2.bf16.msra.mxu0 0
    %4376 = vmatprep.subr.bf16.mxu0 0
    %4377 = vmatpush2.bf16.msra.mxu0 0
    %4378 = vmatprep.subr.bf16.mxu0 0
    %4379 = vmatpush2.bf16.msra.mxu0 0
    %4380 = vmatprep.subr.bf16.mxu0 0
    %4381 = vmatpush2.bf16.msra.mxu0 0
    %4382 = vmatprep.subr.bf16.mxu0 0
    %4383 = vmatpush2.bf16.msra.mxu0 0
    %4384 = vmatprep.subr.bf16.mxu0 0
    %4385 = vmatpush2.bf16.msra.mxu0 0
    %4386 = vmatprep.subr.bf16.mxu0 0
    %4387 = vmatpush2.bf16.msra.mxu0 0
    %4388 = vmatprep.mubr.bf16.mxu0 0
    %4389 = vmatmul.mubr.bf16.gmra.mxu0 %v3400
    %v4390 = vpop.f32.mrf.mxu0
    %v4391 = vadd.f32 %v4294, %v4390
    %v4392 = vpop.f32.mrf.mxu0
    %v4393 = vpop.f32.mrf.mxu0
    %v4394 = vadd.f32 %v4297, %v4393
    %v4395 = vpop.f32.mrf.mxu0
    %4396 = vmatprep.mubr.bf16.mxu0 0
    %4397 = vmatmul.mubr.bf16.gmra.mxu0 %v3409
    %v4398 = vpop.f32.mrf.mxu0
    %v4399 = vadd.f32 %v4302, %v4398
    %v4400 = vpop.f32.mrf.mxu0
    %v4401 = vpop.f32.mrf.mxu0
    %v4402 = vadd.f32 %v4305, %v4401
    %v4403 = vpop.f32.mrf.mxu0
    %4404 = vmatprep.mubr.bf16.mxu0 0
    %4405 = vmatmul.mubr.bf16.gmra.mxu0 %v3418
    %v4406 = vpop.f32.mrf.mxu0
    %v4407 = vadd.f32 %v4310, %v4406
    %v4408 = vpop.f32.mrf.mxu0
    %v4409 = vpop.f32.mrf.mxu0
    %v4410 = vadd.f32 %v4313, %v4409
    %v4411 = vpop.f32.mrf.mxu0
    %4412 = vmatprep.mubr.bf16.mxu0 0
    %4413 = vmatmul.mubr.bf16.gmra.mxu0 %v3427
    %v4414 = vpop.f32.mrf.mxu0
    %v4415 = vadd.f32 %v4318, %v4414
    %v4416 = vpop.f32.mrf.mxu0
    %v4417 = vpop.f32.mrf.mxu0
    %v4418 = vadd.f32 %v4321, %v4417
    %v4419 = vpop.f32.mrf.mxu0
    %4420 = vmatprep.mubr.bf16.mxu0 0
    %4421 = vmatmul.mubr.bf16.gmra.mxu0 %v3436
    %v4422 = vpop.f32.mrf.mxu0
    %v4423 = vadd.f32 %v4326, %v4422
    %v4424 = vpop.f32.mrf.mxu0
    %v4425 = vpop.f32.mrf.mxu0
    %v4426 = vadd.f32 %v4329, %v4425
    %v4427 = vpop.f32.mrf.mxu0
    %4428 = vmatprep.mubr.bf16.mxu0 0
    %4429 = vmatmul.mubr.bf16.gmra.mxu0 %v3445
    %v4430 = vpop.f32.mrf.mxu0
    %v4431 = vadd.f32 %v4334, %v4430
    %v4432 = vpop.f32.mrf.mxu0
    %v4433 = vpop.f32.mrf.mxu0
    %v4434 = vadd.f32 %v4337, %v4433
    %v4435 = vpop.f32.mrf.mxu0
    %4436 = vmatprep.mubr.bf16.mxu0 0
    %4437 = vmatmul.mubr.bf16.gmra.mxu0 %v3454
    %v4438 = vpop.f32.mrf.mxu0
    %v4439 = vadd.f32 %v4342, %v4438
    %v4440 = vpop.f32.mrf.mxu0
    %v4441 = vpop.f32.mrf.mxu0
    %v4442 = vadd.f32 %v4345, %v4441
    %v4443 = vpop.f32.mrf.mxu0
    %4444 = vmatprep.mubr.bf16.mxu0 0
    %4445 = vmatmul.mubr.bf16.gmra.mxu0 %v3463
    %v4446 = vpop.f32.mrf.mxu0
    %v4447 = vadd.f32 %v4350, %v4446
    %v4448 = vpop.f32.mrf.mxu0
    %v4449 = vpop.f32.mrf.mxu0
    %v4450 = vadd.f32 %v4353, %v4449
    %v4451 = vpop.f32.mrf.mxu0
    %4452 = vdwg.mxu0
    %v4453 = vmax.f32 %v4391, 0.0
    %v4454 = vmax.f32 %v4394, 0.0
    %v4455 = vmax.f32 %v4399, 0.0
    %v4456 = vmax.f32 %v4402, 0.0
    %v4457 = vmax.f32 %v4407, 0.0
    %v4458 = vmax.f32 %v4410, 0.0
    %v4459 = vmax.f32 %v4415, 0.0
    %v4460 = vmax.f32 %v4418, 0.0
    %v4461 = vmax.f32 %v4423, 0.0
    %v4462 = vmax.f32 %v4426, 0.0
    %v4463 = vmax.f32 %v4431, 0.0
    %v4464 = vmax.f32 %v4434, 0.0
    %v4465 = vmax.f32 %v4439, 0.0
    %v4466 = vmax.f32 %v4442, 0.0
    %v4467 = vmax.f32 %v4447, 0.0
    %v4468 = vmax.f32 %v4450, 0.0
    %4469 = vst [vmem:[%s103 + $0x8] sm:$0xff] %v4453
    %4470 = vst [vmem:[%s103 + $0x20] sm:$0xff] %v4454
    %4471 = vst [vmem:[%s103 + $0x38] sm:$0xff] %v4455
    %4472 = vst [vmem:[%s103 + $0x50] sm:$0xff] %v4456
    %4473 = vst [vmem:[%s103 + $0x68] sm:$0xff] %v4457
    %4474 = vst [vmem:[%s103 + $0x80] sm:$0xff] %v4458
    %4475 = vst [vmem:[%s103 + $0x98] sm:$0xff] %v4459
    %4476 = vst [vmem:[%s103 + $0xb0] sm:$0xff] %v4460
    %4477 = vst [vmem:[%s103 + $0xf8] sm:$0xff] %v4461
    %4478 = vst [vmem:[%s103 + $0x110] sm:$0xff] %v4462
    %4479 = vst [vmem:[%s103 + $0x128] sm:$0xff] %v4463
    %4480 = vst [vmem:[%s103 + $0x140] sm:$0xff] %v4464
    %4481 = vst [vmem:[%s103 + $0x158] sm:$0xff] %v4465
    %4482 = vst [vmem:[%s103 + $0x170] sm:$0xff] %v4466
    %4483 = vst [vmem:[%s103 + $0x188] sm:$0xff] %v4467
    %4484 = vst [vmem:[%s103 + $0x1a0] sm:$0xff] %v4468
    %v4485 = vld [vmem:[#allocation2 + $0x7] sm:$0xff]
    %v4486 = vld [vmem:[#allocation2 + $0x1f] sm:$0xff]
    %v4487 = vld [vmem:[#allocation2 + $0x37] sm:$0xff]
    %v4488 = vld [vmem:[#allocation2 + $0x4f] sm:$0xff]
    %v4489 = vld [vmem:[#allocation2 + $0x67] sm:$0xff]
    %v4490 = vld [vmem:[#allocation2 + $0x7f] sm:$0xff]
    %v4491 = vld [vmem:[#allocation2 + $0x97] sm:$0xff]
    %v4492 = vld [vmem:[#allocation2 + $0xaf] sm:$0xff]
    %v4493 = vld [vmem:[#allocation2 + $0xc7] sm:$0xff]
    %v4494 = vld [vmem:[#allocation2 + $0xdf] sm:$0xff]
    %v4495 = vld [vmem:[#allocation2 + $0xf7] sm:$0xff]
    %v4496 = vld [vmem:[#allocation2 + $0x10f] sm:$0xff]
    %v4497 = vld [vmem:[#allocation2 + $0x127] sm:$0xff]
    %v4498 = vld [vmem:[#allocation2 + $0x13f] sm:$0xff]
    %v4499 = vld [vmem:[#allocation2 + $0x157] sm:$0xff]
    %v4500 = vld [vmem:[#allocation2 + $0x16f] sm:$0xff]
    %v4501 = vld [vmem:[#allocation2 + $0x187] sm:$0xff]
    %v4502 = vld [vmem:[#allocation2 + $0x19f] sm:$0xff]
    %v4503 = vld [vmem:[#allocation2 + $0x1b7] sm:$0xff]
    %v4504 = vld [vmem:[#allocation2 + $0x1cf] sm:$0xff]
    %v4505 = vpack.c.bf16 %v4486, %v4485
    %v4506 = vpack.c.bf16 %v4488, %v4487
    %v4507 = vpack.c.bf16 %v4490, %v4489
    %v4508 = vpack.c.bf16 %v4492, %v4491
    %v4509 = vpack.c.bf16 %v4496, %v4495
    %v4510 = vpack.c.bf16 %v4498, %v4497
    %v4511 = vpack.c.bf16 %v4500, %v4499
    %v4512 = vpack.c.bf16 %v4502, %v4501
    %v4521 = vunpack.c.l.b16 %v4505
    %v4522 = vunpack.c.h.b16 %v4505
    %v4523 = vunpack.c.l.b16 %v4506
    %v4524 = vunpack.c.h.b16 %v4506
    %v4525 = vunpack.c.l.b16 %v4507
    %v4526 = vunpack.c.h.b16 %v4507
    %v4527 = vunpack.c.l.b16 %v4508
    %v4528 = vunpack.c.h.b16 %v4508
    %v4529 = vunpack.c.l.b16 %v4509
    %v4530 = vunpack.c.h.b16 %v4509
    %v4531 = vunpack.c.l.b16 %v4510
    %v4532 = vunpack.c.h.b16 %v4510
    %v4533 = vunpack.c.l.b16 %v4511
    %v4534 = vunpack.c.h.b16 %v4511
    %v4535 = vunpack.c.l.b16 %v4512
    %v4536 = vunpack.c.h.b16 %v4512
    %v4537 = vpack.c.b16 %v4521, %v4521
    %v4538 = vpack.c.b16 %v4522, %v4522
    %v4539 = vpack.c.b16 %v4523, %v4523
    %v4540 = vpack.c.b16 %v4524, %v4524
    %v4541 = vpack.c.b16 %v4525, %v4525
    %v4542 = vpack.c.b16 %v4526, %v4526
    %v4543 = vpack.c.b16 %v4527, %v4527
    %v4544 = vpack.c.b16 %v4528, %v4528
    %v4545 = vpack.c.b16 %v4529, %v4529
    %v4546 = vpack.c.b16 %v4530, %v4530
    %v4547 = vpack.c.b16 %v4531, %v4531
    %v4548 = vpack.c.b16 %v4532, %v4532
    %v4549 = vpack.c.b16 %v4533, %v4533
    %v4550 = vpack.c.b16 %v4534, %v4534
    %v4551 = vpack.c.b16 %v4535, %v4535
    %v4552 = vpack.c.b16 %v4536, %v4536
    %4569 = vst [vmem:[#allocation3] sm:$0xf] %v4537
    %4570 = vst [vmem:[#allocation3 + $0x24] sm:$0xf] %v4538
    %4571 = vst [vmem:[#allocation3 + $0x48] sm:$0xf] %v4539
    %4572 = vst [vmem:[#allocation3 + $0x6c] sm:$0xf] %v4540
    %4573 = vst [vmem:[#allocation3 + $0x90] sm:$0xf] %v4541
    %4574 = vst [vmem:[#allocation3 + $0xb4] sm:$0xf] %v4542
    %4575 = vst [vmem:[#allocation3 + $0xd8] sm:$0xf] %v4543
    %4576 = vst [vmem:[#allocation3 + $0xfc] sm:$0xf] %v4544
    %4577 = vst [vmem:[#allocation3 + $0x120] sm:$0xf] %v4545
    %4578 = vst [vmem:[#allocation3 + $0x144] sm:$0xf] %v4546
    %4579 = vst [vmem:[#allocation3 + $0x168] sm:$0xf] %v4547
    %4580 = vst [vmem:[#allocation3 + $0x18c] sm:$0xf] %v4548
    %4581 = vst [vmem:[#allocation3 + $0x1b0] sm:$0xf] %v4549
    %4582 = vst [vmem:[#allocation3 + $0x1d4] sm:$0xf] %v4550
    %4583 = vst [vmem:[#allocation3 + $0x1f8] sm:$0xf] %v4551
    %4584 = vst [vmem:[#allocation3 + $0x21c] sm:$0xf] %v4552
    %v4585 = vpack.c.bf16 %v4487, %v4486
    %v4586 = vpack.c.bf16 %v4489, %v4488
    %v4587 = vpack.c.bf16 %v4491, %v4490
    %v4588 = vpack.c.bf16 %v4493, %v4492
    %v4589 = vpack.c.bf16 %v4497, %v4496
    %v4590 = vpack.c.bf16 %v4499, %v4498
    %v4591 = vpack.c.bf16 %v4501, %v4500
    %v4592 = vpack.c.bf16 %v4503, %v4502
    %v4601 = vunpack.c.l.b16 %v4585
    %v4602 = vunpack.c.h.b16 %v4585
    %v4603 = vunpack.c.l.b16 %v4586
    %v4604 = vunpack.c.h.b16 %v4586
    %v4605 = vunpack.c.l.b16 %v4587
    %v4606 = vunpack.c.h.b16 %v4587
    %v4607 = vunpack.c.l.b16 %v4588
    %v4608 = vunpack.c.h.b16 %v4588
    %v4609 = vunpack.c.l.b16 %v4589
    %v4610 = vunpack.c.h.b16 %v4589
    %v4611 = vunpack.c.l.b16 %v4590
    %v4612 = vunpack.c.h.b16 %v4590
    %v4613 = vunpack.c.l.b16 %v4591
    %v4614 = vunpack.c.h.b16 %v4591
    %v4615 = vunpack.c.l.b16 %v4592
    %v4616 = vunpack.c.h.b16 %v4592
    %v4617 = vpack.c.b16 %v4601, %v4601
    %v4618 = vpack.c.b16 %v4602, %v4602
    %v4619 = vpack.c.b16 %v4603, %v4603
    %v4620 = vpack.c.b16 %v4604, %v4604
    %v4621 = vpack.c.b16 %v4605, %v4605
    %v4622 = vpack.c.b16 %v4606, %v4606
    %v4623 = vpack.c.b16 %v4607, %v4607
    %v4624 = vpack.c.b16 %v4608, %v4608
    %v4625 = vpack.c.b16 %v4609, %v4609
    %v4626 = vpack.c.b16 %v4610, %v4610
    %v4627 = vpack.c.b16 %v4611, %v4611
    %v4628 = vpack.c.b16 %v4612, %v4612
    %v4629 = vpack.c.b16 %v4613, %v4613
    %v4630 = vpack.c.b16 %v4614, %v4614
    %v4631 = vpack.c.b16 %v4615, %v4615
    %v4632 = vpack.c.b16 %v4616, %v4616
    %4649 = vst [vmem:[#allocation3 + $0xc] sm:$0xf] %v4617
    %4650 = vst [vmem:[#allocation3 + $0x30] sm:$0xf] %v4618
    %4651 = vst [vmem:[#allocation3 + $0x54] sm:$0xf] %v4619
    %4652 = vst [vmem:[#allocation3 + $0x78] sm:$0xf] %v4620
    %4653 = vst [vmem:[#allocation3 + $0x9c] sm:$0xf] %v4621
    %4654 = vst [vmem:[#allocation3 + $0xc0] sm:$0xf] %v4622
    %4655 = vst [vmem:[#allocation3 + $0xe4] sm:$0xf] %v4623
    %4656 = vst [vmem:[#allocation3 + $0x108] sm:$0xf] %v4624
    %4657 = vst [vmem:[#allocation3 + $0x12c] sm:$0xf] %v4625
    %4658 = vst [vmem:[#allocation3 + $0x150] sm:$0xf] %v4626
    %4659 = vst [vmem:[#allocation3 + $0x174] sm:$0xf] %v4627
    %4660 = vst [vmem:[#allocation3 + $0x198] sm:$0xf] %v4628
    %4661 = vst [vmem:[#allocation3 + $0x1bc] sm:$0xf] %v4629
    %4662 = vst [vmem:[#allocation3 + $0x1e0] sm:$0xf] %v4630
    %4663 = vst [vmem:[#allocation3 + $0x204] sm:$0xf] %v4631
    %4664 = vst [vmem:[#allocation3 + $0x228] sm:$0xf] %v4632
    %v4665 = vpack.c.bf16 %v4494, %v4493
    %v4666 = vpack.c.bf16 %v4504, %v4503
    %v4669 = vunpack.c.l.b16 %v4665
    %v4670 = vunpack.c.h.b16 %v4665
    %v4671 = vunpack.c.l.b16 %v4666
    %v4672 = vunpack.c.h.b16 %v4666
    %v4673 = vpack.c.b16 %v4669, %v4669
    %v4674 = vpack.c.b16 %v4670, %v4670
    %v4675 = vpack.c.b16 %v4671, %v4671
    %v4676 = vpack.c.b16 %v4672, %v4672
    %4681 = vst [vmem:[#allocation3 + $0x18] sm:$0xf] %v4539
    %4682 = vst [vmem:[#allocation3 + $0x3c] sm:$0xf] %v4540
    %4683 = vst [vmem:[#allocation3 + $0x60] sm:$0xf] %v4541
    %4684 = vst [vmem:[#allocation3 + $0x84] sm:$0xf] %v4542
    %4685 = vst [vmem:[#allocation3 + $0xa8] sm:$0xf] %v4543
    %4686 = vst [vmem:[#allocation3 + $0xcc] sm:$0xf] %v4544
    %4687 = vst [vmem:[#allocation3 + $0xf0] sm:$0xf] %v4673
    %4688 = vst [vmem:[#allocation3 + $0x114] sm:$0xf] %v4674
    %4689 = vst [vmem:[#allocation3 + $0x138] sm:$0xf] %v4547
    %4690 = vst [vmem:[#allocation3 + $0x15c] sm:$0xf] %v4548
    %4691 = vst [vmem:[#allocation3 + $0x180] sm:$0xf] %v4549
    %4692 = vst [vmem:[#allocation3 + $0x1a4] sm:$0xf] %v4550
    %4693 = vst [vmem:[#allocation3 + $0x1c8] sm:$0xf] %v4551
    %4694 = vst [vmem:[#allocation3 + $0x1ec] sm:$0xf] %v4552
    %4695 = vst [vmem:[#allocation3 + $0x210] sm:$0xf] %v4675
    %4696 = vst [vmem:[#allocation3 + $0x234] sm:$0xf] %v4676
    %v4697 = vld [vmem:[#allocation2 + $0x8] sm:$0xff]
    %v4698 = vld [vmem:[#allocation2 + $0x20] sm:$0xff]
    %v4699 = vld [vmem:[#allocation2 + $0x38] sm:$0xff]
    %v4700 = vld [vmem:[#allocation2 + $0x50] sm:$0xff]
    %v4701 = vld [vmem:[#allocation2 + $0x68] sm:$0xff]
    %v4702 = vld [vmem:[#allocation2 + $0x80] sm:$0xff]
    %v4703 = vld [vmem:[#allocation2 + $0x98] sm:$0xff]
    %v4704 = vld [vmem:[#allocation2 + $0xb0] sm:$0xff]
    %v4705 = vld [vmem:[#allocation2 + $0xc8] sm:$0xff]
    %v4706 = vld [vmem:[#allocation2 + $0xe0] sm:$0xff]
    %v4707 = vld [vmem:[#allocation2 + $0xf8] sm:$0xff]
    %v4708 = vld [vmem:[#allocation2 + $0x110] sm:$0xff]
    %v4709 = vld [vmem:[#allocation2 + $0x128] sm:$0xff]
    %v4710 = vld [vmem:[#allocation2 + $0x140] sm:$0xff]
    %v4711 = vld [vmem:[#allocation2 + $0x158] sm:$0xff]
    %v4712 = vld [vmem:[#allocation2 + $0x170] sm:$0xff]
    %v4713 = vld [vmem:[#allocation2 + $0x188] sm:$0xff]
    %v4714 = vld [vmem:[#allocation2 + $0x1a0] sm:$0xff]
    %v4715 = vld [vmem:[#allocation2 + $0x1b8] sm:$0xff]
    %v4716 = vld [vmem:[#allocation2 + $0x1d0] sm:$0xff]
    %v4717 = vpack.c.bf16 %v4698, %v4697
    %v4718 = vpack.c.bf16 %v4700, %v4699
    %v4719 = vpack.c.bf16 %v4702, %v4701
    %v4720 = vpack.c.bf16 %v4704, %v4703
    %v4721 = vpack.c.bf16 %v4708, %v4707
    %v4722 = vpack.c.bf16 %v4710, %v4709
    %v4723 = vpack.c.bf16 %v4712, %v4711
    %v4724 = vpack.c.bf16 %v4714, %v4713
    %v4733 = vunpack.c.l.b16 %v4717
    %v4734 = vunpack.c.h.b16 %v4717
    %v4735 = vunpack.c.l.b16 %v4718
    %v4736 = vunpack.c.h.b16 %v4718
    %v4737 = vunpack.c.l.b16 %v4719
    %v4738 = vunpack.c.h.b16 %v4719
    %v4739 = vunpack.c.l.b16 %v4720
    %v4740 = vunpack.c.h.b16 %v4720
    %v4741 = vunpack.c.l.b16 %v4721
    %v4742 = vunpack.c.h.b16 %v4721
    %v4743 = vunpack.c.l.b16 %v4722
    %v4744 = vunpack.c.h.b16 %v4722
    %v4745 = vunpack.c.l.b16 %v4723
    %v4746 = vunpack.c.h.b16 %v4723
    %v4747 = vunpack.c.l.b16 %v4724
    %v4748 = vunpack.c.h.b16 %v4724
    %v4749 = vpack.c.b16 %v4733, %v4733
    %v4750 = vpack.c.b16 %v4734, %v4734
    %v4751 = vpack.c.b16 %v4735, %v4735
    %v4752 = vpack.c.b16 %v4736, %v4736
    %v4753 = vpack.c.b16 %v4737, %v4737
    %v4754 = vpack.c.b16 %v4738, %v4738
    %v4755 = vpack.c.b16 %v4739, %v4739
    %v4756 = vpack.c.b16 %v4740, %v4740
    %v4757 = vpack.c.b16 %v4741, %v4741
    %v4758 = vpack.c.b16 %v4742, %v4742
    %v4759 = vpack.c.b16 %v4743, %v4743
    %v4760 = vpack.c.b16 %v4744, %v4744
    %v4761 = vpack.c.b16 %v4745, %v4745
    %v4762 = vpack.c.b16 %v4746, %v4746
    %v4763 = vpack.c.b16 %v4747, %v4747
    %v4764 = vpack.c.b16 %v4748, %v4748
    %4781 = vst [vmem:[#allocation3 + $0x4] sm:$0xf] %v4749
    %4782 = vst [vmem:[#allocation3 + $0x28] sm:$0xf] %v4750
    %4783 = vst [vmem:[#allocation3 + $0x4c] sm:$0xf] %v4751
    %4784 = vst [vmem:[#allocation3 + $0x70] sm:$0xf] %v4752
    %4785 = vst [vmem:[#allocation3 + $0x94] sm:$0xf] %v4753
    %4786 = vst [vmem:[#allocation3 + $0xb8] sm:$0xf] %v4754
    %4787 = vst [vmem:[#allocation3 + $0xdc] sm:$0xf] %v4755
    %4788 = vst [vmem:[#allocation3 + $0x100] sm:$0xf] %v4756
    %4789 = vst [vmem:[#allocation3 + $0x124] sm:$0xf] %v4757
    %4790 = vst [vmem:[#allocation3 + $0x148] sm:$0xf] %v4758
    %4791 = vst [vmem:[#allocation3 + $0x16c] sm:$0xf] %v4759
    %4792 = vst [vmem:[#allocation3 + $0x190] sm:$0xf] %v4760
    %4793 = vst [vmem:[#allocation3 + $0x1b4] sm:$0xf] %v4761
    %4794 = vst [vmem:[#allocation3 + $0x1d8] sm:$0xf] %v4762
    %4795 = vst [vmem:[#allocation3 + $0x1fc] sm:$0xf] %v4763
    %4796 = vst [vmem:[#allocation3 + $0x220] sm:$0xf] %v4764
    %v4797 = vpack.c.bf16 %v4699, %v4698
    %v4798 = vpack.c.bf16 %v4701, %v4700
    %v4799 = vpack.c.bf16 %v4703, %v4702
    %v4800 = vpack.c.bf16 %v4705, %v4704
    %v4801 = vpack.c.bf16 %v4709, %v4708
    %v4802 = vpack.c.bf16 %v4711, %v4710
    %v4803 = vpack.c.bf16 %v4713, %v4712
    %v4804 = vpack.c.bf16 %v4715, %v4714
    %v4813 = vunpack.c.l.b16 %v4797
    %v4814 = vunpack.c.h.b16 %v4797
    %v4815 = vunpack.c.l.b16 %v4798
    %v4816 = vunpack.c.h.b16 %v4798
    %v4817 = vunpack.c.l.b16 %v4799
    %v4818 = vunpack.c.h.b16 %v4799
    %v4819 = vunpack.c.l.b16 %v4800
    %v4820 = vunpack.c.h.b16 %v4800
    %v4821 = vunpack.c.l.b16 %v4801
    %v4822 = vunpack.c.h.b16 %v4801
    %v4823 = vunpack.c.l.b16 %v4802
    %v4824 = vunpack.c.h.b16 %v4802
    %v4825 = vunpack.c.l.b16 %v4803
    %v4826 = vunpack.c.h.b16 %v4803
    %v4827 = vunpack.c.l.b16 %v4804
    %v4828 = vunpack.c.h.b16 %v4804
    %v4829 = vpack.c.b16 %v4813, %v4813
    %v4830 = vpack.c.b16 %v4814, %v4814
    %v4831 = vpack.c.b16 %v4815, %v4815
    %v4832 = vpack.c.b16 %v4816, %v4816
    %v4833 = vpack.c.b16 %v4817, %v4817
    %v4834 = vpack.c.b16 %v4818, %v4818
    %v4835 = vpack.c.b16 %v4819, %v4819
    %v4836 = vpack.c.b16 %v4820, %v4820
    %v4837 = vpack.c.b16 %v4821, %v4821
    %v4838 = vpack.c.b16 %v4822, %v4822
    %v4839 = vpack.c.b16 %v4823, %v4823
    %v4840 = vpack.c.b16 %v4824, %v4824
    %v4841 = vpack.c.b16 %v4825, %v4825
    %v4842 = vpack.c.b16 %v4826, %v4826
    %v4843 = vpack.c.b16 %v4827, %v4827
    %v4844 = vpack.c.b16 %v4828, %v4828
    %4861 = vst [vmem:[#allocation3 + $0x10] sm:$0xf] %v4829
    %4862 = vst [vmem:[#allocation3 + $0x34] sm:$0xf] %v4830
    %4863 = vst [vmem:[#allocation3 + $0x58] sm:$0xf] %v4831
    %4864 = vst [vmem:[#allocation3 + $0x7c] sm:$0xf] %v4832
    %4865 = vst [vmem:[#allocation3 + $0xa0] sm:$0xf] %v4833
    %4866 = vst [vmem:[#allocation3 + $0xc4] sm:$0xf] %v4834
    %4867 = vst [vmem:[#allocation3 + $0xe8] sm:$0xf] %v4835
    %4868 = vst [vmem:[#allocation3 + $0x10c] sm:$0xf] %v4836
    %4869 = vst [vmem:[#allocation3 + $0x130] sm:$0xf] %v4837
    %4870 = vst [vmem:[#allocation3 + $0x154] sm:$0xf] %v4838
    %4871 = vst [vmem:[#allocation3 + $0x178] sm:$0xf] %v4839
    %4872 = vst [vmem:[#allocation3 + $0x19c] sm:$0xf] %v4840
    %4873 = vst [vmem:[#allocation3 + $0x1c0] sm:$0xf] %v4841
    %4874 = vst [vmem:[#allocation3 + $0x1e4] sm:$0xf] %v4842
    %4875 = vst [vmem:[#allocation3 + $0x208] sm:$0xf] %v4843
    %4876 = vst [vmem:[#allocation3 + $0x22c] sm:$0xf] %v4844
    %v4877 = vpack.c.bf16 %v4706, %v4705
    %v4878 = vpack.c.bf16 %v4716, %v4715
    %v4881 = vunpack.c.l.b16 %v4877
    %v4882 = vunpack.c.h.b16 %v4877
    %v4883 = vunpack.c.l.b16 %v4878
    %v4884 = vunpack.c.h.b16 %v4878
    %v4885 = vpack.c.b16 %v4881, %v4881
    %v4886 = vpack.c.b16 %v4882, %v4882
    %v4887 = vpack.c.b16 %v4883, %v4883
    %v4888 = vpack.c.b16 %v4884, %v4884
    %4893 = vst [vmem:[#allocation3 + $0x1c] sm:$0xf] %v4751
    %4894 = vst [vmem:[#allocation3 + $0x40] sm:$0xf] %v4752
    %4895 = vst [vmem:[#allocation3 + $0x64] sm:$0xf] %v4753
    %4896 = vst [vmem:[#allocation3 + $0x88] sm:$0xf] %v4754
    %4897 = vst [vmem:[#allocation3 + $0xac] sm:$0xf] %v4755
    %4898 = vst [vmem:[#allocation3 + $0xd0] sm:$0xf] %v4756
    %4899 = vst [vmem:[#allocation3 + $0xf4] sm:$0xf] %v4885
    %4900 = vst [vmem:[#allocation3 + $0x118] sm:$0xf] %v4886
    %4901 = vst [vmem:[#allocation3 + $0x13c] sm:$0xf] %v4759
    %4902 = vst [vmem:[#allocation3 + $0x160] sm:$0xf] %v4760
    %4903 = vst [vmem:[#allocation3 + $0x184] sm:$0xf] %v4761
    %4904 = vst [vmem:[#allocation3 + $0x1a8] sm:$0xf] %v4762
    %4905 = vst [vmem:[#allocation3 + $0x1cc] sm:$0xf] %v4763
    %4906 = vst [vmem:[#allocation3 + $0x1f0] sm:$0xf] %v4764
    %4907 = vst [vmem:[#allocation3 + $0x214] sm:$0xf] %v4887
    %4908 = vst [vmem:[#allocation3 + $0x238] sm:$0xf] %v4888
    %v4909 = vld [vmem:[#allocation2 + $0x9] sm:$0xff]
    %v4910 = vld [vmem:[#allocation2 + $0x21] sm:$0xff]
    %v4911 = vld [vmem:[#allocation2 + $0x39] sm:$0xff]
    %v4912 = vld [vmem:[#allocation2 + $0x51] sm:$0xff]
    %v4913 = vld [vmem:[#allocation2 + $0x69] sm:$0xff]
    %v4914 = vld [vmem:[#allocation2 + $0x81] sm:$0xff]
    %v4915 = vld [vmem:[#allocation2 + $0x99] sm:$0xff]
    %v4916 = vld [vmem:[#allocation2 + $0xb1] sm:$0xff]
    %v4917 = vld [vmem:[#allocation2 + $0xc9] sm:$0xff]
    %v4918 = vld [vmem:[#allocation2 + $0xe1] sm:$0xff]
    %v4919 = vld [vmem:[#allocation2 + $0xf9] sm:$0xff]
    %v4920 = vld [vmem:[#allocation2 + $0x111] sm:$0xff]
    %v4921 = vld [vmem:[#allocation2 + $0x129] sm:$0xff]
    %v4922 = vld [vmem:[#allocation2 + $0x141] sm:$0xff]
    %v4923 = vld [vmem:[#allocation2 + $0x159] sm:$0xff]
    %v4924 = vld [vmem:[#allocation2 + $0x171] sm:$0xff]
    %v4925 = vld [vmem:[#allocation2 + $0x189] sm:$0xff]
    %v4926 = vld [vmem:[#allocation2 + $0x1a1] sm:$0xff]
    %v4927 = vld [vmem:[#allocation2 + $0x1b9] sm:$0xff]
    %v4928 = vld [vmem:[#allocation2 + $0x1d1] sm:$0xff]
    %v4929 = vpack.c.bf16 %v4910, %v4909
    %v4930 = vpack.c.bf16 %v4912, %v4911
    %v4931 = vpack.c.bf16 %v4914, %v4913
    %v4932 = vpack.c.bf16 %v4916, %v4915
    %v4933 = vpack.c.bf16 %v4920, %v4919
    %v4934 = vpack.c.bf16 %v4922, %v4921
    %v4935 = vpack.c.bf16 %v4924, %v4923
    %v4936 = vpack.c.bf16 %v4926, %v4925
    %v4945 = vunpack.c.l.b16 %v4929
    %v4946 = vunpack.c.h.b16 %v4929
    %v4947 = vunpack.c.l.b16 %v4930
    %v4948 = vunpack.c.h.b16 %v4930
    %v4949 = vunpack.c.l.b16 %v4931
    %v4950 = vunpack.c.h.b16 %v4931
    %v4951 = vunpack.c.l.b16 %v4932
    %v4952 = vunpack.c.h.b16 %v4932
    %v4953 = vunpack.c.l.b16 %v4933
    %v4954 = vunpack.c.h.b16 %v4933
    %v4955 = vunpack.c.l.b16 %v4934
    %v4956 = vunpack.c.h.b16 %v4934
    %v4957 = vunpack.c.l.b16 %v4935
    %v4958 = vunpack.c.h.b16 %v4935
    %v4959 = vunpack.c.l.b16 %v4936
    %v4960 = vunpack.c.h.b16 %v4936
    %v4961 = vpack.c.b16 %v4945, %v4945
    %v4962 = vpack.c.b16 %v4946, %v4946
    %v4963 = vpack.c.b16 %v4947, %v4947
    %v4964 = vpack.c.b16 %v4948, %v4948
    %v4965 = vpack.c.b16 %v4949, %v4949
    %v4966 = vpack.c.b16 %v4950, %v4950
    %v4967 = vpack.c.b16 %v4951, %v4951
    %v4968 = vpack.c.b16 %v4952, %v4952
    %v4969 = vpack.c.b16 %v4953, %v4953
    %v4970 = vpack.c.b16 %v4954, %v4954
    %v4971 = vpack.c.b16 %v4955, %v4955
    %v4972 = vpack.c.b16 %v4956, %v4956
    %v4973 = vpack.c.b16 %v4957, %v4957
    %v4974 = vpack.c.b16 %v4958, %v4958
    %v4975 = vpack.c.b16 %v4959, %v4959
    %v4976 = vpack.c.b16 %v4960, %v4960
    %4993 = vst [vmem:[#allocation3 + $0x8] sm:$0xf] %v4961
    %4994 = vst [vmem:[#allocation3 + $0x2c] sm:$0xf] %v4962
    %4995 = vst [vmem:[#allocation3 + $0x50] sm:$0xf] %v4963
    %4996 = vst [vmem:[#allocation3 + $0x74] sm:$0xf] %v4964
    %4997 = vst [vmem:[#allocation3 + $0x98] sm:$0xf] %v4965
    %4998 = vst [vmem:[#allocation3 + $0xbc] sm:$0xf] %v4966
    %4999 = vst [vmem:[#allocation3 + $0xe0] sm:$0xf] %v4967
    %5000 = vst [vmem:[#allocation3 + $0x104] sm:$0xf] %v4968
    %5001 = vst [vmem:[#allocation3 + $0x128] sm:$0xf] %v4969
    %5002 = vst [vmem:[#allocation3 + $0x14c] sm:$0xf] %v4970
    %5003 = vst [vmem:[#allocation3 + $0x170] sm:$0xf] %v4971
    %5004 = vst [vmem:[#allocation3 + $0x194] sm:$0xf] %v4972
    %5005 = vst [vmem:[#allocation3 + $0x1b8] sm:$0xf] %v4973
    %5006 = vst [vmem:[#allocation3 + $0x1dc] sm:$0xf] %v4974
    %5007 = vst [vmem:[#allocation3 + $0x200] sm:$0xf] %v4975
    %5008 = vst [vmem:[#allocation3 + $0x224] sm:$0xf] %v4976
    %v5009 = vpack.c.bf16 %v4911, %v4910
    %v5010 = vpack.c.bf16 %v4913, %v4912
    %v5011 = vpack.c.bf16 %v4915, %v4914
    %v5012 = vpack.c.bf16 %v4917, %v4916
    %v5013 = vpack.c.bf16 %v4921, %v4920
    %v5014 = vpack.c.bf16 %v4923, %v4922
    %v5015 = vpack.c.bf16 %v4925, %v4924
    %v5016 = vpack.c.bf16 %v4927, %v4926
    %v5025 = vunpack.c.l.b16 %v5009
    %v5026 = vunpack.c.h.b16 %v5009
    %v5027 = vunpack.c.l.b16 %v5010
    %v5028 = vunpack.c.h.b16 %v5010
    %v5029 = vunpack.c.l.b16 %v5011
    %v5030 = vunpack.c.h.b16 %v5011
    %v5031 = vunpack.c.l.b16 %v5012
    %v5032 = vunpack.c.h.b16 %v5012
    %v5033 = vunpack.c.l.b16 %v5013
    %v5034 = vunpack.c.h.b16 %v5013
    %v5035 = vunpack.c.l.b16 %v5014
    %v5036 = vunpack.c.h.b16 %v5014
    %v5037 = vunpack.c.l.b16 %v5015
    %v5038 = vunpack.c.h.b16 %v5015
    %v5039 = vunpack.c.l.b16 %v5016
    %v5040 = vunpack.c.h.b16 %v5016
    %v5041 = vpack.c.b16 %v5025, %v5025
    %v5042 = vpack.c.b16 %v5026, %v5026
    %v5043 = vpack.c.b16 %v5027, %v5027
    %v5044 = vpack.c.b16 %v5028, %v5028
    %v5045 = vpack.c.b16 %v5029, %v5029
    %v5046 = vpack.c.b16 %v5030, %v5030
    %v5047 = vpack.c.b16 %v5031, %v5031
    %v5048 = vpack.c.b16 %v5032, %v5032
    %v5049 = vpack.c.b16 %v5033, %v5033
    %v5050 = vpack.c.b16 %v5034, %v5034
    %v5051 = vpack.c.b16 %v5035, %v5035
    %v5052 = vpack.c.b16 %v5036, %v5036
    %v5053 = vpack.c.b16 %v5037, %v5037
    %v5054 = vpack.c.b16 %v5038, %v5038
    %v5055 = vpack.c.b16 %v5039, %v5039
    %v5056 = vpack.c.b16 %v5040, %v5040
    %5073 = vst [vmem:[#allocation3 + $0x14] sm:$0xf] %v5041
    %5074 = vst [vmem:[#allocation3 + $0x38] sm:$0xf] %v5042
    %5075 = vst [vmem:[#allocation3 + $0x5c] sm:$0xf] %v5043
    %5076 = vst [vmem:[#allocation3 + $0x80] sm:$0xf] %v5044
    %5077 = vst [vmem:[#allocation3 + $0xa4] sm:$0xf] %v5045
    %5078 = vst [vmem:[#allocation3 + $0xc8] sm:$0xf] %v5046
    %5079 = vst [vmem:[#allocation3 + $0xec] sm:$0xf] %v5047
    %5080 = vst [vmem:[#allocation3 + $0x110] sm:$0xf] %v5048
    %5081 = vst [vmem:[#allocation3 + $0x134] sm:$0xf] %v5049
    %5082 = vst [vmem:[#allocation3 + $0x158] sm:$0xf] %v5050
    %5083 = vst [vmem:[#allocation3 + $0x17c] sm:$0xf] %v5051
    %5084 = vst [vmem:[#allocation3 + $0x1a0] sm:$0xf] %v5052
    %5085 = vst [vmem:[#allocation3 + $0x1c4] sm:$0xf] %v5053
    %5086 = vst [vmem:[#allocation3 + $0x1e8] sm:$0xf] %v5054
    %5087 = vst [vmem:[#allocation3 + $0x20c] sm:$0xf] %v5055
    %5088 = vst [vmem:[#allocation3 + $0x230] sm:$0xf] %v5056
    %v5089 = vpack.c.bf16 %v4918, %v4917
    %v5090 = vpack.c.bf16 %v4928, %v4927
    %v5093 = vunpack.c.l.b16 %v5089
    %v5094 = vunpack.c.h.b16 %v5089
    %v5095 = vunpack.c.l.b16 %v5090
    %v5096 = vunpack.c.h.b16 %v5090
    %v5097 = vpack.c.b16 %v5093, %v5093
    %v5098 = vpack.c.b16 %v5094, %v5094
    %v5099 = vpack.c.b16 %v5095, %v5095
    %v5100 = vpack.c.b16 %v5096, %v5096
    %5105 = vst [vmem:[#allocation3 + $0x20] sm:$0xf] %v4963
    %5106 = vst [vmem:[#allocation3 + $0x44] sm:$0xf] %v4964
    %5107 = vst [vmem:[#allocation3 + $0x68] sm:$0xf] %v4965
    %5108 = vst [vmem:[#allocation3 + $0x8c] sm:$0xf] %v4966
    %5109 = vst [vmem:[#allocation3 + $0xb0] sm:$0xf] %v4967
    %5110 = vst [vmem:[#allocation3 + $0xd4] sm:$0xf] %v4968
    %5111 = vst [vmem:[#allocation3 + $0xf8] sm:$0xf] %v5097
    %5112 = vst [vmem:[#allocation3 + $0x11c] sm:$0xf] %v5098
    %5113 = vst [vmem:[#allocation3 + $0x140] sm:$0xf] %v4971
    %5114 = vst [vmem:[#allocation3 + $0x164] sm:$0xf] %v4972
    %5115 = vst [vmem:[#allocation3 + $0x188] sm:$0xf] %v4973
    %5116 = vst [vmem:[#allocation3 + $0x1ac] sm:$0xf] %v4974
    %5117 = vst [vmem:[#allocation3 + $0x1d0] sm:$0xf] %v4975
    %5118 = vst [vmem:[#allocation3 + $0x1f4] sm:$0xf] %v4976
    %5119 = vst [vmem:[#allocation3 + $0x218] sm:$0xf] %v5099
    %5120 = vst [vmem:[#allocation3 + $0x23c] sm:$0xf] %v5100
    %v5121 = vld [vmem:[#allocation3] sm:$0xff]
    %v5122 = vld [vmem:[#allocation3 + $0x8] sm:$0xff]
    %v5123 = vld [vmem:[#allocation3 + $0x10] sm:$0xff]
    %v5124 = vld [vmem:[#allocation3 + $0x18] sm:$0xff]
    %v5125 = vld [vmem:[#allocation3 + $0x20] sm:$0xf]
    %v5126 = vld [vmem:[#allocation3 + $0x24] sm:$0xff]
    %v5127 = vld [vmem:[#allocation3 + $0x2c] sm:$0xff]
    %v5128 = vld [vmem:[#allocation3 + $0x34] sm:$0xff]
    %v5129 = vld [vmem:[#allocation3 + $0x3c] sm:$0xff]
    %v5130 = vld [vmem:[#allocation3 + $0x44] sm:$0xf]
    %v5131 = vld [vmem:[#allocation3 + $0x48] sm:$0xff]
    %v5132 = vld [vmem:[#allocation3 + $0x50] sm:$0xff]
    %v5133 = vld [vmem:[#allocation3 + $0x58] sm:$0xff]
    %v5134 = vld [vmem:[#allocation3 + $0x60] sm:$0xff]
    %v5135 = vld [vmem:[#allocation3 + $0x68] sm:$0xf]
    %v5136 = vld [vmem:[#allocation3 + $0x6c] sm:$0xff]
    %v5137 = vld [vmem:[#allocation3 + $0x74] sm:$0xff]
    %v5138 = vld [vmem:[#allocation3 + $0x7c] sm:$0xff]
    %v5139 = vld [vmem:[#allocation3 + $0x84] sm:$0xff]
    %v5140 = vld [vmem:[#allocation3 + $0x8c] sm:$0xf]
    %v5141 = vld [vmem:[#allocation3 + $0x90] sm:$0xff]
    %v5142 = vld [vmem:[#allocation3 + $0x98] sm:$0xff]
    %v5143 = vld [vmem:[#allocation3 + $0xa0] sm:$0xff]
    %v5144 = vld [vmem:[#allocation3 + $0xa8] sm:$0xff]
    %v5145 = vld [vmem:[#allocation3 + $0xb0] sm:$0xf]
    %v5146 = vld [vmem:[#allocation3 + $0xb4] sm:$0xff]
    %v5147 = vld [vmem:[#allocation3 + $0xbc] sm:$0xff]
    %v5148 = vld [vmem:[#allocation3 + $0xc4] sm:$0xff]
    %v5149 = vld [vmem:[#allocation3 + $0xcc] sm:$0xff]
    %v5150 = vld [vmem:[#allocation3 + $0xd4] sm:$0xf]
    %v5151 = vld [vmem:[#allocation3 + $0xd8] sm:$0xff]
    %v5152 = vld [vmem:[#allocation3 + $0xe0] sm:$0xff]
    %v5153 = vld [vmem:[#allocation3 + $0xe8] sm:$0xff]
    %v5154 = vld [vmem:[#allocation3 + $0xf0] sm:$0xff]
    %v5155 = vld [vmem:[#allocation3 + $0xf8] sm:$0xf]
    %v5156 = vld [vmem:[#allocation3 + $0xfc] sm:$0xff]
    %v5157 = vld [vmem:[#allocation3 + $0x104] sm:$0xff]
    %v5158 = vld [vmem:[#allocation3 + $0x10c] sm:$0xff]
    %v5159 = vld [vmem:[#allocation3 + $0x114] sm:$0xff]
    %v5160 = vld [vmem:[#allocation3 + $0x11c] sm:$0xf]
    %v5161 = vld [vmem:[#allocation3 + $0x120] sm:$0xff]
    %v5162 = vld [vmem:[#allocation3 + $0x128] sm:$0xff]
    %v5163 = vld [vmem:[#allocation3 + $0x130] sm:$0xff]
    %v5164 = vld [vmem:[#allocation3 + $0x138] sm:$0xff]
    %v5165 = vld [vmem:[#allocation3 + $0x140] sm:$0xf]
    %v5166 = vld [vmem:[#allocation3 + $0x144] sm:$0xff]
    %v5167 = vld [vmem:[#allocation3 + $0x14c] sm:$0xff]
    %v5168 = vld [vmem:[#allocation3 + $0x154] sm:$0xff]
    %v5169 = vld [vmem:[#allocation3 + $0x15c] sm:$0xff]
    %v5170 = vld [vmem:[#allocation3 + $0x164] sm:$0xf]
    %v5171 = vld [vmem:[#allocation3 + $0x168] sm:$0xff]
    %v5172 = vld [vmem:[#allocation3 + $0x170] sm:$0xff]
    %v5173 = vld [vmem:[#allocation3 + $0x178] sm:$0xff]
    %v5174 = vld [vmem:[#allocation3 + $0x180] sm:$0xff]
    %v5175 = vld [vmem:[#allocation3 + $0x188] sm:$0xf]
    %v5176 = vld [vmem:[#allocation3 + $0x18c] sm:$0xff]
    %v5177 = vld [vmem:[#allocation3 + $0x194] sm:$0xff]
    %v5178 = vld [vmem:[#allocation3 + $0x19c] sm:$0xff]
    %v5179 = vld [vmem:[#allocation3 + $0x1a4] sm:$0xff]
    %v5180 = vld [vmem:[#allocation3 + $0x1ac] sm:$0xf]
    %v5181 = vld [vmem:[#allocation3 + $0x1b0] sm:$0xff]
    %v5182 = vld [vmem:[#allocation3 + $0x1b8] sm:$0xff]
    %v5183 = vld [vmem:[#allocation3 + $0x1c0] sm:$0xff]
    %v5184 = vld [vmem:[#allocation3 + $0x1c8] sm:$0xff]
    %v5185 = vld [vmem:[#allocation3 + $0x1d0] sm:$0xf]
    %v5186 = vld [vmem:[#allocation3 + $0x1d4] sm:$0xff]
    %v5187 = vld [vmem:[#allocation3 + $0x1dc] sm:$0xff]
    %v5188 = vld [vmem:[#allocation3 + $0x1e4] sm:$0xff]
    %v5189 = vld [vmem:[#allocation3 + $0x1ec] sm:$0xff]
    %v5190 = vld [vmem:[#allocation3 + $0x1f4] sm:$0xf]
    %v5191 = vld [vmem:[#allocation3 + $0x1f8] sm:$0xff]
    %v5192 = vld [vmem:[#allocation3 + $0x200] sm:$0xff]
    %v5193 = vld [vmem:[#allocation3 + $0x208] sm:$0xff]
    %v5194 = vld [vmem:[#allocation3 + $0x210] sm:$0xff]
    %v5195 = vld [vmem:[#allocation3 + $0x218] sm:$0xf]
    %v5196 = vld [vmem:[#allocation3 + $0x21c] sm:$0xff]
    %v5197 = vld [vmem:[#allocation3 + $0x224] sm:$0xff]
    %v5198 = vld [vmem:[#allocation3 + $0x22c] sm:$0xff]
    %v5199 = vld [vmem:[#allocation3 + $0x234] sm:$0xff]
    %v5200 = vld [vmem:[#allocation3 + $0x23c] sm:$0xf]
    %s5201 = scalar_lea.vmem [#allocation4], 1152
    %v5202 = vld [vmem:[%s5201] sm:$0xf]
    %v5203 = vld [vmem:[%s5201 + $0x4] sm:$0xf]
    %v5204 = vld [vmem:[%s5201 + $0x8] sm:$0xf]
    %v5205 = vld [vmem:[%s5201 + $0xc] sm:$0xf]
    %v5206 = vld [vmem:[%s5201 + $0x10] sm:$0xf]
    %v5207 = vld [vmem:[%s5201 + $0x14] sm:$0xf]
    %v5208 = vld [vmem:[%s5201 + $0x18] sm:$0xf]
    %v5209 = vld [vmem:[%s5201 + $0x1c] sm:$0xf]
    %v5210 = vld [vmem:[%s5201 + $0x20] sm:$0xf]
    %v5211 = vld [vmem:[%s5201 + $0x24] sm:$0xf]
    %v5212 = vld [vmem:[%s5201 + $0x28] sm:$0xf]
    %v5213 = vld [vmem:[%s5201 + $0x2c] sm:$0xf]
    %v5214 = vld [vmem:[%s5201 + $0x30] sm:$0xf]
    %v5215 = vld [vmem:[%s5201 + $0x34] sm:$0xf]
    %v5216 = vld [vmem:[%s5201 + $0x38] sm:$0xf]
    %v5217 = vld [vmem:[%s5201 + $0x3c] sm:$0xf]
    %v5218 = vld [vmem:[%s5201 + $0x40] sm:$0xf]
    %v5219 = vld [vmem:[%s5201 + $0x44] sm:$0xf]
    %v5220 = vld [vmem:[%s5201 + $0x48] sm:$0xf]
    %v5221 = vld [vmem:[%s5201 + $0x4c] sm:$0xf]
    %v5222 = vld [vmem:[%s5201 + $0x50] sm:$0xf]
    %v5223 = vld [vmem:[%s5201 + $0x54] sm:$0xf]
    %v5224 = vld [vmem:[%s5201 + $0x58] sm:$0xf]
    %v5225 = vld [vmem:[%s5201 + $0x5c] sm:$0xf]
    %v5226 = vld [vmem:[%s5201 + $0x60] sm:$0xf]
    %v5227 = vld [vmem:[%s5201 + $0x64] sm:$0xf]
    %v5228 = vld [vmem:[%s5201 + $0x68] sm:$0xf]
    %v5229 = vld [vmem:[%s5201 + $0x6c] sm:$0xf]
    %v5230 = vld [vmem:[%s5201 + $0x70] sm:$0xf]
    %v5231 = vld [vmem:[%s5201 + $0x74] sm:$0xf]
    %v5232 = vld [vmem:[%s5201 + $0x78] sm:$0xf]
    %v5233 = vld [vmem:[%s5201 + $0x7c] sm:$0xf]
    %v5234 = vld [vmem:[%s5201 + $0x80] sm:$0xf]
    %v5235 = vld [vmem:[%s5201 + $0x84] sm:$0xf]
    %v5236 = vld [vmem:[%s5201 + $0x88] sm:$0xf]
    %v5237 = vld [vmem:[%s5201 + $0x8c] sm:$0xf]
    %v5238 = vld [vmem:[%s5201 + $0x90] sm:$0xf]
    %v5239 = vld [vmem:[%s5201 + $0x94] sm:$0xf]
    %v5240 = vld [vmem:[%s5201 + $0x98] sm:$0xf]
    %v5241 = vld [vmem:[%s5201 + $0x9c] sm:$0xf]
    %v5242 = vld [vmem:[%s5201 + $0xa0] sm:$0xf]
    %v5243 = vld [vmem:[%s5201 + $0xa4] sm:$0xf]
    %v5244 = vld [vmem:[%s5201 + $0xa8] sm:$0xf]
    %v5245 = vld [vmem:[%s5201 + $0xac] sm:$0xf]
    %v5246 = vld [vmem:[%s5201 + $0xb0] sm:$0xf]
    %v5247 = vld [vmem:[%s5201 + $0xb4] sm:$0xf]
    %v5248 = vld [vmem:[%s5201 + $0xb8] sm:$0xf]
    %v5249 = vld [vmem:[%s5201 + $0xbc] sm:$0xf]
    %v5250 = vld [vmem:[%s5201 + $0xc0] sm:$0xf]
    %v5251 = vld [vmem:[%s5201 + $0xc4] sm:$0xf]
    %v5252 = vld [vmem:[%s5201 + $0xc8] sm:$0xf]
    %v5253 = vld [vmem:[%s5201 + $0xcc] sm:$0xf]
    %v5254 = vld [vmem:[%s5201 + $0xd0] sm:$0xf]
    %v5255 = vld [vmem:[%s5201 + $0xd4] sm:$0xf]
    %v5256 = vld [vmem:[%s5201 + $0xd8] sm:$0xf]
    %v5257 = vld [vmem:[%s5201 + $0xdc] sm:$0xf]
    %v5258 = vld [vmem:[%s5201 + $0xe0] sm:$0xf]
    %v5259 = vld [vmem:[%s5201 + $0xe4] sm:$0xf]
    %v5260 = vld [vmem:[%s5201 + $0xe8] sm:$0xf]
    %v5261 = vld [vmem:[%s5201 + $0xec] sm:$0xf]
    %v5262 = vld [vmem:[%s5201 + $0xf0] sm:$0xf]
    %v5263 = vld [vmem:[%s5201 + $0xf4] sm:$0xf]
    %v5264 = vld [vmem:[%s5201 + $0xf8] sm:$0xf]
    %v5265 = vld [vmem:[%s5201 + $0xfc] sm:$0xf]
    %v5266 = vld [vmem:[%s5201 + $0x100] sm:$0xf]
    %v5267 = vld [vmem:[%s5201 + $0x104] sm:$0xf]
    %v5268 = vld [vmem:[%s5201 + $0x108] sm:$0xf]
    %v5269 = vld [vmem:[%s5201 + $0x10c] sm:$0xf]
    %v5270 = vld [vmem:[%s5201 + $0x110] sm:$0xf]
    %v5271 = vld [vmem:[%s5201 + $0x114] sm:$0xf]
    %v5272 = vld [vmem:[%s5201 + $0x118] sm:$0xf]
    %v5273 = vld [vmem:[%s5201 + $0x11c] sm:$0xf]
    %v5274 = vld [vmem:[%s5201 + $0x120] sm:$0xf]
    %v5275 = vld [vmem:[%s5201 + $0x124] sm:$0xf]
    %v5276 = vld [vmem:[%s5201 + $0x128] sm:$0xf]
    %v5277 = vld [vmem:[%s5201 + $0x12c] sm:$0xf]
    %v5278 = vld [vmem:[%s5201 + $0x130] sm:$0xf]
    %v5279 = vld [vmem:[%s5201 + $0x134] sm:$0xf]
    %v5280 = vld [vmem:[%s5201 + $0x138] sm:$0xf]
    %v5281 = vld [vmem:[%s5201 + $0x13c] sm:$0xf]
    %v5282 = vld [vmem:[%s5201 + $0x140] sm:$0xf]
    %v5283 = vld [vmem:[%s5201 + $0x144] sm:$0xf]
    %v5284 = vld [vmem:[%s5201 + $0x148] sm:$0xf]
    %v5285 = vld [vmem:[%s5201 + $0x14c] sm:$0xf]
    %v5286 = vld [vmem:[%s5201 + $0x150] sm:$0xf]
    %v5287 = vld [vmem:[%s5201 + $0x154] sm:$0xf]
    %v5288 = vld [vmem:[%s5201 + $0x158] sm:$0xf]
    %v5289 = vld [vmem:[%s5201 + $0x15c] sm:$0xf]
    %v5290 = vld [vmem:[%s5201 + $0x160] sm:$0xf]
    %v5291 = vld [vmem:[%s5201 + $0x164] sm:$0xf]
    %v5292 = vld [vmem:[%s5201 + $0x168] sm:$0xf]
    %v5293 = vld [vmem:[%s5201 + $0x16c] sm:$0xf]
    %v5294 = vld [vmem:[%s5201 + $0x170] sm:$0xf]
    %v5295 = vld [vmem:[%s5201 + $0x174] sm:$0xf]
    %v5296 = vld [vmem:[%s5201 + $0x178] sm:$0xf]
    %v5297 = vld [vmem:[%s5201 + $0x17c] sm:$0xf]
    %v5298 = vld [vmem:[%s5201 + $0x180] sm:$0xf]
    %v5299 = vld [vmem:[%s5201 + $0x184] sm:$0xf]
    %v5300 = vld [vmem:[%s5201 + $0x188] sm:$0xf]
    %v5301 = vld [vmem:[%s5201 + $0x18c] sm:$0xf]
    %v5302 = vld [vmem:[%s5201 + $0x190] sm:$0xf]
    %v5303 = vld [vmem:[%s5201 + $0x194] sm:$0xf]
    %v5304 = vld [vmem:[%s5201 + $0x198] sm:$0xf]
    %v5305 = vld [vmem:[%s5201 + $0x19c] sm:$0xf]
    %v5306 = vld [vmem:[%s5201 + $0x1a0] sm:$0xf]
    %v5307 = vld [vmem:[%s5201 + $0x1a4] sm:$0xf]
    %v5308 = vld [vmem:[%s5201 + $0x1a8] sm:$0xf]
    %v5309 = vld [vmem:[%s5201 + $0x1ac] sm:$0xf]
    %v5310 = vld [vmem:[%s5201 + $0x1b0] sm:$0xf]
    %v5311 = vld [vmem:[%s5201 + $0x1b4] sm:$0xf]
    %v5312 = vld [vmem:[%s5201 + $0x1b8] sm:$0xf]
    %v5313 = vld [vmem:[%s5201 + $0x1bc] sm:$0xf]
    %v5314 = vld [vmem:[%s5201 + $0x1c0] sm:$0xf]
    %v5315 = vld [vmem:[%s5201 + $0x1c4] sm:$0xf]
    %v5316 = vld [vmem:[%s5201 + $0x1c8] sm:$0xf]
    %v5317 = vld [vmem:[%s5201 + $0x1cc] sm:$0xf]
    %v5318 = vld [vmem:[%s5201 + $0x1d0] sm:$0xf]
    %v5319 = vld [vmem:[%s5201 + $0x1d4] sm:$0xf]
    %v5320 = vld [vmem:[%s5201 + $0x1d8] sm:$0xf]
    %v5321 = vld [vmem:[%s5201 + $0x1dc] sm:$0xf]
    %v5322 = vld [vmem:[%s5201 + $0x1e0] sm:$0xf]
    %v5323 = vld [vmem:[%s5201 + $0x1e4] sm:$0xf]
    %v5324 = vld [vmem:[%s5201 + $0x1e8] sm:$0xf]
    %v5325 = vld [vmem:[%s5201 + $0x1ec] sm:$0xf]
    %v5326 = vld [vmem:[%s5201 + $0x1f0] sm:$0xf]
    %v5327 = vld [vmem:[%s5201 + $0x1f4] sm:$0xf]
    %v5328 = vld [vmem:[%s5201 + $0x1f8] sm:$0xf]
    %v5329 = vld [vmem:[%s5201 + $0x1fc] sm:$0xf]
    %v5330 = vld [vmem:[%s5201 + $0x200] sm:$0xf]
    %v5331 = vld [vmem:[%s5201 + $0x204] sm:$0xf]
    %v5332 = vld [vmem:[%s5201 + $0x208] sm:$0xf]
    %v5333 = vld [vmem:[%s5201 + $0x20c] sm:$0xf]
    %v5334 = vld [vmem:[%s5201 + $0x210] sm:$0xf]
    %v5335 = vld [vmem:[%s5201 + $0x214] sm:$0xf]
    %v5336 = vld [vmem:[%s5201 + $0x218] sm:$0xf]
    %v5337 = vld [vmem:[%s5201 + $0x21c] sm:$0xf]
    %v5338 = vld [vmem:[%s5201 + $0x220] sm:$0xf]
    %v5339 = vld [vmem:[%s5201 + $0x224] sm:$0xf]
    %v5340 = vld [vmem:[%s5201 + $0x228] sm:$0xf]
    %v5341 = vld [vmem:[%s5201 + $0x22c] sm:$0xf]
    %v5342 = vld [vmem:[%s5201 + $0x230] sm:$0xf]
    %v5343 = vld [vmem:[%s5201 + $0x234] sm:$0xf]
    %v5344 = vld [vmem:[%s5201 + $0x238] sm:$0xf]
    %v5345 = vld [vmem:[%s5201 + $0x23c] sm:$0xf]
    %v5346 = vld [vmem:[%s2 + $0x2] sm:$0x1]
    %v5347 = vlaneseq
    %v5348 = vshrl.u32 %v5347, 7
    %v5349 = vsub.s32 0, %v5348
    %v5350 = vrot.slane %v5346, %v5349
    %v5431 = vunpack.c.l.b16 %v5121
    %v5432 = vunpack.c.h.b16 %v5121
    %v5433 = vunpack.c.l.b16 %v5122
    %v5434 = vunpack.c.h.b16 %v5122
    %v5435 = vunpack.c.l.b16 %v5123
    %v5436 = vunpack.c.h.b16 %v5123
    %v5437 = vunpack.c.l.b16 %v5124
    %v5438 = vunpack.c.h.b16 %v5124
    %v5439 = vunpack.c.l.b16 %v5125
    %v5440 = vunpack.c.l.b16 %v5126
    %v5441 = vunpack.c.h.b16 %v5126
    %v5442 = vunpack.c.l.b16 %v5127
    %v5443 = vunpack.c.h.b16 %v5127
    %v5444 = vunpack.c.l.b16 %v5128
    %v5445 = vunpack.c.h.b16 %v5128
    %v5446 = vunpack.c.l.b16 %v5129
    %v5447 = vunpack.c.h.b16 %v5129
    %v5448 = vunpack.c.l.b16 %v5130
    %v5449 = vunpack.c.l.b16 %v5131
    %v5450 = vunpack.c.h.b16 %v5131
    %v5451 = vunpack.c.l.b16 %v5132
    %v5452 = vunpack.c.h.b16 %v5132
    %v5453 = vunpack.c.l.b16 %v5133
    %v5454 = vunpack.c.h.b16 %v5133
    %v5455 = vunpack.c.l.b16 %v5134
    %v5456 = vunpack.c.h.b16 %v5134
    %v5457 = vunpack.c.l.b16 %v5135
    %v5458 = vunpack.c.l.b16 %v5136
    %v5459 = vunpack.c.h.b16 %v5136
    %v5460 = vunpack.c.l.b16 %v5137
    %v5461 = vunpack.c.h.b16 %v5137
    %v5462 = vunpack.c.l.b16 %v5138
    %v5463 = vunpack.c.h.b16 %v5138
    %v5464 = vunpack.c.l.b16 %v5139
    %v5465 = vunpack.c.h.b16 %v5139
    %v5466 = vunpack.c.l.b16 %v5140
    %v5467 = vunpack.c.l.b16 %v5141
    %v5468 = vunpack.c.h.b16 %v5141
    %v5469 = vunpack.c.l.b16 %v5142
    %v5470 = vunpack.c.h.b16 %v5142
    %v5471 = vunpack.c.l.b16 %v5143
    %v5472 = vunpack.c.h.b16 %v5143
    %v5473 = vunpack.c.l.b16 %v5144
    %v5474 = vunpack.c.h.b16 %v5144
    %v5475 = vunpack.c.l.b16 %v5145
    %v5476 = vunpack.c.l.b16 %v5146
    %v5477 = vunpack.c.h.b16 %v5146
    %v5478 = vunpack.c.l.b16 %v5147
    %v5479 = vunpack.c.h.b16 %v5147
    %v5480 = vunpack.c.l.b16 %v5148
    %v5481 = vunpack.c.h.b16 %v5148
    %v5482 = vunpack.c.l.b16 %v5149
    %v5483 = vunpack.c.h.b16 %v5149
    %v5484 = vunpack.c.l.b16 %v5150
    %v5485 = vunpack.c.l.b16 %v5151
    %v5486 = vunpack.c.h.b16 %v5151
    %v5487 = vunpack.c.l.b16 %v5152
    %v5488 = vunpack.c.h.b16 %v5152
    %v5489 = vunpack.c.l.b16 %v5153
    %v5490 = vunpack.c.h.b16 %v5153
    %v5491 = vunpack.c.l.b16 %v5154
    %v5492 = vunpack.c.h.b16 %v5154
    %v5493 = vunpack.c.l.b16 %v5155
    %v5494 = vunpack.c.l.b16 %v5156
    %v5495 = vunpack.c.h.b16 %v5156
    %v5496 = vunpack.c.l.b16 %v5157
    %v5497 = vunpack.c.h.b16 %v5157
    %v5498 = vunpack.c.l.b16 %v5158
    %v5499 = vunpack.c.h.b16 %v5158
    %v5500 = vunpack.c.l.b16 %v5159
    %v5501 = vunpack.c.h.b16 %v5159
    %v5502 = vunpack.c.l.b16 %v5160
    %v5503 = vunpack.c.l.b16 %v5161
    %v5504 = vunpack.c.h.b16 %v5161
    %v5505 = vunpack.c.l.b16 %v5162
    %v5506 = vunpack.c.h.b16 %v5162
    %v5507 = vunpack.c.l.b16 %v5163
    %v5508 = vunpack.c.h.b16 %v5163
    %v5509 = vunpack.c.l.b16 %v5164
    %v5510 = vunpack.c.h.b16 %v5164
    %v5511 = vunpack.c.l.b16 %v5165
    %v5512 = vunpack.c.l.b16 %v5166
    %v5513 = vunpack.c.h.b16 %v5166
    %v5514 = vunpack.c.l.b16 %v5167
    %v5515 = vunpack.c.h.b16 %v5167
    %v5516 = vunpack.c.l.b16 %v5168
    %v5517 = vunpack.c.h.b16 %v5168
    %v5518 = vunpack.c.l.b16 %v5169
    %v5519 = vunpack.c.h.b16 %v5169
    %v5520 = vunpack.c.l.b16 %v5170
    %v5521 = vunpack.c.l.b16 %v5171
    %v5522 = vunpack.c.h.b16 %v5171
    %v5523 = vunpack.c.l.b16 %v5172
    %v5524 = vunpack.c.h.b16 %v5172
    %v5525 = vunpack.c.l.b16 %v5173
    %v5526 = vunpack.c.h.b16 %v5173
    %v5527 = vunpack.c.l.b16 %v5174
    %v5528 = vunpack.c.h.b16 %v5174
    %v5529 = vunpack.c.l.b16 %v5175
    %v5530 = vunpack.c.l.b16 %v5176
    %v5531 = vunpack.c.h.b16 %v5176
    %v5532 = vunpack.c.l.b16 %v5177
    %v5533 = vunpack.c.h.b16 %v5177
    %v5534 = vunpack.c.l.b16 %v5178
    %v5535 = vunpack.c.h.b16 %v5178
    %v5536 = vunpack.c.l.b16 %v5179
    %v5537 = vunpack.c.h.b16 %v5179
    %v5538 = vunpack.c.l.b16 %v5180
    %v5539 = vunpack.c.l.b16 %v5181
    %v5540 = vunpack.c.h.b16 %v5181
    %v5541 = vunpack.c.l.b16 %v5182
    %v5542 = vunpack.c.h.b16 %v5182
    %v5543 = vunpack.c.l.b16 %v5183
    %v5544 = vunpack.c.h.b16 %v5183
    %v5545 = vunpack.c.l.b16 %v5184
    %v5546 = vunpack.c.h.b16 %v5184
    %v5547 = vunpack.c.l.b16 %v5185
    %v5548 = vunpack.c.l.b16 %v5186
    %v5549 = vunpack.c.h.b16 %v5186
    %v5550 = vunpack.c.l.b16 %v5187
    %v5551 = vunpack.c.h.b16 %v5187
    %v5552 = vunpack.c.l.b16 %v5188
    %v5553 = vunpack.c.h.b16 %v5188
    %v5554 = vunpack.c.l.b16 %v5189
    %v5555 = vunpack.c.h.b16 %v5189
    %v5556 = vunpack.c.l.b16 %v5190
    %v5557 = vunpack.c.l.b16 %v5191
    %v5558 = vunpack.c.h.b16 %v5191
    %v5559 = vunpack.c.l.b16 %v5192
    %v5560 = vunpack.c.h.b16 %v5192
    %v5561 = vunpack.c.l.b16 %v5193
    %v5562 = vunpack.c.h.b16 %v5193
    %v5563 = vunpack.c.l.b16 %v5194
    %v5564 = vunpack.c.h.b16 %v5194
    %v5565 = vunpack.c.l.b16 %v5195
    %v5566 = vunpack.c.l.b16 %v5196
    %v5567 = vunpack.c.h.b16 %v5196
    %v5568 = vunpack.c.l.b16 %v5197
    %v5569 = vunpack.c.h.b16 %v5197
    %v5570 = vunpack.c.l.b16 %v5198
    %v5571 = vunpack.c.h.b16 %v5198
    %v5572 = vunpack.c.l.b16 %v5199
    %v5573 = vunpack.c.h.b16 %v5199
    %v5574 = vunpack.c.l.b16 %v5200
    %v5575 = vpack.c.b16 %v5440, %v5431
    %v5576 = vpack.c.b16 %v5441, %v5432
    %v5577 = vpack.c.b16 %v5442, %v5433
    %v5578 = vpack.c.b16 %v5443, %v5434
    %v5579 = vpack.c.b16 %v5444, %v5435
    %v5580 = vpack.c.b16 %v5445, %v5436
    %v5581 = vpack.c.b16 %v5446, %v5437
    %v5582 = vpack.c.b16 %v5447, %v5438
    %v5583 = vpack.c.b16 %v5448, %v5439
    %v5584 = vpack.c.b16 %v5458, %v5449
    %v5585 = vpack.c.b16 %v5459, %v5450
    %v5586 = vpack.c.b16 %v5460, %v5451
    %v5587 = vpack.c.b16 %v5461, %v5452
    %v5588 = vpack.c.b16 %v5462, %v5453
    %v5589 = vpack.c.b16 %v5463, %v5454
    %v5590 = vpack.c.b16 %v5464, %v5455
    %v5591 = vpack.c.b16 %v5465, %v5456
    %v5592 = vpack.c.b16 %v5466, %v5457
    %v5593 = vpack.c.b16 %v5476, %v5467
    %v5594 = vpack.c.b16 %v5477, %v5468
    %v5595 = vpack.c.b16 %v5478, %v5469
    %v5596 = vpack.c.b16 %v5479, %v5470
    %v5597 = vpack.c.b16 %v5480, %v5471
    %v5598 = vpack.c.b16 %v5481, %v5472
    %v5599 = vpack.c.b16 %v5482, %v5473
    %v5600 = vpack.c.b16 %v5483, %v5474
    %v5601 = vpack.c.b16 %v5484, %v5475
    %v5602 = vpack.c.b16 %v5494, %v5485
    %v5603 = vpack.c.b16 %v5495, %v5486
    %v5604 = vpack.c.b16 %v5496, %v5487
    %v5605 = vpack.c.b16 %v5497, %v5488
    %v5606 = vpack.c.b16 %v5498, %v5489
    %v5607 = vpack.c.b16 %v5499, %v5490
    %v5608 = vpack.c.b16 %v5500, %v5491
    %v5609 = vpack.c.b16 %v5501, %v5492
    %v5610 = vpack.c.b16 %v5502, %v5493
    %v5611 = vpack.c.b16 %v5512, %v5503
    %v5612 = vpack.c.b16 %v5513, %v5504
    %v5613 = vpack.c.b16 %v5514, %v5505
    %v5614 = vpack.c.b16 %v5515, %v5506
    %v5615 = vpack.c.b16 %v5516, %v5507
    %v5616 = vpack.c.b16 %v5517, %v5508
    %v5617 = vpack.c.b16 %v5518, %v5509
    %v5618 = vpack.c.b16 %v5519, %v5510
    %v5619 = vpack.c.b16 %v5520, %v5511
    %v5620 = vpack.c.b16 %v5530, %v5521
    %v5621 = vpack.c.b16 %v5531, %v5522
    %v5622 = vpack.c.b16 %v5532, %v5523
    %v5623 = vpack.c.b16 %v5533, %v5524
    %v5624 = vpack.c.b16 %v5534, %v5525
    %v5625 = vpack.c.b16 %v5535, %v5526
    %v5626 = vpack.c.b16 %v5536, %v5527
    %v5627 = vpack.c.b16 %v5537, %v5528
    %v5628 = vpack.c.b16 %v5538, %v5529
    %v5629 = vpack.c.b16 %v5548, %v5539
    %v5630 = vpack.c.b16 %v5549, %v5540
    %v5631 = vpack.c.b16 %v5550, %v5541
    %v5632 = vpack.c.b16 %v5551, %v5542
    %v5633 = vpack.c.b16 %v5552, %v5543
    %v5634 = vpack.c.b16 %v5553, %v5544
    %v5635 = vpack.c.b16 %v5554, %v5545
    %v5636 = vpack.c.b16 %v5555, %v5546
    %v5637 = vpack.c.b16 %v5556, %v5547
    %v5638 = vpack.c.b16 %v5566, %v5557
    %v5639 = vpack.c.b16 %v5567, %v5558
    %v5640 = vpack.c.b16 %v5568, %v5559
    %v5641 = vpack.c.b16 %v5569, %v5560
    %v5642 = vpack.c.b16 %v5570, %v5561
    %v5643 = vpack.c.b16 %v5571, %v5562
    %v5644 = vpack.c.b16 %v5572, %v5563
    %v5645 = vpack.c.b16 %v5573, %v5564
    %v5646 = vpack.c.b16 %v5574, %v5565
    %v5863 = vunpack.c.l.b16 %v5202
    %v5864 = vunpack.c.l.b16 %v5203
    %v5865 = vunpack.c.l.b16 %v5204
    %v5866 = vunpack.c.l.b16 %v5205
    %v5867 = vunpack.c.l.b16 %v5206
    %v5868 = vunpack.c.l.b16 %v5207
    %v5869 = vunpack.c.l.b16 %v5208
    %v5870 = vunpack.c.l.b16 %v5209
    %v5871 = vunpack.c.l.b16 %v5210
    %v5872 = vunpack.c.l.b16 %v5211
    %v5873 = vunpack.c.l.b16 %v5212
    %v5874 = vunpack.c.l.b16 %v5213
    %v5875 = vunpack.c.l.b16 %v5214
    %v5876 = vunpack.c.l.b16 %v5215
    %v5877 = vunpack.c.l.b16 %v5216
    %v5878 = vunpack.c.l.b16 %v5217
    %v5879 = vunpack.c.l.b16 %v5218
    %v5880 = vunpack.c.l.b16 %v5219
    %v5881 = vunpack.c.l.b16 %v5220
    %v5882 = vunpack.c.l.b16 %v5221
    %v5883 = vunpack.c.l.b16 %v5222
    %v5884 = vunpack.c.l.b16 %v5223
    %v5885 = vunpack.c.l.b16 %v5224
    %v5886 = vunpack.c.l.b16 %v5225
    %v5887 = vunpack.c.l.b16 %v5226
    %v5888 = vunpack.c.l.b16 %v5227
    %v5889 = vunpack.c.l.b16 %v5228
    %v5890 = vunpack.c.l.b16 %v5229
    %v5891 = vunpack.c.l.b16 %v5230
    %v5892 = vunpack.c.l.b16 %v5231
    %v5893 = vunpack.c.l.b16 %v5232
    %v5894 = vunpack.c.l.b16 %v5233
    %v5895 = vunpack.c.l.b16 %v5234
    %v5896 = vunpack.c.l.b16 %v5235
    %v5897 = vunpack.c.l.b16 %v5236
    %v5898 = vunpack.c.l.b16 %v5237
    %v5899 = vunpack.c.l.b16 %v5238
    %v5900 = vunpack.c.l.b16 %v5239
    %v5901 = vunpack.c.l.b16 %v5240
    %v5902 = vunpack.c.l.b16 %v5241
    %v5903 = vunpack.c.l.b16 %v5242
    %v5904 = vunpack.c.l.b16 %v5243
    %v5905 = vunpack.c.l.b16 %v5244
    %v5906 = vunpack.c.l.b16 %v5245
    %v5907 = vunpack.c.l.b16 %v5246
    %v5908 = vunpack.c.l.b16 %v5247
    %v5909 = vunpack.c.l.b16 %v5248
    %v5910 = vunpack.c.l.b16 %v5249
    %v5911 = vunpack.c.l.b16 %v5250
    %v5912 = vunpack.c.l.b16 %v5251
    %v5913 = vunpack.c.l.b16 %v5252
    %v5914 = vunpack.c.l.b16 %v5253
    %v5915 = vunpack.c.l.b16 %v5254
    %v5916 = vunpack.c.l.b16 %v5255
    %v5917 = vunpack.c.l.b16 %v5256
    %v5918 = vunpack.c.l.b16 %v5257
    %v5919 = vunpack.c.l.b16 %v5258
    %v5920 = vunpack.c.l.b16 %v5259
    %v5921 = vunpack.c.l.b16 %v5260
    %v5922 = vunpack.c.l.b16 %v5261
    %v5923 = vunpack.c.l.b16 %v5262
    %v5924 = vunpack.c.l.b16 %v5263
    %v5925 = vunpack.c.l.b16 %v5264
    %v5926 = vunpack.c.l.b16 %v5265
    %v5927 = vunpack.c.l.b16 %v5266
    %v5928 = vunpack.c.l.b16 %v5267
    %v5929 = vunpack.c.l.b16 %v5268
    %v5930 = vunpack.c.l.b16 %v5269
    %v5931 = vunpack.c.l.b16 %v5270
    %v5932 = vunpack.c.l.b16 %v5271
    %v5933 = vunpack.c.l.b16 %v5272
    %v5934 = vunpack.c.l.b16 %v5273
    %v5935 = vunpack.c.l.b16 %v5274
    %v5936 = vunpack.c.l.b16 %v5275
    %v5937 = vunpack.c.l.b16 %v5276
    %v5938 = vunpack.c.l.b16 %v5277
    %v5939 = vunpack.c.l.b16 %v5278
    %v5940 = vunpack.c.l.b16 %v5279
    %v5941 = vunpack.c.l.b16 %v5280
    %v5942 = vunpack.c.l.b16 %v5281
    %v5943 = vunpack.c.l.b16 %v5282
    %v5944 = vunpack.c.l.b16 %v5283
    %v5945 = vunpack.c.l.b16 %v5284
    %v5946 = vunpack.c.l.b16 %v5285
    %v5947 = vunpack.c.l.b16 %v5286
    %v5948 = vunpack.c.l.b16 %v5287
    %v5949 = vunpack.c.l.b16 %v5288
    %v5950 = vunpack.c.l.b16 %v5289
    %v5951 = vunpack.c.l.b16 %v5290
    %v5952 = vunpack.c.l.b16 %v5291
    %v5953 = vunpack.c.l.b16 %v5292
    %v5954 = vunpack.c.l.b16 %v5293
    %v5955 = vunpack.c.l.b16 %v5294
    %v5956 = vunpack.c.l.b16 %v5295
    %v5957 = vunpack.c.l.b16 %v5296
    %v5958 = vunpack.c.l.b16 %v5297
    %v5959 = vunpack.c.l.b16 %v5298
    %v5960 = vunpack.c.l.b16 %v5299
    %v5961 = vunpack.c.l.b16 %v5300
    %v5962 = vunpack.c.l.b16 %v5301
    %v5963 = vunpack.c.l.b16 %v5302
    %v5964 = vunpack.c.l.b16 %v5303
    %v5965 = vunpack.c.l.b16 %v5304
    %v5966 = vunpack.c.l.b16 %v5305
    %v5967 = vunpack.c.l.b16 %v5306
    %v5968 = vunpack.c.l.b16 %v5307
    %v5969 = vunpack.c.l.b16 %v5308
    %v5970 = vunpack.c.l.b16 %v5309
    %v5971 = vunpack.c.l.b16 %v5310
    %v5972 = vunpack.c.l.b16 %v5311
    %v5973 = vunpack.c.l.b16 %v5312
    %v5974 = vunpack.c.l.b16 %v5313
    %v5975 = vunpack.c.l.b16 %v5314
    %v5976 = vunpack.c.l.b16 %v5315
    %v5977 = vunpack.c.l.b16 %v5316
    %v5978 = vunpack.c.l.b16 %v5317
    %v5979 = vunpack.c.l.b16 %v5318
    %v5980 = vunpack.c.l.b16 %v5319
    %v5981 = vunpack.c.l.b16 %v5320
    %v5982 = vunpack.c.l.b16 %v5321
    %v5983 = vunpack.c.l.b16 %v5322
    %v5984 = vunpack.c.l.b16 %v5323
    %v5985 = vunpack.c.l.b16 %v5324
    %v5986 = vunpack.c.l.b16 %v5325
    %v5987 = vunpack.c.l.b16 %v5326
    %v5988 = vunpack.c.l.b16 %v5327
    %v5989 = vunpack.c.l.b16 %v5328
    %v5990 = vunpack.c.l.b16 %v5329
    %v5991 = vunpack.c.l.b16 %v5330
    %v5992 = vunpack.c.l.b16 %v5331
    %v5993 = vunpack.c.l.b16 %v5332
    %v5994 = vunpack.c.l.b16 %v5333
    %v5995 = vunpack.c.l.b16 %v5334
    %v5996 = vunpack.c.l.b16 %v5335
    %v5997 = vunpack.c.l.b16 %v5336
    %v5998 = vunpack.c.l.b16 %v5337
    %v5999 = vunpack.c.l.b16 %v5338
    %v6000 = vunpack.c.l.b16 %v5339
    %v6001 = vunpack.c.l.b16 %v5340
    %v6002 = vunpack.c.l.b16 %v5341
    %v6003 = vunpack.c.l.b16 %v5342
    %v6004 = vunpack.c.l.b16 %v5343
    %v6005 = vunpack.c.l.b16 %v5344
    %v6006 = vunpack.c.l.b16 %v5345
    %v6007 = vpack.c.b16 %v5864, %v5863
    %v6008 = vpack.c.b16 %v5866, %v5865
    %v6009 = vpack.c.b16 %v5868, %v5867
    %v6010 = vpack.c.b16 %v5870, %v5869
    %v6011 = vpack.c.b16 %v5872, %v5871
    %v6012 = vpack.c.b16 %v5874, %v5873
    %v6013 = vpack.c.b16 %v5876, %v5875
    %v6014 = vpack.c.b16 %v5878, %v5877
    %v6015 = vpack.c.b16 %v5880, %v5879
    %v6016 = vpack.c.b16 %v5882, %v5881
    %v6017 = vpack.c.b16 %v5884, %v5883
    %v6018 = vpack.c.b16 %v5886, %v5885
    %v6019 = vpack.c.b16 %v5888, %v5887
    %v6020 = vpack.c.b16 %v5890, %v5889
    %v6021 = vpack.c.b16 %v5892, %v5891
    %v6022 = vpack.c.b16 %v5894, %v5893
    %v6023 = vpack.c.b16 %v5896, %v5895
    %v6024 = vpack.c.b16 %v5898, %v5897
    %v6025 = vpack.c.b16 %v5900, %v5899
    %v6026 = vpack.c.b16 %v5902, %v5901
    %v6027 = vpack.c.b16 %v5904, %v5903
    %v6028 = vpack.c.b16 %v5906, %v5905
    %v6029 = vpack.c.b16 %v5908, %v5907
    %v6030 = vpack.c.b16 %v5910, %v5909
    %v6031 = vpack.c.b16 %v5912, %v5911
    %v6032 = vpack.c.b16 %v5914, %v5913
    %v6033 = vpack.c.b16 %v5916, %v5915
    %v6034 = vpack.c.b16 %v5918, %v5917
    %v6035 = vpack.c.b16 %v5920, %v5919
    %v6036 = vpack.c.b16 %v5922, %v5921
    %v6037 = vpack.c.b16 %v5924, %v5923
    %v6038 = vpack.c.b16 %v5926, %v5925
    %v6039 = vpack.c.b16 %v5928, %v5927
    %v6040 = vpack.c.b16 %v5930, %v5929
    %v6041 = vpack.c.b16 %v5932, %v5931
    %v6042 = vpack.c.b16 %v5934, %v5933
    %v6043 = vpack.c.b16 %v5936, %v5935
    %v6044 = vpack.c.b16 %v5938, %v5937
    %v6045 = vpack.c.b16 %v5940, %v5939
    %v6046 = vpack.c.b16 %v5942, %v5941
    %v6047 = vpack.c.b16 %v5944, %v5943
    %v6048 = vpack.c.b16 %v5946, %v5945
    %v6049 = vpack.c.b16 %v5948, %v5947
    %v6050 = vpack.c.b16 %v5950, %v5949
    %v6051 = vpack.c.b16 %v5952, %v5951
    %v6052 = vpack.c.b16 %v5954, %v5953
    %v6053 = vpack.c.b16 %v5956, %v5955
    %v6054 = vpack.c.b16 %v5958, %v5957
    %v6055 = vpack.c.b16 %v5960, %v5959
    %v6056 = vpack.c.b16 %v5962, %v5961
    %v6057 = vpack.c.b16 %v5964, %v5963
    %v6058 = vpack.c.b16 %v5966, %v5965
    %v6059 = vpack.c.b16 %v5968, %v5967
    %v6060 = vpack.c.b16 %v5970, %v5969
    %v6061 = vpack.c.b16 %v5972, %v5971
    %v6062 = vpack.c.b16 %v5974, %v5973
    %v6063 = vpack.c.b16 %v5976, %v5975
    %v6064 = vpack.c.b16 %v5978, %v5977
    %v6065 = vpack.c.b16 %v5980, %v5979
    %v6066 = vpack.c.b16 %v5982, %v5981
    %v6067 = vpack.c.b16 %v5984, %v5983
    %v6068 = vpack.c.b16 %v5986, %v5985
    %v6069 = vpack.c.b16 %v5988, %v5987
    %v6070 = vpack.c.b16 %v5990, %v5989
    %v6071 = vpack.c.b16 %v5992, %v5991
    %v6072 = vpack.c.b16 %v5994, %v5993
    %v6073 = vpack.c.b16 %v5996, %v5995
    %v6074 = vpack.c.b16 %v5998, %v5997
    %v6075 = vpack.c.b16 %v6000, %v5999
    %v6076 = vpack.c.b16 %v6002, %v6001
    %v6077 = vpack.c.b16 %v6004, %v6003
    %v6078 = vpack.c.b16 %v6006, %v6005
    %6151 = vmatprep.subr.bf16.mxu0 0
    %6152 = vmatpush1.bf16.msra.mxu0 %v6014
    %6153 = vmatprep.subr.bf16.mxu0 0
    %6154 = vmatpush1.bf16.msra.mxu0 %v6013
    %6155 = vmatprep.subr.bf16.mxu0 0
    %6156 = vmatpush1.bf16.msra.mxu0 %v6012
    %6157 = vmatprep.subr.bf16.mxu0 0
    %6158 = vmatpush1.bf16.msra.mxu0 %v6011
    %6159 = vmatprep.subr.bf16.mxu0 0
    %6160 = vmatpush1.bf16.msra.mxu0 %v6010
    %6161 = vmatprep.subr.bf16.mxu0 0
    %6162 = vmatpush1.bf16.msra.mxu0 %v6009
    %6163 = vmatprep.subr.bf16.mxu0 0
    %6164 = vmatpush1.bf16.msra.mxu0 %v6008
    %6165 = vmatprep.subr.bf16.mxu0 0
    %6166 = vmatpush1.bf16.msra.mxu0 %v6007
    %6167 = vmatprep.subr.bf16.mxu0 0
    %6168 = vmatpush2.bf16.msra.mxu0 %v6022
    %6169 = vmatprep.subr.bf16.mxu0 0
    %6170 = vmatpush2.bf16.msra.mxu0 %v6021
    %6171 = vmatprep.subr.bf16.mxu0 0
    %6172 = vmatpush2.bf16.msra.mxu0 %v6020
    %6173 = vmatprep.subr.bf16.mxu0 0
    %6174 = vmatpush2.bf16.msra.mxu0 %v6019
    %6175 = vmatprep.subr.bf16.mxu0 0
    %6176 = vmatpush2.bf16.msra.mxu0 %v6018
    %6177 = vmatprep.subr.bf16.mxu0 0
    %6178 = vmatpush2.bf16.msra.mxu0 %v6017
    %6179 = vmatprep.subr.bf16.mxu0 0
    %6180 = vmatpush2.bf16.msra.mxu0 %v6016
    %6181 = vmatprep.subr.bf16.mxu0 0
    %6182 = vmatpush2.bf16.msra.mxu0 %v6015
    %6183 = vmatprep.mubr.bf16.mxu0 %v5576
    %6184 = vmatmul.mubr.bf16.gmra.mxu0 %v5575
    %v6185 = vpop.f32.mrf.mxu0
    %v6186 = vadd.f32 %v5350, %v6185
    %v6187 = vpop.f32.mrf.mxu0
    %v6188 = vpop.f32.mrf.mxu0
    %v6189 = vadd.f32 %v5350, %v6188
    %v6190 = vpop.f32.mrf.mxu0
    %6191 = vmatprep.mubr.bf16.mxu0 %v5585
    %6192 = vmatmul.mubr.bf16.gmra.mxu0 %v5584
    %v6193 = vpop.f32.mrf.mxu0
    %v6194 = vadd.f32 %v5350, %v6193
    %v6195 = vpop.f32.mrf.mxu0
    %v6196 = vpop.f32.mrf.mxu0
    %v6197 = vadd.f32 %v5350, %v6196
    %v6198 = vpop.f32.mrf.mxu0
    %6199 = vmatprep.mubr.bf16.mxu0 %v5594
    %6200 = vmatmul.mubr.bf16.gmra.mxu0 %v5593
    %v6201 = vpop.f32.mrf.mxu0
    %v6202 = vadd.f32 %v5350, %v6201
    %v6203 = vpop.f32.mrf.mxu0
    %v6204 = vpop.f32.mrf.mxu0
    %v6205 = vadd.f32 %v5350, %v6204
    %v6206 = vpop.f32.mrf.mxu0
    %6207 = vmatprep.mubr.bf16.mxu0 %v5603
    %6208 = vmatmul.mubr.bf16.gmra.mxu0 %v5602
    %v6209 = vpop.f32.mrf.mxu0
    %v6210 = vadd.f32 %v5350, %v6209
    %v6211 = vpop.f32.mrf.mxu0
    %v6212 = vpop.f32.mrf.mxu0
    %v6213 = vadd.f32 %v5350, %v6212
    %v6214 = vpop.f32.mrf.mxu0
    %6215 = vmatprep.mubr.bf16.mxu0 %v5612
    %6216 = vmatmul.mubr.bf16.gmra.mxu0 %v5611
    %v6217 = vpop.f32.mrf.mxu0
    %v6218 = vadd.f32 %v5350, %v6217
    %v6219 = vpop.f32.mrf.mxu0
    %v6220 = vpop.f32.mrf.mxu0
    %v6221 = vadd.f32 %v5350, %v6220
    %v6222 = vpop.f32.mrf.mxu0
    %6223 = vmatprep.mubr.bf16.mxu0 %v5621
    %6224 = vmatmul.mubr.bf16.gmra.mxu0 %v5620
    %v6225 = vpop.f32.mrf.mxu0
    %v6226 = vadd.f32 %v5350, %v6225
    %v6227 = vpop.f32.mrf.mxu0
    %v6228 = vpop.f32.mrf.mxu0
    %v6229 = vadd.f32 %v5350, %v6228
    %v6230 = vpop.f32.mrf.mxu0
    %6231 = vmatprep.mubr.bf16.mxu0 %v5630
    %6232 = vmatmul.mubr.bf16.gmra.mxu0 %v5629
    %v6233 = vpop.f32.mrf.mxu0
    %v6234 = vadd.f32 %v5350, %v6233
    %v6235 = vpop.f32.mrf.mxu0
    %v6236 = vpop.f32.mrf.mxu0
    %v6237 = vadd.f32 %v5350, %v6236
    %v6238 = vpop.f32.mrf.mxu0
    %6239 = vmatprep.mubr.bf16.mxu0 %v5639
    %6240 = vmatmul.mubr.bf16.gmra.mxu0 %v5638
    %v6241 = vpop.f32.mrf.mxu0
    %v6242 = vadd.f32 %v5350, %v6241
    %v6243 = vpop.f32.mrf.mxu0
    %v6244 = vpop.f32.mrf.mxu0
    %v6245 = vadd.f32 %v5350, %v6244
    %v6246 = vpop.f32.mrf.mxu0
    %6247 = vdwg.mxu0
    %6248 = vmatprep.subr.bf16.mxu0 0
    %6249 = vmatpush1.bf16.msra.mxu0 %v6030
    %6250 = vmatprep.subr.bf16.mxu0 0
    %6251 = vmatpush1.bf16.msra.mxu0 %v6029
    %6252 = vmatprep.subr.bf16.mxu0 0
    %6253 = vmatpush1.bf16.msra.mxu0 %v6028
    %6254 = vmatprep.subr.bf16.mxu0 0
    %6255 = vmatpush1.bf16.msra.mxu0 %v6027
    %6256 = vmatprep.subr.bf16.mxu0 0
    %6257 = vmatpush1.bf16.msra.mxu0 %v6026
    %6258 = vmatprep.subr.bf16.mxu0 0
    %6259 = vmatpush1.bf16.msra.mxu0 %v6025
    %6260 = vmatprep.subr.bf16.mxu0 0
    %6261 = vmatpush1.bf16.msra.mxu0 %v6024
    %6262 = vmatprep.subr.bf16.mxu0 0
    %6263 = vmatpush1.bf16.msra.mxu0 %v6023
    %6264 = vmatprep.subr.bf16.mxu0 0
    %6265 = vmatpush2.bf16.msra.mxu0 %v6038
    %6266 = vmatprep.subr.bf16.mxu0 0
    %6267 = vmatpush2.bf16.msra.mxu0 %v6037
    %6268 = vmatprep.subr.bf16.mxu0 0
    %6269 = vmatpush2.bf16.msra.mxu0 %v6036
    %6270 = vmatprep.subr.bf16.mxu0 0
    %6271 = vmatpush2.bf16.msra.mxu0 %v6035
    %6272 = vmatprep.subr.bf16.mxu0 0
    %6273 = vmatpush2.bf16.msra.mxu0 %v6034
    %6274 = vmatprep.subr.bf16.mxu0 0
    %6275 = vmatpush2.bf16.msra.mxu0 %v6033
    %6276 = vmatprep.subr.bf16.mxu0 0
    %6277 = vmatpush2.bf16.msra.mxu0 %v6032
    %6278 = vmatprep.subr.bf16.mxu0 0
    %6279 = vmatpush2.bf16.msra.mxu0 %v6031
    %6280 = vmatprep.mubr.bf16.mxu0 %v5578
    %6281 = vmatmul.mubr.bf16.gmra.mxu0 %v5577
    %v6282 = vpop.f32.mrf.mxu0
    %v6283 = vadd.f32 %v6186, %v6282
    %v6284 = vpop.f32.mrf.mxu0
    %v6285 = vpop.f32.mrf.mxu0
    %v6286 = vadd.f32 %v6189, %v6285
    %v6287 = vpop.f32.mrf.mxu0
    %6288 = vmatprep.mubr.bf16.mxu0 %v5587
    %6289 = vmatmul.mubr.bf16.gmra.mxu0 %v5586
    %v6290 = vpop.f32.mrf.mxu0
    %v6291 = vadd.f32 %v6194, %v6290
    %v6292 = vpop.f32.mrf.mxu0
    %v6293 = vpop.f32.mrf.mxu0
    %v6294 = vadd.f32 %v6197, %v6293
    %v6295 = vpop.f32.mrf.mxu0
    %6296 = vmatprep.mubr.bf16.mxu0 %v5596
    %6297 = vmatmul.mubr.bf16.gmra.mxu0 %v5595
    %v6298 = vpop.f32.mrf.mxu0
    %v6299 = vadd.f32 %v6202, %v6298
    %v6300 = vpop.f32.mrf.mxu0
    %v6301 = vpop.f32.mrf.mxu0
    %v6302 = vadd.f32 %v6205, %v6301
    %v6303 = vpop.f32.mrf.mxu0
    %6304 = vmatprep.mubr.bf16.mxu0 %v5605
    %6305 = vmatmul.mubr.bf16.gmra.mxu0 %v5604
    %v6306 = vpop.f32.mrf.mxu0
    %v6307 = vadd.f32 %v6210, %v6306
    %v6308 = vpop.f32.mrf.mxu0
    %v6309 = vpop.f32.mrf.mxu0
    %v6310 = vadd.f32 %v6213, %v6309
    %v6311 = vpop.f32.mrf.mxu0
    %6312 = vmatprep.mubr.bf16.mxu0 %v5614
    %6313 = vmatmul.mubr.bf16.gmra.mxu0 %v5613
    %v6314 = vpop.f32.mrf.mxu0
    %v6315 = vadd.f32 %v6218, %v6314
    %v6316 = vpop.f32.mrf.mxu0
    %v6317 = vpop.f32.mrf.mxu0
    %v6318 = vadd.f32 %v6221, %v6317
    %v6319 = vpop.f32.mrf.mxu0
    %6320 = vmatprep.mubr.bf16.mxu0 %v5623
    %6321 = vmatmul.mubr.bf16.gmra.mxu0 %v5622
    %v6322 = vpop.f32.mrf.mxu0
    %v6323 = vadd.f32 %v6226, %v6322
    %v6324 = vpop.f32.mrf.mxu0
    %v6325 = vpop.f32.mrf.mxu0
    %v6326 = vadd.f32 %v6229, %v6325
    %v6327 = vpop.f32.mrf.mxu0
    %6328 = vmatprep.mubr.bf16.mxu0 %v5632
    %6329 = vmatmul.mubr.bf16.gmra.mxu0 %v5631
    %v6330 = vpop.f32.mrf.mxu0
    %v6331 = vadd.f32 %v6234, %v6330
    %v6332 = vpop.f32.mrf.mxu0
    %v6333 = vpop.f32.mrf.mxu0
    %v6334 = vadd.f32 %v6237, %v6333
    %v6335 = vpop.f32.mrf.mxu0
    %6336 = vmatprep.mubr.bf16.mxu0 %v5641
    %6337 = vmatmul.mubr.bf16.gmra.mxu0 %v5640
    %v6338 = vpop.f32.mrf.mxu0
    %v6339 = vadd.f32 %v6242, %v6338
    %v6340 = vpop.f32.mrf.mxu0
    %v6341 = vpop.f32.mrf.mxu0
    %v6342 = vadd.f32 %v6245, %v6341
    %v6343 = vpop.f32.mrf.mxu0
    %6344 = vdwg.mxu0
    %6345 = vmatprep.subr.bf16.mxu0 0
    %6346 = vmatpush1.bf16.msra.mxu0 %v6046
    %6347 = vmatprep.subr.bf16.mxu0 0
    %6348 = vmatpush1.bf16.msra.mxu0 %v6045
    %6349 = vmatprep.subr.bf16.mxu0 0
    %6350 = vmatpush1.bf16.msra.mxu0 %v6044
    %6351 = vmatprep.subr.bf16.mxu0 0
    %6352 = vmatpush1.bf16.msra.mxu0 %v6043
    %6353 = vmatprep.subr.bf16.mxu0 0
    %6354 = vmatpush1.bf16.msra.mxu0 %v6042
    %6355 = vmatprep.subr.bf16.mxu0 0
    %6356 = vmatpush1.bf16.msra.mxu0 %v6041
    %6357 = vmatprep.subr.bf16.mxu0 0
    %6358 = vmatpush1.bf16.msra.mxu0 %v6040
    %6359 = vmatprep.subr.bf16.mxu0 0
    %6360 = vmatpush1.bf16.msra.mxu0 %v6039
    %6361 = vmatprep.subr.bf16.mxu0 0
    %6362 = vmatpush2.bf16.msra.mxu0 %v6054
    %6363 = vmatprep.subr.bf16.mxu0 0
    %6364 = vmatpush2.bf16.msra.mxu0 %v6053
    %6365 = vmatprep.subr.bf16.mxu0 0
    %6366 = vmatpush2.bf16.msra.mxu0 %v6052
    %6367 = vmatprep.subr.bf16.mxu0 0
    %6368 = vmatpush2.bf16.msra.mxu0 %v6051
    %6369 = vmatprep.subr.bf16.mxu0 0
    %6370 = vmatpush2.bf16.msra.mxu0 %v6050
    %6371 = vmatprep.subr.bf16.mxu0 0
    %6372 = vmatpush2.bf16.msra.mxu0 %v6049
    %6373 = vmatprep.subr.bf16.mxu0 0
    %6374 = vmatpush2.bf16.msra.mxu0 %v6048
    %6375 = vmatprep.subr.bf16.mxu0 0
    %6376 = vmatpush2.bf16.msra.mxu0 %v6047
    %6377 = vmatprep.mubr.bf16.mxu0 %v5580
    %6378 = vmatmul.mubr.bf16.gmra.mxu0 %v5579
    %v6379 = vpop.f32.mrf.mxu0
    %v6380 = vadd.f32 %v6283, %v6379
    %v6381 = vpop.f32.mrf.mxu0
    %v6382 = vpop.f32.mrf.mxu0
    %v6383 = vadd.f32 %v6286, %v6382
    %v6384 = vpop.f32.mrf.mxu0
    %6385 = vmatprep.mubr.bf16.mxu0 %v5589
    %6386 = vmatmul.mubr.bf16.gmra.mxu0 %v5588
    %v6387 = vpop.f32.mrf.mxu0
    %v6388 = vadd.f32 %v6291, %v6387
    %v6389 = vpop.f32.mrf.mxu0
    %v6390 = vpop.f32.mrf.mxu0
    %v6391 = vadd.f32 %v6294, %v6390
    %v6392 = vpop.f32.mrf.mxu0
    %6393 = vmatprep.mubr.bf16.mxu0 %v5598
    %6394 = vmatmul.mubr.bf16.gmra.mxu0 %v5597
    %v6395 = vpop.f32.mrf.mxu0
    %v6396 = vadd.f32 %v6299, %v6395
    %v6397 = vpop.f32.mrf.mxu0
    %v6398 = vpop.f32.mrf.mxu0
    %v6399 = vadd.f32 %v6302, %v6398
    %v6400 = vpop.f32.mrf.mxu0
    %6401 = vmatprep.mubr.bf16.mxu0 %v5607
    %6402 = vmatmul.mubr.bf16.gmra.mxu0 %v5606
    %v6403 = vpop.f32.mrf.mxu0
    %v6404 = vadd.f32 %v6307, %v6403
    %v6405 = vpop.f32.mrf.mxu0
    %v6406 = vpop.f32.mrf.mxu0
    %v6407 = vadd.f32 %v6310, %v6406
    %v6408 = vpop.f32.mrf.mxu0
    %6409 = vmatprep.mubr.bf16.mxu0 %v5616
    %6410 = vmatmul.mubr.bf16.gmra.mxu0 %v5615
    %v6411 = vpop.f32.mrf.mxu0
    %v6412 = vadd.f32 %v6315, %v6411
    %v6413 = vpop.f32.mrf.mxu0
    %v6414 = vpop.f32.mrf.mxu0
    %v6415 = vadd.f32 %v6318, %v6414
    %v6416 = vpop.f32.mrf.mxu0
    %6417 = vmatprep.mubr.bf16.mxu0 %v5625
    %6418 = vmatmul.mubr.bf16.gmra.mxu0 %v5624
    %v6419 = vpop.f32.mrf.mxu0
    %v6420 = vadd.f32 %v6323, %v6419
    %v6421 = vpop.f32.mrf.mxu0
    %v6422 = vpop.f32.mrf.mxu0
    %v6423 = vadd.f32 %v6326, %v6422
    %v6424 = vpop.f32.mrf.mxu0
    %6425 = vmatprep.mubr.bf16.mxu0 %v5634
    %6426 = vmatmul.mubr.bf16.gmra.mxu0 %v5633
    %v6427 = vpop.f32.mrf.mxu0
    %v6428 = vadd.f32 %v6331, %v6427
    %v6429 = vpop.f32.mrf.mxu0
    %v6430 = vpop.f32.mrf.mxu0
    %v6431 = vadd.f32 %v6334, %v6430
    %v6432 = vpop.f32.mrf.mxu0
    %6433 = vmatprep.mubr.bf16.mxu0 %v5643
    %6434 = vmatmul.mubr.bf16.gmra.mxu0 %v5642
    %v6435 = vpop.f32.mrf.mxu0
    %v6436 = vadd.f32 %v6339, %v6435
    %v6437 = vpop.f32.mrf.mxu0
    %v6438 = vpop.f32.mrf.mxu0
    %v6439 = vadd.f32 %v6342, %v6438
    %v6440 = vpop.f32.mrf.mxu0
    %6441 = vdwg.mxu0
    %6442 = vmatprep.subr.bf16.mxu0 0
    %6443 = vmatpush1.bf16.msra.mxu0 %v6062
    %6444 = vmatprep.subr.bf16.mxu0 0
    %6445 = vmatpush1.bf16.msra.mxu0 %v6061
    %6446 = vmatprep.subr.bf16.mxu0 0
    %6447 = vmatpush1.bf16.msra.mxu0 %v6060
    %6448 = vmatprep.subr.bf16.mxu0 0
    %6449 = vmatpush1.bf16.msra.mxu0 %v6059
    %6450 = vmatprep.subr.bf16.mxu0 0
    %6451 = vmatpush1.bf16.msra.mxu0 %v6058
    %6452 = vmatprep.subr.bf16.mxu0 0
    %6453 = vmatpush1.bf16.msra.mxu0 %v6057
    %6454 = vmatprep.subr.bf16.mxu0 0
    %6455 = vmatpush1.bf16.msra.mxu0 %v6056
    %6456 = vmatprep.subr.bf16.mxu0 0
    %6457 = vmatpush1.bf16.msra.mxu0 %v6055
    %6458 = vmatprep.subr.bf16.mxu0 0
    %6459 = vmatpush2.bf16.msra.mxu0 %v6070
    %6460 = vmatprep.subr.bf16.mxu0 0
    %6461 = vmatpush2.bf16.msra.mxu0 %v6069
    %6462 = vmatprep.subr.bf16.mxu0 0
    %6463 = vmatpush2.bf16.msra.mxu0 %v6068
    %6464 = vmatprep.subr.bf16.mxu0 0
    %6465 = vmatpush2.bf16.msra.mxu0 %v6067
    %6466 = vmatprep.subr.bf16.mxu0 0
    %6467 = vmatpush2.bf16.msra.mxu0 %v6066
    %6468 = vmatprep.subr.bf16.mxu0 0
    %6469 = vmatpush2.bf16.msra.mxu0 %v6065
    %6470 = vmatprep.subr.bf16.mxu0 0
    %6471 = vmatpush2.bf16.msra.mxu0 %v6064
    %6472 = vmatprep.subr.bf16.mxu0 0
    %6473 = vmatpush2.bf16.msra.mxu0 %v6063
    %6474 = vmatprep.mubr.bf16.mxu0 %v5582
    %6475 = vmatmul.mubr.bf16.gmra.mxu0 %v5581
    %v6476 = vpop.f32.mrf.mxu0
    %v6477 = vadd.f32 %v6380, %v6476
    %v6478 = vpop.f32.mrf.mxu0
    %v6479 = vpop.f32.mrf.mxu0
    %v6480 = vadd.f32 %v6383, %v6479
    %v6481 = vpop.f32.mrf.mxu0
    %6482 = vmatprep.mubr.bf16.mxu0 %v5591
    %6483 = vmatmul.mubr.bf16.gmra.mxu0 %v5590
    %v6484 = vpop.f32.mrf.mxu0
    %v6485 = vadd.f32 %v6388, %v6484
    %v6486 = vpop.f32.mrf.mxu0
    %v6487 = vpop.f32.mrf.mxu0
    %v6488 = vadd.f32 %v6391, %v6487
    %v6489 = vpop.f32.mrf.mxu0
    %6490 = vmatprep.mubr.bf16.mxu0 %v5600
    %6491 = vmatmul.mubr.bf16.gmra.mxu0 %v5599
    %v6492 = vpop.f32.mrf.mxu0
    %v6493 = vadd.f32 %v6396, %v6492
    %v6494 = vpop.f32.mrf.mxu0
    %v6495 = vpop.f32.mrf.mxu0
    %v6496 = vadd.f32 %v6399, %v6495
    %v6497 = vpop.f32.mrf.mxu0
    %6498 = vmatprep.mubr.bf16.mxu0 %v5609
    %6499 = vmatmul.mubr.bf16.gmra.mxu0 %v5608
    %v6500 = vpop.f32.mrf.mxu0
    %v6501 = vadd.f32 %v6404, %v6500
    %v6502 = vpop.f32.mrf.mxu0
    %v6503 = vpop.f32.mrf.mxu0
    %v6504 = vadd.f32 %v6407, %v6503
    %v6505 = vpop.f32.mrf.mxu0
    %6506 = vmatprep.mubr.bf16.mxu0 %v5618
    %6507 = vmatmul.mubr.bf16.gmra.mxu0 %v5617
    %v6508 = vpop.f32.mrf.mxu0
    %v6509 = vadd.f32 %v6412, %v6508
    %v6510 = vpop.f32.mrf.mxu0
    %v6511 = vpop.f32.mrf.mxu0
    %v6512 = vadd.f32 %v6415, %v6511
    %v6513 = vpop.f32.mrf.mxu0
    %6514 = vmatprep.mubr.bf16.mxu0 %v5627
    %6515 = vmatmul.mubr.bf16.gmra.mxu0 %v5626
    %v6516 = vpop.f32.mrf.mxu0
    %v6517 = vadd.f32 %v6420, %v6516
    %v6518 = vpop.f32.mrf.mxu0
    %v6519 = vpop.f32.mrf.mxu0
    %v6520 = vadd.f32 %v6423, %v6519
    %v6521 = vpop.f32.mrf.mxu0
    %6522 = vmatprep.mubr.bf16.mxu0 %v5636
    %6523 = vmatmul.mubr.bf16.gmra.mxu0 %v5635
    %v6524 = vpop.f32.mrf.mxu0
    %v6525 = vadd.f32 %v6428, %v6524
    %v6526 = vpop.f32.mrf.mxu0
    %v6527 = vpop.f32.mrf.mxu0
    %v6528 = vadd.f32 %v6431, %v6527
    %v6529 = vpop.f32.mrf.mxu0
    %6530 = vmatprep.mubr.bf16.mxu0 %v5645
    %6531 = vmatmul.mubr.bf16.gmra.mxu0 %v5644
    %v6532 = vpop.f32.mrf.mxu0
    %v6533 = vadd.f32 %v6436, %v6532
    %v6534 = vpop.f32.mrf.mxu0
    %v6535 = vpop.f32.mrf.mxu0
    %v6536 = vadd.f32 %v6439, %v6535
    %v6537 = vpop.f32.mrf.mxu0
    %6538 = vdwg.mxu0
    %6539 = vmatprep.subr.bf16.mxu0 0
    %6540 = vmatpush1.bf16.msra.mxu0 %v6078
    %6541 = vmatprep.subr.bf16.mxu0 0
    %6542 = vmatpush1.bf16.msra.mxu0 %v6077
    %6543 = vmatprep.subr.bf16.mxu0 0
    %6544 = vmatpush1.bf16.msra.mxu0 %v6076
    %6545 = vmatprep.subr.bf16.mxu0 0
    %6546 = vmatpush1.bf16.msra.mxu0 %v6075
    %6547 = vmatprep.subr.bf16.mxu0 0
    %6548 = vmatpush1.bf16.msra.mxu0 %v6074
    %6549 = vmatprep.subr.bf16.mxu0 0
    %6550 = vmatpush1.bf16.msra.mxu0 %v6073
    %6551 = vmatprep.subr.bf16.mxu0 0
    %6552 = vmatpush1.bf16.msra.mxu0 %v6072
    %6553 = vmatprep.subr.bf16.mxu0 0
    %6554 = vmatpush1.bf16.msra.mxu0 %v6071
    %6555 = vmatprep.subr.bf16.mxu0 0
    %6556 = vmatpush2.bf16.msra.mxu0 0
    %6557 = vmatprep.subr.bf16.mxu0 0
    %6558 = vmatpush2.bf16.msra.mxu0 0
    %6559 = vmatprep.subr.bf16.mxu0 0
    %6560 = vmatpush2.bf16.msra.mxu0 0
    %6561 = vmatprep.subr.bf16.mxu0 0
    %6562 = vmatpush2.bf16.msra.mxu0 0
    %6563 = vmatprep.subr.bf16.mxu0 0
    %6564 = vmatpush2.bf16.msra.mxu0 0
    %6565 = vmatprep.subr.bf16.mxu0 0
    %6566 = vmatpush2.bf16.msra.mxu0 0
    %6567 = vmatprep.subr.bf16.mxu0 0
    %6568 = vmatpush2.bf16.msra.mxu0 0
    %6569 = vmatprep.subr.bf16.mxu0 0
    %6570 = vmatpush2.bf16.msra.mxu0 0
    %6571 = vmatprep.mubr.bf16.mxu0 0
    %6572 = vmatmul.mubr.bf16.gmra.mxu0 %v5583
    %v6573 = vpop.f32.mrf.mxu0
    %v6574 = vadd.f32 %v6477, %v6573
    %v6575 = vpop.f32.mrf.mxu0
    %v6576 = vpop.f32.mrf.mxu0
    %v6577 = vadd.f32 %v6480, %v6576
    %v6578 = vpop.f32.mrf.mxu0
    %6579 = vmatprep.mubr.bf16.mxu0 0
    %6580 = vmatmul.mubr.bf16.gmra.mxu0 %v5592
    %v6581 = vpop.f32.mrf.mxu0
    %v6582 = vadd.f32 %v6485, %v6581
    %v6583 = vpop.f32.mrf.mxu0
    %v6584 = vpop.f32.mrf.mxu0
    %v6585 = vadd.f32 %v6488, %v6584
    %v6586 = vpop.f32.mrf.mxu0
    %6587 = vmatprep.mubr.bf16.mxu0 0
    %6588 = vmatmul.mubr.bf16.gmra.mxu0 %v5601
    %v6589 = vpop.f32.mrf.mxu0
    %v6590 = vadd.f32 %v6493, %v6589
    %v6591 = vpop.f32.mrf.mxu0
    %v6592 = vpop.f32.mrf.mxu0
    %v6593 = vadd.f32 %v6496, %v6592
    %v6594 = vpop.f32.mrf.mxu0
    %6595 = vmatprep.mubr.bf16.mxu0 0
    %6596 = vmatmul.mubr.bf16.gmra.mxu0 %v5610
    %v6597 = vpop.f32.mrf.mxu0
    %v6598 = vadd.f32 %v6501, %v6597
    %v6599 = vpop.f32.mrf.mxu0
    %v6600 = vpop.f32.mrf.mxu0
    %v6601 = vadd.f32 %v6504, %v6600
    %v6602 = vpop.f32.mrf.mxu0
    %6603 = vmatprep.mubr.bf16.mxu0 0
    %6604 = vmatmul.mubr.bf16.gmra.mxu0 %v5619
    %v6605 = vpop.f32.mrf.mxu0
    %v6606 = vadd.f32 %v6509, %v6605
    %v6607 = vpop.f32.mrf.mxu0
    %v6608 = vpop.f32.mrf.mxu0
    %v6609 = vadd.f32 %v6512, %v6608
    %v6610 = vpop.f32.mrf.mxu0
    %6611 = vmatprep.mubr.bf16.mxu0 0
    %6612 = vmatmul.mubr.bf16.gmra.mxu0 %v5628
    %v6613 = vpop.f32.mrf.mxu0
    %v6614 = vadd.f32 %v6517, %v6613
    %v6615 = vpop.f32.mrf.mxu0
    %v6616 = vpop.f32.mrf.mxu0
    %v6617 = vadd.f32 %v6520, %v6616
    %v6618 = vpop.f32.mrf.mxu0
    %6619 = vmatprep.mubr.bf16.mxu0 0
    %6620 = vmatmul.mubr.bf16.gmra.mxu0 %v5637
    %v6621 = vpop.f32.mrf.mxu0
    %v6622 = vadd.f32 %v6525, %v6621
    %v6623 = vpop.f32.mrf.mxu0
    %v6624 = vpop.f32.mrf.mxu0
    %v6625 = vadd.f32 %v6528, %v6624
    %v6626 = vpop.f32.mrf.mxu0
    %6627 = vmatprep.mubr.bf16.mxu0 0
    %6628 = vmatmul.mubr.bf16.gmra.mxu0 %v5646
    %v6629 = vpop.f32.mrf.mxu0
    %v6630 = vadd.f32 %v6533, %v6629
    %v6631 = vpop.f32.mrf.mxu0
    %v6632 = vpop.f32.mrf.mxu0
    %v6633 = vadd.f32 %v6536, %v6632
    %v6634 = vpop.f32.mrf.mxu0
    %6635 = vdwg.mxu0
    %v6636 = vmax.f32 %v6574, 0.0
    %v6637 = vmax.f32 %v6577, 0.0
    %v6638 = vmax.f32 %v6582, 0.0
    %v6639 = vmax.f32 %v6585, 0.0
    %v6640 = vmax.f32 %v6590, 0.0
    %v6641 = vmax.f32 %v6593, 0.0
    %v6642 = vmax.f32 %v6598, 0.0
    %v6643 = vmax.f32 %v6601, 0.0
    %v6644 = vmax.f32 %v6606, 0.0
    %v6645 = vmax.f32 %v6609, 0.0
    %v6646 = vmax.f32 %v6614, 0.0
    %v6647 = vmax.f32 %v6617, 0.0
    %v6648 = vmax.f32 %v6622, 0.0
    %v6649 = vmax.f32 %v6625, 0.0
    %v6650 = vmax.f32 %v6630, 0.0
    %v6651 = vmax.f32 %v6633, 0.0
    %v6652 = vadd.f32 %v6636, %v6637
    %v6653 = vadd.f32 %v6652, %v6638
    %v6654 = vadd.f32 %v6653, %v6639
    %v6655 = vadd.f32 %v6654, %v6640
    %v6656 = vadd.f32 %v6655, %v6641
    %v6657 = vadd.f32 %v6656, %v6642
    %v6658 = vadd.f32 %v6657, %v6643
    %v6659 = vrot.slane %v6658, 4
    %v6660 = vadd.f32 %v6658, %v6659
    %v6661 = vrot.slane %v6660, 2
    %v6662 = vadd.f32 %v6660, %v6661
    %v6663 = vrot.slane %v6662, 1
    %v6664 = vadd.f32 %v6662, %v6663
    %v6665 = vld [vmem:[%s3] sm:$0xff]
    %v6666 = vld [vmem:[%s3 + $0x8] sm:$0xff]
    %v6667 = vld [vmem:[%s3 + $0x10] sm:$0xff]
    %v6668 = vld [vmem:[%s3 + $0x18] sm:$0xff]
    %v6669 = vld [vmem:[%s3 + $0x20] sm:$0xff]
    %v6670 = vld [vmem:[%s3 + $0x28] sm:$0xff]
    %v6671 = vld [vmem:[%s3 + $0x30] sm:$0xff]
    %v6672 = vld [vmem:[%s3 + $0x38] sm:$0xff]
    %v6673 = vld [vmem:[%s3 + $0x40] sm:$0xff]
    %v6674 = vld [vmem:[%s3 + $0x48] sm:$0xff]
    %v6675 = vld [vmem:[%s3 + $0x50] sm:$0xff]
    %v6676 = vld [vmem:[%s3 + $0x58] sm:$0xff]
    %v6677 = vld [vmem:[%s3 + $0x60] sm:$0xff]
    %v6678 = vld [vmem:[%s3 + $0x68] sm:$0xff]
    %v6679 = vld [vmem:[%s3 + $0x70] sm:$0xff]
    %v6680 = vld [vmem:[%s3 + $0x78] sm:$0xff]
    %v6681 = vld [vmem:[%s4] sm:$0x1]
    %6682 = vmatprep.subr.mxu0 0.0
    %6683 = vmatpush1.msra.mxu0 %v6680
    %6684 = vmatprep.subr.mxu0 0.0
    %6685 = vmatpush1.msra.mxu0 %v6679
    %6686 = vmatprep.subr.mxu0 0.0
    %6687 = vmatpush1.msra.mxu0 %v6678
    %6688 = vmatprep.subr.mxu0 0.0
    %6689 = vmatpush1.msra.mxu0 %v6677
    %6690 = vmatprep.subr.mxu0 0.0
    %6691 = vmatpush1.msra.mxu0 %v6676
    %6692 = vmatprep.subr.mxu0 0.0
    %6693 = vmatpush1.msra.mxu0 %v6675
    %6694 = vmatprep.subr.mxu0 0.0
    %6695 = vmatpush1.msra.mxu0 %v6674
    %6696 = vmatprep.subr.mxu0 0.0
    %6697 = vmatpush1.msra.mxu0 %v6673
    %6698 = vmatprep.subr.mxu0 0.0
    %6699 = vmatpush1.msra.mxu0 %v6672
    %6700 = vmatprep.subr.mxu0 0.0
    %6701 = vmatpush1.msra.mxu0 %v6671
    %6702 = vmatprep.subr.mxu0 0.0
    %6703 = vmatpush1.msra.mxu0 %v6670
    %6704 = vmatprep.subr.mxu0 0.0
    %6705 = vmatpush1.msra.mxu0 %v6669
    %6706 = vmatprep.subr.mxu0 0.0
    %6707 = vmatpush1.msra.mxu0 %v6668
    %6708 = vmatprep.subr.mxu0 0.0
    %6709 = vmatpush1.msra.mxu0 %v6667
    %6710 = vmatprep.subr.mxu0 0.0
    %6711 = vmatpush1.msra.mxu0 %v6666
    %6712 = vmatprep.subr.mxu0 0.0
    %6713 = vmatpush1.msra.mxu0 %v6665
    %6714 = vmatprep.subr.mxu0 0.0
    %6715 = vmatpush2.msra.mxu0 0.0
    %6716 = vmatprep.subr.mxu0 0.0
    %6717 = vmatpush2.msra.mxu0 0.0
    %6718 = vmatprep.subr.mxu0 0.0
    %6719 = vmatpush2.msra.mxu0 0.0
    %6720 = vmatprep.subr.mxu0 0.0
    %6721 = vmatpush2.msra.mxu0 0.0
    %6722 = vmatprep.subr.mxu0 0.0
    %6723 = vmatpush2.msra.mxu0 0.0
    %6724 = vmatprep.subr.mxu0 0.0
    %6725 = vmatpush2.msra.mxu0 0.0
    %6726 = vmatprep.subr.mxu0 0.0
    %6727 = vmatpush2.msra.mxu0 0.0
    %6728 = vmatprep.subr.mxu0 0.0
    %6729 = vmatpush2.msra.mxu0 0.0
    %6730 = vmatprep.subr.mxu0 0.0
    %6731 = vmatpush2.msra.mxu0 0.0
    %6732 = vmatprep.subr.mxu0 0.0
    %6733 = vmatpush2.msra.mxu0 0.0
    %6734 = vmatprep.subr.mxu0 0.0
    %6735 = vmatpush2.msra.mxu0 0.0
    %6736 = vmatprep.subr.mxu0 0.0
    %6737 = vmatpush2.msra.mxu0 0.0
    %6738 = vmatprep.subr.mxu0 0.0
    %6739 = vmatpush2.msra.mxu0 0.0
    %6740 = vmatprep.subr.mxu0 0.0
    %6741 = vmatpush2.msra.mxu0 0.0
    %6742 = vmatprep.subr.mxu0 0.0
    %6743 = vmatpush2.msra.mxu0 0.0
    %6744 = vmatprep.subr.mxu0 0.0
    %6745 = vmatpush2.msra.mxu0 0.0
    %6746 = vmatprep.mubr.f32.mxu0 0.0
    %6747 = vmatmul.mubr.f32.gmra.mxu0 %v6664
    %v6748 = vpop.f32.mrf.mxu0
    %v6749 = vadd.f32 %v6681, %v6748
    %v6750 = vpop.f32.mrf.mxu0
    %6751 = vdwg.mxu0
    %v6752 = vmax.f32 %v6749, 0.0
    %v6753 = vld [vmem:[%s5] sm:$0x3]
    %v6754 = vld [vmem:[%s6] sm:$0x1]
    %vm6755 = vcmask 15360
    %v6757 = vsel %vm6755, %v6752, 0
    %vm6759 = vcmask 1041408
    %v6761 = vsel %vm6759, %v6753, 0
    %6763 = vmatprep.subr.mxu0 0.0
    %6764 = vmatpush1.msra.mxu0 0.0
    %6765 = vmatprep.subr.mxu0 0.0
    %6766 = vmatpush1.msra.mxu0 0.0
    %6767 = vmatprep.subr.mxu0 0.0
    %6768 = vmatpush1.msra.mxu0 0.0
    %6769 = vmatprep.subr.mxu0 0.0
    %6770 = vmatpush1.msra.mxu0 0.0
    %6771 = vmatprep.subr.mxu0 0.0
    %6772 = vmatpush1.msra.mxu0 0.0
    %6773 = vmatprep.subr.mxu0 0.0
    %6774 = vmatpush1.msra.mxu0 0.0
    %6775 = vmatprep.subr.mxu0 0.0
    %6776 = vmatpush1.msra.mxu0 0.0
    %6777 = vmatprep.subr.mxu0 0.0
    %6778 = vmatpush1.msra.mxu0 0.0
    %6779 = vmatprep.subr.mxu0 0.0
    %6780 = vmatpush1.msra.mxu0 0.0
    %6781 = vmatprep.subr.mxu0 0.0
    %6782 = vmatpush1.msra.mxu0 0.0
    %6783 = vmatprep.subr.mxu0 0.0
    %6784 = vmatpush1.msra.mxu0 0.0
    %6785 = vmatprep.subr.mxu0 0.0
    %6786 = vmatpush1.msra.mxu0 0.0
    %6787 = vmatprep.subr.mxu0 0.0
    %6788 = vmatpush1.msra.mxu0 0.0
    %6789 = vmatprep.subr.mxu0 0.0
    %6790 = vmatpush1.msra.mxu0 0.0
    %6791 = vmatprep.subr.mxu0 0.0
    %6792 = vmatpush1.msra.mxu0 0.0
    %6793 = vmatprep.subr.mxu0 0.0
    %6794 = vmatpush1.msra.mxu0 %v6761
    %6795 = vmatprep.subr.mxu0 0.0
    %6796 = vmatpush2.msra.mxu0 0.0
    %6797 = vmatprep.subr.mxu0 0.0
    %6798 = vmatpush2.msra.mxu0 0.0
    %6799 = vmatprep.subr.mxu0 0.0
    %6800 = vmatpush2.msra.mxu0 0.0
    %6801 = vmatprep.subr.mxu0 0.0
    %6802 = vmatpush2.msra.mxu0 0.0
    %6803 = vmatprep.subr.mxu0 0.0
    %6804 = vmatpush2.msra.mxu0 0.0
    %6805 = vmatprep.subr.mxu0 0.0
    %6806 = vmatpush2.msra.mxu0 0.0
    %6807 = vmatprep.subr.mxu0 0.0
    %6808 = vmatpush2.msra.mxu0 0.0
    %6809 = vmatprep.subr.mxu0 0.0
    %6810 = vmatpush2.msra.mxu0 0.0
    %6811 = vmatprep.subr.mxu0 0.0
    %6812 = vmatpush2.msra.mxu0 0.0
    %6813 = vmatprep.subr.mxu0 0.0
    %6814 = vmatpush2.msra.mxu0 0.0
    %6815 = vmatprep.subr.mxu0 0.0
    %6816 = vmatpush2.msra.mxu0 0.0
    %6817 = vmatprep.subr.mxu0 0.0
    %6818 = vmatpush2.msra.mxu0 0.0
    %6819 = vmatprep.subr.mxu0 0.0
    %6820 = vmatpush2.msra.mxu0 0.0
    %6821 = vmatprep.subr.mxu0 0.0
    %6822 = vmatpush2.msra.mxu0 0.0
    %6823 = vmatprep.subr.mxu0 0.0
    %6824 = vmatpush2.msra.mxu0 0.0
    %6825 = vmatprep.subr.mxu0 0.0
    %6826 = vmatpush2.msra.mxu0 0.0
    %6827 = vmatprep.mubr.f32.mxu0 0.0
    %6828 = vmatmul.mubr.f32.gmra.mxu0 %v6757
    %v6829 = vpop.f32.mrf.mxu0
    %v6830 = vadd.f32 %v6754, %v6829
    %v6831 = vpop.f32.mrf.mxu0
    %6832 = vdwg.mxu0
    %v6833 = vsub.f32 0.0, %v6830
    %v6834 = vmul.f32 %v6833, 1.442695
    %v6835 = vpow.pop %v6834
    %v6836 = vadd.f32 %v6835, 1.0
    %v6837 = vrcp.pop %v6836
    %v6838 = vmul.f32 1.0, %v6837
    %v6839 = vld [vmem:[%s0] sm:$0xff]
    %v6840 = vld [vmem:[%s0 + $0x8] sm:$0xff]
    %v6841 = vld [vmem:[%s0 + $0x10] sm:$0xff]
    %v6842 = vld [vmem:[%s0 + $0x18] sm:$0xff]
    %v6843 = vld [vmem:[%s0 + $0x20] sm:$0xff]
    %v6844 = vld [vmem:[%s0 + $0x28] sm:$0xff]
    %v6845 = vld [vmem:[%s0 + $0x30] sm:$0xff]
    %v6846 = vld [vmem:[%s0 + $0x38] sm:$0xff]
    %v6847 = vlaneseq
    %v6848 = vshrl.u32 %v6847, 7
    %v6849 = vsub.s32 0, %v6848
    %v6850 = vrot.slane %v6838, %v6849
    %v6851 = vmul.f32 %v6636, %v6850
    %v6852 = vmul.f32 %v6637, %v6850
    %v6853 = vmul.f32 %v6638, %v6850
    %v6854 = vmul.f32 %v6639, %v6850
    %v6855 = vmul.f32 %v6640, %v6850
    %v6856 = vmul.f32 %v6641, %v6850
    %v6857 = vmul.f32 %v6642, %v6850
    %v6858 = vmul.f32 %v6643, %v6850
    %v6859 = vadd.f32 %v6851, %v6839
    %v6860 = vadd.f32 %v6852, %v6840
    %v6861 = vadd.f32 %v6853, %v6841
    %v6862 = vadd.f32 %v6854, %v6842
    %v6863 = vadd.f32 %v6855, %v6843
    %v6864 = vadd.f32 %v6856, %v6844
    %v6865 = vadd.f32 %v6857, %v6845
    %v6866 = vadd.f32 %v6858, %v6846
    %6867 = vst [vmem:[#allocation7] sm:$0xff] %v6859
    %6868 = vst [vmem:[#allocation7 + $0x8] sm:$0xff] %v6860
    %6869 = vst [vmem:[#allocation7 + $0x10] sm:$0xff] %v6861
    %6870 = vst [vmem:[#allocation7 + $0x18] sm:$0xff] %v6862
    %6871 = vst [vmem:[#allocation7 + $0x20] sm:$0xff] %v6863
    %6872 = vst [vmem:[#allocation7 + $0x28] sm:$0xff] %v6864
    %6873 = vst [vmem:[#allocation7 + $0x30] sm:$0xff] %v6865
    %6874 = vst [vmem:[#allocation7 + $0x38] sm:$0xff] %v6866
    %v6875 = vadd.f32 %v6644, %v6645
    %v6876 = vadd.f32 %v6875, %v6646
    %v6877 = vadd.f32 %v6876, %v6647
    %v6878 = vadd.f32 %v6877, %v6648
    %v6879 = vadd.f32 %v6878, %v6649
    %v6880 = vadd.f32 %v6879, %v6650
    %v6881 = vadd.f32 %v6880, %v6651
    %v6882 = vrot.slane %v6881, 4
    %v6883 = vadd.f32 %v6881, %v6882
    %v6884 = vrot.slane %v6883, 2
    %v6885 = vadd.f32 %v6883, %v6884
    %v6886 = vrot.slane %v6885, 1
    %v6887 = vadd.f32 %v6885, %v6886
    %v6888 = vld [vmem:[%s3] sm:$0xff]
    %v6889 = vld [vmem:[%s3 + $0x8] sm:$0xff]
    %v6890 = vld [vmem:[%s3 + $0x10] sm:$0xff]
    %v6891 = vld [vmem:[%s3 + $0x18] sm:$0xff]
    %v6892 = vld [vmem:[%s3 + $0x20] sm:$0xff]
    %v6893 = vld [vmem:[%s3 + $0x28] sm:$0xff]
    %v6894 = vld [vmem:[%s3 + $0x30] sm:$0xff]
    %v6895 = vld [vmem:[%s3 + $0x38] sm:$0xff]
    %v6896 = vld [vmem:[%s3 + $0x40] sm:$0xff]
    %v6897 = vld [vmem:[%s3 + $0x48] sm:$0xff]
    %v6898 = vld [vmem:[%s3 + $0x50] sm:$0xff]
    %v6899 = vld [vmem:[%s3 + $0x58] sm:$0xff]
    %v6900 = vld [vmem:[%s3 + $0x60] sm:$0xff]
    %v6901 = vld [vmem:[%s3 + $0x68] sm:$0xff]
    %v6902 = vld [vmem:[%s3 + $0x70] sm:$0xff]
    %v6903 = vld [vmem:[%s3 + $0x78] sm:$0xff]
    %v6904 = vld [vmem:[%s4] sm:$0x1]
    %6905 = vmatprep.subr.mxu0 0.0
    %6906 = vmatpush1.msra.mxu0 %v6903
    %6907 = vmatprep.subr.mxu0 0.0
    %6908 = vmatpush1.msra.mxu0 %v6902
    %6909 = vmatprep.subr.mxu0 0.0
    %6910 = vmatpush1.msra.mxu0 %v6901
    %6911 = vmatprep.subr.mxu0 0.0
    %6912 = vmatpush1.msra.mxu0 %v6900
    %6913 = vmatprep.subr.mxu0 0.0
    %6914 = vmatpush1.msra.mxu0 %v6899
    %6915 = vmatprep.subr.mxu0 0.0
    %6916 = vmatpush1.msra.mxu0 %v6898
    %6917 = vmatprep.subr.mxu0 0.0
    %6918 = vmatpush1.msra.mxu0 %v6897
    %6919 = vmatprep.subr.mxu0 0.0
    %6920 = vmatpush1.msra.mxu0 %v6896
    %6921 = vmatprep.subr.mxu0 0.0
    %6922 = vmatpush1.msra.mxu0 %v6895
    %6923 = vmatprep.subr.mxu0 0.0
    %6924 = vmatpush1.msra.mxu0 %v6894
    %6925 = vmatprep.subr.mxu0 0.0
    %6926 = vmatpush1.msra.mxu0 %v6893
    %6927 = vmatprep.subr.mxu0 0.0
    %6928 = vmatpush1.msra.mxu0 %v6892
    %6929 = vmatprep.subr.mxu0 0.0
    %6930 = vmatpush1.msra.mxu0 %v6891
    %6931 = vmatprep.subr.mxu0 0.0
    %6932 = vmatpush1.msra.mxu0 %v6890
    %6933 = vmatprep.subr.mxu0 0.0
    %6934 = vmatpush1.msra.mxu0 %v6889
    %6935 = vmatprep.subr.mxu0 0.0
    %6936 = vmatpush1.msra.mxu0 %v6888
    %6937 = vmatprep.subr.mxu0 0.0
    %6938 = vmatpush2.msra.mxu0 0.0
    %6939 = vmatprep.subr.mxu0 0.0
    %6940 = vmatpush2.msra.mxu0 0.0
    %6941 = vmatprep.subr.mxu0 0.0
    %6942 = vmatpush2.msra.mxu0 0.0
    %6943 = vmatprep.subr.mxu0 0.0
    %6944 = vmatpush2.msra.mxu0 0.0
    %6945 = vmatprep.subr.mxu0 0.0
    %6946 = vmatpush2.msra.mxu0 0.0
    %6947 = vmatprep.subr.mxu0 0.0
    %6948 = vmatpush2.msra.mxu0 0.0
    %6949 = vmatprep.subr.mxu0 0.0
    %6950 = vmatpush2.msra.mxu0 0.0
    %6951 = vmatprep.subr.mxu0 0.0
    %6952 = vmatpush2.msra.mxu0 0.0
    %6953 = vmatprep.subr.mxu0 0.0
    %6954 = vmatpush2.msra.mxu0 0.0
    %6955 = vmatprep.subr.mxu0 0.0
    %6956 = vmatpush2.msra.mxu0 0.0
    %6957 = vmatprep.subr.mxu0 0.0
    %6958 = vmatpush2.msra.mxu0 0.0
    %6959 = vmatprep.subr.mxu0 0.0
    %6960 = vmatpush2.msra.mxu0 0.0
    %6961 = vmatprep.subr.mxu0 0.0
    %6962 = vmatpush2.msra.mxu0 0.0
    %6963 = vmatprep.subr.mxu0 0.0
    %6964 = vmatpush2.msra.mxu0 0.0
    %6965 = vmatprep.subr.mxu0 0.0
    %6966 = vmatpush2.msra.mxu0 0.0
    %6967 = vmatprep.subr.mxu0 0.0
    %6968 = vmatpush2.msra.mxu0 0.0
    %6969 = vmatprep.mubr.f32.mxu0 0.0
    %6970 = vmatmul.mubr.f32.gmra.mxu0 %v6887
    %v6971 = vpop.f32.mrf.mxu0
    %v6972 = vadd.f32 %v6904, %v6971
    %v6973 = vpop.f32.mrf.mxu0
    %6974 = vdwg.mxu0
    %v6975 = vmax.f32 %v6972, 0.0
    %v6976 = vld [vmem:[%s5] sm:$0x3]
    %v6977 = vld [vmem:[%s6] sm:$0x1]
    %v6979 = vsel %vm6755, %v6975, 0
    %v6982 = vsel %vm6759, %v6976, 0
    %6984 = vmatprep.subr.mxu0 0.0
    %6985 = vmatpush1.msra.mxu0 0.0
    %6986 = vmatprep.subr.mxu0 0.0
    %6987 = vmatpush1.msra.mxu0 0.0
    %6988 = vmatprep.subr.mxu0 0.0
    %6989 = vmatpush1.msra.mxu0 0.0
    %6990 = vmatprep.subr.mxu0 0.0
    %6991 = vmatpush1.msra.mxu0 0.0
    %6992 = vmatprep.subr.mxu0 0.0
    %6993 = vmatpush1.msra.mxu0 0.0
    %6994 = vmatprep.subr.mxu0 0.0
    %6995 = vmatpush1.msra.mxu0 0.0
    %6996 = vmatprep.subr.mxu0 0.0
    %6997 = vmatpush1.msra.mxu0 0.0
    %6998 = vmatprep.subr.mxu0 0.0
    %6999 = vmatpush1.msra.mxu0 0.0
    %7000 = vmatprep.subr.mxu0 0.0
    %7001 = vmatpush1.msra.mxu0 0.0
    %7002 = vmatprep.subr.mxu0 0.0
    %7003 = vmatpush1.msra.mxu0 0.0
    %7004 = vmatprep.subr.mxu0 0.0
    %7005 = vmatpush1.msra.mxu0 0.0
    %7006 = vmatprep.subr.mxu0 0.0
    %7007 = vmatpush1.msra.mxu0 0.0
    %7008 = vmatprep.subr.mxu0 0.0
    %7009 = vmatpush1.msra.mxu0 0.0
    %7010 = vmatprep.subr.mxu0 0.0
    %7011 = vmatpush1.msra.mxu0 0.0
    %7012 = vmatprep.subr.mxu0 0.0
    %7013 = vmatpush1.msra.mxu0 0.0
    %7014 = vmatprep.subr.mxu0 0.0
    %7015 = vmatpush1.msra.mxu0 %v6982
    %7016 = vmatprep.subr.mxu0 0.0
    %7017 = vmatpush2.msra.mxu0 0.0
    %7018 = vmatprep.subr.mxu0 0.0
    %7019 = vmatpush2.msra.mxu0 0.0
    %7020 = vmatprep.subr.mxu0 0.0
    %7021 = vmatpush2.msra.mxu0 0.0
    %7022 = vmatprep.subr.mxu0 0.0
    %7023 = vmatpush2.msra.mxu0 0.0
    %7024 = vmatprep.subr.mxu0 0.0
    %7025 = vmatpush2.msra.mxu0 0.0
    %7026 = vmatprep.subr.mxu0 0.0
    %7027 = vmatpush2.msra.mxu0 0.0
    %7028 = vmatprep.subr.mxu0 0.0
    %7029 = vmatpush2.msra.mxu0 0.0
    %7030 = vmatprep.subr.mxu0 0.0
    %7031 = vmatpush2.msra.mxu0 0.0
    %7032 = vmatprep.subr.mxu0 0.0
    %7033 = vmatpush2.msra.mxu0 0.0
    %7034 = vmatprep.subr.mxu0 0.0
    %7035 = vmatpush2.msra.mxu0 0.0
    %7036 = vmatprep.subr.mxu0 0.0
    %7037 = vmatpush2.msra.mxu0 0.0
    %7038 = vmatprep.subr.mxu0 0.0
    %7039 = vmatpush2.msra.mxu0 0.0
    %7040 = vmatprep.subr.mxu0 0.0
    %7041 = vmatpush2.msra.mxu0 0.0
    %7042 = vmatprep.subr.mxu0 0.0
    %7043 = vmatpush2.msra.mxu0 0.0
    %7044 = vmatprep.subr.mxu0 0.0
    %7045 = vmatpush2.msra.mxu0 0.0
    %7046 = vmatprep.subr.mxu0 0.0
    %7047 = vmatpush2.msra.mxu0 0.0
    %7048 = vmatprep.mubr.f32.mxu0 0.0
    %7049 = vmatmul.mubr.f32.gmra.mxu0 %v6979
    %v7050 = vpop.f32.mrf.mxu0
    %v7051 = vadd.f32 %v6977, %v7050
    %v7052 = vpop.f32.mrf.mxu0
    %7053 = vdwg.mxu0
    %v7054 = vsub.f32 0.0, %v7051
    %v7055 = vmul.f32 %v7054, 1.442695
    %v7056 = vpow.pop %v7055
    %v7057 = vadd.f32 %v7056, 1.0
    %v7058 = vrcp.pop %v7057
    %v7059 = vmul.f32 1.0, %v7058
    %s7060 = scalar_lea.vmem %s0, 64
    %v7061 = vld [vmem:[%s7060] sm:$0xff]
    %v7062 = vld [vmem:[%s7060 + $0x8] sm:$0xff]
    %v7063 = vld [vmem:[%s7060 + $0x10] sm:$0xff]
    %v7064 = vld [vmem:[%s7060 + $0x18] sm:$0xff]
    %v7065 = vld [vmem:[%s7060 + $0x20] sm:$0xff]
    %v7066 = vld [vmem:[%s7060 + $0x28] sm:$0xff]
    %v7067 = vld [vmem:[%s7060 + $0x30] sm:$0xff]
    %v7068 = vld [vmem:[%s7060 + $0x38] sm:$0xff]
    %v7069 = vlaneseq
    %v7070 = vshrl.u32 %v7069, 7
    %v7071 = vsub.s32 0, %v7070
    %v7072 = vrot.slane %v7059, %v7071
    %v7073 = vmul.f32 %v6644, %v7072
    %v7074 = vmul.f32 %v6645, %v7072
    %v7075 = vmul.f32 %v6646, %v7072
    %v7076 = vmul.f32 %v6647, %v7072
    %v7077 = vmul.f32 %v6648, %v7072
    %v7078 = vmul.f32 %v6649, %v7072
    %v7079 = vmul.f32 %v6650, %v7072
    %v7080 = vmul.f32 %v6651, %v7072
    %v7081 = vadd.f32 %v7073, %v7061
    %v7082 = vadd.f32 %v7074, %v7062
    %v7083 = vadd.f32 %v7075, %v7063
    %v7084 = vadd.f32 %v7076, %v7064
    %v7085 = vadd.f32 %v7077, %v7065
    %v7086 = vadd.f32 %v7078, %v7066
    %v7087 = vadd.f32 %v7079, %v7067
    %v7088 = vadd.f32 %v7080, %v7068
    %s7089 = scalar_lea.vmem [#allocation7], 64
    %7090 = vst [vmem:[%s7089] sm:$0xff] %v7081
    %7091 = vst [vmem:[%s7089 + $0x8] sm:$0xff] %v7082
    %7092 = vst [vmem:[%s7089 + $0x10] sm:$0xff] %v7083
    %7093 = vst [vmem:[%s7089 + $0x18] sm:$0xff] %v7084
    %7094 = vst [vmem:[%s7089 + $0x20] sm:$0xff] %v7085
    %7095 = vst [vmem:[%s7089 + $0x28] sm:$0xff] %v7086
    %7096 = vst [vmem:[%s7089 + $0x30] sm:$0xff] %v7087
    %7097 = vst [vmem:[%s7089 + $0x38] sm:$0xff] %v7088
    // Predicated region
    $region34: #{tpu_custom_call.1} parent=1 // pred_check
      _
    $region35: #{tpu_custom_call.1} parent=1 // pred_check_branch
      %7099 = sbr.rel (0) target = $region37
    $region36: #{tpu_custom_call.1} parent=1 // pred_region
      %s7101 = ssub.s32 2048, 2048
      %7102 = vsyncadd [#allocation6], %s7101
      %s7103 = sshll.u32 [#allocation7], 4
      %s7104 = int_to_ptr.vmem [resolvable:$true] %s7103
      %7109 = dma.vmem_to_hbm [thread:$0]  %s7104, 2048, %s7, [#allocation6], 128, 128, 8
    $region37: #{tpu_custom_call.1} parent=1 // pred_fallthru
      _
    // Predicated region
    $region38: #{tpu_custom_call.1} parent=1 // pred_check
      _
    $region39: #{tpu_custom_call.1} parent=1 // pred_check_branch
      %7111 = sbr.rel (0) target = $region41
    $region40: #{tpu_custom_call.1} parent=1 // pred_region
      %7112 = dma.done [#allocation6], 2048
    $region41: #{tpu_custom_call.1} parent=1 // pred_fallthru
      _
    %7113 = vsyncpa [#allocation5], 1
    %7114 = vsyncpa [#allocation6], 1

</llo_original>
